<compile_context>
chip_gen: v5e
topology: v5e:2x2
jax: 0.10.0
libtpu: 0.0.40
codegen_flags: <defaults>
</compile_context>

<pallas_src>
import functools

import jax
import jax.numpy as jnp
from jax.experimental import pallas as pl
from jax.experimental.pallas import tpu as pltpu

# ---------------- configuration (small, consistent with the module) ----------------
BATCH       = 2
TRIPLE_DIM  = 16
IMAGE_DIM   = 32          # transformer width D
IMAGE_SIZE  = 8           # H = W = 8  -> 64 image tokens
MAX_REL     = 8           # triples per image (max_relationships_per_image)
HEADS       = 4
HEAD_DIM    = IMAGE_DIM // HEADS
LAYERS      = 2
THRESHOLD   = 0.3
L_IMG       = IMAGE_SIZE * IMAGE_SIZE
L_TOTAL     = MAX_REL + L_IMG
N_OBJ       = 4
SG_ONLY     = False       # attn_mask = None (matches the sg_only=False branch)


# ------------------------- fused forward Pallas kernel (per grid step) -------------------------
def _fused_forward_kernel(triple_ref, img_ref, mask_ref,
                          mlp_w_ref, mlp_b_ref,
                          wqkv_ref, bqkv_ref, wo_ref,
                          wfc_ref, bfc_ref, wproj_ref, vecs_ref,
                          o_ref, x_scr, ctx_scr):
    BB = triple_ref.shape[0]                  # batch elements handled by this grid step
    D, H, E, L, T = IMAGE_DIM, HEADS, HEAD_DIM, L_TOTAL, MAX_REL
    scale = 1.0 / float(E ** 0.5)

    def layernorm(v, w, b):
        mu = jnp.mean(v, axis=-1, keepdims=True)
        var = jnp.mean(v * v, axis=-1, keepdims=True) - mu * mu   # single-pass variance
        return (v - mu) * jax.lax.rsqrt(var + 1e-5) * w + b

    # ---- triple MLP + token assembly directly in VMEM scratch (no register concat) ----
    mlp_w = mlp_w_ref[...]
    mlp_b = mlp_b_ref[...]
    for b in range(BB):
        t_b = jnp.dot(triple_ref[b], mlp_w,
                      preferred_element_type=jnp.float32) + mlp_b             # (T, D)
        x_scr[b * L:b * L + T, :] = t_b
        x_scr[b * L + T:(b + 1) * L, :] = mask_ref[b] * img_ref[b]            # masked img
    x = x_scr[...]                                                            # (BB*L, D)

    # ---- 2 x CLIP ResidualAttentionBlock (attn_mask=None since sg_only=False) ----
    for l in range(LAYERS):
        ln1_w, ln1_b = vecs_ref[l, 0], vecs_ref[l, 1]
        b_o          = vecs_ref[l, 2]
        ln2_w, ln2_b = vecs_ref[l, 3], vecs_ref[l, 4]
        b_proj       = vecs_ref[l, 5]

        # multi-head self-attention: one full-width QKV matmul (M=BB*L, K=D, N=3D)
        h1 = layernorm(x, ln1_w, ln1_b)                                       # (BB*L, D)
        qkv = jnp.dot(h1, wqkv_ref[l],
                      preferred_element_type=jnp.float32) + bqkv_ref[l]       # (BB*L, 3D)

        # per-(batch, head) attention on static lane/sublane slices; head outputs are
        # staged into a VMEM scratch so the output projection is a single K=D matmul.
        for b in range(BB):
            r0 = b * L
            for h in range(H):
                q_h = qkv[r0:r0 + L, 0 * D + h * E:0 * D + (h + 1) * E]       # (L, E)
                k_h = qkv[r0:r0 + L, 1 * D + h * E:1 * D + (h + 1) * E]
                v_h = qkv[r0:r0 + L, 2 * D + h * E:2 * D + (h + 1) * E]
                s = jax.lax.dot_general(q_h, k_h, (((1,), (1,)), ((), ())),
                                        preferred_element_type=jnp.float32) * scale
                s = s - jnp.max(s, axis=-1, keepdims=True)                    # stable softmax
                p = jnp.exp(s)
                p = p * pl.reciprocal(jnp.sum(p, axis=-1, keepdims=True), approx=True)
                ctx_scr[r0:r0 + L, h * E:(h + 1) * E] = jnp.dot(
                    p, v_h, preferred_element_type=jnp.float32)               # (L, E)

        # fused output projection over all heads (single K=D=32 matmul) + residual
        x = x + jnp.dot(ctx_scr[...], wo_ref[l],
                        preferred_element_type=jnp.float32) + b_o

        # MLP with QuickGELU (CLIP)
        h2 = layernorm(x, ln2_w, ln2_b)
        m = jnp.dot(h2, wfc_ref[l], preferred_element_type=jnp.float32) + bfc_ref[l]
        m = m * jax.nn.sigmoid(1.702 * m)
        m = jnp.dot(m, wproj_ref[l], preferred_element_type=jnp.float32) + b_proj
        x = x + m

    # ---- masked-MSE partial sum for this grid step's BB batch elements ----
    # loss_mask is 0 on triple rows and (1 - image_mask) on image rows, so only masked
    # image patches contribute.  The denominator B * L_TOTAL * D (MSELoss 'mean' over the
    # full tensor) is applied in the wrapper.
    sse = jnp.float32(0.0)
    for b in range(BB):
        lm = 1.0 - mask_ref[b]                                                # (L_IMG, 1)
        diff = (x[b * L + T:(b + 1) * L, :] - img_ref[b]) * lm
        sse = sse + jnp.sum(diff * diff)
    o_ref[...] = jnp.zeros((1, 8, 128), jnp.float32) + sse                    # lane-dense store


def _fused_forward(triple, img_tokens, image_mask, pp, batch_block):
    B = triple.shape[0]
    assert B % batch_block == 0
    BB = batch_block
    steps = B // BB
    D = IMAGE_DIM
    grid_spec = pltpu.PrefetchScalarGridSpec(
        num_scalar_prefetch=0,
        grid=(steps,),
        in_specs=[
            pl.BlockSpec((BB, MAX_REL, TRIPLE_DIM), lambda b: (b, 0, 0)),
            pl.BlockSpec((BB, L_IMG, D),            lambda b: (b, 0, 0)),
            pl.BlockSpec((BB, L_IMG, 1),            lambda b: (b, 0, 0)),
            pl.BlockSpec((TRIPLE_DIM, D),           lambda b: (0, 0)),
            pl.BlockSpec((1, D),                    lambda b: (0, 0)),
            pl.BlockSpec((LAYERS, D, 3 * D),        lambda b: (0, 0, 0)),
            pl.BlockSpec((LAYERS, 1, 3 * D),        lambda b: (0, 0, 0)),
            pl.BlockSpec((LAYERS, D, D),            lambda b: (0, 0, 0)),
            pl.BlockSpec((LAYERS, D, 4 * D),        lambda b: (0, 0, 0)),
            pl.BlockSpec((LAYERS, 1, 4 * D),        lambda b: (0, 0, 0)),
            pl.BlockSpec((LAYERS, 4 * D, D),        lambda b: (0, 0, 0)),
            pl.BlockSpec((LAYERS, 6, 1, D),         lambda b: (0, 0, 0, 0)),
        ],
        out_specs=pl.BlockSpec((1, 8, 128), lambda b: (b, 0, 0)),
        scratch_shapes=[pltpu.VMEM((BB * L_TOTAL, D), jnp.float32),   # token sequence
                        pltpu.VMEM((BB * L_TOTAL, D), jnp.float32)],  # merged attn context
    )
    return pl.pallas_call(
        _fused_forward_kernel,
        out_shape=jax.ShapeDtypeStruct((steps, 8, 128), jnp.float32),
        grid_spec=grid_spec,
        compiler_params=pltpu.CompilerParams(dimension_semantics=("parallel",)),
    )(triple, img_tokens, image_mask,
      pp['mlp_w'], pp['mlp_b'],
      pp['w_qkv'], pp['b_qkv'], pp['w_o'],
      pp['w_fc'], pp['b_fc'], pp['w_proj'], pp['vecs'])


def _batch_block_for_device(batch):
    """One batch element per grid step on multi-TensorCore chips (v7x) so the 'parallel'
    grid maps onto the two cores; fold the whole batch into a single step on single-TC
    chips (v5e / v6e) to avoid per-step overhead and double the matmul M dimension."""
    try:
        kind = jax.devices()[0].device_kind.lower()
    except Exception:
        kind = ""
    multi_tc = ("v7" in kind) or ("7x" in kind)
    return 1 if multi_tc else batch


# ------------------------------ plain-JAX glue: box mask -----------------------------
def boxes_to_mask(boxes, obj_to_img, batch, H, W, threshold):
    # TODO(synk): original boxes_to_mask source unavailable; semantics approximated as
    # "pixel is masked (0) if any of its image's GT boxes covers > threshold of the cell".
    yy = jnp.arange(H, dtype=jnp.float32) / H
    xx = jnp.arange(W, dtype=jnp.float32) / W
    py0 = jnp.broadcast_to(yy[:, None], (H, W)); py1 = py0 + 1.0 / H
    px0 = jnp.broadcast_to(xx[None, :], (H, W)); px1 = px0 + 1.0 / W
    bx0, by0, bx1, by1 = boxes[:, 0], boxes[:, 1], boxes[:, 2], boxes[:, 3]
    ix = jnp.clip(jnp.minimum(px1[None], bx1[:, None, None]) -
                  jnp.maximum(px0[None], bx0[:, None, None]), 0.0)
    iy = jnp.clip(jnp.minimum(py1[None], by1[:, None, None]) -
                  jnp.maximum(py0[None], by0[:, None, None]), 0.0)
    cover = (ix * iy) * (H * W)                               # fraction of cell covered
    covered = (cover > threshold).astype(jnp.float32)         # (O, H, W)
    onehot = jax.nn.one_hot(obj_to_img, batch, dtype=jnp.float32)   # (O, B)
    any_cov = jnp.einsum('ob,ohw->bhw', onehot, covered) > 0.0
    return 1.0 - any_cov.astype(jnp.float32)                  # 1 = visible, 0 = masked


# ------------------------------ parameter initialization -----------------------------
def init_params(key):
    def nrm(k, shape, scale=0.02):
        return scale * jax.random.normal(k, shape, dtype=jnp.float32)

    keys = jax.random.split(key, 2 + LAYERS * 4)
    params = {
        'mlp_w': nrm(keys[0], (TRIPLE_DIM, IMAGE_DIM)),
        'mlp_b': jnp.zeros((1, IMAGE_DIM), jnp.float32),
        'blocks': [],
    }
    D = IMAGE_DIM
    for l in range(LAYERS):
        k0, k1, k2, k3 = keys[2 + 4 * l: 6 + 4 * l]
        params['blocks'].append({
            'ln1_w': jnp.ones((1, D), jnp.float32),
            'ln1_b': jnp.zeros((1, D), jnp.float32),
            'w_qkv': nrm(k0, (D, 3 * D)),     # [q | k | v] columns, head-contiguous (H, E)
            'b_qkv': jnp.zeros((1, 3 * D), jnp.float32),
            'w_o':   nrm(k1, (D, D)),
            'b_o':   jnp.zeros((1, D), jnp.float32),
            'ln2_w': jnp.ones((1, D), jnp.float32),
            'ln2_b': jnp.zeros((1, D), jnp.float32),
            'w_fc':  nrm(k2, (D, 4 * D)),
            'b_fc':  jnp.zeros((1, 4 * D), jnp.float32),
            'w_proj': nrm(k3, (4 * D, D)),
            'b_proj': jnp.zeros((1, D), jnp.float32),
        })
    return params


def pack_params(params):
    """Host-side repack: per-layer stacking, lane-dense weight layouts, small-vector packing.
    NOTE: the [q|k|v] column order with (H, E)-contiguous head blocks matches this repo's
    own init; loading torch nn.MultiheadAttention in_proj weights would need a re-layout."""
    w_qkv, b_qkv, w_o, w_fc, b_fc, w_proj, vecs = [], [], [], [], [], [], []
    for blk in params['blocks']:
        w_qkv.append(blk['w_qkv'])                    # (D, 3D)   lane-dense
        b_qkv.append(blk['b_qkv'])                    # (1, 3D)
        w_o.append(blk['w_o'])                        # (D, D)
        w_fc.append(blk['w_fc'])                      # (D, 4D)
        b_fc.append(blk['b_fc'])                      # (1, 4D)
        w_proj.append(blk['w_proj'])                  # (4D, D)
        vecs.append(jnp.stack([blk['ln1_w'], blk['ln1_b'], blk['b_o'],
                               blk['ln2_w'], blk['ln2_b'], blk['b_proj']], axis=0))  # (6,1,D)
    return {
        'mlp_w':  params['mlp_w'],
        'mlp_b':  params['mlp_b'],
        'w_qkv':  jnp.stack(w_qkv),    # (LAYERS, D, 3D)
        'b_qkv':  jnp.stack(b_qkv),    # (LAYERS, 1, 3D)
        'w_o':    jnp.stack(w_o),      # (LAYERS, D, D)
        'w_fc':   jnp.stack(w_fc),     # (LAYERS, D, 4D)
        'b_fc':   jnp.stack(b_fc),     # (LAYERS, 1, 4D)
        'w_proj': jnp.stack(w_proj),   # (LAYERS, 4D, D)
        'vecs':   jnp.stack(vecs),     # (LAYERS, 6, 1, D)
    }


# --------------------------------- module forward ------------------------------------
@functools.partial(jax.jit, static_argnames=("batch_block",))
def scene_graph_masked_img_loss(packed, triple_per_img, image_feature, gt_boxes, obj_to_img,
                                batch_block=1):
    B = triple_per_img.shape[0]

    # NCHW -> (B, H*W, D) tokens
    img_tokens = jnp.transpose(image_feature, (0, 2, 3, 1)).reshape(B, L_IMG, IMAGE_DIM)

    # box mask over image patches (1 = visible, 0 = masked)
    image_mask = boxes_to_mask(gt_boxes, obj_to_img, B, IMAGE_SIZE, IMAGE_SIZE, THRESHOLD)
    image_mask = image_mask.reshape(B, L_IMG, 1)

    # fused: triple_mlp + concat + 2x ResidualAttentionBlock + masked-SSE partials
    partial_sse = _fused_forward(triple_per_img, img_tokens, image_mask, packed, batch_block)

    # MSELoss(reduction='mean') over the full (B, L_TOTAL, D) tensor
    return jnp.sum(partial_sse[:, 0, 0]) / float(B * L_TOTAL * IMAGE_DIM)


# --------------------------------------- main ----------------------------------------
if __name__ == "__main__":
    root = jax.random.PRNGKey(0)
    k_par, k_tri, k_img, k_box = jax.random.split(root, 4)

    params = init_params(k_par)
    packed = pack_params(params)

    triple_per_img = jax.random.normal(k_tri, (BATCH, MAX_REL, TRIPLE_DIM), dtype=jnp.float32)
    image_feature = jax.random.normal(
        k_img, (BATCH, IMAGE_DIM, IMAGE_SIZE, IMAGE_SIZE), dtype=jnp.float32)   # NCHW

    # deterministic normalized boxes [x0, y0, x1, y1]
    kc, ks = jax.random.split(k_box)
    centers = jax.random.uniform(kc, (N_OBJ, 2), minval=0.3, maxval=0.7)
    sizes = jax.random.uniform(ks, (N_OBJ, 2), minval=0.2, maxval=0.5)
    gt_boxes = jnp.clip(
        jnp.concatenate([centers - sizes / 2.0, centers + sizes / 2.0], axis=1), 0.0, 1.0)
    obj_to_img = jnp.array([0, 0, 1, 1], dtype=jnp.int32)

    bb = _batch_block_for_device(BATCH)   # v7x: 1 (2-way parallel grid); v5e/v6e: BATCH (folded)
    loss = scene_graph_masked_img_loss(packed, triple_per_img, image_feature,
                                       gt_boxes, obj_to_img, batch_block=bb)
    loss = jax.block_until_ready(loss)
    assert jnp.isfinite(loss)
    print("KERNEL_OK")
</pallas_src>

<mosaic_0001>
module attributes {stable_mosaic.version = 11 : i64} {
  func.func @_fused_forward_kernel(%arg0: i32, %arg1: memref<2x8x16xf32, #tpu.memory_space<vmem>>, %arg2: memref<2x64x32xf32, #tpu.memory_space<vmem>>, %arg3: memref<2x64x1xf32, #tpu.memory_space<vmem>>, %arg4: memref<16x32xf32, #tpu.memory_space<vmem>>, %arg5: memref<1x32xf32, #tpu.memory_space<vmem>>, %arg6: memref<2x32x96xf32, #tpu.memory_space<vmem>>, %arg7: memref<2x1x96xf32, #tpu.memory_space<vmem>>, %arg8: memref<2x32x32xf32, #tpu.memory_space<vmem>>, %arg9: memref<2x32x128xf32, #tpu.memory_space<vmem>>, %arg10: memref<2x1x128xf32, #tpu.memory_space<vmem>>, %arg11: memref<2x128x32xf32, #tpu.memory_space<vmem>>, %arg12: memref<2x6x1x32xf32, #tpu.memory_space<vmem>>, %arg13: memref<1x8x128xf32, #tpu.memory_space<vmem>>, %arg14: memref<144x32xf32, #tpu.memory_space<vmem>>, %arg15: memref<144x32xf32, #tpu.memory_space<vmem>>) attributes {dimension_semantics = [#tpu.dimension_semantics<parallel>], iteration_bounds = array<i64: 1>, scalar_prefetch = 0 : i64, scratch_operands = 2 : i64, tpu.core_type = #tpu.core_type<tc>, window_params = [{transform_indices = @transform_0, window_bounds = array<i64: 2, 8, 16>}, {transform_indices = @transform_1, window_bounds = array<i64: 2, 64, 32>}, {transform_indices = @transform_2, window_bounds = array<i64: 2, 64, 1>}, {pipeline_mode = #tpu.pipeline_mode<synchronous>, transform_indices = @transform_3, window_bounds = array<i64: 16, 32>}, {pipeline_mode = #tpu.pipeline_mode<synchronous>, transform_indices = @transform_4, window_bounds = array<i64: 1, 32>}, {pipeline_mode = #tpu.pipeline_mode<synchronous>, transform_indices = @transform_5, window_bounds = array<i64: 2, 32, 96>}, {pipeline_mode = #tpu.pipeline_mode<synchronous>, transform_indices = @transform_6, window_bounds = array<i64: 2, 1, 96>}, {pipeline_mode = #tpu.pipeline_mode<synchronous>, transform_indices = @transform_7, window_bounds = array<i64: 2, 32, 32>}, {pipeline_mode = #tpu.pipeline_mode<synchronous>, transform_indices = @transform_8, window_bounds = array<i64: 2, 32, 128>}, {pipeline_mode = #tpu.pipeline_mode<synchronous>, transform_indices = @transform_9, window_bounds = array<i64: 2, 1, 128>}, {pipeline_mode = #tpu.pipeline_mode<synchronous>, transform_indices = @transform_10, window_bounds = array<i64: 2, 128, 32>}, {pipeline_mode = #tpu.pipeline_mode<synchronous>, transform_indices = @transform_11, window_bounds = array<i64: 2, 6, 1, 32>}, {transform_indices = @transform_12, window_bounds = array<i64: 1, 8, 128>}]} {
    %c0 = arith.constant 0 : index
    %c0_0 = arith.constant 0 : index
    %0 = vector.load %arg4[%c0, %c0_0] : memref<16x32xf32, #tpu.memory_space<vmem>>, vector<16x32xf32>
    %c0_1 = arith.constant 0 : index
    %c0_2 = arith.constant 0 : index
    %1 = vector.load %arg5[%c0_1, %c0_2] : memref<1x32xf32, #tpu.memory_space<vmem>>, vector<1x32xf32>
    %c0_3 = arith.constant 0 : index
    %c0_4 = arith.constant 0 : index
    %c0_5 = arith.constant 0 : index
    %2 = vector.load %arg1[%c0_3, %c0_4, %c0_5] : memref<2x8x16xf32, #tpu.memory_space<vmem>>, vector<1x8x16xf32>
    %3 = vector.shape_cast %2 : vector<1x8x16xf32> to vector<8x16xf32>
    %cst = arith.constant dense<0.000000e+00> : vector<8x32xf32>
    %4 = tpu.matmul %3, %0, %cst {dimension_numbers = #tpu.dot_dimension_numbers<[1], [0], [0], [1], [0, 0, 1, 1], [], []>} : vector<8x16xf32>, vector<16x32xf32>, vector<8x32xf32> -> vector<8x32xf32>
    %5 = vector.broadcast %1 : vector<1x32xf32> to vector<8x32xf32>
    %6 = arith.addf %4, %5 : vector<8x32xf32>
    %c0_6 = arith.constant 0 : index
    %c0_7 = arith.constant 0 : index
    %7 = vector.load %arg14[%c0_6, %c0_7] : memref<144x32xf32, #tpu.memory_space<vmem>>, vector<8x32xf32>
    tpu.vector_store %arg14[%c0_6, %c0_7], %6 {strides = array<i32>} : memref<144x32xf32, #tpu.memory_space<vmem>>, vector<8x32xf32>,
    %c0_8 = arith.constant 0 : index
    %c0_9 = arith.constant 0 : index
    %c0_10 = arith.constant 0 : index
    %8 = vector.load %arg3[%c0_8, %c0_9, %c0_10] : memref<2x64x1xf32, #tpu.memory_space<vmem>>, vector<1x64x1xf32>
    %9 = vector.shape_cast %8 : vector<1x64x1xf32> to vector<64x1xf32>
    %c0_11 = arith.constant 0 : index
    %c0_12 = arith.constant 0 : index
    %c0_13 = arith.constant 0 : index
    %10 = vector.load %arg2[%c0_11, %c0_12, %c0_13] : memref<2x64x32xf32, #tpu.memory_space<vmem>>, vector<1x64x32xf32>
    %11 = vector.shape_cast %10 : vector<1x64x32xf32> to vector<64x32xf32>
    %12 = vector.broadcast %9 : vector<64x1xf32> to vector<64x32xf32>
    %13 = arith.mulf %12, %11 : vector<64x32xf32>
    %c8 = arith.constant 8 : index
    %c0_14 = arith.constant 0 : index
    %14 = vector.load %arg14[%c8, %c0_14] : memref<144x32xf32, #tpu.memory_space<vmem>>, vector<64x32xf32>
    tpu.vector_store %arg14[%c8, %c0_14], %13 {strides = array<i32>} : memref<144x32xf32, #tpu.memory_space<vmem>>, vector<64x32xf32>,
    %c1 = arith.constant 1 : index
    %c0_15 = arith.constant 0 : index
    %c0_16 = arith.constant 0 : index
    %15 = vector.load %arg1[%c1, %c0_15, %c0_16] : memref<2x8x16xf32, #tpu.memory_space<vmem>>, vector<1x8x16xf32>
    %16 = vector.shape_cast %15 : vector<1x8x16xf32> to vector<8x16xf32>
    %cst_17 = arith.constant dense<0.000000e+00> : vector<8x32xf32>
    %17 = tpu.matmul %16, %0, %cst_17 {dimension_numbers = #tpu.dot_dimension_numbers<[1], [0], [0], [1], [0, 0, 1, 1], [], []>} : vector<8x16xf32>, vector<16x32xf32>, vector<8x32xf32> -> vector<8x32xf32>
    %18 = vector.broadcast %1 : vector<1x32xf32> to vector<8x32xf32>
    %19 = arith.addf %17, %18 : vector<8x32xf32>
    %c72 = arith.constant 72 : index
    %c0_18 = arith.constant 0 : index
    %20 = vector.load %arg14[%c72, %c0_18] : memref<144x32xf32, #tpu.memory_space<vmem>>, vector<8x32xf32>
    tpu.vector_store %arg14[%c72, %c0_18], %19 {strides = array<i32>} : memref<144x32xf32, #tpu.memory_space<vmem>>, vector<8x32xf32>,
    %c1_19 = arith.constant 1 : index
    %c0_20 = arith.constant 0 : index
    %c0_21 = arith.constant 0 : index
    %21 = vector.load %arg3[%c1_19, %c0_20, %c0_21] : memref<2x64x1xf32, #tpu.memory_space<vmem>>, vector<1x64x1xf32>
    %22 = vector.shape_cast %21 : vector<1x64x1xf32> to vector<64x1xf32>
    %c1_22 = arith.constant 1 : index
    %c0_23 = arith.constant 0 : index
    %c0_24 = arith.constant 0 : index
    %23 = vector.load %arg2[%c1_22, %c0_23, %c0_24] : memref<2x64x32xf32, #tpu.memory_space<vmem>>, vector<1x64x32xf32>
    %24 = vector.shape_cast %23 : vector<1x64x32xf32> to vector<64x32xf32>
    %25 = vector.broadcast %22 : vector<64x1xf32> to vector<64x32xf32>
    %26 = arith.mulf %25, %24 : vector<64x32xf32>
    %c80 = arith.constant 80 : index
    %c0_25 = arith.constant 0 : index
    %27 = vector.load %arg14[%c80, %c0_25] : memref<144x32xf32, #tpu.memory_space<vmem>>, vector<64x32xf32>
    tpu.vector_store %arg14[%c80, %c0_25], %26 {strides = array<i32>} : memref<144x32xf32, #tpu.memory_space<vmem>>, vector<64x32xf32>,
    %c0_26 = arith.constant 0 : index
    %c0_27 = arith.constant 0 : index
    %28 = vector.load %arg14[%c0_26, %c0_27] : memref<144x32xf32, #tpu.memory_space<vmem>>, vector<144x32xf32>
    %c0_28 = arith.constant 0 : index
    %c0_29 = arith.constant 0 : index
    %c0_30 = arith.constant 0 : index
    %c0_31 = arith.constant 0 : index
    %29 = vector.load %arg12[%c0_28, %c0_29, %c0_30, %c0_31] : memref<2x6x1x32xf32, #tpu.memory_space<vmem>>, vector<1x1x1x32xf32>
    %30 = vector.shape_cast %29 : vector<1x1x1x32xf32> to vector<1x32xf32>
    %c0_32 = arith.constant 0 : index
    %c1_33 = arith.constant 1 : index
    %c0_34 = arith.constant 0 : index
    %c0_35 = arith.constant 0 : index
    %31 = vector.load %arg12[%c0_32, %c1_33, %c0_34, %c0_35] : memref<2x6x1x32xf32, #tpu.memory_space<vmem>>, vector<1x1x1x32xf32>
    %32 = vector.shape_cast %31 : vector<1x1x1x32xf32> to vector<1x32xf32>
    %c0_36 = arith.constant 0 : index
    %c2 = arith.constant 2 : index
    %c0_37 = arith.constant 0 : index
    %c0_38 = arith.constant 0 : index
    %33 = vector.load %arg12[%c0_36, %c2, %c0_37, %c0_38] : memref<2x6x1x32xf32, #tpu.memory_space<vmem>>, vector<1x1x1x32xf32>
    %34 = vector.shape_cast %33 : vector<1x1x1x32xf32> to vector<1x32xf32>
    %c0_39 = arith.constant 0 : index
    %c3 = arith.constant 3 : index
    %c0_40 = arith.constant 0 : index
    %c0_41 = arith.constant 0 : index
    %35 = vector.load %arg12[%c0_39, %c3, %c0_40, %c0_41] : memref<2x6x1x32xf32, #tpu.memory_space<vmem>>, vector<1x1x1x32xf32>
    %36 = vector.shape_cast %35 : vector<1x1x1x32xf32> to vector<1x32xf32>
    %c0_42 = arith.constant 0 : index
    %c4 = arith.constant 4 : index
    %c0_43 = arith.constant 0 : index
    %c0_44 = arith.constant 0 : index
    %37 = vector.load %arg12[%c0_42, %c4, %c0_43, %c0_44] : memref<2x6x1x32xf32, #tpu.memory_space<vmem>>, vector<1x1x1x32xf32>
    %38 = vector.shape_cast %37 : vector<1x1x1x32xf32> to vector<1x32xf32>
    %c0_45 = arith.constant 0 : index
    %c5 = arith.constant 5 : index
    %c0_46 = arith.constant 0 : index
    %c0_47 = arith.constant 0 : index
    %39 = vector.load %arg12[%c0_45, %c5, %c0_46, %c0_47] : memref<2x6x1x32xf32, #tpu.memory_space<vmem>>, vector<1x1x1x32xf32>
    %40 = vector.shape_cast %39 : vector<1x1x1x32xf32> to vector<1x32xf32>
    %cst_48 = arith.constant dense<0.000000e+00> : vector<144xf32>
    %41 = vector.multi_reduction <add>, %28, %cst_48 [1] : vector<144x32xf32> to vector<144xf32>
    %42 = vector.shape_cast %41 : vector<144xf32> to vector<144x1xf32>
    %cst_49 = arith.constant 3.200000e+01 : f32
    %43 = vector.broadcast %cst_49 : f32 to vector<144x1xf32>
    %44 = arith.divf %42, %43 : vector<144x1xf32>
    %45 = arith.mulf %28, %28 : vector<144x32xf32>
    %cst_50 = arith.constant dense<0.000000e+00> : vector<144xf32>
    %46 = vector.multi_reduction <add>, %45, %cst_50 [1] : vector<144x32xf32> to vector<144xf32>
    %47 = vector.shape_cast %46 : vector<144xf32> to vector<144x1xf32>
    %cst_51 = arith.constant 3.200000e+01 : f32
    %48 = vector.broadcast %cst_51 : f32 to vector<144x1xf32>
    %49 = arith.divf %47, %48 : vector<144x1xf32>
    %50 = arith.mulf %44, %44 : vector<144x1xf32>
    %51 = arith.subf %49, %50 : vector<144x1xf32>
    %52 = vector.broadcast %44 : vector<144x1xf32> to vector<144x32xf32>
    %53 = arith.subf %28, %52 : vector<144x32xf32>
    %cst_52 = arith.constant 9.99999974E-6 : f32
    %54 = vector.broadcast %cst_52 : f32 to vector<144x1xf32>
    %55 = arith.addf %51, %54 : vector<144x1xf32>
    %56 = math.rsqrt %55 : vector<144x1xf32>
    %57 = vector.broadcast %56 : vector<144x1xf32> to vector<144x32xf32>
    %58 = arith.mulf %53, %57 : vector<144x32xf32>
    %59 = vector.broadcast %30 : vector<1x32xf32> to vector<144x32xf32>
    %60 = arith.mulf %58, %59 : vector<144x32xf32>
    %61 = vector.broadcast %32 : vector<1x32xf32> to vector<144x32xf32>
    %62 = arith.addf %60, %61 : vector<144x32xf32>
    %c0_53 = arith.constant 0 : index
    %c0_54 = arith.constant 0 : index
    %c0_55 = arith.constant 0 : index
    %63 = vector.load %arg6[%c0_53, %c0_54, %c0_55] : memref<2x32x96xf32, #tpu.memory_space<vmem>>, vector<1x32x96xf32>
    %64 = vector.shape_cast %63 : vector<1x32x96xf32> to vector<32x96xf32>
    %cst_56 = arith.constant dense<0.000000e+00> : vector<144x96xf32>
    %65 = tpu.matmul %62, %64, %cst_56 {dimension_numbers = #tpu.dot_dimension_numbers<[1], [0], [0], [1], [0, 0, 1, 1], [], []>} : vector<144x32xf32>, vector<32x96xf32>, vector<144x96xf32> -> vector<144x96xf32>
    %c0_57 = arith.constant 0 : index
    %c0_58 = arith.constant 0 : index
    %c0_59 = arith.constant 0 : index
    %66 = vector.load %arg7[%c0_57, %c0_58, %c0_59] : memref<2x1x96xf32, #tpu.memory_space<vmem>>, vector<1x1x96xf32>
    %67 = vector.shape_cast %66 : vector<1x1x96xf32> to vector<1x96xf32>
    %68 = vector.broadcast %67 : vector<1x96xf32> to vector<144x96xf32>
    %69 = arith.addf %65, %68 : vector<144x96xf32>
    %70 = vector.extract_strided_slice %69 {offsets = [0, 0], sizes = [72, 8], strides = [1, 1]} : vector<144x96xf32> to vector<72x8xf32>
    %71 = vector.extract_strided_slice %69 {offsets = [0, 32], sizes = [72, 8], strides = [1, 1]} : vector<144x96xf32> to vector<72x8xf32>
    %72 = vector.extract_strided_slice %69 {offsets = [0, 64], sizes = [72, 8], strides = [1, 1]} : vector<144x96xf32> to vector<72x8xf32>
    %cst_60 = arith.constant dense<0.000000e+00> : vector<72x72xf32>
    %73 = tpu.matmul %70, %71, %cst_60 {dimension_numbers = #tpu.dot_dimension_numbers<[1], [1], [0], [0], [0, 0, 1, 0], [], []>} : vector<72x8xf32>, vector<72x8xf32>, vector<72x72xf32> -> vector<72x72xf32>
    %cst_61 = arith.constant 0.353553385 : f32
    %74 = vector.broadcast %cst_61 : f32 to vector<72x72xf32>
    %75 = arith.mulf %73, %74 : vector<72x72xf32>
    %cst_62 = arith.constant dense<0xFF800000> : vector<72xf32>
    %76 = vector.multi_reduction <maximumf>, %75, %cst_62 [1] : vector<72x72xf32> to vector<72xf32>
    %77 = vector.shape_cast %76 : vector<72xf32> to vector<72x1xf32>
    %78 = vector.broadcast %77 : vector<72x1xf32> to vector<72x72xf32>
    %79 = arith.subf %75, %78 : vector<72x72xf32>
    %80 = math.exp %79 : vector<72x72xf32>
    %cst_63 = arith.constant dense<0.000000e+00> : vector<72xf32>
    %81 = vector.multi_reduction <add>, %80, %cst_63 [1] : vector<72x72xf32> to vector<72xf32>
    %82 = vector.shape_cast %81 : vector<72xf32> to vector<72x1xf32>
    %83 = tpu.reciprocal %82 {approx = true} : vector<72x1xf32> -> vector<72x1xf32>
    %84 = vector.broadcast %83 : vector<72x1xf32> to vector<72x72xf32>
    %85 = arith.mulf %80, %84 : vector<72x72xf32>
    %cst_64 = arith.constant dense<0.000000e+00> : vector<72x8xf32>
    %86 = tpu.matmul %85, %72, %cst_64 {dimension_numbers = #tpu.dot_dimension_numbers<[1], [0], [0], [1], [0, 0, 1, 1], [], []>} : vector<72x72xf32>, vector<72x8xf32>, vector<72x8xf32> -> vector<72x8xf32>
    %c0_65 = arith.constant 0 : index
    %c0_66 = arith.constant 0 : index
    %87 = vector.load %arg15[%c0_65, %c0_66] : memref<144x32xf32, #tpu.memory_space<vmem>>, vector<72x8xf32>
    tpu.vector_store %arg15[%c0_65, %c0_66], %86 {strides = array<i32>} : memref<144x32xf32, #tpu.memory_space<vmem>>, vector<72x8xf32>,
    %88 = vector.extract_strided_slice %69 {offsets = [0, 8], sizes = [72, 8], strides = [1, 1]} : vector<144x96xf32> to vector<72x8xf32>
    %89 = vector.extract_strided_slice %69 {offsets = [0, 40], sizes = [72, 8], strides = [1, 1]} : vector<144x96xf32> to vector<72x8xf32>
    %90 = vector.extract_strided_slice %69 {offsets = [0, 72], sizes = [72, 8], strides = [1, 1]} : vector<144x96xf32> to vector<72x8xf32>
    %cst_67 = arith.constant dense<0.000000e+00> : vector<72x72xf32>
    %91 = tpu.matmul %88, %89, %cst_67 {dimension_numbers = #tpu.dot_dimension_numbers<[1], [1], [0], [0], [0, 0, 1, 0], [], []>} : vector<72x8xf32>, vector<72x8xf32>, vector<72x72xf32> -> vector<72x72xf32>
    %cst_68 = arith.constant 0.353553385 : f32
    %92 = vector.broadcast %cst_68 : f32 to vector<72x72xf32>
    %93 = arith.mulf %91, %92 : vector<72x72xf32>
    %cst_69 = arith.constant dense<0xFF800000> : vector<72xf32>
    %94 = vector.multi_reduction <maximumf>, %93, %cst_69 [1] : vector<72x72xf32> to vector<72xf32>
    %95 = vector.shape_cast %94 : vector<72xf32> to vector<72x1xf32>
    %96 = vector.broadcast %95 : vector<72x1xf32> to vector<72x72xf32>
    %97 = arith.subf %93, %96 : vector<72x72xf32>
    %98 = math.exp %97 : vector<72x72xf32>
    %cst_70 = arith.constant dense<0.000000e+00> : vector<72xf32>
    %99 = vector.multi_reduction <add>, %98, %cst_70 [1] : vector<72x72xf32> to vector<72xf32>
    %100 = vector.shape_cast %99 : vector<72xf32> to vector<72x1xf32>
    %101 = tpu.reciprocal %100 {approx = true} : vector<72x1xf32> -> vector<72x1xf32>
    %102 = vector.broadcast %101 : vector<72x1xf32> to vector<72x72xf32>
    %103 = arith.mulf %98, %102 : vector<72x72xf32>
    %cst_71 = arith.constant dense<0.000000e+00> : vector<72x8xf32>
    %104 = tpu.matmul %103, %90, %cst_71 {dimension_numbers = #tpu.dot_dimension_numbers<[1], [0], [0], [1], [0, 0, 1, 1], [], []>} : vector<72x72xf32>, vector<72x8xf32>, vector<72x8xf32> -> vector<72x8xf32>
    %c0_72 = arith.constant 0 : index
    %c8_73 = arith.constant 8 : index
    %105 = vector.load %arg15[%c0_72, %c8_73] : memref<144x32xf32, #tpu.memory_space<vmem>>, vector<72x8xf32>
    tpu.vector_store %arg15[%c0_72, %c8_73], %104 {strides = array<i32>} : memref<144x32xf32, #tpu.memory_space<vmem>>, vector<72x8xf32>,
    %106 = vector.extract_strided_slice %69 {offsets = [0, 16], sizes = [72, 8], strides = [1, 1]} : vector<144x96xf32> to vector<72x8xf32>
    %107 = vector.extract_strided_slice %69 {offsets = [0, 48], sizes = [72, 8], strides = [1, 1]} : vector<144x96xf32> to vector<72x8xf32>
    %108 = vector.extract_strided_slice %69 {offsets = [0, 80], sizes = [72, 8], strides = [1, 1]} : vector<144x96xf32> to vector<72x8xf32>
    %cst_74 = arith.constant dense<0.000000e+00> : vector<72x72xf32>
    %109 = tpu.matmul %106, %107, %cst_74 {dimension_numbers = #tpu.dot_dimension_numbers<[1], [1], [0], [0], [0, 0, 1, 0], [], []>} : vector<72x8xf32>, vector<72x8xf32>, vector<72x72xf32> -> vector<72x72xf32>
    %cst_75 = arith.constant 0.353553385 : f32
    %110 = vector.broadcast %cst_75 : f32 to vector<72x72xf32>
    %111 = arith.mulf %109, %110 : vector<72x72xf32>
    %cst_76 = arith.constant dense<0xFF800000> : vector<72xf32>
    %112 = vector.multi_reduction <maximumf>, %111, %cst_76 [1] : vector<72x72xf32> to vector<72xf32>
    %113 = vector.shape_cast %112 : vector<72xf32> to vector<72x1xf32>
    %114 = vector.broadcast %113 : vector<72x1xf32> to vector<72x72xf32>
    %115 = arith.subf %111, %114 : vector<72x72xf32>
    %116 = math.exp %115 : vector<72x72xf32>
    %cst_77 = arith.constant dense<0.000000e+00> : vector<72xf32>
    %117 = vector.multi_reduction <add>, %116, %cst_77 [1] : vector<72x72xf32> to vector<72xf32>
    %118 = vector.shape_cast %117 : vector<72xf32> to vector<72x1xf32>
    %119 = tpu.reciprocal %118 {approx = true} : vector<72x1xf32> -> vector<72x1xf32>
    %120 = vector.broadcast %119 : vector<72x1xf32> to vector<72x72xf32>
    %121 = arith.mulf %116, %120 : vector<72x72xf32>
    %cst_78 = arith.constant dense<0.000000e+00> : vector<72x8xf32>
    %122 = tpu.matmul %121, %108, %cst_78 {dimension_numbers = #tpu.dot_dimension_numbers<[1], [0], [0], [1], [0, 0, 1, 1], [], []>} : vector<72x72xf32>, vector<72x8xf32>, vector<72x8xf32> -> vector<72x8xf32>
    %c0_79 = arith.constant 0 : index
    %c16 = arith.constant 16 : index
    %123 = vector.load %arg15[%c0_79, %c16] : memref<144x32xf32, #tpu.memory_space<vmem>>, vector<72x8xf32>
    tpu.vector_store %arg15[%c0_79, %c16], %122 {strides = array<i32>} : memref<144x32xf32, #tpu.memory_space<vmem>>, vector<72x8xf32>,
    %124 = vector.extract_strided_slice %69 {offsets = [0, 24], sizes = [72, 8], strides = [1, 1]} : vector<144x96xf32> to vector<72x8xf32>
    %125 = vector.extract_strided_slice %69 {offsets = [0, 56], sizes = [72, 8], strides = [1, 1]} : vector<144x96xf32> to vector<72x8xf32>
    %126 = vector.extract_strided_slice %69 {offsets = [0, 88], sizes = [72, 8], strides = [1, 1]} : vector<144x96xf32> to vector<72x8xf32>
    %cst_80 = arith.constant dense<0.000000e+00> : vector<72x72xf32>
    %127 = tpu.matmul %124, %125, %cst_80 {dimension_numbers = #tpu.dot_dimension_numbers<[1], [1], [0], [0], [0, 0, 1, 0], [], []>} : vector<72x8xf32>, vector<72x8xf32>, vector<72x72xf32> -> vector<72x72xf32>
    %cst_81 = arith.constant 0.353553385 : f32
    %128 = vector.broadcast %cst_81 : f32 to vector<72x72xf32>
    %129 = arith.mulf %127, %128 : vector<72x72xf32>
    %cst_82 = arith.constant dense<0xFF800000> : vector<72xf32>
    %130 = vector.multi_reduction <maximumf>, %129, %cst_82 [1] : vector<72x72xf32> to vector<72xf32>
    %131 = vector.shape_cast %130 : vector<72xf32> to vector<72x1xf32>
    %132 = vector.broadcast %131 : vector<72x1xf32> to vector<72x72xf32>
    %133 = arith.subf %129, %132 : vector<72x72xf32>
    %134 = math.exp %133 : vector<72x72xf32>
    %cst_83 = arith.constant dense<0.000000e+00> : vector<72xf32>
    %135 = vector.multi_reduction <add>, %134, %cst_83 [1] : vector<72x72xf32> to vector<72xf32>
    %136 = vector.shape_cast %135 : vector<72xf32> to vector<72x1xf32>
    %137 = tpu.reciprocal %136 {approx = true} : vector<72x1xf32> -> vector<72x1xf32>
    %138 = vector.broadcast %137 : vector<72x1xf32> to vector<72x72xf32>
    %139 = arith.mulf %134, %138 : vector<72x72xf32>
    %cst_84 = arith.constant dense<0.000000e+00> : vector<72x8xf32>
    %140 = tpu.matmul %139, %126, %cst_84 {dimension_numbers = #tpu.dot_dimension_numbers<[1], [0], [0], [1], [0, 0, 1, 1], [], []>} : vector<72x72xf32>, vector<72x8xf32>, vector<72x8xf32> -> vector<72x8xf32>
    %c0_85 = arith.constant 0 : index
    %c24 = arith.constant 24 : index
    %141 = vector.load %arg15[%c0_85, %c24] : memref<144x32xf32, #tpu.memory_space<vmem>>, vector<72x8xf32>
    tpu.vector_store %arg15[%c0_85, %c24], %140 {strides = array<i32>} : memref<144x32xf32, #tpu.memory_space<vmem>>, vector<72x8xf32>,
    %142 = vector.extract_strided_slice %69 {offsets = [72, 0], sizes = [72, 8], strides = [1, 1]} : vector<144x96xf32> to vector<72x8xf32>
    %143 = vector.extract_strided_slice %69 {offsets = [72, 32], sizes = [72, 8], strides = [1, 1]} : vector<144x96xf32> to vector<72x8xf32>
    %144 = vector.extract_strided_slice %69 {offsets = [72, 64], sizes = [72, 8], strides = [1, 1]} : vector<144x96xf32> to vector<72x8xf32>
    %cst_86 = arith.constant dense<0.000000e+00> : vector<72x72xf32>
    %145 = tpu.matmul %142, %143, %cst_86 {dimension_numbers = #tpu.dot_dimension_numbers<[1], [1], [0], [0], [0, 0, 1, 0], [], []>} : vector<72x8xf32>, vector<72x8xf32>, vector<72x72xf32> -> vector<72x72xf32>
    %cst_87 = arith.constant 0.353553385 : f32
    %146 = vector.broadcast %cst_87 : f32 to vector<72x72xf32>
    %147 = arith.mulf %145, %146 : vector<72x72xf32>
    %cst_88 = arith.constant dense<0xFF800000> : vector<72xf32>
    %148 = vector.multi_reduction <maximumf>, %147, %cst_88 [1] : vector<72x72xf32> to vector<72xf32>
    %149 = vector.shape_cast %148 : vector<72xf32> to vector<72x1xf32>
    %150 = vector.broadcast %149 : vector<72x1xf32> to vector<72x72xf32>
    %151 = arith.subf %147, %150 : vector<72x72xf32>
    %152 = math.exp %151 : vector<72x72xf32>
    %cst_89 = arith.constant dense<0.000000e+00> : vector<72xf32>
    %153 = vector.multi_reduction <add>, %152, %cst_89 [1] : vector<72x72xf32> to vector<72xf32>
    %154 = vector.shape_cast %153 : vector<72xf32> to vector<72x1xf32>
    %155 = tpu.reciprocal %154 {approx = true} : vector<72x1xf32> -> vector<72x1xf32>
    %156 = vector.broadcast %155 : vector<72x1xf32> to vector<72x72xf32>
    %157 = arith.mulf %152, %156 : vector<72x72xf32>
    %cst_90 = arith.constant dense<0.000000e+00> : vector<72x8xf32>
    %158 = tpu.matmul %157, %144, %cst_90 {dimension_numbers = #tpu.dot_dimension_numbers<[1], [0], [0], [1], [0, 0, 1, 1], [], []>} : vector<72x72xf32>, vector<72x8xf32>, vector<72x8xf32> -> vector<72x8xf32>
    %c72_91 = arith.constant 72 : index
    %c0_92 = arith.constant 0 : index
    %159 = vector.load %arg15[%c72_91, %c0_92] : memref<144x32xf32, #tpu.memory_space<vmem>>, vector<72x8xf32>
    tpu.vector_store %arg15[%c72_91, %c0_92], %158 {strides = array<i32>} : memref<144x32xf32, #tpu.memory_space<vmem>>, vector<72x8xf32>,
    %160 = vector.extract_strided_slice %69 {offsets = [72, 8], sizes = [72, 8], strides = [1, 1]} : vector<144x96xf32> to vector<72x8xf32>
    %161 = vector.extract_strided_slice %69 {offsets = [72, 40], sizes = [72, 8], strides = [1, 1]} : vector<144x96xf32> to vector<72x8xf32>
    %162 = vector.extract_strided_slice %69 {offsets = [72, 72], sizes = [72, 8], strides = [1, 1]} : vector<144x96xf32> to vector<72x8xf32>
    %cst_93 = arith.constant dense<0.000000e+00> : vector<72x72xf32>
    %163 = tpu.matmul %160, %161, %cst_93 {dimension_numbers = #tpu.dot_dimension_numbers<[1], [1], [0], [0], [0, 0, 1, 0], [], []>} : vector<72x8xf32>, vector<72x8xf32>, vector<72x72xf32> -> vector<72x72xf32>
    %cst_94 = arith.constant 0.353553385 : f32
    %164 = vector.broadcast %cst_94 : f32 to vector<72x72xf32>
    %165 = arith.mulf %163, %164 : vector<72x72xf32>
    %cst_95 = arith.constant dense<0xFF800000> : vector<72xf32>
    %166 = vector.multi_reduction <maximumf>, %165, %cst_95 [1] : vector<72x72xf32> to vector<72xf32>
    %167 = vector.shape_cast %166 : vector<72xf32> to vector<72x1xf32>
    %168 = vector.broadcast %167 : vector<72x1xf32> to vector<72x72xf32>
    %169 = arith.subf %165, %168 : vector<72x72xf32>
    %170 = math.exp %169 : vector<72x72xf32>
    %cst_96 = arith.constant dense<0.000000e+00> : vector<72xf32>
    %171 = vector.multi_reduction <add>, %170, %cst_96 [1] : vector<72x72xf32> to vector<72xf32>
    %172 = vector.shape_cast %171 : vector<72xf32> to vector<72x1xf32>
    %173 = tpu.reciprocal %172 {approx = true} : vector<72x1xf32> -> vector<72x1xf32>
    %174 = vector.broadcast %173 : vector<72x1xf32> to vector<72x72xf32>
    %175 = arith.mulf %170, %174 : vector<72x72xf32>
    %cst_97 = arith.constant dense<0.000000e+00> : vector<72x8xf32>
    %176 = tpu.matmul %175, %162, %cst_97 {dimension_numbers = #tpu.dot_dimension_numbers<[1], [0], [0], [1], [0, 0, 1, 1], [], []>} : vector<72x72xf32>, vector<72x8xf32>, vector<72x8xf32> -> vector<72x8xf32>
    %c72_98 = arith.constant 72 : index
    %c8_99 = arith.constant 8 : index
    %177 = vector.load %arg15[%c72_98, %c8_99] : memref<144x32xf32, #tpu.memory_space<vmem>>, vector<72x8xf32>
    tpu.vector_store %arg15[%c72_98, %c8_99], %176 {strides = array<i32>} : memref<144x32xf32, #tpu.memory_space<vmem>>, vector<72x8xf32>,
    %178 = vector.extract_strided_slice %69 {offsets = [72, 16], sizes = [72, 8], strides = [1, 1]} : vector<144x96xf32> to vector<72x8xf32>
    %179 = vector.extract_strided_slice %69 {offsets = [72, 48], sizes = [72, 8], strides = [1, 1]} : vector<144x96xf32> to vector<72x8xf32>
    %180 = vector.extract_strided_slice %69 {offsets = [72, 80], sizes = [72, 8], strides = [1, 1]} : vector<144x96xf32> to vector<72x8xf32>
    %cst_100 = arith.constant dense<0.000000e+00> : vector<72x72xf32>
    %181 = tpu.matmul %178, %179, %cst_100 {dimension_numbers = #tpu.dot_dimension_numbers<[1], [1], [0], [0], [0, 0, 1, 0], [], []>} : vector<72x8xf32>, vector<72x8xf32>, vector<72x72xf32> -> vector<72x72xf32>
    %cst_101 = arith.constant 0.353553385 : f32
    %182 = vector.broadcast %cst_101 : f32 to vector<72x72xf32>
    %183 = arith.mulf %181, %182 : vector<72x72xf32>
    %cst_102 = arith.constant dense<0xFF800000> : vector<72xf32>
    %184 = vector.multi_reduction <maximumf>, %183, %cst_102 [1] : vector<72x72xf32> to vector<72xf32>
    %185 = vector.shape_cast %184 : vector<72xf32> to vector<72x1xf32>
    %186 = vector.broadcast %185 : vector<72x1xf32> to vector<72x72xf32>
    %187 = arith.subf %183, %186 : vector<72x72xf32>
    %188 = math.exp %187 : vector<72x72xf32>
    %cst_103 = arith.constant dense<0.000000e+00> : vector<72xf32>
    %189 = vector.multi_reduction <add>, %188, %cst_103 [1] : vector<72x72xf32> to vector<72xf32>
    %190 = vector.shape_cast %189 : vector<72xf32> to vector<72x1xf32>
    %191 = tpu.reciprocal %190 {approx = true} : vector<72x1xf32> -> vector<72x1xf32>
    %192 = vector.broadcast %191 : vector<72x1xf32> to vector<72x72xf32>
    %193 = arith.mulf %188, %192 : vector<72x72xf32>
    %cst_104 = arith.constant dense<0.000000e+00> : vector<72x8xf32>
    %194 = tpu.matmul %193, %180, %cst_104 {dimension_numbers = #tpu.dot_dimension_numbers<[1], [0], [0], [1], [0, 0, 1, 1], [], []>} : vector<72x72xf32>, vector<72x8xf32>, vector<72x8xf32> -> vector<72x8xf32>
    %c72_105 = arith.constant 72 : index
    %c16_106 = arith.constant 16 : index
    %195 = vector.load %arg15[%c72_105, %c16_106] : memref<144x32xf32, #tpu.memory_space<vmem>>, vector<72x8xf32>
    tpu.vector_store %arg15[%c72_105, %c16_106], %194 {strides = array<i32>} : memref<144x32xf32, #tpu.memory_space<vmem>>, vector<72x8xf32>,
    %196 = vector.extract_strided_slice %69 {offsets = [72, 24], sizes = [72, 8], strides = [1, 1]} : vector<144x96xf32> to vector<72x8xf32>
    %197 = vector.extract_strided_slice %69 {offsets = [72, 56], sizes = [72, 8], strides = [1, 1]} : vector<144x96xf32> to vector<72x8xf32>
    %198 = vector.extract_strided_slice %69 {offsets = [72, 88], sizes = [72, 8], strides = [1, 1]} : vector<144x96xf32> to vector<72x8xf32>
    %cst_107 = arith.constant dense<0.000000e+00> : vector<72x72xf32>
    %199 = tpu.matmul %196, %197, %cst_107 {dimension_numbers = #tpu.dot_dimension_numbers<[1], [1], [0], [0], [0, 0, 1, 0], [], []>} : vector<72x8xf32>, vector<72x8xf32>, vector<72x72xf32> -> vector<72x72xf32>
    %cst_108 = arith.constant 0.353553385 : f32
    %200 = vector.broadcast %cst_108 : f32 to vector<72x72xf32>
    %201 = arith.mulf %199, %200 : vector<72x72xf32>
    %cst_109 = arith.constant dense<0xFF800000> : vector<72xf32>
    %202 = vector.multi_reduction <maximumf>, %201, %cst_109 [1] : vector<72x72xf32> to vector<72xf32>
    %203 = vector.shape_cast %202 : vector<72xf32> to vector<72x1xf32>
    %204 = vector.broadcast %203 : vector<72x1xf32> to vector<72x72xf32>
    %205 = arith.subf %201, %204 : vector<72x72xf32>
    %206 = math.exp %205 : vector<72x72xf32>
    %cst_110 = arith.constant dense<0.000000e+00> : vector<72xf32>
    %207 = vector.multi_reduction <add>, %206, %cst_110 [1] : vector<72x72xf32> to vector<72xf32>
    %208 = vector.shape_cast %207 : vector<72xf32> to vector<72x1xf32>
    %209 = tpu.reciprocal %208 {approx = true} : vector<72x1xf32> -> vector<72x1xf32>
    %210 = vector.broadcast %209 : vector<72x1xf32> to vector<72x72xf32>
    %211 = arith.mulf %206, %210 : vector<72x72xf32>
    %cst_111 = arith.constant dense<0.000000e+00> : vector<72x8xf32>
    %212 = tpu.matmul %211, %198, %cst_111 {dimension_numbers = #tpu.dot_dimension_numbers<[1], [0], [0], [1], [0, 0, 1, 1], [], []>} : vector<72x72xf32>, vector<72x8xf32>, vector<72x8xf32> -> vector<72x8xf32>
    %c72_112 = arith.constant 72 : index
    %c24_113 = arith.constant 24 : index
    %213 = vector.load %arg15[%c72_112, %c24_113] : memref<144x32xf32, #tpu.memory_space<vmem>>, vector<72x8xf32>
    tpu.vector_store %arg15[%c72_112, %c24_113], %212 {strides = array<i32>} : memref<144x32xf32, #tpu.memory_space<vmem>>, vector<72x8xf32>,
    %c0_114 = arith.constant 0 : index
    %c0_115 = arith.constant 0 : index
    %214 = vector.load %arg15[%c0_114, %c0_115] : memref<144x32xf32, #tpu.memory_space<vmem>>, vector<144x32xf32>
    %c0_116 = arith.constant 0 : index
    %c0_117 = arith.constant 0 : index
    %c0_118 = arith.constant 0 : index
    %215 = vector.load %arg8[%c0_116, %c0_117, %c0_118] : memref<2x32x32xf32, #tpu.memory_space<vmem>>, vector<1x32x32xf32>
    %216 = vector.shape_cast %215 : vector<1x32x32xf32> to vector<32x32xf32>
    %cst_119 = arith.constant dense<0.000000e+00> : vector<144x32xf32>
    %217 = tpu.matmul %214, %216, %cst_119 {dimension_numbers = #tpu.dot_dimension_numbers<[1], [0], [0], [1], [0, 0, 1, 1], [], []>} : vector<144x32xf32>, vector<32x32xf32>, vector<144x32xf32> -> vector<144x32xf32>
    %218 = arith.addf %28, %217 : vector<144x32xf32>
    %219 = vector.broadcast %34 : vector<1x32xf32> to vector<144x32xf32>
    %220 = arith.addf %218, %219 : vector<144x32xf32>
    %cst_120 = arith.constant dense<0.000000e+00> : vector<144xf32>
    %221 = vector.multi_reduction <add>, %220, %cst_120 [1] : vector<144x32xf32> to vector<144xf32>
    %222 = vector.shape_cast %221 : vector<144xf32> to vector<144x1xf32>
    %cst_121 = arith.constant 3.200000e+01 : f32
    %223 = vector.broadcast %cst_121 : f32 to vector<144x1xf32>
    %224 = arith.divf %222, %223 : vector<144x1xf32>
    %225 = arith.mulf %220, %220 : vector<144x32xf32>
    %cst_122 = arith.constant dense<0.000000e+00> : vector<144xf32>
    %226 = vector.multi_reduction <add>, %225, %cst_122 [1] : vector<144x32xf32> to vector<144xf32>
    %227 = vector.shape_cast %226 : vector<144xf32> to vector<144x1xf32>
    %cst_123 = arith.constant 3.200000e+01 : f32
    %228 = vector.broadcast %cst_123 : f32 to vector<144x1xf32>
    %229 = arith.divf %227, %228 : vector<144x1xf32>
    %230 = arith.mulf %224, %224 : vector<144x1xf32>
    %231 = arith.subf %229, %230 : vector<144x1xf32>
    %232 = vector.broadcast %224 : vector<144x1xf32> to vector<144x32xf32>
    %233 = arith.subf %220, %232 : vector<144x32xf32>
    %cst_124 = arith.constant 9.99999974E-6 : f32
    %234 = vector.broadcast %cst_124 : f32 to vector<144x1xf32>
    %235 = arith.addf %231, %234 : vector<144x1xf32>
    %236 = math.rsqrt %235 : vector<144x1xf32>
    %237 = vector.broadcast %236 : vector<144x1xf32> to vector<144x32xf32>
    %238 = arith.mulf %233, %237 : vector<144x32xf32>
    %239 = vector.broadcast %36 : vector<1x32xf32> to vector<144x32xf32>
    %240 = arith.mulf %238, %239 : vector<144x32xf32>
    %241 = vector.broadcast %38 : vector<1x32xf32> to vector<144x32xf32>
    %242 = arith.addf %240, %241 : vector<144x32xf32>
    %c0_125 = arith.constant 0 : index
    %c0_126 = arith.constant 0 : index
    %c0_127 = arith.constant 0 : index
    %243 = vector.load %arg9[%c0_125, %c0_126, %c0_127] : memref<2x32x128xf32, #tpu.memory_space<vmem>>, vector<1x32x128xf32>
    %244 = vector.shape_cast %243 : vector<1x32x128xf32> to vector<32x128xf32>
    %cst_128 = arith.constant dense<0.000000e+00> : vector<144x128xf32>
    %245 = tpu.matmul %242, %244, %cst_128 {dimension_numbers = #tpu.dot_dimension_numbers<[1], [0], [0], [1], [0, 0, 1, 1], [], []>} : vector<144x32xf32>, vector<32x128xf32>, vector<144x128xf32> -> vector<144x128xf32>
    %c0_129 = arith.constant 0 : index
    %c0_130 = arith.constant 0 : index
    %c0_131 = arith.constant 0 : index
    %246 = vector.load %arg10[%c0_129, %c0_130, %c0_131] : memref<2x1x128xf32, #tpu.memory_space<vmem>>, vector<1x1x128xf32>
    %247 = vector.shape_cast %246 : vector<1x1x128xf32> to vector<1x128xf32>
    %248 = vector.broadcast %247 : vector<1x128xf32> to vector<144x128xf32>
    %249 = arith.addf %245, %248 : vector<144x128xf32>
    %cst_132 = arith.constant 1.702000e+00 : f32
    %250 = vector.broadcast %cst_132 : f32 to vector<144x128xf32>
    %251 = arith.mulf %250, %249 : vector<144x128xf32>
    %252 = arith.negf %251 : vector<144x128xf32>
    %253 = math.exp %252 : vector<144x128xf32>
    %cst_133 = arith.constant 1.000000e+00 : f32
    %254 = vector.broadcast %cst_133 : f32 to vector<144x128xf32>
    %255 = arith.addf %254, %253 : vector<144x128xf32>
    %256 = arith.divf %254, %255 : vector<144x128xf32>
    %257 = arith.mulf %249, %256 : vector<144x128xf32>
    %c0_134 = arith.constant 0 : index
    %c0_135 = arith.constant 0 : index
    %c0_136 = arith.constant 0 : index
    %258 = vector.load %arg11[%c0_134, %c0_135, %c0_136] : memref<2x128x32xf32, #tpu.memory_space<vmem>>, vector<1x128x32xf32>
    %259 = vector.shape_cast %258 : vector<1x128x32xf32> to vector<128x32xf32>
    %cst_137 = arith.constant dense<0.000000e+00> : vector<144x32xf32>
    %260 = tpu.matmul %257, %259, %cst_137 {dimension_numbers = #tpu.dot_dimension_numbers<[1], [0], [0], [1], [0, 0, 1, 1], [], []>} : vector<144x128xf32>, vector<128x32xf32>, vector<144x32xf32> -> vector<144x32xf32>
    %261 = vector.broadcast %40 : vector<1x32xf32> to vector<144x32xf32>
    %262 = arith.addf %260, %261 : vector<144x32xf32>
    %263 = arith.addf %220, %262 : vector<144x32xf32>
    %c1_138 = arith.constant 1 : index
    %c0_139 = arith.constant 0 : index
    %c0_140 = arith.constant 0 : index
    %c0_141 = arith.constant 0 : index
    %264 = vector.load %arg12[%c1_138, %c0_139, %c0_140, %c0_141] : memref<2x6x1x32xf32, #tpu.memory_space<vmem>>, vector<1x1x1x32xf32>
    %265 = vector.shape_cast %264 : vector<1x1x1x32xf32> to vector<1x32xf32>
    %c1_142 = arith.constant 1 : index
    %c1_143 = arith.constant 1 : index
    %c0_144 = arith.constant 0 : index
    %c0_145 = arith.constant 0 : index
    %266 = vector.load %arg12[%c1_142, %c1_143, %c0_144, %c0_145] : memref<2x6x1x32xf32, #tpu.memory_space<vmem>>, vector<1x1x1x32xf32>
    %267 = vector.shape_cast %266 : vector<1x1x1x32xf32> to vector<1x32xf32>
    %c1_146 = arith.constant 1 : index
    %c2_147 = arith.constant 2 : index
    %c0_148 = arith.constant 0 : index
    %c0_149 = arith.constant 0 : index
    %268 = vector.load %arg12[%c1_146, %c2_147, %c0_148, %c0_149] : memref<2x6x1x32xf32, #tpu.memory_space<vmem>>, vector<1x1x1x32xf32>
    %269 = vector.shape_cast %268 : vector<1x1x1x32xf32> to vector<1x32xf32>
    %c1_150 = arith.constant 1 : index
    %c3_151 = arith.constant 3 : index
    %c0_152 = arith.constant 0 : index
    %c0_153 = arith.constant 0 : index
    %270 = vector.load %arg12[%c1_150, %c3_151, %c0_152, %c0_153] : memref<2x6x1x32xf32, #tpu.memory_space<vmem>>, vector<1x1x1x32xf32>
    %271 = vector.shape_cast %270 : vector<1x1x1x32xf32> to vector<1x32xf32>
    %c1_154 = arith.constant 1 : index
    %c4_155 = arith.constant 4 : index
    %c0_156 = arith.constant 0 : index
    %c0_157 = arith.constant 0 : index
    %272 = vector.load %arg12[%c1_154, %c4_155, %c0_156, %c0_157] : memref<2x6x1x32xf32, #tpu.memory_space<vmem>>, vector<1x1x1x32xf32>
    %273 = vector.shape_cast %272 : vector<1x1x1x32xf32> to vector<1x32xf32>
    %c1_158 = arith.constant 1 : index
    %c5_159 = arith.constant 5 : index
    %c0_160 = arith.constant 0 : index
    %c0_161 = arith.constant 0 : index
    %274 = vector.load %arg12[%c1_158, %c5_159, %c0_160, %c0_161] : memref<2x6x1x32xf32, #tpu.memory_space<vmem>>, vector<1x1x1x32xf32>
    %275 = vector.shape_cast %274 : vector<1x1x1x32xf32> to vector<1x32xf32>
    %cst_162 = arith.constant dense<0.000000e+00> : vector<144xf32>
    %276 = vector.multi_reduction <add>, %263, %cst_162 [1] : vector<144x32xf32> to vector<144xf32>
    %277 = vector.shape_cast %276 : vector<144xf32> to vector<144x1xf32>
    %cst_163 = arith.constant 3.200000e+01 : f32
    %278 = vector.broadcast %cst_163 : f32 to vector<144x1xf32>
    %279 = arith.divf %277, %278 : vector<144x1xf32>
    %280 = arith.mulf %263, %263 : vector<144x32xf32>
    %cst_164 = arith.constant dense<0.000000e+00> : vector<144xf32>
    %281 = vector.multi_reduction <add>, %280, %cst_164 [1] : vector<144x32xf32> to vector<144xf32>
    %282 = vector.shape_cast %281 : vector<144xf32> to vector<144x1xf32>
    %cst_165 = arith.constant 3.200000e+01 : f32
    %283 = vector.broadcast %cst_165 : f32 to vector<144x1xf32>
    %284 = arith.divf %282, %283 : vector<144x1xf32>
    %285 = arith.mulf %279, %279 : vector<144x1xf32>
    %286 = arith.subf %284, %285 : vector<144x1xf32>
    %287 = vector.broadcast %279 : vector<144x1xf32> to vector<144x32xf32>
    %288 = arith.subf %263, %287 : vector<144x32xf32>
    %cst_166 = arith.constant 9.99999974E-6 : f32
    %289 = vector.broadcast %cst_166 : f32 to vector<144x1xf32>
    %290 = arith.addf %286, %289 : vector<144x1xf32>
    %291 = math.rsqrt %290 : vector<144x1xf32>
    %292 = vector.broadcast %291 : vector<144x1xf32> to vector<144x32xf32>
    %293 = arith.mulf %288, %292 : vector<144x32xf32>
    %294 = vector.broadcast %265 : vector<1x32xf32> to vector<144x32xf32>
    %295 = arith.mulf %293, %294 : vector<144x32xf32>
    %296 = vector.broadcast %267 : vector<1x32xf32> to vector<144x32xf32>
    %297 = arith.addf %295, %296 : vector<144x32xf32>
    %c1_167 = arith.constant 1 : index
    %c0_168 = arith.constant 0 : index
    %c0_169 = arith.constant 0 : index
    %298 = vector.load %arg6[%c1_167, %c0_168, %c0_169] : memref<2x32x96xf32, #tpu.memory_space<vmem>>, vector<1x32x96xf32>
    %299 = vector.shape_cast %298 : vector<1x32x96xf32> to vector<32x96xf32>
    %cst_170 = arith.constant dense<0.000000e+00> : vector<144x96xf32>
    %300 = tpu.matmul %297, %299, %cst_170 {dimension_numbers = #tpu.dot_dimension_numbers<[1], [0], [0], [1], [0, 0, 1, 1], [], []>} : vector<144x32xf32>, vector<32x96xf32>, vector<144x96xf32> -> vector<144x96xf32>
    %c1_171 = arith.constant 1 : index
    %c0_172 = arith.constant 0 : index
    %c0_173 = arith.constant 0 : index
    %301 = vector.load %arg7[%c1_171, %c0_172, %c0_173] : memref<2x1x96xf32, #tpu.memory_space<vmem>>, vector<1x1x96xf32>
    %302 = vector.shape_cast %301 : vector<1x1x96xf32> to vector<1x96xf32>
    %303 = vector.broadcast %302 : vector<1x96xf32> to vector<144x96xf32>
    %304 = arith.addf %300, %303 : vector<144x96xf32>
    %305 = vector.extract_strided_slice %304 {offsets = [0, 0], sizes = [72, 8], strides = [1, 1]} : vector<144x96xf32> to vector<72x8xf32>
    %306 = vector.extract_strided_slice %304 {offsets = [0, 32], sizes = [72, 8], strides = [1, 1]} : vector<144x96xf32> to vector<72x8xf32>
    %307 = vector.extract_strided_slice %304 {offsets = [0, 64], sizes = [72, 8], strides = [1, 1]} : vector<144x96xf32> to vector<72x8xf32>
    %cst_174 = arith.constant dense<0.000000e+00> : vector<72x72xf32>
    %308 = tpu.matmul %305, %306, %cst_174 {dimension_numbers = #tpu.dot_dimension_numbers<[1], [1], [0], [0], [0, 0, 1, 0], [], []>} : vector<72x8xf32>, vector<72x8xf32>, vector<72x72xf32> -> vector<72x72xf32>
    %cst_175 = arith.constant 0.353553385 : f32
    %309 = vector.broadcast %cst_175 : f32 to vector<72x72xf32>
    %310 = arith.mulf %308, %309 : vector<72x72xf32>
    %cst_176 = arith.constant dense<0xFF800000> : vector<72xf32>
    %311 = vector.multi_reduction <maximumf>, %310, %cst_176 [1] : vector<72x72xf32> to vector<72xf32>
    %312 = vector.shape_cast %311 : vector<72xf32> to vector<72x1xf32>
    %313 = vector.broadcast %312 : vector<72x1xf32> to vector<72x72xf32>
    %314 = arith.subf %310, %313 : vector<72x72xf32>
    %315 = math.exp %314 : vector<72x72xf32>
    %cst_177 = arith.constant dense<0.000000e+00> : vector<72xf32>
    %316 = vector.multi_reduction <add>, %315, %cst_177 [1] : vector<72x72xf32> to vector<72xf32>
    %317 = vector.shape_cast %316 : vector<72xf32> to vector<72x1xf32>
    %318 = tpu.reciprocal %317 {approx = true} : vector<72x1xf32> -> vector<72x1xf32>
    %319 = vector.broadcast %318 : vector<72x1xf32> to vector<72x72xf32>
    %320 = arith.mulf %315, %319 : vector<72x72xf32>
    %cst_178 = arith.constant dense<0.000000e+00> : vector<72x8xf32>
    %321 = tpu.matmul %320, %307, %cst_178 {dimension_numbers = #tpu.dot_dimension_numbers<[1], [0], [0], [1], [0, 0, 1, 1], [], []>} : vector<72x72xf32>, vector<72x8xf32>, vector<72x8xf32> -> vector<72x8xf32>
    %c0_179 = arith.constant 0 : index
    %c0_180 = arith.constant 0 : index
    %322 = vector.load %arg15[%c0_179, %c0_180] : memref<144x32xf32, #tpu.memory_space<vmem>>, vector<72x8xf32>
    tpu.vector_store %arg15[%c0_179, %c0_180], %321 {strides = array<i32>} : memref<144x32xf32, #tpu.memory_space<vmem>>, vector<72x8xf32>,
    %323 = vector.extract_strided_slice %304 {offsets = [0, 8], sizes = [72, 8], strides = [1, 1]} : vector<144x96xf32> to vector<72x8xf32>
    %324 = vector.extract_strided_slice %304 {offsets = [0, 40], sizes = [72, 8], strides = [1, 1]} : vector<144x96xf32> to vector<72x8xf32>
    %325 = vector.extract_strided_slice %304 {offsets = [0, 72], sizes = [72, 8], strides = [1, 1]} : vector<144x96xf32> to vector<72x8xf32>
    %cst_181 = arith.constant dense<0.000000e+00> : vector<72x72xf32>
    %326 = tpu.matmul %323, %324, %cst_181 {dimension_numbers = #tpu.dot_dimension_numbers<[1], [1], [0], [0], [0, 0, 1, 0], [], []>} : vector<72x8xf32>, vector<72x8xf32>, vector<72x72xf32> -> vector<72x72xf32>
    %cst_182 = arith.constant 0.353553385 : f32
    %327 = vector.broadcast %cst_182 : f32 to vector<72x72xf32>
    %328 = arith.mulf %326, %327 : vector<72x72xf32>
    %cst_183 = arith.constant dense<0xFF800000> : vector<72xf32>
    %329 = vector.multi_reduction <maximumf>, %328, %cst_183 [1] : vector<72x72xf32> to vector<72xf32>
    %330 = vector.shape_cast %329 : vector<72xf32> to vector<72x1xf32>
    %331 = vector.broadcast %330 : vector<72x1xf32> to vector<72x72xf32>
    %332 = arith.subf %328, %331 : vector<72x72xf32>
    %333 = math.exp %332 : vector<72x72xf32>
    %cst_184 = arith.constant dense<0.000000e+00> : vector<72xf32>
    %334 = vector.multi_reduction <add>, %333, %cst_184 [1] : vector<72x72xf32> to vector<72xf32>
    %335 = vector.shape_cast %334 : vector<72xf32> to vector<72x1xf32>
    %336 = tpu.reciprocal %335 {approx = true} : vector<72x1xf32> -> vector<72x1xf32>
    %337 = vector.broadcast %336 : vector<72x1xf32> to vector<72x72xf32>
    %338 = arith.mulf %333, %337 : vector<72x72xf32>
    %cst_185 = arith.constant dense<0.000000e+00> : vector<72x8xf32>
    %339 = tpu.matmul %338, %325, %cst_185 {dimension_numbers = #tpu.dot_dimension_numbers<[1], [0], [0], [1], [0, 0, 1, 1], [], []>} : vector<72x72xf32>, vector<72x8xf32>, vector<72x8xf32> -> vector<72x8xf32>
    %c0_186 = arith.constant 0 : index
    %c8_187 = arith.constant 8 : index
    %340 = vector.load %arg15[%c0_186, %c8_187] : memref<144x32xf32, #tpu.memory_space<vmem>>, vector<72x8xf32>
    tpu.vector_store %arg15[%c0_186, %c8_187], %339 {strides = array<i32>} : memref<144x32xf32, #tpu.memory_space<vmem>>, vector<72x8xf32>,
    %341 = vector.extract_strided_slice %304 {offsets = [0, 16], sizes = [72, 8], strides = [1, 1]} : vector<144x96xf32> to vector<72x8xf32>
    %342 = vector.extract_strided_slice %304 {offsets = [0, 48], sizes = [72, 8], strides = [1, 1]} : vector<144x96xf32> to vector<72x8xf32>
    %343 = vector.extract_strided_slice %304 {offsets = [0, 80], sizes = [72, 8], strides = [1, 1]} : vector<144x96xf32> to vector<72x8xf32>
    %cst_188 = arith.constant dense<0.000000e+00> : vector<72x72xf32>
    %344 = tpu.matmul %341, %342, %cst_188 {dimension_numbers = #tpu.dot_dimension_numbers<[1], [1], [0], [0], [0, 0, 1, 0], [], []>} : vector<72x8xf32>, vector<72x8xf32>, vector<72x72xf32> -> vector<72x72xf32>
    %cst_189 = arith.constant 0.353553385 : f32
    %345 = vector.broadcast %cst_189 : f32 to vector<72x72xf32>
    %346 = arith.mulf %344, %345 : vector<72x72xf32>
    %cst_190 = arith.constant dense<0xFF800000> : vector<72xf32>
    %347 = vector.multi_reduction <maximumf>, %346, %cst_190 [1] : vector<72x72xf32> to vector<72xf32>
    %348 = vector.shape_cast %347 : vector<72xf32> to vector<72x1xf32>
    %349 = vector.broadcast %348 : vector<72x1xf32> to vector<72x72xf32>
    %350 = arith.subf %346, %349 : vector<72x72xf32>
    %351 = math.exp %350 : vector<72x72xf32>
    %cst_191 = arith.constant dense<0.000000e+00> : vector<72xf32>
    %352 = vector.multi_reduction <add>, %351, %cst_191 [1] : vector<72x72xf32> to vector<72xf32>
    %353 = vector.shape_cast %352 : vector<72xf32> to vector<72x1xf32>
    %354 = tpu.reciprocal %353 {approx = true} : vector<72x1xf32> -> vector<72x1xf32>
    %355 = vector.broadcast %354 : vector<72x1xf32> to vector<72x72xf32>
    %356 = arith.mulf %351, %355 : vector<72x72xf32>
    %cst_192 = arith.constant dense<0.000000e+00> : vector<72x8xf32>
    %357 = tpu.matmul %356, %343, %cst_192 {dimension_numbers = #tpu.dot_dimension_numbers<[1], [0], [0], [1], [0, 0, 1, 1], [], []>} : vector<72x72xf32>, vector<72x8xf32>, vector<72x8xf32> -> vector<72x8xf32>
    %c0_193 = arith.constant 0 : index
    %c16_194 = arith.constant 16 : index
    %358 = vector.load %arg15[%c0_193, %c16_194] : memref<144x32xf32, #tpu.memory_space<vmem>>, vector<72x8xf32>
    tpu.vector_store %arg15[%c0_193, %c16_194], %357 {strides = array<i32>} : memref<144x32xf32, #tpu.memory_space<vmem>>, vector<72x8xf32>,
    %359 = vector.extract_strided_slice %304 {offsets = [0, 24], sizes = [72, 8], strides = [1, 1]} : vector<144x96xf32> to vector<72x8xf32>
    %360 = vector.extract_strided_slice %304 {offsets = [0, 56], sizes = [72, 8], strides = [1, 1]} : vector<144x96xf32> to vector<72x8xf32>
    %361 = vector.extract_strided_slice %304 {offsets = [0, 88], sizes = [72, 8], strides = [1, 1]} : vector<144x96xf32> to vector<72x8xf32>
    %cst_195 = arith.constant dense<0.000000e+00> : vector<72x72xf32>
    %362 = tpu.matmul %359, %360, %cst_195 {dimension_numbers = #tpu.dot_dimension_numbers<[1], [1], [0], [0], [0, 0, 1, 0], [], []>} : vector<72x8xf32>, vector<72x8xf32>, vector<72x72xf32> -> vector<72x72xf32>
    %cst_196 = arith.constant 0.353553385 : f32
    %363 = vector.broadcast %cst_196 : f32 to vector<72x72xf32>
    %364 = arith.mulf %362, %363 : vector<72x72xf32>
    %cst_197 = arith.constant dense<0xFF800000> : vector<72xf32>
    %365 = vector.multi_reduction <maximumf>, %364, %cst_197 [1] : vector<72x72xf32> to vector<72xf32>
    %366 = vector.shape_cast %365 : vector<72xf32> to vector<72x1xf32>
    %367 = vector.broadcast %366 : vector<72x1xf32> to vector<72x72xf32>
    %368 = arith.subf %364, %367 : vector<72x72xf32>
    %369 = math.exp %368 : vector<72x72xf32>
    %cst_198 = arith.constant dense<0.000000e+00> : vector<72xf32>
    %370 = vector.multi_reduction <add>, %369, %cst_198 [1] : vector<72x72xf32> to vector<72xf32>
    %371 = vector.shape_cast %370 : vector<72xf32> to vector<72x1xf32>
    %372 = tpu.reciprocal %371 {approx = true} : vector<72x1xf32> -> vector<72x1xf32>
    %373 = vector.broadcast %372 : vector<72x1xf32> to vector<72x72xf32>
    %374 = arith.mulf %369, %373 : vector<72x72xf32>
    %cst_199 = arith.constant dense<0.000000e+00> : vector<72x8xf32>
    %375 = tpu.matmul %374, %361, %cst_199 {dimension_numbers = #tpu.dot_dimension_numbers<[1], [0], [0], [1], [0, 0, 1, 1], [], []>} : vector<72x72xf32>, vector<72x8xf32>, vector<72x8xf32> -> vector<72x8xf32>
    %c0_200 = arith.constant 0 : index
    %c24_201 = arith.constant 24 : index
    %376 = vector.load %arg15[%c0_200, %c24_201] : memref<144x32xf32, #tpu.memory_space<vmem>>, vector<72x8xf32>
    tpu.vector_store %arg15[%c0_200, %c24_201], %375 {strides = array<i32>} : memref<144x32xf32, #tpu.memory_space<vmem>>, vector<72x8xf32>,
    %377 = vector.extract_strided_slice %304 {offsets = [72, 0], sizes = [72, 8], strides = [1, 1]} : vector<144x96xf32> to vector<72x8xf32>
    %378 = vector.extract_strided_slice %304 {offsets = [72, 32], sizes = [72, 8], strides = [1, 1]} : vector<144x96xf32> to vector<72x8xf32>
    %379 = vector.extract_strided_slice %304 {offsets = [72, 64], sizes = [72, 8], strides = [1, 1]} : vector<144x96xf32> to vector<72x8xf32>
    %cst_202 = arith.constant dense<0.000000e+00> : vector<72x72xf32>
    %380 = tpu.matmul %377, %378, %cst_202 {dimension_numbers = #tpu.dot_dimension_numbers<[1], [1], [0], [0], [0, 0, 1, 0], [], []>} : vector<72x8xf32>, vector<72x8xf32>, vector<72x72xf32> -> vector<72x72xf32>
    %cst_203 = arith.constant 0.353553385 : f32
    %381 = vector.broadcast %cst_203 : f32 to vector<72x72xf32>
    %382 = arith.mulf %380, %381 : vector<72x72xf32>
    %cst_204 = arith.constant dense<0xFF800000> : vector<72xf32>
    %383 = vector.multi_reduction <maximumf>, %382, %cst_204 [1] : vector<72x72xf32> to vector<72xf32>
    %384 = vector.shape_cast %383 : vector<72xf32> to vector<72x1xf32>
    %385 = vector.broadcast %384 : vector<72x1xf32> to vector<72x72xf32>
    %386 = arith.subf %382, %385 : vector<72x72xf32>
    %387 = math.exp %386 : vector<72x72xf32>
    %cst_205 = arith.constant dense<0.000000e+00> : vector<72xf32>
    %388 = vector.multi_reduction <add>, %387, %cst_205 [1] : vector<72x72xf32> to vector<72xf32>
    %389 = vector.shape_cast %388 : vector<72xf32> to vector<72x1xf32>
    %390 = tpu.reciprocal %389 {approx = true} : vector<72x1xf32> -> vector<72x1xf32>
    %391 = vector.broadcast %390 : vector<72x1xf32> to vector<72x72xf32>
    %392 = arith.mulf %387, %391 : vector<72x72xf32>
    %cst_206 = arith.constant dense<0.000000e+00> : vector<72x8xf32>
    %393 = tpu.matmul %392, %379, %cst_206 {dimension_numbers = #tpu.dot_dimension_numbers<[1], [0], [0], [1], [0, 0, 1, 1], [], []>} : vector<72x72xf32>, vector<72x8xf32>, vector<72x8xf32> -> vector<72x8xf32>
    %c72_207 = arith.constant 72 : index
    %c0_208 = arith.constant 0 : index
    %394 = vector.load %arg15[%c72_207, %c0_208] : memref<144x32xf32, #tpu.memory_space<vmem>>, vector<72x8xf32>
    tpu.vector_store %arg15[%c72_207, %c0_208], %393 {strides = array<i32>} : memref<144x32xf32, #tpu.memory_space<vmem>>, vector<72x8xf32>,
    %395 = vector.extract_strided_slice %304 {offsets = [72, 8], sizes = [72, 8], strides = [1, 1]} : vector<144x96xf32> to vector<72x8xf32>
    %396 = vector.extract_strided_slice %304 {offsets = [72, 40], sizes = [72, 8], strides = [1, 1]} : vector<144x96xf32> to vector<72x8xf32>
    %397 = vector.extract_strided_slice %304 {offsets = [72, 72], sizes = [72, 8], strides = [1, 1]} : vector<144x96xf32> to vector<72x8xf32>
    %cst_209 = arith.constant dense<0.000000e+00> : vector<72x72xf32>
    %398 = tpu.matmul %395, %396, %cst_209 {dimension_numbers = #tpu.dot_dimension_numbers<[1], [1], [0], [0], [0, 0, 1, 0], [], []>} : vector<72x8xf32>, vector<72x8xf32>, vector<72x72xf32> -> vector<72x72xf32>
    %cst_210 = arith.constant 0.353553385 : f32
    %399 = vector.broadcast %cst_210 : f32 to vector<72x72xf32>
    %400 = arith.mulf %398, %399 : vector<72x72xf32>
    %cst_211 = arith.constant dense<0xFF800000> : vector<72xf32>
    %401 = vector.multi_reduction <maximumf>, %400, %cst_211 [1] : vector<72x72xf32> to vector<72xf32>
    %402 = vector.shape_cast %401 : vector<72xf32> to vector<72x1xf32>
    %403 = vector.broadcast %402 : vector<72x1xf32> to vector<72x72xf32>
    %404 = arith.subf %400, %403 : vector<72x72xf32>
    %405 = math.exp %404 : vector<72x72xf32>
    %cst_212 = arith.constant dense<0.000000e+00> : vector<72xf32>
    %406 = vector.multi_reduction <add>, %405, %cst_212 [1] : vector<72x72xf32> to vector<72xf32>
    %407 = vector.shape_cast %406 : vector<72xf32> to vector<72x1xf32>
    %408 = tpu.reciprocal %407 {approx = true} : vector<72x1xf32> -> vector<72x1xf32>
    %409 = vector.broadcast %408 : vector<72x1xf32> to vector<72x72xf32>
    %410 = arith.mulf %405, %409 : vector<72x72xf32>
    %cst_213 = arith.constant dense<0.000000e+00> : vector<72x8xf32>
    %411 = tpu.matmul %410, %397, %cst_213 {dimension_numbers = #tpu.dot_dimension_numbers<[1], [0], [0], [1], [0, 0, 1, 1], [], []>} : vector<72x72xf32>, vector<72x8xf32>, vector<72x8xf32> -> vector<72x8xf32>
    %c72_214 = arith.constant 72 : index
    %c8_215 = arith.constant 8 : index
    %412 = vector.load %arg15[%c72_214, %c8_215] : memref<144x32xf32, #tpu.memory_space<vmem>>, vector<72x8xf32>
    tpu.vector_store %arg15[%c72_214, %c8_215], %411 {strides = array<i32>} : memref<144x32xf32, #tpu.memory_space<vmem>>, vector<72x8xf32>,
    %413 = vector.extract_strided_slice %304 {offsets = [72, 16], sizes = [72, 8], strides = [1, 1]} : vector<144x96xf32> to vector<72x8xf32>
    %414 = vector.extract_strided_slice %304 {offsets = [72, 48], sizes = [72, 8], strides = [1, 1]} : vector<144x96xf32> to vector<72x8xf32>
    %415 = vector.extract_strided_slice %304 {offsets = [72, 80], sizes = [72, 8], strides = [1, 1]} : vector<144x96xf32> to vector<72x8xf32>
    %cst_216 = arith.constant dense<0.000000e+00> : vector<72x72xf32>
    %416 = tpu.matmul %413, %414, %cst_216 {dimension_numbers = #tpu.dot_dimension_numbers<[1], [1], [0], [0], [0, 0, 1, 0], [], []>} : vector<72x8xf32>, vector<72x8xf32>, vector<72x72xf32> -> vector<72x72xf32>
    %cst_217 = arith.constant 0.353553385 : f32
    %417 = vector.broadcast %cst_217 : f32 to vector<72x72xf32>
    %418 = arith.mulf %416, %417 : vector<72x72xf32>
    %cst_218 = arith.constant dense<0xFF800000> : vector<72xf32>
    %419 = vector.multi_reduction <maximumf>, %418, %cst_218 [1] : vector<72x72xf32> to vector<72xf32>
    %420 = vector.shape_cast %419 : vector<72xf32> to vector<72x1xf32>
    %421 = vector.broadcast %420 : vector<72x1xf32> to vector<72x72xf32>
    %422 = arith.subf %418, %421 : vector<72x72xf32>
    %423 = math.exp %422 : vector<72x72xf32>
    %cst_219 = arith.constant dense<0.000000e+00> : vector<72xf32>
    %424 = vector.multi_reduction <add>, %423, %cst_219 [1] : vector<72x72xf32> to vector<72xf32>
    %425 = vector.shape_cast %424 : vector<72xf32> to vector<72x1xf32>
    %426 = tpu.reciprocal %425 {approx = true} : vector<72x1xf32> -> vector<72x1xf32>
    %427 = vector.broadcast %426 : vector<72x1xf32> to vector<72x72xf32>
    %428 = arith.mulf %423, %427 : vector<72x72xf32>
    %cst_220 = arith.constant dense<0.000000e+00> : vector<72x8xf32>
    %429 = tpu.matmul %428, %415, %cst_220 {dimension_numbers = #tpu.dot_dimension_numbers<[1], [0], [0], [1], [0, 0, 1, 1], [], []>} : vector<72x72xf32>, vector<72x8xf32>, vector<72x8xf32> -> vector<72x8xf32>
    %c72_221 = arith.constant 72 : index
    %c16_222 = arith.constant 16 : index
    %430 = vector.load %arg15[%c72_221, %c16_222] : memref<144x32xf32, #tpu.memory_space<vmem>>, vector<72x8xf32>
    tpu.vector_store %arg15[%c72_221, %c16_222], %429 {strides = array<i32>} : memref<144x32xf32, #tpu.memory_space<vmem>>, vector<72x8xf32>,
    %431 = vector.extract_strided_slice %304 {offsets = [72, 24], sizes = [72, 8], strides = [1, 1]} : vector<144x96xf32> to vector<72x8xf32>
    %432 = vector.extract_strided_slice %304 {offsets = [72, 56], sizes = [72, 8], strides = [1, 1]} : vector<144x96xf32> to vector<72x8xf32>
    %433 = vector.extract_strided_slice %304 {offsets = [72, 88], sizes = [72, 8], strides = [1, 1]} : vector<144x96xf32> to vector<72x8xf32>
    %cst_223 = arith.constant dense<0.000000e+00> : vector<72x72xf32>
    %434 = tpu.matmul %431, %432, %cst_223 {dimension_numbers = #tpu.dot_dimension_numbers<[1], [1], [0], [0], [0, 0, 1, 0], [], []>} : vector<72x8xf32>, vector<72x8xf32>, vector<72x72xf32> -> vector<72x72xf32>
    %cst_224 = arith.constant 0.353553385 : f32
    %435 = vector.broadcast %cst_224 : f32 to vector<72x72xf32>
    %436 = arith.mulf %434, %435 : vector<72x72xf32>
    %cst_225 = arith.constant dense<0xFF800000> : vector<72xf32>
    %437 = vector.multi_reduction <maximumf>, %436, %cst_225 [1] : vector<72x72xf32> to vector<72xf32>
    %438 = vector.shape_cast %437 : vector<72xf32> to vector<72x1xf32>
    %439 = vector.broadcast %438 : vector<72x1xf32> to vector<72x72xf32>
    %440 = arith.subf %436, %439 : vector<72x72xf32>
    %441 = math.exp %440 : vector<72x72xf32>
    %cst_226 = arith.constant dense<0.000000e+00> : vector<72xf32>
    %442 = vector.multi_reduction <add>, %441, %cst_226 [1] : vector<72x72xf32> to vector<72xf32>
    %443 = vector.shape_cast %442 : vector<72xf32> to vector<72x1xf32>
    %444 = tpu.reciprocal %443 {approx = true} : vector<72x1xf32> -> vector<72x1xf32>
    %445 = vector.broadcast %444 : vector<72x1xf32> to vector<72x72xf32>
    %446 = arith.mulf %441, %445 : vector<72x72xf32>
    %cst_227 = arith.constant dense<0.000000e+00> : vector<72x8xf32>
    %447 = tpu.matmul %446, %433, %cst_227 {dimension_numbers = #tpu.dot_dimension_numbers<[1], [0], [0], [1], [0, 0, 1, 1], [], []>} : vector<72x72xf32>, vector<72x8xf32>, vector<72x8xf32> -> vector<72x8xf32>
    %c72_228 = arith.constant 72 : index
    %c24_229 = arith.constant 24 : index
    %448 = vector.load %arg15[%c72_228, %c24_229] : memref<144x32xf32, #tpu.memory_space<vmem>>, vector<72x8xf32>
    tpu.vector_store %arg15[%c72_228, %c24_229], %447 {strides = array<i32>} : memref<144x32xf32, #tpu.memory_space<vmem>>, vector<72x8xf32>,
    %c0_230 = arith.constant 0 : index
    %c0_231 = arith.constant 0 : index
    %449 = vector.load %arg15[%c0_230, %c0_231] : memref<144x32xf32, #tpu.memory_space<vmem>>, vector<144x32xf32>
    %c1_232 = arith.constant 1 : index
    %c0_233 = arith.constant 0 : index
    %c0_234 = arith.constant 0 : index
    %450 = vector.load %arg8[%c1_232, %c0_233, %c0_234] : memref<2x32x32xf32, #tpu.memory_space<vmem>>, vector<1x32x32xf32>
    %451 = vector.shape_cast %450 : vector<1x32x32xf32> to vector<32x32xf32>
    %cst_235 = arith.constant dense<0.000000e+00> : vector<144x32xf32>
    %452 = tpu.matmul %449, %451, %cst_235 {dimension_numbers = #tpu.dot_dimension_numbers<[1], [0], [0], [1], [0, 0, 1, 1], [], []>} : vector<144x32xf32>, vector<32x32xf32>, vector<144x32xf32> -> vector<144x32xf32>
    %453 = arith.addf %263, %452 : vector<144x32xf32>
    %454 = vector.broadcast %269 : vector<1x32xf32> to vector<144x32xf32>
    %455 = arith.addf %453, %454 : vector<144x32xf32>
    %cst_236 = arith.constant dense<0.000000e+00> : vector<144xf32>
    %456 = vector.multi_reduction <add>, %455, %cst_236 [1] : vector<144x32xf32> to vector<144xf32>
    %457 = vector.shape_cast %456 : vector<144xf32> to vector<144x1xf32>
    %cst_237 = arith.constant 3.200000e+01 : f32
    %458 = vector.broadcast %cst_237 : f32 to vector<144x1xf32>
    %459 = arith.divf %457, %458 : vector<144x1xf32>
    %460 = arith.mulf %455, %455 : vector<144x32xf32>
    %cst_238 = arith.constant dense<0.000000e+00> : vector<144xf32>
    %461 = vector.multi_reduction <add>, %460, %cst_238 [1] : vector<144x32xf32> to vector<144xf32>
    %462 = vector.shape_cast %461 : vector<144xf32> to vector<144x1xf32>
    %cst_239 = arith.constant 3.200000e+01 : f32
    %463 = vector.broadcast %cst_239 : f32 to vector<144x1xf32>
    %464 = arith.divf %462, %463 : vector<144x1xf32>
    %465 = arith.mulf %459, %459 : vector<144x1xf32>
    %466 = arith.subf %464, %465 : vector<144x1xf32>
    %467 = vector.broadcast %459 : vector<144x1xf32> to vector<144x32xf32>
    %468 = arith.subf %455, %467 : vector<144x32xf32>
    %cst_240 = arith.constant 9.99999974E-6 : f32
    %469 = vector.broadcast %cst_240 : f32 to vector<144x1xf32>
    %470 = arith.addf %466, %469 : vector<144x1xf32>
    %471 = math.rsqrt %470 : vector<144x1xf32>
    %472 = vector.broadcast %471 : vector<144x1xf32> to vector<144x32xf32>
    %473 = arith.mulf %468, %472 : vector<144x32xf32>
    %474 = vector.broadcast %271 : vector<1x32xf32> to vector<144x32xf32>
    %475 = arith.mulf %473, %474 : vector<144x32xf32>
    %476 = vector.broadcast %273 : vector<1x32xf32> to vector<144x32xf32>
    %477 = arith.addf %475, %476 : vector<144x32xf32>
    %c1_241 = arith.constant 1 : index
    %c0_242 = arith.constant 0 : index
    %c0_243 = arith.constant 0 : index
    %478 = vector.load %arg9[%c1_241, %c0_242, %c0_243] : memref<2x32x128xf32, #tpu.memory_space<vmem>>, vector<1x32x128xf32>
    %479 = vector.shape_cast %478 : vector<1x32x128xf32> to vector<32x128xf32>
    %cst_244 = arith.constant dense<0.000000e+00> : vector<144x128xf32>
    %480 = tpu.matmul %477, %479, %cst_244 {dimension_numbers = #tpu.dot_dimension_numbers<[1], [0], [0], [1], [0, 0, 1, 1], [], []>} : vector<144x32xf32>, vector<32x128xf32>, vector<144x128xf32> -> vector<144x128xf32>
    %c1_245 = arith.constant 1 : index
    %c0_246 = arith.constant 0 : index
    %c0_247 = arith.constant 0 : index
    %481 = vector.load %arg10[%c1_245, %c0_246, %c0_247] : memref<2x1x128xf32, #tpu.memory_space<vmem>>, vector<1x1x128xf32>
    %482 = vector.shape_cast %481 : vector<1x1x128xf32> to vector<1x128xf32>
    %483 = vector.broadcast %482 : vector<1x128xf32> to vector<144x128xf32>
    %484 = arith.addf %480, %483 : vector<144x128xf32>
    %cst_248 = arith.constant 1.702000e+00 : f32
    %485 = vector.broadcast %cst_248 : f32 to vector<144x128xf32>
    %486 = arith.mulf %485, %484 : vector<144x128xf32>
    %487 = arith.negf %486 : vector<144x128xf32>
    %488 = math.exp %487 : vector<144x128xf32>
    %cst_249 = arith.constant 1.000000e+00 : f32
    %489 = vector.broadcast %cst_249 : f32 to vector<144x128xf32>
    %490 = arith.addf %489, %488 : vector<144x128xf32>
    %491 = arith.divf %489, %490 : vector<144x128xf32>
    %492 = arith.mulf %484, %491 : vector<144x128xf32>
    %c1_250 = arith.constant 1 : index
    %c0_251 = arith.constant 0 : index
    %c0_252 = arith.constant 0 : index
    %493 = vector.load %arg11[%c1_250, %c0_251, %c0_252] : memref<2x128x32xf32, #tpu.memory_space<vmem>>, vector<1x128x32xf32>
    %494 = vector.shape_cast %493 : vector<1x128x32xf32> to vector<128x32xf32>
    %cst_253 = arith.constant dense<0.000000e+00> : vector<144x32xf32>
    %495 = tpu.matmul %492, %494, %cst_253 {dimension_numbers = #tpu.dot_dimension_numbers<[1], [0], [0], [1], [0, 0, 1, 1], [], []>} : vector<144x128xf32>, vector<128x32xf32>, vector<144x32xf32> -> vector<144x32xf32>
    %496 = vector.broadcast %275 : vector<1x32xf32> to vector<144x32xf32>
    %497 = arith.addf %495, %496 : vector<144x32xf32>
    %498 = arith.addf %455, %497 : vector<144x32xf32>
    %c0_254 = arith.constant 0 : index
    %c0_255 = arith.constant 0 : index
    %c0_256 = arith.constant 0 : index
    %499 = vector.load %arg3[%c0_254, %c0_255, %c0_256] : memref<2x64x1xf32, #tpu.memory_space<vmem>>, vector<1x64x1xf32>
    %500 = vector.shape_cast %499 : vector<1x64x1xf32> to vector<64x1xf32>
    %cst_257 = arith.constant 1.000000e+00 : f32
    %501 = vector.broadcast %cst_257 : f32 to vector<64x1xf32>
    %502 = arith.subf %501, %500 : vector<64x1xf32>
    %503 = vector.extract_strided_slice %498 {offsets = [8, 0], sizes = [64, 32], strides = [1, 1]} : vector<144x32xf32> to vector<64x32xf32>
    %c0_258 = arith.constant 0 : index
    %c0_259 = arith.constant 0 : index
    %c0_260 = arith.constant 0 : index
    %504 = vector.load %arg2[%c0_258, %c0_259, %c0_260] : memref<2x64x32xf32, #tpu.memory_space<vmem>>, vector<1x64x32xf32>
    %505 = vector.shape_cast %504 : vector<1x64x32xf32> to vector<64x32xf32>
    %506 = arith.subf %503, %505 : vector<64x32xf32>
    %507 = vector.broadcast %502 : vector<64x1xf32> to vector<64x32xf32>
    %508 = arith.mulf %506, %507 : vector<64x32xf32>
    %509 = arith.mulf %508, %508 : vector<64x32xf32>
    %510 = vector.shape_cast %509 : vector<64x32xf32> to vector<1x64x32xf32>
    %cst_261 = arith.constant dense<0.000000e+00> : vector<1xf32>
    %511 = vector.multi_reduction <add>, %510, %cst_261 [1, 2] : vector<1x64x32xf32> to vector<1xf32>
    %512 = vector.shape_cast %511 : vector<1xf32> to vector<1x1x1xf32>
    %513 = vector.extract %512[0, 0, 0] : f32 from vector<1x1x1xf32>
    %cst_262 = arith.constant 0.000000e+00 : f32
    %514 = arith.addf %cst_262, %513 : f32
    %c1_263 = arith.constant 1 : index
    %c0_264 = arith.constant 0 : index
    %c0_265 = arith.constant 0 : index
    %515 = vector.load %arg3[%c1_263, %c0_264, %c0_265] : memref<2x64x1xf32, #tpu.memory_space<vmem>>, vector<1x64x1xf32>
    %516 = vector.shape_cast %515 : vector<1x64x1xf32> to vector<64x1xf32>
    %cst_266 = arith.constant 1.000000e+00 : f32
    %517 = vector.broadcast %cst_266 : f32 to vector<64x1xf32>
    %518 = arith.subf %517, %516 : vector<64x1xf32>
    %519 = vector.extract_strided_slice %498 {offsets = [80, 0], sizes = [64, 32], strides = [1, 1]} : vector<144x32xf32> to vector<64x32xf32>
    %c1_267 = arith.constant 1 : index
    %c0_268 = arith.constant 0 : index
    %c0_269 = arith.constant 0 : index
    %520 = vector.load %arg2[%c1_267, %c0_268, %c0_269] : memref<2x64x32xf32, #tpu.memory_space<vmem>>, vector<1x64x32xf32>
    %521 = vector.shape_cast %520 : vector<1x64x32xf32> to vector<64x32xf32>
    %522 = arith.subf %519, %521 : vector<64x32xf32>
    %523 = vector.broadcast %518 : vector<64x1xf32> to vector<64x32xf32>
    %524 = arith.mulf %522, %523 : vector<64x32xf32>
    %525 = arith.mulf %524, %524 : vector<64x32xf32>
    %526 = vector.shape_cast %525 : vector<64x32xf32> to vector<1x64x32xf32>
    %cst_270 = arith.constant dense<0.000000e+00> : vector<1xf32>
    %527 = vector.multi_reduction <add>, %526, %cst_270 [1, 2] : vector<1x64x32xf32> to vector<1xf32>
    %528 = vector.shape_cast %527 : vector<1xf32> to vector<1x1x1xf32>
    %529 = vector.extract %528[0, 0, 0] : f32 from vector<1x1x1xf32>
    %530 = arith.addf %514, %529 : f32
    %cst_271 = arith.constant 0.000000e+00 : f32
    %531 = vector.broadcast %cst_271 : f32 to vector<1x8x128xf32>
    %532 = vector.broadcast %530 : f32 to vector<1x8x128xf32>
    %533 = arith.addf %531, %532 : vector<1x8x128xf32>
    %c0_272 = arith.constant 0 : index
    %c0_273 = arith.constant 0 : index
    %c0_274 = arith.constant 0 : index
    %534 = vector.load %arg13[%c0_272, %c0_273, %c0_274] : memref<1x8x128xf32, #tpu.memory_space<vmem>>, vector<1x8x128xf32>
    tpu.vector_store %arg13[%c0_272, %c0_273, %c0_274], %533 {strides = array<i32>} : memref<1x8x128xf32, #tpu.memory_space<vmem>>, vector<1x8x128xf32>,
    return
  }
  func.func @transform_0(%arg0: i32) -> (i32, i32, i32) {
    %c0_i32 = arith.constant 0 : i32
    %c0_i32_0 = arith.constant 0 : i32
    %c0_i32_1 = arith.constant 0 : i32
    return %arg0, %c0_i32, %c0_i32_0 : i32, i32, i32
  }
  func.func @transform_1(%arg0: i32) -> (i32, i32, i32) {
    %c0_i32 = arith.constant 0 : i32
    %c0_i32_0 = arith.constant 0 : i32
    %c0_i32_1 = arith.constant 0 : i32
    return %arg0, %c0_i32, %c0_i32_0 : i32, i32, i32
  }
  func.func @transform_2(%arg0: i32) -> (i32, i32, i32) {
    %c0_i32 = arith.constant 0 : i32
    %c0_i32_0 = arith.constant 0 : i32
    %c0_i32_1 = arith.constant 0 : i32
    return %arg0, %c0_i32, %c0_i32_0 : i32, i32, i32
  }
  func.func @transform_3(%arg0: i32) -> (i32, i32) {
    %c0_i32 = arith.constant 0 : i32
    %c0_i32_0 = arith.constant 0 : i32
    %c0_i32_1 = arith.constant 0 : i32
    return %c0_i32, %c0_i32_0 : i32, i32
  }
  func.func @transform_4(%arg0: i32) -> (i32, i32) {
    %c0_i32 = arith.constant 0 : i32
    %c0_i32_0 = arith.constant 0 : i32
    %c0_i32_1 = arith.constant 0 : i32
    return %c0_i32, %c0_i32_0 : i32, i32
  }
  func.func @transform_5(%arg0: i32) -> (i32, i32, i32) {
    %c0_i32 = arith.constant 0 : i32
    %c0_i32_0 = arith.constant 0 : i32
    %c0_i32_1 = arith.constant 0 : i32
    %c0_i32_2 = arith.constant 0 : i32
    return %c0_i32, %c0_i32_0, %c0_i32_1 : i32, i32, i32
  }
  func.func @transform_6(%arg0: i32) -> (i32, i32, i32) {
    %c0_i32 = arith.constant 0 : i32
    %c0_i32_0 = arith.constant 0 : i32
    %c0_i32_1 = arith.constant 0 : i32
    %c0_i32_2 = arith.constant 0 : i32
    return %c0_i32, %c0_i32_0, %c0_i32_1 : i32, i32, i32
  }
  func.func @transform_7(%arg0: i32) -> (i32, i32, i32) {
    %c0_i32 = arith.constant 0 : i32
    %c0_i32_0 = arith.constant 0 : i32
    %c0_i32_1 = arith.constant 0 : i32
    %c0_i32_2 = arith.constant 0 : i32
    return %c0_i32, %c0_i32_0, %c0_i32_1 : i32, i32, i32
  }
  func.func @transform_8(%arg0: i32) -> (i32, i32, i32) {
    %c0_i32 = arith.constant 0 : i32
    %c0_i32_0 = arith.constant 0 : i32
    %c0_i32_1 = arith.constant 0 : i32
    %c0_i32_2 = arith.constant 0 : i32
    return %c0_i32, %c0_i32_0, %c0_i32_1 : i32, i32, i32
  }
  func.func @transform_9(%arg0: i32) -> (i32, i32, i32) {
    %c0_i32 = arith.constant 0 : i32
    %c0_i32_0 = arith.constant 0 : i32
    %c0_i32_1 = arith.constant 0 : i32
    %c0_i32_2 = arith.constant 0 : i32
    return %c0_i32, %c0_i32_0, %c0_i32_1 : i32, i32, i32
  }
  func.func @transform_10(%arg0: i32) -> (i32, i32, i32) {
    %c0_i32 = arith.constant 0 : i32
    %c0_i32_0 = arith.constant 0 : i32
    %c0_i32_1 = arith.constant 0 : i32
    %c0_i32_2 = arith.constant 0 : i32
    return %c0_i32, %c0_i32_0, %c0_i32_1 : i32, i32, i32
  }
  func.func @transform_11(%arg0: i32) -> (i32, i32, i32, i32) {
    %c0_i32 = arith.constant 0 : i32
    %c0_i32_0 = arith.constant 0 : i32
    %c0_i32_1 = arith.constant 0 : i32
    %c0_i32_2 = arith.constant 0 : i32
    %c0_i32_3 = arith.constant 0 : i32
    return %c0_i32, %c0_i32_0, %c0_i32_1, %c0_i32_2 : i32, i32, i32, i32
  }
  func.func @transform_12(%arg0: i32) -> (i32, i32, i32) {
    %c0_i32 = arith.constant 0 : i32
    %c0_i32_0 = arith.constant 0 : i32
    %c0_i32_1 = arith.constant 0 : i32
    return %arg0, %c0_i32, %c0_i32_0 : i32, i32, i32
  }
}

</mosaic_0001>

<llo_original>
// kernel: scene_graph_masked_img_loss.1
$region0: #{scene_graph_masked_img_loss.1}
  #allocation0 [shape = 'u32[]', space=smem, size = 0x4, offset = 0x4, fixed_abs, tag = 'smem constant byte address 0x4 - core index']
  #allocation1 [shape = 'u32[72,128]{1,0:T(1,128)}', space=vmem, size = 0x9000, scoped, tag = 'internal scratch']
  #allocation2 [shape = 'f32[144,32]{1,0:T(8,128)}', space=vmem, size = 0x12000, scoped, tag = 'scratch operand']
  #allocation3 [shape = 'f32[144,32]{1,0:T(8,128)}', space=vmem, size = 0x12000, scoped, tag = 'scratch operand']
  %s0 = inlined_call_operand.vmem [shape: f32[2,8,16], index: 0, kind: input, shape index: {}]
  %s1 = inlined_call_operand.vmem [shape: f32[2,64,32], index: 1, kind: input, shape index: {}]
  %s2 = inlined_call_operand.vmem [shape: f32[2,64,1], index: 2, kind: input, shape index: {}]
  %s3 = inlined_call_operand.vmem [shape: f32[16,32], index: 3, kind: input, shape index: {}]
  %s4 = inlined_call_operand.vmem [shape: f32[1,32], index: 4, kind: input, shape index: {}]
  %s5 = inlined_call_operand.vmem [shape: f32[2,32,96], index: 5, kind: input, shape index: {}]
  %s6 = inlined_call_operand.vmem [shape: f32[2,1,96], index: 6, kind: input, shape index: {}]
  %s7 = inlined_call_operand.vmem [shape: f32[2,32,32], index: 7, kind: input, shape index: {}]
  %s8 = inlined_call_operand.vmem [shape: f32[2,32,128], index: 8, kind: input, shape index: {}]
  %s9 = inlined_call_operand.vmem [shape: f32[2,1,128], index: 9, kind: input, shape index: {}]
  %s10 = inlined_call_operand.vmem [shape: f32[2,128,32], index: 10, kind: input, shape index: {}]
  %s11 = inlined_call_operand.vmem [shape: f32[2,6,1,32], index: 11, kind: input, shape index: {}]
  %s12 = inlined_call_operand.vmem [shape: f32[1,8,128], index: 12, kind: output, shape index: {}]
  %s13 = sld [smem:[#allocation0]]
  $region58: #{scene_graph_masked_img_loss.1} parent=0
    _
  %s15 = ssub.s32 1, %s13
  %s16 = scalar_select 0, %s15, %s13
  // Predicated region
  $region2: #{scene_graph_masked_img_loss.1} parent=0 // pred_check
    _
  $region3: #{scene_graph_masked_img_loss.1} parent=0 // pred_check_branch
    %18 = sbr.rel (0) target = $region5
  $region4: #{scene_graph_masked_img_loss.1} parent=0 // pred_region
    _
  $region5: #{scene_graph_masked_img_loss.1} parent=0 // pred_fallthru
    _
  // Predicated region
  $region6: #{scene_graph_masked_img_loss.1} parent=0 // pred_check
    _
  $region7: #{scene_graph_masked_img_loss.1} parent=0 // pred_check_branch
    %20 = sbr.rel (0) target = $region9
  $region8: #{scene_graph_masked_img_loss.1} parent=0 // pred_region
    _
  $region9: #{scene_graph_masked_img_loss.1} parent=0 // pred_fallthru
    _
  // Predicated region
  $region10: #{scene_graph_masked_img_loss.1} parent=0 // pred_check
    _
  $region11: #{scene_graph_masked_img_loss.1} parent=0 // pred_check_branch
    %22 = sbr.rel (0) target = $region13
  $region12: #{scene_graph_masked_img_loss.1} parent=0 // pred_region
    _
  $region13: #{scene_graph_masked_img_loss.1} parent=0 // pred_fallthru
    _
  // Predicated region
  $region14: #{scene_graph_masked_img_loss.1} parent=0 // pred_check
    _
  $region15: #{scene_graph_masked_img_loss.1} parent=0 // pred_check_branch
    %24 = sbr.rel (0) target = $region17
  $region16: #{scene_graph_masked_img_loss.1} parent=0 // pred_region
    _
  $region17: #{scene_graph_masked_img_loss.1} parent=0 // pred_fallthru
    _
  // Predicated region
  $region18: #{scene_graph_masked_img_loss.1} parent=0 // pred_check
    _
  $region19: #{scene_graph_masked_img_loss.1} parent=0 // pred_check_branch
    %26 = sbr.rel (0) target = $region21
  $region20: #{scene_graph_masked_img_loss.1} parent=0 // pred_region
    _
  $region21: #{scene_graph_masked_img_loss.1} parent=0 // pred_fallthru
    _
  // Predicated region
  $region22: #{scene_graph_masked_img_loss.1} parent=0 // pred_check
    _
  $region23: #{scene_graph_masked_img_loss.1} parent=0 // pred_check_branch
    %28 = sbr.rel (0) target = $region25
  $region24: #{scene_graph_masked_img_loss.1} parent=0 // pred_region
    _
  $region25: #{scene_graph_masked_img_loss.1} parent=0 // pred_fallthru
    _
  // Predicated region
  $region26: #{scene_graph_masked_img_loss.1} parent=0 // pred_check
    _
  $region27: #{scene_graph_masked_img_loss.1} parent=0 // pred_check_branch
    %30 = sbr.rel (0) target = $region29
  $region28: #{scene_graph_masked_img_loss.1} parent=0 // pred_region
    _
  $region29: #{scene_graph_masked_img_loss.1} parent=0 // pred_fallthru
    _
  // Predicated region
  $region30: #{scene_graph_masked_img_loss.1} parent=0 // pred_check
    _
  $region31: #{scene_graph_masked_img_loss.1} parent=0 // pred_check_branch
    %32 = sbr.rel (0) target = $region33
  $region32: #{scene_graph_masked_img_loss.1} parent=0 // pred_region
    _
  $region33: #{scene_graph_masked_img_loss.1} parent=0 // pred_fallthru
    _
  // Predicated region
  $region34: #{scene_graph_masked_img_loss.1} parent=0 // pred_check
    _
  $region35: #{scene_graph_masked_img_loss.1} parent=0 // pred_check_branch
    %34 = sbr.rel (0) target = $region37
  $region36: #{scene_graph_masked_img_loss.1} parent=0 // pred_region
    _
  $region37: #{scene_graph_masked_img_loss.1} parent=0 // pred_fallthru
    _
  // Predicated region
  $region38: #{scene_graph_masked_img_loss.1} parent=0 // pred_check
    _
  $region39: #{scene_graph_masked_img_loss.1} parent=0 // pred_check_branch
    %36 = sbr.rel (0) target = $region41
  $region40: #{scene_graph_masked_img_loss.1} parent=0 // pred_region
    _
  $region41: #{scene_graph_masked_img_loss.1} parent=0 // pred_fallthru
    _
  // Predicated region
  $region42: #{scene_graph_masked_img_loss.1} parent=0 // pred_check
    _
  $region43: #{scene_graph_masked_img_loss.1} parent=0 // pred_check_branch
    %38 = sbr.rel (0) target = $region45
  $region44: #{scene_graph_masked_img_loss.1} parent=0 // pred_region
    _
  $region45: #{scene_graph_masked_img_loss.1} parent=0 // pred_fallthru
    _
  // Predicated region
  $region46: #{scene_graph_masked_img_loss.1} parent=0 // pred_check
    _
  $region47: #{scene_graph_masked_img_loss.1} parent=0 // pred_check_branch
    %40 = sbr.rel (0) target = $region49
  $region48: #{scene_graph_masked_img_loss.1} parent=0 // pred_region
    _
  $region49: #{scene_graph_masked_img_loss.1} parent=0 // pred_fallthru
    _
  %v41 = vld [vmem:[%s3] sm:$0xff]
  %v42 = vld [vmem:[%s3 + $0x8] sm:$0xff]
  %v43 = vld [vmem:[%s4] sm:$0x1]
  %v44 = vld [vmem:[%s0] sm:$0xff]
  %v46 = vperm.slane %v43, 0
  %vm48 = vcmask 130048
  %v50 = vsel %vm48, %v44, 0
  %52 = vmatpush.msra.mxu0 0.0
  %53 = vmatpush.msra.mxu0 0.0
  %54 = vmatpush.msra.mxu0 0.0
  %55 = vmatpush.msra.mxu0 0.0
  %56 = vmatpush.msra.mxu0 0.0
  %57 = vmatpush.msra.mxu0 0.0
  %58 = vmatpush.msra.mxu0 0.0
  %59 = vmatpush.msra.mxu0 0.0
  %60 = vmatpush.msra.mxu0 0.0
  %61 = vmatpush.msra.mxu0 0.0
  %62 = vmatpush.msra.mxu0 0.0
  %63 = vmatpush.msra.mxu0 0.0
  %64 = vmatpush.msra.mxu0 0.0
  %65 = vmatpush.msra.mxu0 0.0
  %66 = vmatpush.msra.mxu0 %v42
  %67 = vmatpush.msra.mxu0 %v41
  %68 = vmatmul.f32.gmra.mxu0 %v50
  %v69 = vpop.f32.mrf.mxu0
  %v70 = vadd.f32 %v46, %v69
  %71 = vdwg.mxu0
  %vm72 = vcmask 261120
  %73 = vst.msk [vmem:[#allocation2] sm:$0xff] %vm72, %v70
  %v74 = vld [vmem:[%s2] sm:$0xff]
  %v75 = vld [vmem:[%s2 + $0x8] sm:$0xff]
  %v76 = vld [vmem:[%s2 + $0x10] sm:$0xff]
  %v77 = vld [vmem:[%s2 + $0x18] sm:$0xff]
  %v78 = vld [vmem:[%s2 + $0x20] sm:$0xff]
  %v79 = vld [vmem:[%s2 + $0x28] sm:$0xff]
  %v80 = vld [vmem:[%s2 + $0x30] sm:$0xff]
  %v81 = vld [vmem:[%s2 + $0x38] sm:$0xff]
  %v82 = vld [vmem:[%s1] sm:$0xff]
  %v83 = vld [vmem:[%s1 + $0x8] sm:$0xff]
  %v84 = vld [vmem:[%s1 + $0x10] sm:$0xff]
  %v85 = vld [vmem:[%s1 + $0x18] sm:$0xff]
  %v86 = vld [vmem:[%s1 + $0x20] sm:$0xff]
  %v87 = vld [vmem:[%s1 + $0x28] sm:$0xff]
  %v88 = vld [vmem:[%s1 + $0x30] sm:$0xff]
  %v89 = vld [vmem:[%s1 + $0x38] sm:$0xff]
  %91 = vset.pattern.permute.xlu0 0
  %92 = vperm.xlu0 %91, %v74
  %v93 = vpop.permute.xlu0 %92
  %96 = vset.pattern.permute.xlu0 0
  %97 = vperm.xlu0 %96, %v75
  %v98 = vpop.permute.xlu0 %97
  %101 = vset.pattern.permute.xlu0 0
  %102 = vperm.xlu0 %101, %v76
  %v103 = vpop.permute.xlu0 %102
  %106 = vset.pattern.permute.xlu0 0
  %107 = vperm.xlu0 %106, %v77
  %v108 = vpop.permute.xlu0 %107
  %111 = vset.pattern.permute.xlu0 0
  %112 = vperm.xlu0 %111, %v78
  %v113 = vpop.permute.xlu0 %112
  %116 = vset.pattern.permute.xlu0 0
  %117 = vperm.xlu0 %116, %v79
  %v118 = vpop.permute.xlu0 %117
  %121 = vset.pattern.permute.xlu0 0
  %122 = vperm.xlu0 %121, %v80
  %v123 = vpop.permute.xlu0 %122
  %126 = vset.pattern.permute.xlu0 0
  %127 = vperm.xlu0 %126, %v81
  %v128 = vpop.permute.xlu0 %127
  %v130 = vmul.f32 %v93, %v82
  %v131 = vmul.f32 %v98, %v83
  %v132 = vmul.f32 %v103, %v84
  %v133 = vmul.f32 %v108, %v85
  %v134 = vmul.f32 %v113, %v86
  %v135 = vmul.f32 %v118, %v87
  %v136 = vmul.f32 %v123, %v88
  %v137 = vmul.f32 %v128, %v89
  %138 = vst.msk [vmem:[#allocation2 + $0x8] sm:$0xff] %vm72, %v130
  %139 = vst.msk [vmem:[#allocation2 + $0x10] sm:$0xff] %vm72, %v131
  %140 = vst.msk [vmem:[#allocation2 + $0x18] sm:$0xff] %vm72, %v132
  %141 = vst.msk [vmem:[#allocation2 + $0x20] sm:$0xff] %vm72, %v133
  %142 = vst.msk [vmem:[#allocation2 + $0x28] sm:$0xff] %vm72, %v134
  %143 = vst.msk [vmem:[#allocation2 + $0x30] sm:$0xff] %vm72, %v135
  %144 = vst.msk [vmem:[#allocation2 + $0x38] sm:$0xff] %vm72, %v136
  %145 = vst.msk [vmem:[#allocation2 + $0x40] sm:$0xff] %vm72, %v137
  %s146 = scalar_lea.vmem %s0, 8
  %v147 = vld [vmem:[%s146] sm:$0xff]
  %v149 = vsel %vm48, %v147, 0
  %151 = vmatpush.msra.mxu0 0.0
  %152 = vmatpush.msra.mxu0 0.0
  %153 = vmatpush.msra.mxu0 0.0
  %154 = vmatpush.msra.mxu0 0.0
  %155 = vmatpush.msra.mxu0 0.0
  %156 = vmatpush.msra.mxu0 0.0
  %157 = vmatpush.msra.mxu0 0.0
  %158 = vmatpush.msra.mxu0 0.0
  %159 = vmatpush.msra.mxu0 0.0
  %160 = vmatpush.msra.mxu0 0.0
  %161 = vmatpush.msra.mxu0 0.0
  %162 = vmatpush.msra.mxu0 0.0
  %163 = vmatpush.msra.mxu0 0.0
  %164 = vmatpush.msra.mxu0 0.0
  %165 = vmatpush.msra.mxu0 %v42
  %166 = vmatpush.msra.mxu0 %v41
  %167 = vmatmul.f32.gmra.mxu0 %v149
  %v168 = vpop.f32.mrf.mxu0
  %v169 = vadd.f32 %v46, %v168
  %170 = vdwg.mxu0
  %171 = vst.msk [vmem:[#allocation2 + $0x48] sm:$0xff] %vm72, %v169
  %s172 = scalar_lea.vmem %s2, 64
  %v173 = vld [vmem:[%s172] sm:$0xff]
  %v174 = vld [vmem:[%s172 + $0x8] sm:$0xff]
  %v175 = vld [vmem:[%s172 + $0x10] sm:$0xff]
  %v176 = vld [vmem:[%s172 + $0x18] sm:$0xff]
  %v177 = vld [vmem:[%s172 + $0x20] sm:$0xff]
  %v178 = vld [vmem:[%s172 + $0x28] sm:$0xff]
  %v179 = vld [vmem:[%s172 + $0x30] sm:$0xff]
  %v180 = vld [vmem:[%s172 + $0x38] sm:$0xff]
  %s181 = scalar_lea.vmem %s1, 64
  %v182 = vld [vmem:[%s181] sm:$0xff]
  %v183 = vld [vmem:[%s181 + $0x8] sm:$0xff]
  %v184 = vld [vmem:[%s181 + $0x10] sm:$0xff]
  %v185 = vld [vmem:[%s181 + $0x18] sm:$0xff]
  %v186 = vld [vmem:[%s181 + $0x20] sm:$0xff]
  %v187 = vld [vmem:[%s181 + $0x28] sm:$0xff]
  %v188 = vld [vmem:[%s181 + $0x30] sm:$0xff]
  %v189 = vld [vmem:[%s181 + $0x38] sm:$0xff]
  %191 = vset.pattern.permute.xlu0 0
  %192 = vperm.xlu0 %191, %v173
  %v193 = vpop.permute.xlu0 %192
  %196 = vset.pattern.permute.xlu0 0
  %197 = vperm.xlu0 %196, %v174
  %v198 = vpop.permute.xlu0 %197
  %201 = vset.pattern.permute.xlu0 0
  %202 = vperm.xlu0 %201, %v175
  %v203 = vpop.permute.xlu0 %202
  %206 = vset.pattern.permute.xlu0 0
  %207 = vperm.xlu0 %206, %v176
  %v208 = vpop.permute.xlu0 %207
  %211 = vset.pattern.permute.xlu0 0
  %212 = vperm.xlu0 %211, %v177
  %v213 = vpop.permute.xlu0 %212
  %216 = vset.pattern.permute.xlu0 0
  %217 = vperm.xlu0 %216, %v178
  %v218 = vpop.permute.xlu0 %217
  %221 = vset.pattern.permute.xlu0 0
  %222 = vperm.xlu0 %221, %v179
  %v223 = vpop.permute.xlu0 %222
  %226 = vset.pattern.permute.xlu0 0
  %227 = vperm.xlu0 %226, %v180
  %v228 = vpop.permute.xlu0 %227
  %v230 = vmul.f32 %v193, %v182
  %v231 = vmul.f32 %v198, %v183
  %v232 = vmul.f32 %v203, %v184
  %v233 = vmul.f32 %v208, %v185
  %v234 = vmul.f32 %v213, %v186
  %v235 = vmul.f32 %v218, %v187
  %v236 = vmul.f32 %v223, %v188
  %v237 = vmul.f32 %v228, %v189
  %238 = vst.msk [vmem:[#allocation2 + $0x50] sm:$0xff] %vm72, %v230
  %239 = vst.msk [vmem:[#allocation2 + $0x58] sm:$0xff] %vm72, %v231
  %240 = vst.msk [vmem:[#allocation2 + $0x60] sm:$0xff] %vm72, %v232
  %241 = vst.msk [vmem:[#allocation2 + $0x68] sm:$0xff] %vm72, %v233
  %242 = vst.msk [vmem:[#allocation2 + $0x70] sm:$0xff] %vm72, %v234
  %243 = vst.msk [vmem:[#allocation2 + $0x78] sm:$0xff] %vm72, %v235
  %244 = vst.msk [vmem:[#allocation2 + $0x80] sm:$0xff] %vm72, %v236
  %245 = vst.msk [vmem:[#allocation2 + $0x88] sm:$0xff] %vm72, %v237
  %v246 = vld [vmem:[#allocation2] sm:$0xff]
  %v247 = vld [vmem:[#allocation2 + $0x8] sm:$0xff]
  %v248 = vld [vmem:[#allocation2 + $0x10] sm:$0xff]
  %v249 = vld [vmem:[#allocation2 + $0x18] sm:$0xff]
  %v250 = vld [vmem:[#allocation2 + $0x20] sm:$0xff]
  %v251 = vld [vmem:[#allocation2 + $0x28] sm:$0xff]
  %v252 = vld [vmem:[#allocation2 + $0x30] sm:$0xff]
  %v253 = vld [vmem:[#allocation2 + $0x38] sm:$0xff]
  %v254 = vld [vmem:[#allocation2 + $0x40] sm:$0xff]
  %v255 = vld [vmem:[#allocation2 + $0x48] sm:$0xff]
  %v256 = vld [vmem:[#allocation2 + $0x50] sm:$0xff]
  %v257 = vld [vmem:[#allocation2 + $0x58] sm:$0xff]
  %v258 = vld [vmem:[#allocation2 + $0x60] sm:$0xff]
  %v259 = vld [vmem:[#allocation2 + $0x68] sm:$0xff]
  %v260 = vld [vmem:[#allocation2 + $0x70] sm:$0xff]
  %v261 = vld [vmem:[#allocation2 + $0x78] sm:$0xff]
  %v262 = vld [vmem:[#allocation2 + $0x80] sm:$0xff]
  %v263 = vld [vmem:[#allocation2 + $0x88] sm:$0xff]
  %v264 = vld [vmem:[%s11] sm:$0x1]
  %s265 = scalar_lea.vmem %s11, 1
  %v266 = vld [vmem:[%s265] sm:$0x1]
  %s267 = scalar_lea.vmem %s11, 2
  %v268 = vld [vmem:[%s267] sm:$0x1]
  %s269 = scalar_lea.vmem %s11, 3
  %v270 = vld [vmem:[%s269] sm:$0x1]
  %s271 = scalar_lea.vmem %s11, 4
  %v272 = vld [vmem:[%s271] sm:$0x1]
  %s273 = scalar_lea.vmem %s11, 5
  %v274 = vld [vmem:[%s273] sm:$0x1]
  %v275 = vsel %vm72, %v246, 0.0
  %276 = vadd.xlane.f32.xlu0 %v275
  %v277 = vpop.xlane.xlu0 %276
  %v278 = vsel %vm72, %v247, 0.0
  %279 = vadd.xlane.f32.xlu0 %v278
  %v280 = vpop.xlane.xlu0 %279
  %v281 = vsel %vm72, %v248, 0.0
  %282 = vadd.xlane.f32.xlu0 %v281
  %v283 = vpop.xlane.xlu0 %282
  %v284 = vsel %vm72, %v249, 0.0
  %285 = vadd.xlane.f32.xlu0 %v284
  %v286 = vpop.xlane.xlu0 %285
  %v287 = vsel %vm72, %v250, 0.0
  %288 = vadd.xlane.f32.xlu0 %v287
  %v289 = vpop.xlane.xlu0 %288
  %v290 = vsel %vm72, %v251, 0.0
  %291 = vadd.xlane.f32.xlu0 %v290
  %v292 = vpop.xlane.xlu0 %291
  %v293 = vsel %vm72, %v252, 0.0
  %294 = vadd.xlane.f32.xlu0 %v293
  %v295 = vpop.xlane.xlu0 %294
  %v296 = vsel %vm72, %v253, 0.0
  %297 = vadd.xlane.f32.xlu0 %v296
  %v298 = vpop.xlane.xlu0 %297
  %v299 = vsel %vm72, %v254, 0.0
  %300 = vadd.xlane.f32.xlu0 %v299
  %v301 = vpop.xlane.xlu0 %300
  %v302 = vsel %vm72, %v255, 0.0
  %303 = vadd.xlane.f32.xlu0 %v302
  %v304 = vpop.xlane.xlu0 %303
  %v305 = vsel %vm72, %v256, 0.0
  %306 = vadd.xlane.f32.xlu0 %v305
  %v307 = vpop.xlane.xlu0 %306
  %v308 = vsel %vm72, %v257, 0.0
  %309 = vadd.xlane.f32.xlu0 %v308
  %v310 = vpop.xlane.xlu0 %309
  %v311 = vsel %vm72, %v258, 0.0
  %312 = vadd.xlane.f32.xlu0 %v311
  %v313 = vpop.xlane.xlu0 %312
  %v314 = vsel %vm72, %v259, 0.0
  %315 = vadd.xlane.f32.xlu0 %v314
  %v316 = vpop.xlane.xlu0 %315
  %v317 = vsel %vm72, %v260, 0.0
  %318 = vadd.xlane.f32.xlu0 %v317
  %v319 = vpop.xlane.xlu0 %318
  %v320 = vsel %vm72, %v261, 0.0
  %321 = vadd.xlane.f32.xlu0 %v320
  %v322 = vpop.xlane.xlu0 %321
  %v323 = vsel %vm72, %v262, 0.0
  %324 = vadd.xlane.f32.xlu0 %v323
  %v325 = vpop.xlane.xlu0 %324
  %v326 = vsel %vm72, %v263, 0.0
  %327 = vadd.xlane.f32.xlu0 %v326
  %v328 = vpop.xlane.xlu0 %327
  %v329 = vrcp.pop 32.0
  %v330 = vmul.f32 32.0, %v329
  %v331 = vsub.f32 1.0, %v330
  %v332 = vmul.f32 %v329, %v331
  %v333 = vadd.f32 %v329, %v332
  %vm334 = vweird.f32 %v329
  %v335 = vsel %vm334, %v329, %v333
  %v336 = vmul.f32 %v277, %v335
  %v337 = vmul.f32 %v280, %v335
  %v338 = vmul.f32 %v283, %v335
  %v339 = vmul.f32 %v286, %v335
  %v340 = vmul.f32 %v289, %v335
  %v341 = vmul.f32 %v292, %v335
  %v342 = vmul.f32 %v295, %v335
  %v343 = vmul.f32 %v298, %v335
  %v344 = vmul.f32 %v301, %v335
  %v345 = vmul.f32 %v304, %v335
  %v346 = vmul.f32 %v307, %v335
  %v347 = vmul.f32 %v310, %v335
  %v348 = vmul.f32 %v313, %v335
  %v349 = vmul.f32 %v316, %v335
  %v350 = vmul.f32 %v319, %v335
  %v351 = vmul.f32 %v322, %v335
  %v352 = vmul.f32 %v325, %v335
  %v353 = vmul.f32 %v328, %v335
  %v354 = vmul.f32 %v246, %v246
  %v355 = vmul.f32 %v247, %v247
  %v356 = vmul.f32 %v248, %v248
  %v357 = vmul.f32 %v249, %v249
  %v358 = vmul.f32 %v250, %v250
  %v359 = vmul.f32 %v251, %v251
  %v360 = vmul.f32 %v252, %v252
  %v361 = vmul.f32 %v253, %v253
  %v362 = vmul.f32 %v254, %v254
  %v363 = vmul.f32 %v255, %v255
  %v364 = vmul.f32 %v256, %v256
  %v365 = vmul.f32 %v257, %v257
  %v366 = vmul.f32 %v258, %v258
  %v367 = vmul.f32 %v259, %v259
  %v368 = vmul.f32 %v260, %v260
  %v369 = vmul.f32 %v261, %v261
  %v370 = vmul.f32 %v262, %v262
  %v371 = vmul.f32 %v263, %v263
  %v372 = vsel %vm72, %v354, 0.0
  %373 = vadd.xlane.f32.xlu0 %v372
  %v374 = vpop.xlane.xlu0 %373
  %v375 = vsel %vm72, %v355, 0.0
  %376 = vadd.xlane.f32.xlu0 %v375
  %v377 = vpop.xlane.xlu0 %376
  %v378 = vsel %vm72, %v356, 0.0
  %379 = vadd.xlane.f32.xlu0 %v378
  %v380 = vpop.xlane.xlu0 %379
  %v381 = vsel %vm72, %v357, 0.0
  %382 = vadd.xlane.f32.xlu0 %v381
  %v383 = vpop.xlane.xlu0 %382
  %v384 = vsel %vm72, %v358, 0.0
  %385 = vadd.xlane.f32.xlu0 %v384
  %v386 = vpop.xlane.xlu0 %385
  %v387 = vsel %vm72, %v359, 0.0
  %388 = vadd.xlane.f32.xlu0 %v387
  %v389 = vpop.xlane.xlu0 %388
  %v390 = vsel %vm72, %v360, 0.0
  %391 = vadd.xlane.f32.xlu0 %v390
  %v392 = vpop.xlane.xlu0 %391
  %v393 = vsel %vm72, %v361, 0.0
  %394 = vadd.xlane.f32.xlu0 %v393
  %v395 = vpop.xlane.xlu0 %394
  %v396 = vsel %vm72, %v362, 0.0
  %397 = vadd.xlane.f32.xlu0 %v396
  %v398 = vpop.xlane.xlu0 %397
  %v399 = vsel %vm72, %v363, 0.0
  %400 = vadd.xlane.f32.xlu0 %v399
  %v401 = vpop.xlane.xlu0 %400
  %v402 = vsel %vm72, %v364, 0.0
  %403 = vadd.xlane.f32.xlu0 %v402
  %v404 = vpop.xlane.xlu0 %403
  %v405 = vsel %vm72, %v365, 0.0
  %406 = vadd.xlane.f32.xlu0 %v405
  %v407 = vpop.xlane.xlu0 %406
  %v408 = vsel %vm72, %v366, 0.0
  %409 = vadd.xlane.f32.xlu0 %v408
  %v410 = vpop.xlane.xlu0 %409
  %v411 = vsel %vm72, %v367, 0.0
  %412 = vadd.xlane.f32.xlu0 %v411
  %v413 = vpop.xlane.xlu0 %412
  %v414 = vsel %vm72, %v368, 0.0
  %415 = vadd.xlane.f32.xlu0 %v414
  %v416 = vpop.xlane.xlu0 %415
  %v417 = vsel %vm72, %v369, 0.0
  %418 = vadd.xlane.f32.xlu0 %v417
  %v419 = vpop.xlane.xlu0 %418
  %v420 = vsel %vm72, %v370, 0.0
  %421 = vadd.xlane.f32.xlu0 %v420
  %v422 = vpop.xlane.xlu0 %421
  %v423 = vsel %vm72, %v371, 0.0
  %424 = vadd.xlane.f32.xlu0 %v423
  %v425 = vpop.xlane.xlu0 %424
  %v426 = vmul.f32 %v374, %v335
  %v427 = vmul.f32 %v377, %v335
  %v428 = vmul.f32 %v380, %v335
  %v429 = vmul.f32 %v383, %v335
  %v430 = vmul.f32 %v386, %v335
  %v431 = vmul.f32 %v389, %v335
  %v432 = vmul.f32 %v392, %v335
  %v433 = vmul.f32 %v395, %v335
  %v434 = vmul.f32 %v398, %v335
  %v435 = vmul.f32 %v401, %v335
  %v436 = vmul.f32 %v404, %v335
  %v437 = vmul.f32 %v407, %v335
  %v438 = vmul.f32 %v410, %v335
  %v439 = vmul.f32 %v413, %v335
  %v440 = vmul.f32 %v416, %v335
  %v441 = vmul.f32 %v419, %v335
  %v442 = vmul.f32 %v422, %v335
  %v443 = vmul.f32 %v425, %v335
  %v444 = vmul.f32 %v336, %v336
  %v445 = vmul.f32 %v337, %v337
  %v446 = vmul.f32 %v338, %v338
  %v447 = vmul.f32 %v339, %v339
  %v448 = vmul.f32 %v340, %v340
  %v449 = vmul.f32 %v341, %v341
  %v450 = vmul.f32 %v342, %v342
  %v451 = vmul.f32 %v343, %v343
  %v452 = vmul.f32 %v344, %v344
  %v453 = vmul.f32 %v345, %v345
  %v454 = vmul.f32 %v346, %v346
  %v455 = vmul.f32 %v347, %v347
  %v456 = vmul.f32 %v348, %v348
  %v457 = vmul.f32 %v349, %v349
  %v458 = vmul.f32 %v350, %v350
  %v459 = vmul.f32 %v351, %v351
  %v460 = vmul.f32 %v352, %v352
  %v461 = vmul.f32 %v353, %v353
  %v462 = vsub.f32 %v426, %v444
  %v463 = vsub.f32 %v427, %v445
  %v464 = vsub.f32 %v428, %v446
  %v465 = vsub.f32 %v429, %v447
  %v466 = vsub.f32 %v430, %v448
  %v467 = vsub.f32 %v431, %v449
  %v468 = vsub.f32 %v432, %v450
  %v469 = vsub.f32 %v433, %v451
  %v470 = vsub.f32 %v434, %v452
  %v471 = vsub.f32 %v435, %v453
  %v472 = vsub.f32 %v436, %v454
  %v473 = vsub.f32 %v437, %v455
  %v474 = vsub.f32 %v438, %v456
  %v475 = vsub.f32 %v439, %v457
  %v476 = vsub.f32 %v440, %v458
  %v477 = vsub.f32 %v441, %v459
  %v478 = vsub.f32 %v442, %v460
  %v479 = vsub.f32 %v443, %v461
  %v480 = vsub.f32 %v246, %v336
  %v481 = vsub.f32 %v247, %v337
  %v482 = vsub.f32 %v248, %v338
  %v483 = vsub.f32 %v249, %v339
  %v484 = vsub.f32 %v250, %v340
  %v485 = vsub.f32 %v251, %v341
  %v486 = vsub.f32 %v252, %v342
  %v487 = vsub.f32 %v253, %v343
  %v488 = vsub.f32 %v254, %v344
  %v489 = vsub.f32 %v255, %v345
  %v490 = vsub.f32 %v256, %v346
  %v491 = vsub.f32 %v257, %v347
  %v492 = vsub.f32 %v258, %v348
  %v493 = vsub.f32 %v259, %v349
  %v494 = vsub.f32 %v260, %v350
  %v495 = vsub.f32 %v261, %v351
  %v496 = vsub.f32 %v262, %v352
  %v497 = vsub.f32 %v263, %v353
  %v498 = vadd.f32 %v462, 1e-05
  %v499 = vadd.f32 %v463, 1e-05
  %v500 = vadd.f32 %v464, 1e-05
  %v501 = vadd.f32 %v465, 1e-05
  %v502 = vadd.f32 %v466, 1e-05
  %v503 = vadd.f32 %v467, 1e-05
  %v504 = vadd.f32 %v468, 1e-05
  %v505 = vadd.f32 %v469, 1e-05
  %v506 = vadd.f32 %v470, 1e-05
  %v507 = vadd.f32 %v471, 1e-05
  %v508 = vadd.f32 %v472, 1e-05
  %v509 = vadd.f32 %v473, 1e-05
  %v510 = vadd.f32 %v474, 1e-05
  %v511 = vadd.f32 %v475, 1e-05
  %v512 = vadd.f32 %v476, 1e-05
  %v513 = vadd.f32 %v477, 1e-05
  %v514 = vadd.f32 %v478, 1e-05
  %v515 = vadd.f32 %v479, 1e-05
  %v516 = vrsqrt.pop %v498
  %v517 = vmul.f32 %v516, %v498
  %v518 = vmul.f32 %v517, %v516
  %v519 = vmul.f32 0.5, %v518
  %v520 = vsub.f32 1.5, %v519
  %v521 = vmul.f32 %v516, %v520
  %vm522 = vweird.f32 %v498
  %vm523 = vweird.f32 %v516
  %vm524 = vmor %vm522, %vm523
  %v525 = vsel %vm524, %v516, %v521
  %v526 = vrsqrt.pop %v499
  %v527 = vmul.f32 %v526, %v499
  %v528 = vmul.f32 %v527, %v526
  %v529 = vmul.f32 0.5, %v528
  %v530 = vsub.f32 1.5, %v529
  %v531 = vmul.f32 %v526, %v530
  %vm532 = vweird.f32 %v499
  %vm533 = vweird.f32 %v526
  %vm534 = vmor %vm532, %vm533
  %v535 = vsel %vm534, %v526, %v531
  %v536 = vrsqrt.pop %v500
  %v537 = vmul.f32 %v536, %v500
  %v538 = vmul.f32 %v537, %v536
  %v539 = vmul.f32 0.5, %v538
  %v540 = vsub.f32 1.5, %v539
  %v541 = vmul.f32 %v536, %v540
  %vm542 = vweird.f32 %v500
  %vm543 = vweird.f32 %v536
  %vm544 = vmor %vm542, %vm543
  %v545 = vsel %vm544, %v536, %v541
  %v546 = vrsqrt.pop %v501
  %v547 = vmul.f32 %v546, %v501
  %v548 = vmul.f32 %v547, %v546
  %v549 = vmul.f32 0.5, %v548
  %v550 = vsub.f32 1.5, %v549
  %v551 = vmul.f32 %v546, %v550
  %vm552 = vweird.f32 %v501
  %vm553 = vweird.f32 %v546
  %vm554 = vmor %vm552, %vm553
  %v555 = vsel %vm554, %v546, %v551
  %v556 = vrsqrt.pop %v502
  %v557 = vmul.f32 %v556, %v502
  %v558 = vmul.f32 %v557, %v556
  %v559 = vmul.f32 0.5, %v558
  %v560 = vsub.f32 1.5, %v559
  %v561 = vmul.f32 %v556, %v560
  %vm562 = vweird.f32 %v502
  %vm563 = vweird.f32 %v556
  %vm564 = vmor %vm562, %vm563
  %v565 = vsel %vm564, %v556, %v561
  %v566 = vrsqrt.pop %v503
  %v567 = vmul.f32 %v566, %v503
  %v568 = vmul.f32 %v567, %v566
  %v569 = vmul.f32 0.5, %v568
  %v570 = vsub.f32 1.5, %v569
  %v571 = vmul.f32 %v566, %v570
  %vm572 = vweird.f32 %v503
  %vm573 = vweird.f32 %v566
  %vm574 = vmor %vm572, %vm573
  %v575 = vsel %vm574, %v566, %v571
  %v576 = vrsqrt.pop %v504
  %v577 = vmul.f32 %v576, %v504
  %v578 = vmul.f32 %v577, %v576
  %v579 = vmul.f32 0.5, %v578
  %v580 = vsub.f32 1.5, %v579
  %v581 = vmul.f32 %v576, %v580
  %vm582 = vweird.f32 %v504
  %vm583 = vweird.f32 %v576
  %vm584 = vmor %vm582, %vm583
  %v585 = vsel %vm584, %v576, %v581
  %v586 = vrsqrt.pop %v505
  %v587 = vmul.f32 %v586, %v505
  %v588 = vmul.f32 %v587, %v586
  %v589 = vmul.f32 0.5, %v588
  %v590 = vsub.f32 1.5, %v589
  %v591 = vmul.f32 %v586, %v590
  %vm592 = vweird.f32 %v505
  %vm593 = vweird.f32 %v586
  %vm594 = vmor %vm592, %vm593
  %v595 = vsel %vm594, %v586, %v591
  %v596 = vrsqrt.pop %v506
  %v597 = vmul.f32 %v596, %v506
  %v598 = vmul.f32 %v597, %v596
  %v599 = vmul.f32 0.5, %v598
  %v600 = vsub.f32 1.5, %v599
  %v601 = vmul.f32 %v596, %v600
  %vm602 = vweird.f32 %v506
  %vm603 = vweird.f32 %v596
  %vm604 = vmor %vm602, %vm603
  %v605 = vsel %vm604, %v596, %v601
  %v606 = vrsqrt.pop %v507
  %v607 = vmul.f32 %v606, %v507
  %v608 = vmul.f32 %v607, %v606
  %v609 = vmul.f32 0.5, %v608
  %v610 = vsub.f32 1.5, %v609
  %v611 = vmul.f32 %v606, %v610
  %vm612 = vweird.f32 %v507
  %vm613 = vweird.f32 %v606
  %vm614 = vmor %vm612, %vm613
  %v615 = vsel %vm614, %v606, %v611
  %v616 = vrsqrt.pop %v508
  %v617 = vmul.f32 %v616, %v508
  %v618 = vmul.f32 %v617, %v616
  %v619 = vmul.f32 0.5, %v618
  %v620 = vsub.f32 1.5, %v619
  %v621 = vmul.f32 %v616, %v620
  %vm622 = vweird.f32 %v508
  %vm623 = vweird.f32 %v616
  %vm624 = vmor %vm622, %vm623
  %v625 = vsel %vm624, %v616, %v621
  %v626 = vrsqrt.pop %v509
  %v627 = vmul.f32 %v626, %v509
  %v628 = vmul.f32 %v627, %v626
  %v629 = vmul.f32 0.5, %v628
  %v630 = vsub.f32 1.5, %v629
  %v631 = vmul.f32 %v626, %v630
  %vm632 = vweird.f32 %v509
  %vm633 = vweird.f32 %v626
  %vm634 = vmor %vm632, %vm633
  %v635 = vsel %vm634, %v626, %v631
  %v636 = vrsqrt.pop %v510
  %v637 = vmul.f32 %v636, %v510
  %v638 = vmul.f32 %v637, %v636
  %v639 = vmul.f32 0.5, %v638
  %v640 = vsub.f32 1.5, %v639
  %v641 = vmul.f32 %v636, %v640
  %vm642 = vweird.f32 %v510
  %vm643 = vweird.f32 %v636
  %vm644 = vmor %vm642, %vm643
  %v645 = vsel %vm644, %v636, %v641
  %v646 = vrsqrt.pop %v511
  %v647 = vmul.f32 %v646, %v511
  %v648 = vmul.f32 %v647, %v646
  %v649 = vmul.f32 0.5, %v648
  %v650 = vsub.f32 1.5, %v649
  %v651 = vmul.f32 %v646, %v650
  %vm652 = vweird.f32 %v511
  %vm653 = vweird.f32 %v646
  %vm654 = vmor %vm652, %vm653
  %v655 = vsel %vm654, %v646, %v651
  %v656 = vrsqrt.pop %v512
  %v657 = vmul.f32 %v656, %v512
  %v658 = vmul.f32 %v657, %v656
  %v659 = vmul.f32 0.5, %v658
  %v660 = vsub.f32 1.5, %v659
  %v661 = vmul.f32 %v656, %v660
  %vm662 = vweird.f32 %v512
  %vm663 = vweird.f32 %v656
  %vm664 = vmor %vm662, %vm663
  %v665 = vsel %vm664, %v656, %v661
  %v666 = vrsqrt.pop %v513
  %v667 = vmul.f32 %v666, %v513
  %v668 = vmul.f32 %v667, %v666
  %v669 = vmul.f32 0.5, %v668
  %v670 = vsub.f32 1.5, %v669
  %v671 = vmul.f32 %v666, %v670
  %vm672 = vweird.f32 %v513
  %vm673 = vweird.f32 %v666
  %vm674 = vmor %vm672, %vm673
  %v675 = vsel %vm674, %v666, %v671
  %v676 = vrsqrt.pop %v514
  %v677 = vmul.f32 %v676, %v514
  %v678 = vmul.f32 %v677, %v676
  %v679 = vmul.f32 0.5, %v678
  %v680 = vsub.f32 1.5, %v679
  %v681 = vmul.f32 %v676, %v680
  %vm682 = vweird.f32 %v514
  %vm683 = vweird.f32 %v676
  %vm684 = vmor %vm682, %vm683
  %v685 = vsel %vm684, %v676, %v681
  %v686 = vrsqrt.pop %v515
  %v687 = vmul.f32 %v686, %v515
  %v688 = vmul.f32 %v687, %v686
  %v689 = vmul.f32 0.5, %v688
  %v690 = vsub.f32 1.5, %v689
  %v691 = vmul.f32 %v686, %v690
  %vm692 = vweird.f32 %v515
  %vm693 = vweird.f32 %v686
  %vm694 = vmor %vm692, %vm693
  %v695 = vsel %vm694, %v686, %v691
  %v696 = vmul.f32 %v480, %v525
  %v697 = vmul.f32 %v481, %v535
  %v698 = vmul.f32 %v482, %v545
  %v699 = vmul.f32 %v483, %v555
  %v700 = vmul.f32 %v484, %v565
  %v701 = vmul.f32 %v485, %v575
  %v702 = vmul.f32 %v486, %v585
  %v703 = vmul.f32 %v487, %v595
  %v704 = vmul.f32 %v488, %v605
  %v705 = vmul.f32 %v489, %v615
  %v706 = vmul.f32 %v490, %v625
  %v707 = vmul.f32 %v491, %v635
  %v708 = vmul.f32 %v492, %v645
  %v709 = vmul.f32 %v493, %v655
  %v710 = vmul.f32 %v494, %v665
  %v711 = vmul.f32 %v495, %v675
  %v712 = vmul.f32 %v496, %v685
  %v713 = vmul.f32 %v497, %v695
  %v715 = vperm.slane %v264, 0
  %v717 = vmul.f32 %v696, %v715
  %v718 = vmul.f32 %v697, %v715
  %v719 = vmul.f32 %v698, %v715
  %v720 = vmul.f32 %v699, %v715
  %v721 = vmul.f32 %v700, %v715
  %v722 = vmul.f32 %v701, %v715
  %v723 = vmul.f32 %v702, %v715
  %v724 = vmul.f32 %v703, %v715
  %v725 = vmul.f32 %v704, %v715
  %v726 = vmul.f32 %v705, %v715
  %v727 = vmul.f32 %v706, %v715
  %v728 = vmul.f32 %v707, %v715
  %v729 = vmul.f32 %v708, %v715
  %v730 = vmul.f32 %v709, %v715
  %v731 = vmul.f32 %v710, %v715
  %v732 = vmul.f32 %v711, %v715
  %v733 = vmul.f32 %v712, %v715
  %v734 = vmul.f32 %v713, %v715
  %v736 = vperm.slane %v266, 0
  %v738 = vadd.f32 %v717, %v736
  %v739 = vadd.f32 %v718, %v736
  %v740 = vadd.f32 %v719, %v736
  %v741 = vadd.f32 %v720, %v736
  %v742 = vadd.f32 %v721, %v736
  %v743 = vadd.f32 %v722, %v736
  %v744 = vadd.f32 %v723, %v736
  %v745 = vadd.f32 %v724, %v736
  %v746 = vadd.f32 %v725, %v736
  %v747 = vadd.f32 %v726, %v736
  %v748 = vadd.f32 %v727, %v736
  %v749 = vadd.f32 %v728, %v736
  %v750 = vadd.f32 %v729, %v736
  %v751 = vadd.f32 %v730, %v736
  %v752 = vadd.f32 %v731, %v736
  %v753 = vadd.f32 %v732, %v736
  %v754 = vadd.f32 %v733, %v736
  %v755 = vadd.f32 %v734, %v736
  %v756 = vld [vmem:[%s5] sm:$0xff]
  %v757 = vld [vmem:[%s5 + $0x8] sm:$0xff]
  %v758 = vld [vmem:[%s5 + $0x10] sm:$0xff]
  %v759 = vld [vmem:[%s5 + $0x18] sm:$0xff]
  %v760 = vld [vmem:[%s6] sm:$0x1]
  %v762 = vperm.slane %v760, 0
  %v765 = vsel %vm72, %v738, 0
  %v768 = vsel %vm72, %v739, 0
  %v771 = vsel %vm72, %v740, 0
  %v774 = vsel %vm72, %v741, 0
  %v777 = vsel %vm72, %v742, 0
  %v780 = vsel %vm72, %v743, 0
  %v783 = vsel %vm72, %v744, 0
  %v786 = vsel %vm72, %v745, 0
  %v789 = vsel %vm72, %v746, 0
  %v792 = vsel %vm72, %v747, 0
  %v795 = vsel %vm72, %v748, 0
  %v798 = vsel %vm72, %v749, 0
  %v801 = vsel %vm72, %v750, 0
  %v804 = vsel %vm72, %v751, 0
  %v807 = vsel %vm72, %v752, 0
  %v810 = vsel %vm72, %v753, 0
  %v813 = vsel %vm72, %v754, 0
  %v816 = vsel %vm72, %v755, 0
  %818 = vmatpush.msra.mxu0 0.0
  %819 = vmatpush.msra.mxu0 0.0
  %820 = vmatpush.msra.mxu0 0.0
  %821 = vmatpush.msra.mxu0 0.0
  %822 = vmatpush.msra.mxu0 0.0
  %823 = vmatpush.msra.mxu0 0.0
  %824 = vmatpush.msra.mxu0 0.0
  %825 = vmatpush.msra.mxu0 0.0
  %826 = vmatpush.msra.mxu0 0.0
  %827 = vmatpush.msra.mxu0 0.0
  %828 = vmatpush.msra.mxu0 0.0
  %829 = vmatpush.msra.mxu0 0.0
  %830 = vmatpush.msra.mxu0 %v759
  %831 = vmatpush.msra.mxu0 %v758
  %832 = vmatpush.msra.mxu0 %v757
  %833 = vmatpush.msra.mxu0 %v756
  %834 = vmatmul.f32.gmra.mxu0 %v765
  %v835 = vpop.f32.mrf.mxu0
  %v836 = vadd.f32 %v762, %v835
  %837 = vmatmul.f32.gmra.mxu0 %v768
  %v838 = vpop.f32.mrf.mxu0
  %v839 = vadd.f32 %v762, %v838
  %840 = vmatmul.f32.gmra.mxu0 %v771
  %v841 = vpop.f32.mrf.mxu0
  %v842 = vadd.f32 %v762, %v841
  %843 = vmatmul.f32.gmra.mxu0 %v774
  %v844 = vpop.f32.mrf.mxu0
  %v845 = vadd.f32 %v762, %v844
  %846 = vmatmul.f32.gmra.mxu0 %v777
  %v847 = vpop.f32.mrf.mxu0
  %v848 = vadd.f32 %v762, %v847
  %849 = vmatmul.f32.gmra.mxu0 %v780
  %v850 = vpop.f32.mrf.mxu0
  %v851 = vadd.f32 %v762, %v850
  %852 = vmatmul.f32.gmra.mxu0 %v783
  %v853 = vpop.f32.mrf.mxu0
  %v854 = vadd.f32 %v762, %v853
  %855 = vmatmul.f32.gmra.mxu0 %v786
  %v856 = vpop.f32.mrf.mxu0
  %v857 = vadd.f32 %v762, %v856
  %858 = vmatmul.f32.gmra.mxu0 %v789
  %v859 = vpop.f32.mrf.mxu0
  %v860 = vadd.f32 %v762, %v859
  %861 = vmatmul.f32.gmra.mxu0 %v792
  %v862 = vpop.f32.mrf.mxu0
  %v863 = vadd.f32 %v762, %v862
  %864 = vmatmul.f32.gmra.mxu0 %v795
  %v865 = vpop.f32.mrf.mxu0
  %v866 = vadd.f32 %v762, %v865
  %867 = vmatmul.f32.gmra.mxu0 %v798
  %v868 = vpop.f32.mrf.mxu0
  %v869 = vadd.f32 %v762, %v868
  %870 = vmatmul.f32.gmra.mxu0 %v801
  %v871 = vpop.f32.mrf.mxu0
  %v872 = vadd.f32 %v762, %v871
  %873 = vmatmul.f32.gmra.mxu0 %v804
  %v874 = vpop.f32.mrf.mxu0
  %v875 = vadd.f32 %v762, %v874
  %876 = vmatmul.f32.gmra.mxu0 %v807
  %v877 = vpop.f32.mrf.mxu0
  %v878 = vadd.f32 %v762, %v877
  %879 = vmatmul.f32.gmra.mxu0 %v810
  %v880 = vpop.f32.mrf.mxu0
  %v881 = vadd.f32 %v762, %v880
  %882 = vmatmul.f32.gmra.mxu0 %v813
  %v883 = vpop.f32.mrf.mxu0
  %v884 = vadd.f32 %v762, %v883
  %885 = vmatmul.f32.gmra.mxu0 %v816
  %v886 = vpop.f32.mrf.mxu0
  %v887 = vadd.f32 %v762, %v886
  %888 = vdwg.mxu0
  %898 = vrot.lane.b32.xlu0 %v836, 96
  %v899 = vpop.permute.xlu0 %898
  %900 = vrot.lane.b32.xlu0 %v839, 96
  %v901 = vpop.permute.xlu0 %900
  %902 = vrot.lane.b32.xlu0 %v842, 96
  %v903 = vpop.permute.xlu0 %902
  %904 = vrot.lane.b32.xlu0 %v845, 96
  %v905 = vpop.permute.xlu0 %904
  %906 = vrot.lane.b32.xlu0 %v848, 96
  %v907 = vpop.permute.xlu0 %906
  %908 = vrot.lane.b32.xlu0 %v851, 96
  %v909 = vpop.permute.xlu0 %908
  %910 = vrot.lane.b32.xlu0 %v854, 96
  %v911 = vpop.permute.xlu0 %910
  %912 = vrot.lane.b32.xlu0 %v857, 96
  %v913 = vpop.permute.xlu0 %912
  %914 = vrot.lane.b32.xlu0 %v860, 96
  %v915 = vpop.permute.xlu0 %914
  %vm916 = vcmask 64512
  %v917 = vsel %vm916, %v836, 0
  %v919 = vsel %vm916, %v839, 0
  %v921 = vsel %vm916, %v842, 0
  %v923 = vsel %vm916, %v845, 0
  %v925 = vsel %vm916, %v848, 0
  %v927 = vsel %vm916, %v851, 0
  %v929 = vsel %vm916, %v854, 0
  %v931 = vsel %vm916, %v857, 0
  %v933 = vsel %vm916, %v860, 0
  %v935 = vsel %vm916, %v899, 0
  %v937 = vsel %vm916, %v901, 0
  %v939 = vsel %vm916, %v903, 0
  %v941 = vsel %vm916, %v905, 0
  %v943 = vsel %vm916, %v907, 0
  %v945 = vsel %vm916, %v909, 0
  %v947 = vsel %vm916, %v911, 0
  %v949 = vsel %vm916, %v913, 0
  %v951 = vsel %vm916, %v915, 0
  %953 = vmatpush.xpose.msra.mxu0 0.0
  %954 = vmatpush.xpose.msra.mxu0 0.0
  %955 = vmatpush.xpose.msra.mxu0 0.0
  %956 = vmatpush.xpose.msra.mxu0 0.0
  %957 = vmatpush.xpose.msra.mxu0 0.0
  %958 = vmatpush.xpose.msra.mxu0 0.0
  %959 = vmatpush.xpose.msra.mxu0 0.0
  %960 = vmatpush.xpose.msra.mxu0 %v951
  %961 = vmatpush.xpose.msra.mxu0 %v949
  %962 = vmatpush.xpose.msra.mxu0 %v947
  %963 = vmatpush.xpose.msra.mxu0 %v945
  %964 = vmatpush.xpose.msra.mxu0 %v943
  %965 = vmatpush.xpose.msra.mxu0 %v941
  %966 = vmatpush.xpose.msra.mxu0 %v939
  %967 = vmatpush.xpose.msra.mxu0 %v937
  %968 = vmatpush.xpose.msra.mxu0 %v935
  %969 = vmatmul.f32.gmra.mxu0 %v917
  %v970 = vpop.f32.mrf.mxu0
  %v971 = vadd.f32 0.0, %v970
  %972 = vmatmul.f32.gmra.mxu0 %v919
  %v973 = vpop.f32.mrf.mxu0
  %v974 = vadd.f32 0.0, %v973
  %975 = vmatmul.f32.gmra.mxu0 %v921
  %v976 = vpop.f32.mrf.mxu0
  %v977 = vadd.f32 0.0, %v976
  %978 = vmatmul.f32.gmra.mxu0 %v923
  %v979 = vpop.f32.mrf.mxu0
  %v980 = vadd.f32 0.0, %v979
  %981 = vmatmul.f32.gmra.mxu0 %v925
  %v982 = vpop.f32.mrf.mxu0
  %v983 = vadd.f32 0.0, %v982
  %984 = vmatmul.f32.gmra.mxu0 %v927
  %v985 = vpop.f32.mrf.mxu0
  %v986 = vadd.f32 0.0, %v985
  %987 = vmatmul.f32.gmra.mxu0 %v929
  %v988 = vpop.f32.mrf.mxu0
  %v989 = vadd.f32 0.0, %v988
  %990 = vmatmul.f32.gmra.mxu0 %v931
  %v991 = vpop.f32.mrf.mxu0
  %v992 = vadd.f32 0.0, %v991
  %993 = vmatmul.f32.gmra.mxu0 %v933
  %v994 = vpop.f32.mrf.mxu0
  %v995 = vadd.f32 0.0, %v994
  %996 = vdwg.mxu0
  %v997 = vmul.f32 %v971, 0.35355338
  %v998 = vmul.f32 %v974, 0.35355338
  %v999 = vmul.f32 %v977, 0.35355338
  %v1000 = vmul.f32 %v980, 0.35355338
  %v1001 = vmul.f32 %v983, 0.35355338
  %v1002 = vmul.f32 %v986, 0.35355338
  %v1003 = vmul.f32 %v989, 0.35355338
  %v1004 = vmul.f32 %v992, 0.35355338
  %v1005 = vmul.f32 %v995, 0.35355338
  %vm1006 = vcmask 588800
  %v1007 = vsel %vm1006, %v997, -inf
  %1008 = vmax.xlane.f32.xlu0 %v1007
  %v1009 = vpop.xlane.xlu0 %1008
  %v1010 = vsel %vm1006, %v998, -inf
  %1011 = vmax.xlane.f32.xlu0 %v1010
  %v1012 = vpop.xlane.xlu0 %1011
  %v1013 = vsel %vm1006, %v999, -inf
  %1014 = vmax.xlane.f32.xlu0 %v1013
  %v1015 = vpop.xlane.xlu0 %1014
  %v1016 = vsel %vm1006, %v1000, -inf
  %1017 = vmax.xlane.f32.xlu0 %v1016
  %v1018 = vpop.xlane.xlu0 %1017
  %v1019 = vsel %vm1006, %v1001, -inf
  %1020 = vmax.xlane.f32.xlu0 %v1019
  %v1021 = vpop.xlane.xlu0 %1020
  %v1022 = vsel %vm1006, %v1002, -inf
  %1023 = vmax.xlane.f32.xlu0 %v1022
  %v1024 = vpop.xlane.xlu0 %1023
  %v1025 = vsel %vm1006, %v1003, -inf
  %1026 = vmax.xlane.f32.xlu0 %v1025
  %v1027 = vpop.xlane.xlu0 %1026
  %v1028 = vsel %vm1006, %v1004, -inf
  %1029 = vmax.xlane.f32.xlu0 %v1028
  %v1030 = vpop.xlane.xlu0 %1029
  %v1031 = vsel %vm1006, %v1005, -inf
  %1032 = vmax.xlane.f32.xlu0 %v1031
  %v1033 = vpop.xlane.xlu0 %1032
  %v1034 = vsub.f32 %v997, %v1009
  %v1035 = vsub.f32 %v998, %v1012
  %v1036 = vsub.f32 %v999, %v1015
  %v1037 = vsub.f32 %v1000, %v1018
  %v1038 = vsub.f32 %v1001, %v1021
  %v1039 = vsub.f32 %v1002, %v1024
  %v1040 = vsub.f32 %v1003, %v1027
  %v1041 = vsub.f32 %v1004, %v1030
  %v1042 = vsub.f32 %v1005, %v1033
  %v1043 = vmul.f32 %v1034, 1.442695
  %v1044 = vpow.pop %v1043
  %v1045 = vmul.f32 %v1035, 1.442695
  %v1046 = vpow.pop %v1045
  %v1047 = vmul.f32 %v1036, 1.442695
  %v1048 = vpow.pop %v1047
  %v1049 = vmul.f32 %v1037, 1.442695
  %v1050 = vpow.pop %v1049
  %v1051 = vmul.f32 %v1038, 1.442695
  %v1052 = vpow.pop %v1051
  %v1053 = vmul.f32 %v1039, 1.442695
  %v1054 = vpow.pop %v1053
  %v1055 = vmul.f32 %v1040, 1.442695
  %v1056 = vpow.pop %v1055
  %v1057 = vmul.f32 %v1041, 1.442695
  %v1058 = vpow.pop %v1057
  %v1059 = vmul.f32 %v1042, 1.442695
  %v1060 = vpow.pop %v1059
  %v1061 = vsel %vm1006, %v1044, 0.0
  %1062 = vadd.xlane.f32.xlu0 %v1061
  %v1063 = vpop.xlane.xlu0 %1062
  %v1064 = vsel %vm1006, %v1046, 0.0
  %1065 = vadd.xlane.f32.xlu0 %v1064
  %v1066 = vpop.xlane.xlu0 %1065
  %v1067 = vsel %vm1006, %v1048, 0.0
  %1068 = vadd.xlane.f32.xlu0 %v1067
  %v1069 = vpop.xlane.xlu0 %1068
  %v1070 = vsel %vm1006, %v1050, 0.0
  %1071 = vadd.xlane.f32.xlu0 %v1070
  %v1072 = vpop.xlane.xlu0 %1071
  %v1073 = vsel %vm1006, %v1052, 0.0
  %1074 = vadd.xlane.f32.xlu0 %v1073
  %v1075 = vpop.xlane.xlu0 %1074
  %v1076 = vsel %vm1006, %v1054, 0.0
  %1077 = vadd.xlane.f32.xlu0 %v1076
  %v1078 = vpop.xlane.xlu0 %1077
  %v1079 = vsel %vm1006, %v1056, 0.0
  %1080 = vadd.xlane.f32.xlu0 %v1079
  %v1081 = vpop.xlane.xlu0 %1080
  %v1082 = vsel %vm1006, %v1058, 0.0
  %1083 = vadd.xlane.f32.xlu0 %v1082
  %v1084 = vpop.xlane.xlu0 %1083
  %v1085 = vsel %vm1006, %v1060, 0.0
  %1086 = vadd.xlane.f32.xlu0 %v1085
  %v1087 = vpop.xlane.xlu0 %1086
  %v1088 = vrcp.pop %v1063
  %v1089 = vrcp.pop %v1066
  %v1090 = vrcp.pop %v1069
  %v1091 = vrcp.pop %v1072
  %v1092 = vrcp.pop %v1075
  %v1093 = vrcp.pop %v1078
  %v1094 = vrcp.pop %v1081
  %v1095 = vrcp.pop %v1084
  %v1096 = vrcp.pop %v1087
  %v1097 = vmul.f32 %v1044, %v1088
  %v1098 = vmul.f32 %v1046, %v1089
  %v1099 = vmul.f32 %v1048, %v1090
  %v1100 = vmul.f32 %v1050, %v1091
  %v1101 = vmul.f32 %v1052, %v1092
  %v1102 = vmul.f32 %v1054, %v1093
  %v1103 = vmul.f32 %v1056, %v1094
  %v1104 = vmul.f32 %v1058, %v1095
  %v1105 = vmul.f32 %v1060, %v1096
  %1106 = vrot.lane.b32.xlu0 %v836, 64
  %v1107 = vpop.permute.xlu0 %1106
  %1108 = vrot.lane.b32.xlu0 %v839, 64
  %v1109 = vpop.permute.xlu0 %1108
  %1110 = vrot.lane.b32.xlu0 %v842, 64
  %v1111 = vpop.permute.xlu0 %1110
  %1112 = vrot.lane.b32.xlu0 %v845, 64
  %v1113 = vpop.permute.xlu0 %1112
  %1114 = vrot.lane.b32.xlu0 %v848, 64
  %v1115 = vpop.permute.xlu0 %1114
  %1116 = vrot.lane.b32.xlu0 %v851, 64
  %v1117 = vpop.permute.xlu0 %1116
  %1118 = vrot.lane.b32.xlu0 %v854, 64
  %v1119 = vpop.permute.xlu0 %1118
  %1120 = vrot.lane.b32.xlu0 %v857, 64
  %v1121 = vpop.permute.xlu0 %1120
  %1122 = vrot.lane.b32.xlu0 %v860, 64
  %v1123 = vpop.permute.xlu0 %1122
  %v1134 = vsel %vm1006, %v1097, 0
  %v1137 = vsel %vm1006, %v1098, 0
  %v1140 = vsel %vm1006, %v1099, 0
  %v1143 = vsel %vm1006, %v1100, 0
  %v1146 = vsel %vm1006, %v1101, 0
  %v1149 = vsel %vm1006, %v1102, 0
  %v1152 = vsel %vm1006, %v1103, 0
  %v1155 = vsel %vm1006, %v1104, 0
  %v1158 = vsel %vm1006, %v1105, 0
  %1160 = vmatpush.msra.mxu0 0.0
  %1161 = vmatpush.msra.mxu0 0.0
  %1162 = vmatpush.msra.mxu0 0.0
  %1163 = vmatpush.msra.mxu0 0.0
  %1164 = vmatpush.msra.mxu0 0.0
  %1165 = vmatpush.msra.mxu0 0.0
  %1166 = vmatpush.msra.mxu0 0.0
  %1167 = vmatpush.msra.mxu0 %v1123
  %1168 = vmatpush.msra.mxu0 %v1121
  %1169 = vmatpush.msra.mxu0 %v1119
  %1170 = vmatpush.msra.mxu0 %v1117
  %1171 = vmatpush.msra.mxu0 %v1115
  %1172 = vmatpush.msra.mxu0 %v1113
  %1173 = vmatpush.msra.mxu0 %v1111
  %1174 = vmatpush.msra.mxu0 %v1109
  %1175 = vmatpush.msra.mxu0 %v1107
  %1176 = vmatmul.f32.gmra.mxu0 %v1134
  %v1177 = vpop.f32.mrf.mxu0
  %v1178 = vadd.f32 0.0, %v1177
  %1179 = vmatmul.f32.gmra.mxu0 %v1137
  %v1180 = vpop.f32.mrf.mxu0
  %v1181 = vadd.f32 0.0, %v1180
  %1182 = vmatmul.f32.gmra.mxu0 %v1140
  %v1183 = vpop.f32.mrf.mxu0
  %v1184 = vadd.f32 0.0, %v1183
  %1185 = vmatmul.f32.gmra.mxu0 %v1143
  %v1186 = vpop.f32.mrf.mxu0
  %v1187 = vadd.f32 0.0, %v1186
  %1188 = vmatmul.f32.gmra.mxu0 %v1146
  %v1189 = vpop.f32.mrf.mxu0
  %v1190 = vadd.f32 0.0, %v1189
  %1191 = vmatmul.f32.gmra.mxu0 %v1149
  %v1192 = vpop.f32.mrf.mxu0
  %v1193 = vadd.f32 0.0, %v1192
  %1194 = vmatmul.f32.gmra.mxu0 %v1152
  %v1195 = vpop.f32.mrf.mxu0
  %v1196 = vadd.f32 0.0, %v1195
  %1197 = vmatmul.f32.gmra.mxu0 %v1155
  %v1198 = vpop.f32.mrf.mxu0
  %v1199 = vadd.f32 0.0, %v1198
  %1200 = vmatmul.f32.gmra.mxu0 %v1158
  %v1201 = vpop.f32.mrf.mxu0
  %v1202 = vadd.f32 0.0, %v1201
  %1203 = vdwg.mxu0
  %1204 = vst.msk [vmem:[#allocation3] sm:$0xff] %vm916, %v1178
  %1205 = vst.msk [vmem:[#allocation3 + $0x8] sm:$0xff] %vm916, %v1181
  %1206 = vst.msk [vmem:[#allocation3 + $0x10] sm:$0xff] %vm916, %v1184
  %1207 = vst.msk [vmem:[#allocation3 + $0x18] sm:$0xff] %vm916, %v1187
  %1208 = vst.msk [vmem:[#allocation3 + $0x20] sm:$0xff] %vm916, %v1190
  %1209 = vst.msk [vmem:[#allocation3 + $0x28] sm:$0xff] %vm916, %v1193
  %1210 = vst.msk [vmem:[#allocation3 + $0x30] sm:$0xff] %vm916, %v1196
  %1211 = vst.msk [vmem:[#allocation3 + $0x38] sm:$0xff] %vm916, %v1199
  %1212 = vst.msk [vmem:[#allocation3 + $0x40] sm:$0xff] %vm916, %v1202
  %1213 = vrot.lane.b32.xlu0 %v836, 120
  %v1214 = vpop.permute.xlu0 %1213
  %1215 = vrot.lane.b32.xlu0 %v839, 120
  %v1216 = vpop.permute.xlu0 %1215
  %1217 = vrot.lane.b32.xlu0 %v842, 120
  %v1218 = vpop.permute.xlu0 %1217
  %1219 = vrot.lane.b32.xlu0 %v845, 120
  %v1220 = vpop.permute.xlu0 %1219
  %1221 = vrot.lane.b32.xlu0 %v848, 120
  %v1222 = vpop.permute.xlu0 %1221
  %1223 = vrot.lane.b32.xlu0 %v851, 120
  %v1224 = vpop.permute.xlu0 %1223
  %1225 = vrot.lane.b32.xlu0 %v854, 120
  %v1226 = vpop.permute.xlu0 %1225
  %1227 = vrot.lane.b32.xlu0 %v857, 120
  %v1228 = vpop.permute.xlu0 %1227
  %1229 = vrot.lane.b32.xlu0 %v860, 120
  %v1230 = vpop.permute.xlu0 %1229
  %1231 = vrot.lane.b32.xlu0 %v836, 88
  %v1232 = vpop.permute.xlu0 %1231
  %1233 = vrot.lane.b32.xlu0 %v839, 88
  %v1234 = vpop.permute.xlu0 %1233
  %1235 = vrot.lane.b32.xlu0 %v842, 88
  %v1236 = vpop.permute.xlu0 %1235
  %1237 = vrot.lane.b32.xlu0 %v845, 88
  %v1238 = vpop.permute.xlu0 %1237
  %1239 = vrot.lane.b32.xlu0 %v848, 88
  %v1240 = vpop.permute.xlu0 %1239
  %1241 = vrot.lane.b32.xlu0 %v851, 88
  %v1242 = vpop.permute.xlu0 %1241
  %1243 = vrot.lane.b32.xlu0 %v854, 88
  %v1244 = vpop.permute.xlu0 %1243
  %1245 = vrot.lane.b32.xlu0 %v857, 88
  %v1246 = vpop.permute.xlu0 %1245
  %1247 = vrot.lane.b32.xlu0 %v860, 88
  %v1248 = vpop.permute.xlu0 %1247
  %v1249 = vsel %vm916, %v1214, 0
  %v1251 = vsel %vm916, %v1216, 0
  %v1253 = vsel %vm916, %v1218, 0
  %v1255 = vsel %vm916, %v1220, 0
  %v1257 = vsel %vm916, %v1222, 0
  %v1259 = vsel %vm916, %v1224, 0
  %v1261 = vsel %vm916, %v1226, 0
  %v1263 = vsel %vm916, %v1228, 0
  %v1265 = vsel %vm916, %v1230, 0
  %v1267 = vsel %vm916, %v1232, 0
  %v1269 = vsel %vm916, %v1234, 0
  %v1271 = vsel %vm916, %v1236, 0
  %v1273 = vsel %vm916, %v1238, 0
  %v1275 = vsel %vm916, %v1240, 0
  %v1277 = vsel %vm916, %v1242, 0
  %v1279 = vsel %vm916, %v1244, 0
  %v1281 = vsel %vm916, %v1246, 0
  %v1283 = vsel %vm916, %v1248, 0
  %1285 = vmatpush.xpose.msra.mxu0 0.0
  %1286 = vmatpush.xpose.msra.mxu0 0.0
  %1287 = vmatpush.xpose.msra.mxu0 0.0
  %1288 = vmatpush.xpose.msra.mxu0 0.0
  %1289 = vmatpush.xpose.msra.mxu0 0.0
  %1290 = vmatpush.xpose.msra.mxu0 0.0
  %1291 = vmatpush.xpose.msra.mxu0 0.0
  %1292 = vmatpush.xpose.msra.mxu0 %v1283
  %1293 = vmatpush.xpose.msra.mxu0 %v1281
  %1294 = vmatpush.xpose.msra.mxu0 %v1279
  %1295 = vmatpush.xpose.msra.mxu0 %v1277
  %1296 = vmatpush.xpose.msra.mxu0 %v1275
  %1297 = vmatpush.xpose.msra.mxu0 %v1273
  %1298 = vmatpush.xpose.msra.mxu0 %v1271
  %1299 = vmatpush.xpose.msra.mxu0 %v1269
  %1300 = vmatpush.xpose.msra.mxu0 %v1267
  %1301 = vmatmul.f32.gmra.mxu0 %v1249
  %v1302 = vpop.f32.mrf.mxu0
  %v1303 = vadd.f32 0.0, %v1302
  %1304 = vmatmul.f32.gmra.mxu0 %v1251
  %v1305 = vpop.f32.mrf.mxu0
  %v1306 = vadd.f32 0.0, %v1305
  %1307 = vmatmul.f32.gmra.mxu0 %v1253
  %v1308 = vpop.f32.mrf.mxu0
  %v1309 = vadd.f32 0.0, %v1308
  %1310 = vmatmul.f32.gmra.mxu0 %v1255
  %v1311 = vpop.f32.mrf.mxu0
  %v1312 = vadd.f32 0.0, %v1311
  %1313 = vmatmul.f32.gmra.mxu0 %v1257
  %v1314 = vpop.f32.mrf.mxu0
  %v1315 = vadd.f32 0.0, %v1314
  %1316 = vmatmul.f32.gmra.mxu0 %v1259
  %v1317 = vpop.f32.mrf.mxu0
  %v1318 = vadd.f32 0.0, %v1317
  %1319 = vmatmul.f32.gmra.mxu0 %v1261
  %v1320 = vpop.f32.mrf.mxu0
  %v1321 = vadd.f32 0.0, %v1320
  %1322 = vmatmul.f32.gmra.mxu0 %v1263
  %v1323 = vpop.f32.mrf.mxu0
  %v1324 = vadd.f32 0.0, %v1323
  %1325 = vmatmul.f32.gmra.mxu0 %v1265
  %v1326 = vpop.f32.mrf.mxu0
  %v1327 = vadd.f32 0.0, %v1326
  %1328 = vdwg.mxu0
  %v1329 = vmul.f32 %v1303, 0.35355338
  %v1330 = vmul.f32 %v1306, 0.35355338
  %v1331 = vmul.f32 %v1309, 0.35355338
  %v1332 = vmul.f32 %v1312, 0.35355338
  %v1333 = vmul.f32 %v1315, 0.35355338
  %v1334 = vmul.f32 %v1318, 0.35355338
  %v1335 = vmul.f32 %v1321, 0.35355338
  %v1336 = vmul.f32 %v1324, 0.35355338
  %v1337 = vmul.f32 %v1327, 0.35355338
  %v1338 = vsel %vm1006, %v1329, -inf
  %1339 = vmax.xlane.f32.xlu0 %v1338
  %v1340 = vpop.xlane.xlu0 %1339
  %v1341 = vsel %vm1006, %v1330, -inf
  %1342 = vmax.xlane.f32.xlu0 %v1341
  %v1343 = vpop.xlane.xlu0 %1342
  %v1344 = vsel %vm1006, %v1331, -inf
  %1345 = vmax.xlane.f32.xlu0 %v1344
  %v1346 = vpop.xlane.xlu0 %1345
  %v1347 = vsel %vm1006, %v1332, -inf
  %1348 = vmax.xlane.f32.xlu0 %v1347
  %v1349 = vpop.xlane.xlu0 %1348
  %v1350 = vsel %vm1006, %v1333, -inf
  %1351 = vmax.xlane.f32.xlu0 %v1350
  %v1352 = vpop.xlane.xlu0 %1351
  %v1353 = vsel %vm1006, %v1334, -inf
  %1354 = vmax.xlane.f32.xlu0 %v1353
  %v1355 = vpop.xlane.xlu0 %1354
  %v1356 = vsel %vm1006, %v1335, -inf
  %1357 = vmax.xlane.f32.xlu0 %v1356
  %v1358 = vpop.xlane.xlu0 %1357
  %v1359 = vsel %vm1006, %v1336, -inf
  %1360 = vmax.xlane.f32.xlu0 %v1359
  %v1361 = vpop.xlane.xlu0 %1360
  %v1362 = vsel %vm1006, %v1337, -inf
  %1363 = vmax.xlane.f32.xlu0 %v1362
  %v1364 = vpop.xlane.xlu0 %1363
  %v1365 = vsub.f32 %v1329, %v1340
  %v1366 = vsub.f32 %v1330, %v1343
  %v1367 = vsub.f32 %v1331, %v1346
  %v1368 = vsub.f32 %v1332, %v1349
  %v1369 = vsub.f32 %v1333, %v1352
  %v1370 = vsub.f32 %v1334, %v1355
  %v1371 = vsub.f32 %v1335, %v1358
  %v1372 = vsub.f32 %v1336, %v1361
  %v1373 = vsub.f32 %v1337, %v1364
  %v1374 = vmul.f32 %v1365, 1.442695
  %v1375 = vpow.pop %v1374
  %v1376 = vmul.f32 %v1366, 1.442695
  %v1377 = vpow.pop %v1376
  %v1378 = vmul.f32 %v1367, 1.442695
  %v1379 = vpow.pop %v1378
  %v1380 = vmul.f32 %v1368, 1.442695
  %v1381 = vpow.pop %v1380
  %v1382 = vmul.f32 %v1369, 1.442695
  %v1383 = vpow.pop %v1382
  %v1384 = vmul.f32 %v1370, 1.442695
  %v1385 = vpow.pop %v1384
  %v1386 = vmul.f32 %v1371, 1.442695
  %v1387 = vpow.pop %v1386
  %v1388 = vmul.f32 %v1372, 1.442695
  %v1389 = vpow.pop %v1388
  %v1390 = vmul.f32 %v1373, 1.442695
  %v1391 = vpow.pop %v1390
  %v1392 = vsel %vm1006, %v1375, 0.0
  %1393 = vadd.xlane.f32.xlu0 %v1392
  %v1394 = vpop.xlane.xlu0 %1393
  %v1395 = vsel %vm1006, %v1377, 0.0
  %1396 = vadd.xlane.f32.xlu0 %v1395
  %v1397 = vpop.xlane.xlu0 %1396
  %v1398 = vsel %vm1006, %v1379, 0.0
  %1399 = vadd.xlane.f32.xlu0 %v1398
  %v1400 = vpop.xlane.xlu0 %1399
  %v1401 = vsel %vm1006, %v1381, 0.0
  %1402 = vadd.xlane.f32.xlu0 %v1401
  %v1403 = vpop.xlane.xlu0 %1402
  %v1404 = vsel %vm1006, %v1383, 0.0
  %1405 = vadd.xlane.f32.xlu0 %v1404
  %v1406 = vpop.xlane.xlu0 %1405
  %v1407 = vsel %vm1006, %v1385, 0.0
  %1408 = vadd.xlane.f32.xlu0 %v1407
  %v1409 = vpop.xlane.xlu0 %1408
  %v1410 = vsel %vm1006, %v1387, 0.0
  %1411 = vadd.xlane.f32.xlu0 %v1410
  %v1412 = vpop.xlane.xlu0 %1411
  %v1413 = vsel %vm1006, %v1389, 0.0
  %1414 = vadd.xlane.f32.xlu0 %v1413
  %v1415 = vpop.xlane.xlu0 %1414
  %v1416 = vsel %vm1006, %v1391, 0.0
  %1417 = vadd.xlane.f32.xlu0 %v1416
  %v1418 = vpop.xlane.xlu0 %1417
  %v1419 = vrcp.pop %v1394
  %v1420 = vrcp.pop %v1397
  %v1421 = vrcp.pop %v1400
  %v1422 = vrcp.pop %v1403
  %v1423 = vrcp.pop %v1406
  %v1424 = vrcp.pop %v1409
  %v1425 = vrcp.pop %v1412
  %v1426 = vrcp.pop %v1415
  %v1427 = vrcp.pop %v1418
  %v1428 = vmul.f32 %v1375, %v1419
  %v1429 = vmul.f32 %v1377, %v1420
  %v1430 = vmul.f32 %v1379, %v1421
  %v1431 = vmul.f32 %v1381, %v1422
  %v1432 = vmul.f32 %v1383, %v1423
  %v1433 = vmul.f32 %v1385, %v1424
  %v1434 = vmul.f32 %v1387, %v1425
  %v1435 = vmul.f32 %v1389, %v1426
  %v1436 = vmul.f32 %v1391, %v1427
  %1437 = vrot.lane.b32.xlu0 %v836, 56
  %v1438 = vpop.permute.xlu0 %1437
  %1439 = vrot.lane.b32.xlu0 %v839, 56
  %v1440 = vpop.permute.xlu0 %1439
  %1441 = vrot.lane.b32.xlu0 %v842, 56
  %v1442 = vpop.permute.xlu0 %1441
  %1443 = vrot.lane.b32.xlu0 %v845, 56
  %v1444 = vpop.permute.xlu0 %1443
  %1445 = vrot.lane.b32.xlu0 %v848, 56
  %v1446 = vpop.permute.xlu0 %1445
  %1447 = vrot.lane.b32.xlu0 %v851, 56
  %v1448 = vpop.permute.xlu0 %1447
  %1449 = vrot.lane.b32.xlu0 %v854, 56
  %v1450 = vpop.permute.xlu0 %1449
  %1451 = vrot.lane.b32.xlu0 %v857, 56
  %v1452 = vpop.permute.xlu0 %1451
  %1453 = vrot.lane.b32.xlu0 %v860, 56
  %v1454 = vpop.permute.xlu0 %1453
  %v1465 = vsel %vm1006, %v1428, 0
  %v1468 = vsel %vm1006, %v1429, 0
  %v1471 = vsel %vm1006, %v1430, 0
  %v1474 = vsel %vm1006, %v1431, 0
  %v1477 = vsel %vm1006, %v1432, 0
  %v1480 = vsel %vm1006, %v1433, 0
  %v1483 = vsel %vm1006, %v1434, 0
  %v1486 = vsel %vm1006, %v1435, 0
  %v1489 = vsel %vm1006, %v1436, 0
  %1491 = vmatpush.msra.mxu0 0.0
  %1492 = vmatpush.msra.mxu0 0.0
  %1493 = vmatpush.msra.mxu0 0.0
  %1494 = vmatpush.msra.mxu0 0.0
  %1495 = vmatpush.msra.mxu0 0.0
  %1496 = vmatpush.msra.mxu0 0.0
  %1497 = vmatpush.msra.mxu0 0.0
  %1498 = vmatpush.msra.mxu0 %v1454
  %1499 = vmatpush.msra.mxu0 %v1452
  %1500 = vmatpush.msra.mxu0 %v1450
  %1501 = vmatpush.msra.mxu0 %v1448
  %1502 = vmatpush.msra.mxu0 %v1446
  %1503 = vmatpush.msra.mxu0 %v1444
  %1504 = vmatpush.msra.mxu0 %v1442
  %1505 = vmatpush.msra.mxu0 %v1440
  %1506 = vmatpush.msra.mxu0 %v1438
  %1507 = vmatmul.f32.gmra.mxu0 %v1465
  %v1508 = vpop.f32.mrf.mxu0
  %v1509 = vadd.f32 0.0, %v1508
  %1510 = vmatmul.f32.gmra.mxu0 %v1468
  %v1511 = vpop.f32.mrf.mxu0
  %v1512 = vadd.f32 0.0, %v1511
  %1513 = vmatmul.f32.gmra.mxu0 %v1471
  %v1514 = vpop.f32.mrf.mxu0
  %v1515 = vadd.f32 0.0, %v1514
  %1516 = vmatmul.f32.gmra.mxu0 %v1474
  %v1517 = vpop.f32.mrf.mxu0
  %v1518 = vadd.f32 0.0, %v1517
  %1519 = vmatmul.f32.gmra.mxu0 %v1477
  %v1520 = vpop.f32.mrf.mxu0
  %v1521 = vadd.f32 0.0, %v1520
  %1522 = vmatmul.f32.gmra.mxu0 %v1480
  %v1523 = vpop.f32.mrf.mxu0
  %v1524 = vadd.f32 0.0, %v1523
  %1525 = vmatmul.f32.gmra.mxu0 %v1483
  %v1526 = vpop.f32.mrf.mxu0
  %v1527 = vadd.f32 0.0, %v1526
  %1528 = vmatmul.f32.gmra.mxu0 %v1486
  %v1529 = vpop.f32.mrf.mxu0
  %v1530 = vadd.f32 0.0, %v1529
  %1531 = vmatmul.f32.gmra.mxu0 %v1489
  %v1532 = vpop.f32.mrf.mxu0
  %v1533 = vadd.f32 0.0, %v1532
  %1534 = vdwg.mxu0
  %1544 = vrot.lane.b32.xlu0 %v1509, 8
  %v1545 = vpop.permute.xlu0 %1544
  %1546 = vrot.lane.b32.xlu0 %v1512, 8
  %v1547 = vpop.permute.xlu0 %1546
  %1548 = vrot.lane.b32.xlu0 %v1515, 8
  %v1549 = vpop.permute.xlu0 %1548
  %1550 = vrot.lane.b32.xlu0 %v1518, 8
  %v1551 = vpop.permute.xlu0 %1550
  %1552 = vrot.lane.b32.xlu0 %v1521, 8
  %v1553 = vpop.permute.xlu0 %1552
  %1554 = vrot.lane.b32.xlu0 %v1524, 8
  %v1555 = vpop.permute.xlu0 %1554
  %1556 = vrot.lane.b32.xlu0 %v1527, 8
  %v1557 = vpop.permute.xlu0 %1556
  %1558 = vrot.lane.b32.xlu0 %v1530, 8
  %v1559 = vpop.permute.xlu0 %1558
  %1560 = vrot.lane.b32.xlu0 %v1533, 8
  %v1561 = vpop.permute.xlu0 %1560
  %vm1571 = vcmask 130112
  %1572 = vst.msk [vmem:[#allocation3] sm:$0xff] %vm1571, %v1545
  %1573 = vst.msk [vmem:[#allocation3 + $0x8] sm:$0xff] %vm1571, %v1547
  %1574 = vst.msk [vmem:[#allocation3 + $0x10] sm:$0xff] %vm1571, %v1549
  %1575 = vst.msk [vmem:[#allocation3 + $0x18] sm:$0xff] %vm1571, %v1551
  %1576 = vst.msk [vmem:[#allocation3 + $0x20] sm:$0xff] %vm1571, %v1553
  %1577 = vst.msk [vmem:[#allocation3 + $0x28] sm:$0xff] %vm1571, %v1555
  %1578 = vst.msk [vmem:[#allocation3 + $0x30] sm:$0xff] %vm1571, %v1557
  %1579 = vst.msk [vmem:[#allocation3 + $0x38] sm:$0xff] %vm1571, %v1559
  %1580 = vst.msk [vmem:[#allocation3 + $0x40] sm:$0xff] %vm1571, %v1561
  %1581 = vrot.lane.b32.xlu0 %v836, 112
  %v1582 = vpop.permute.xlu0 %1581
  %1583 = vrot.lane.b32.xlu0 %v839, 112
  %v1584 = vpop.permute.xlu0 %1583
  %1585 = vrot.lane.b32.xlu0 %v842, 112
  %v1586 = vpop.permute.xlu0 %1585
  %1587 = vrot.lane.b32.xlu0 %v845, 112
  %v1588 = vpop.permute.xlu0 %1587
  %1589 = vrot.lane.b32.xlu0 %v848, 112
  %v1590 = vpop.permute.xlu0 %1589
  %1591 = vrot.lane.b32.xlu0 %v851, 112
  %v1592 = vpop.permute.xlu0 %1591
  %1593 = vrot.lane.b32.xlu0 %v854, 112
  %v1594 = vpop.permute.xlu0 %1593
  %1595 = vrot.lane.b32.xlu0 %v857, 112
  %v1596 = vpop.permute.xlu0 %1595
  %1597 = vrot.lane.b32.xlu0 %v860, 112
  %v1598 = vpop.permute.xlu0 %1597
  %1599 = vrot.lane.b32.xlu0 %v836, 80
  %v1600 = vpop.permute.xlu0 %1599
  %1601 = vrot.lane.b32.xlu0 %v839, 80
  %v1602 = vpop.permute.xlu0 %1601
  %1603 = vrot.lane.b32.xlu0 %v842, 80
  %v1604 = vpop.permute.xlu0 %1603
  %1605 = vrot.lane.b32.xlu0 %v845, 80
  %v1606 = vpop.permute.xlu0 %1605
  %1607 = vrot.lane.b32.xlu0 %v848, 80
  %v1608 = vpop.permute.xlu0 %1607
  %1609 = vrot.lane.b32.xlu0 %v851, 80
  %v1610 = vpop.permute.xlu0 %1609
  %1611 = vrot.lane.b32.xlu0 %v854, 80
  %v1612 = vpop.permute.xlu0 %1611
  %1613 = vrot.lane.b32.xlu0 %v857, 80
  %v1614 = vpop.permute.xlu0 %1613
  %1615 = vrot.lane.b32.xlu0 %v860, 80
  %v1616 = vpop.permute.xlu0 %1615
  %v1617 = vsel %vm916, %v1582, 0
  %v1619 = vsel %vm916, %v1584, 0
  %v1621 = vsel %vm916, %v1586, 0
  %v1623 = vsel %vm916, %v1588, 0
  %v1625 = vsel %vm916, %v1590, 0
  %v1627 = vsel %vm916, %v1592, 0
  %v1629 = vsel %vm916, %v1594, 0
  %v1631 = vsel %vm916, %v1596, 0
  %v1633 = vsel %vm916, %v1598, 0
  %v1635 = vsel %vm916, %v1600, 0
  %v1637 = vsel %vm916, %v1602, 0
  %v1639 = vsel %vm916, %v1604, 0
  %v1641 = vsel %vm916, %v1606, 0
  %v1643 = vsel %vm916, %v1608, 0
  %v1645 = vsel %vm916, %v1610, 0
  %v1647 = vsel %vm916, %v1612, 0
  %v1649 = vsel %vm916, %v1614, 0
  %v1651 = vsel %vm916, %v1616, 0
  %1653 = vmatpush.xpose.msra.mxu0 0.0
  %1654 = vmatpush.xpose.msra.mxu0 0.0
  %1655 = vmatpush.xpose.msra.mxu0 0.0
  %1656 = vmatpush.xpose.msra.mxu0 0.0
  %1657 = vmatpush.xpose.msra.mxu0 0.0
  %1658 = vmatpush.xpose.msra.mxu0 0.0
  %1659 = vmatpush.xpose.msra.mxu0 0.0
  %1660 = vmatpush.xpose.msra.mxu0 %v1651
  %1661 = vmatpush.xpose.msra.mxu0 %v1649
  %1662 = vmatpush.xpose.msra.mxu0 %v1647
  %1663 = vmatpush.xpose.msra.mxu0 %v1645
  %1664 = vmatpush.xpose.msra.mxu0 %v1643
  %1665 = vmatpush.xpose.msra.mxu0 %v1641
  %1666 = vmatpush.xpose.msra.mxu0 %v1639
  %1667 = vmatpush.xpose.msra.mxu0 %v1637
  %1668 = vmatpush.xpose.msra.mxu0 %v1635
  %1669 = vmatmul.f32.gmra.mxu0 %v1617
  %v1670 = vpop.f32.mrf.mxu0
  %v1671 = vadd.f32 0.0, %v1670
  %1672 = vmatmul.f32.gmra.mxu0 %v1619
  %v1673 = vpop.f32.mrf.mxu0
  %v1674 = vadd.f32 0.0, %v1673
  %1675 = vmatmul.f32.gmra.mxu0 %v1621
  %v1676 = vpop.f32.mrf.mxu0
  %v1677 = vadd.f32 0.0, %v1676
  %1678 = vmatmul.f32.gmra.mxu0 %v1623
  %v1679 = vpop.f32.mrf.mxu0
  %v1680 = vadd.f32 0.0, %v1679
  %1681 = vmatmul.f32.gmra.mxu0 %v1625
  %v1682 = vpop.f32.mrf.mxu0
  %v1683 = vadd.f32 0.0, %v1682
  %1684 = vmatmul.f32.gmra.mxu0 %v1627
  %v1685 = vpop.f32.mrf.mxu0
  %v1686 = vadd.f32 0.0, %v1685
  %1687 = vmatmul.f32.gmra.mxu0 %v1629
  %v1688 = vpop.f32.mrf.mxu0
  %v1689 = vadd.f32 0.0, %v1688
  %1690 = vmatmul.f32.gmra.mxu0 %v1631
  %v1691 = vpop.f32.mrf.mxu0
  %v1692 = vadd.f32 0.0, %v1691
  %1693 = vmatmul.f32.gmra.mxu0 %v1633
  %v1694 = vpop.f32.mrf.mxu0
  %v1695 = vadd.f32 0.0, %v1694
  %1696 = vdwg.mxu0
  %v1697 = vmul.f32 %v1671, 0.35355338
  %v1698 = vmul.f32 %v1674, 0.35355338
  %v1699 = vmul.f32 %v1677, 0.35355338
  %v1700 = vmul.f32 %v1680, 0.35355338
  %v1701 = vmul.f32 %v1683, 0.35355338
  %v1702 = vmul.f32 %v1686, 0.35355338
  %v1703 = vmul.f32 %v1689, 0.35355338
  %v1704 = vmul.f32 %v1692, 0.35355338
  %v1705 = vmul.f32 %v1695, 0.35355338
  %v1706 = vsel %vm1006, %v1697, -inf
  %1707 = vmax.xlane.f32.xlu0 %v1706
  %v1708 = vpop.xlane.xlu0 %1707
  %v1709 = vsel %vm1006, %v1698, -inf
  %1710 = vmax.xlane.f32.xlu0 %v1709
  %v1711 = vpop.xlane.xlu0 %1710
  %v1712 = vsel %vm1006, %v1699, -inf
  %1713 = vmax.xlane.f32.xlu0 %v1712
  %v1714 = vpop.xlane.xlu0 %1713
  %v1715 = vsel %vm1006, %v1700, -inf
  %1716 = vmax.xlane.f32.xlu0 %v1715
  %v1717 = vpop.xlane.xlu0 %1716
  %v1718 = vsel %vm1006, %v1701, -inf
  %1719 = vmax.xlane.f32.xlu0 %v1718
  %v1720 = vpop.xlane.xlu0 %1719
  %v1721 = vsel %vm1006, %v1702, -inf
  %1722 = vmax.xlane.f32.xlu0 %v1721
  %v1723 = vpop.xlane.xlu0 %1722
  %v1724 = vsel %vm1006, %v1703, -inf
  %1725 = vmax.xlane.f32.xlu0 %v1724
  %v1726 = vpop.xlane.xlu0 %1725
  %v1727 = vsel %vm1006, %v1704, -inf
  %1728 = vmax.xlane.f32.xlu0 %v1727
  %v1729 = vpop.xlane.xlu0 %1728
  %v1730 = vsel %vm1006, %v1705, -inf
  %1731 = vmax.xlane.f32.xlu0 %v1730
  %v1732 = vpop.xlane.xlu0 %1731
  %v1733 = vsub.f32 %v1697, %v1708
  %v1734 = vsub.f32 %v1698, %v1711
  %v1735 = vsub.f32 %v1699, %v1714
  %v1736 = vsub.f32 %v1700, %v1717
  %v1737 = vsub.f32 %v1701, %v1720
  %v1738 = vsub.f32 %v1702, %v1723
  %v1739 = vsub.f32 %v1703, %v1726
  %v1740 = vsub.f32 %v1704, %v1729
  %v1741 = vsub.f32 %v1705, %v1732
  %v1742 = vmul.f32 %v1733, 1.442695
  %v1743 = vpow.pop %v1742
  %v1744 = vmul.f32 %v1734, 1.442695
  %v1745 = vpow.pop %v1744
  %v1746 = vmul.f32 %v1735, 1.442695
  %v1747 = vpow.pop %v1746
  %v1748 = vmul.f32 %v1736, 1.442695
  %v1749 = vpow.pop %v1748
  %v1750 = vmul.f32 %v1737, 1.442695
  %v1751 = vpow.pop %v1750
  %v1752 = vmul.f32 %v1738, 1.442695
  %v1753 = vpow.pop %v1752
  %v1754 = vmul.f32 %v1739, 1.442695
  %v1755 = vpow.pop %v1754
  %v1756 = vmul.f32 %v1740, 1.442695
  %v1757 = vpow.pop %v1756
  %v1758 = vmul.f32 %v1741, 1.442695
  %v1759 = vpow.pop %v1758
  %v1760 = vsel %vm1006, %v1743, 0.0
  %1761 = vadd.xlane.f32.xlu0 %v1760
  %v1762 = vpop.xlane.xlu0 %1761
  %v1763 = vsel %vm1006, %v1745, 0.0
  %1764 = vadd.xlane.f32.xlu0 %v1763
  %v1765 = vpop.xlane.xlu0 %1764
  %v1766 = vsel %vm1006, %v1747, 0.0
  %1767 = vadd.xlane.f32.xlu0 %v1766
  %v1768 = vpop.xlane.xlu0 %1767
  %v1769 = vsel %vm1006, %v1749, 0.0
  %1770 = vadd.xlane.f32.xlu0 %v1769
  %v1771 = vpop.xlane.xlu0 %1770
  %v1772 = vsel %vm1006, %v1751, 0.0
  %1773 = vadd.xlane.f32.xlu0 %v1772
  %v1774 = vpop.xlane.xlu0 %1773
  %v1775 = vsel %vm1006, %v1753, 0.0
  %1776 = vadd.xlane.f32.xlu0 %v1775
  %v1777 = vpop.xlane.xlu0 %1776
  %v1778 = vsel %vm1006, %v1755, 0.0
  %1779 = vadd.xlane.f32.xlu0 %v1778
  %v1780 = vpop.xlane.xlu0 %1779
  %v1781 = vsel %vm1006, %v1757, 0.0
  %1782 = vadd.xlane.f32.xlu0 %v1781
  %v1783 = vpop.xlane.xlu0 %1782
  %v1784 = vsel %vm1006, %v1759, 0.0
  %1785 = vadd.xlane.f32.xlu0 %v1784
  %v1786 = vpop.xlane.xlu0 %1785
  %v1787 = vrcp.pop %v1762
  %v1788 = vrcp.pop %v1765
  %v1789 = vrcp.pop %v1768
  %v1790 = vrcp.pop %v1771
  %v1791 = vrcp.pop %v1774
  %v1792 = vrcp.pop %v1777
  %v1793 = vrcp.pop %v1780
  %v1794 = vrcp.pop %v1783
  %v1795 = vrcp.pop %v1786
  %v1796 = vmul.f32 %v1743, %v1787
  %v1797 = vmul.f32 %v1745, %v1788
  %v1798 = vmul.f32 %v1747, %v1789
  %v1799 = vmul.f32 %v1749, %v1790
  %v1800 = vmul.f32 %v1751, %v1791
  %v1801 = vmul.f32 %v1753, %v1792
  %v1802 = vmul.f32 %v1755, %v1793
  %v1803 = vmul.f32 %v1757, %v1794
  %v1804 = vmul.f32 %v1759, %v1795
  %1805 = vrot.lane.b32.xlu0 %v836, 48
  %v1806 = vpop.permute.xlu0 %1805
  %1807 = vrot.lane.b32.xlu0 %v839, 48
  %v1808 = vpop.permute.xlu0 %1807
  %1809 = vrot.lane.b32.xlu0 %v842, 48
  %v1810 = vpop.permute.xlu0 %1809
  %1811 = vrot.lane.b32.xlu0 %v845, 48
  %v1812 = vpop.permute.xlu0 %1811
  %1813 = vrot.lane.b32.xlu0 %v848, 48
  %v1814 = vpop.permute.xlu0 %1813
  %1815 = vrot.lane.b32.xlu0 %v851, 48
  %v1816 = vpop.permute.xlu0 %1815
  %1817 = vrot.lane.b32.xlu0 %v854, 48
  %v1818 = vpop.permute.xlu0 %1817
  %1819 = vrot.lane.b32.xlu0 %v857, 48
  %v1820 = vpop.permute.xlu0 %1819
  %1821 = vrot.lane.b32.xlu0 %v860, 48
  %v1822 = vpop.permute.xlu0 %1821
  %v1833 = vsel %vm1006, %v1796, 0
  %v1836 = vsel %vm1006, %v1797, 0
  %v1839 = vsel %vm1006, %v1798, 0
  %v1842 = vsel %vm1006, %v1799, 0
  %v1845 = vsel %vm1006, %v1800, 0
  %v1848 = vsel %vm1006, %v1801, 0
  %v1851 = vsel %vm1006, %v1802, 0
  %v1854 = vsel %vm1006, %v1803, 0
  %v1857 = vsel %vm1006, %v1804, 0
  %1859 = vmatpush.msra.mxu0 0.0
  %1860 = vmatpush.msra.mxu0 0.0
  %1861 = vmatpush.msra.mxu0 0.0
  %1862 = vmatpush.msra.mxu0 0.0
  %1863 = vmatpush.msra.mxu0 0.0
  %1864 = vmatpush.msra.mxu0 0.0
  %1865 = vmatpush.msra.mxu0 0.0
  %1866 = vmatpush.msra.mxu0 %v1822
  %1867 = vmatpush.msra.mxu0 %v1820
  %1868 = vmatpush.msra.mxu0 %v1818
  %1869 = vmatpush.msra.mxu0 %v1816
  %1870 = vmatpush.msra.mxu0 %v1814
  %1871 = vmatpush.msra.mxu0 %v1812
  %1872 = vmatpush.msra.mxu0 %v1810
  %1873 = vmatpush.msra.mxu0 %v1808
  %1874 = vmatpush.msra.mxu0 %v1806
  %1875 = vmatmul.f32.gmra.mxu0 %v1833
  %v1876 = vpop.f32.mrf.mxu0
  %v1877 = vadd.f32 0.0, %v1876
  %1878 = vmatmul.f32.gmra.mxu0 %v1836
  %v1879 = vpop.f32.mrf.mxu0
  %v1880 = vadd.f32 0.0, %v1879
  %1881 = vmatmul.f32.gmra.mxu0 %v1839
  %v1882 = vpop.f32.mrf.mxu0
  %v1883 = vadd.f32 0.0, %v1882
  %1884 = vmatmul.f32.gmra.mxu0 %v1842
  %v1885 = vpop.f32.mrf.mxu0
  %v1886 = vadd.f32 0.0, %v1885
  %1887 = vmatmul.f32.gmra.mxu0 %v1845
  %v1888 = vpop.f32.mrf.mxu0
  %v1889 = vadd.f32 0.0, %v1888
  %1890 = vmatmul.f32.gmra.mxu0 %v1848
  %v1891 = vpop.f32.mrf.mxu0
  %v1892 = vadd.f32 0.0, %v1891
  %1893 = vmatmul.f32.gmra.mxu0 %v1851
  %v1894 = vpop.f32.mrf.mxu0
  %v1895 = vadd.f32 0.0, %v1894
  %1896 = vmatmul.f32.gmra.mxu0 %v1854
  %v1897 = vpop.f32.mrf.mxu0
  %v1898 = vadd.f32 0.0, %v1897
  %1899 = vmatmul.f32.gmra.mxu0 %v1857
  %v1900 = vpop.f32.mrf.mxu0
  %v1901 = vadd.f32 0.0, %v1900
  %1902 = vdwg.mxu0
  %1912 = vrot.lane.b32.xlu0 %v1877, 16
  %v1913 = vpop.permute.xlu0 %1912
  %1914 = vrot.lane.b32.xlu0 %v1880, 16
  %v1915 = vpop.permute.xlu0 %1914
  %1916 = vrot.lane.b32.xlu0 %v1883, 16
  %v1917 = vpop.permute.xlu0 %1916
  %1918 = vrot.lane.b32.xlu0 %v1886, 16
  %v1919 = vpop.permute.xlu0 %1918
  %1920 = vrot.lane.b32.xlu0 %v1889, 16
  %v1921 = vpop.permute.xlu0 %1920
  %1922 = vrot.lane.b32.xlu0 %v1892, 16
  %v1923 = vpop.permute.xlu0 %1922
  %1924 = vrot.lane.b32.xlu0 %v1895, 16
  %v1925 = vpop.permute.xlu0 %1924
  %1926 = vrot.lane.b32.xlu0 %v1898, 16
  %v1927 = vpop.permute.xlu0 %1926
  %1928 = vrot.lane.b32.xlu0 %v1901, 16
  %v1929 = vpop.permute.xlu0 %1928
  %vm1939 = vcmask 195712
  %1940 = vst.msk [vmem:[#allocation3] sm:$0xff] %vm1939, %v1913
  %1941 = vst.msk [vmem:[#allocation3 + $0x8] sm:$0xff] %vm1939, %v1915
  %1942 = vst.msk [vmem:[#allocation3 + $0x10] sm:$0xff] %vm1939, %v1917
  %1943 = vst.msk [vmem:[#allocation3 + $0x18] sm:$0xff] %vm1939, %v1919
  %1944 = vst.msk [vmem:[#allocation3 + $0x20] sm:$0xff] %vm1939, %v1921
  %1945 = vst.msk [vmem:[#allocation3 + $0x28] sm:$0xff] %vm1939, %v1923
  %1946 = vst.msk [vmem:[#allocation3 + $0x30] sm:$0xff] %vm1939, %v1925
  %1947 = vst.msk [vmem:[#allocation3 + $0x38] sm:$0xff] %vm1939, %v1927
  %1948 = vst.msk [vmem:[#allocation3 + $0x40] sm:$0xff] %vm1939, %v1929
  %1949 = vrot.lane.b32.xlu0 %v836, 104
  %v1950 = vpop.permute.xlu0 %1949
  %1951 = vrot.lane.b32.xlu0 %v839, 104
  %v1952 = vpop.permute.xlu0 %1951
  %1953 = vrot.lane.b32.xlu0 %v842, 104
  %v1954 = vpop.permute.xlu0 %1953
  %1955 = vrot.lane.b32.xlu0 %v845, 104
  %v1956 = vpop.permute.xlu0 %1955
  %1957 = vrot.lane.b32.xlu0 %v848, 104
  %v1958 = vpop.permute.xlu0 %1957
  %1959 = vrot.lane.b32.xlu0 %v851, 104
  %v1960 = vpop.permute.xlu0 %1959
  %1961 = vrot.lane.b32.xlu0 %v854, 104
  %v1962 = vpop.permute.xlu0 %1961
  %1963 = vrot.lane.b32.xlu0 %v857, 104
  %v1964 = vpop.permute.xlu0 %1963
  %1965 = vrot.lane.b32.xlu0 %v860, 104
  %v1966 = vpop.permute.xlu0 %1965
  %1967 = vrot.lane.b32.xlu0 %v836, 72
  %v1968 = vpop.permute.xlu0 %1967
  %1969 = vrot.lane.b32.xlu0 %v839, 72
  %v1970 = vpop.permute.xlu0 %1969
  %1971 = vrot.lane.b32.xlu0 %v842, 72
  %v1972 = vpop.permute.xlu0 %1971
  %1973 = vrot.lane.b32.xlu0 %v845, 72
  %v1974 = vpop.permute.xlu0 %1973
  %1975 = vrot.lane.b32.xlu0 %v848, 72
  %v1976 = vpop.permute.xlu0 %1975
  %1977 = vrot.lane.b32.xlu0 %v851, 72
  %v1978 = vpop.permute.xlu0 %1977
  %1979 = vrot.lane.b32.xlu0 %v854, 72
  %v1980 = vpop.permute.xlu0 %1979
  %1981 = vrot.lane.b32.xlu0 %v857, 72
  %v1982 = vpop.permute.xlu0 %1981
  %1983 = vrot.lane.b32.xlu0 %v860, 72
  %v1984 = vpop.permute.xlu0 %1983
  %v1985 = vsel %vm916, %v1950, 0
  %v1987 = vsel %vm916, %v1952, 0
  %v1989 = vsel %vm916, %v1954, 0
  %v1991 = vsel %vm916, %v1956, 0
  %v1993 = vsel %vm916, %v1958, 0
  %v1995 = vsel %vm916, %v1960, 0
  %v1997 = vsel %vm916, %v1962, 0
  %v1999 = vsel %vm916, %v1964, 0
  %v2001 = vsel %vm916, %v1966, 0
  %v2003 = vsel %vm916, %v1968, 0
  %v2005 = vsel %vm916, %v1970, 0
  %v2007 = vsel %vm916, %v1972, 0
  %v2009 = vsel %vm916, %v1974, 0
  %v2011 = vsel %vm916, %v1976, 0
  %v2013 = vsel %vm916, %v1978, 0
  %v2015 = vsel %vm916, %v1980, 0
  %v2017 = vsel %vm916, %v1982, 0
  %v2019 = vsel %vm916, %v1984, 0
  %2021 = vmatpush.xpose.msra.mxu0 0.0
  %2022 = vmatpush.xpose.msra.mxu0 0.0
  %2023 = vmatpush.xpose.msra.mxu0 0.0
  %2024 = vmatpush.xpose.msra.mxu0 0.0
  %2025 = vmatpush.xpose.msra.mxu0 0.0
  %2026 = vmatpush.xpose.msra.mxu0 0.0
  %2027 = vmatpush.xpose.msra.mxu0 0.0
  %2028 = vmatpush.xpose.msra.mxu0 %v2019
  %2029 = vmatpush.xpose.msra.mxu0 %v2017
  %2030 = vmatpush.xpose.msra.mxu0 %v2015
  %2031 = vmatpush.xpose.msra.mxu0 %v2013
  %2032 = vmatpush.xpose.msra.mxu0 %v2011
  %2033 = vmatpush.xpose.msra.mxu0 %v2009
  %2034 = vmatpush.xpose.msra.mxu0 %v2007
  %2035 = vmatpush.xpose.msra.mxu0 %v2005
  %2036 = vmatpush.xpose.msra.mxu0 %v2003
  %2037 = vmatmul.f32.gmra.mxu0 %v1985
  %v2038 = vpop.f32.mrf.mxu0
  %v2039 = vadd.f32 0.0, %v2038
  %2040 = vmatmul.f32.gmra.mxu0 %v1987
  %v2041 = vpop.f32.mrf.mxu0
  %v2042 = vadd.f32 0.0, %v2041
  %2043 = vmatmul.f32.gmra.mxu0 %v1989
  %v2044 = vpop.f32.mrf.mxu0
  %v2045 = vadd.f32 0.0, %v2044
  %2046 = vmatmul.f32.gmra.mxu0 %v1991
  %v2047 = vpop.f32.mrf.mxu0
  %v2048 = vadd.f32 0.0, %v2047
  %2049 = vmatmul.f32.gmra.mxu0 %v1993
  %v2050 = vpop.f32.mrf.mxu0
  %v2051 = vadd.f32 0.0, %v2050
  %2052 = vmatmul.f32.gmra.mxu0 %v1995
  %v2053 = vpop.f32.mrf.mxu0
  %v2054 = vadd.f32 0.0, %v2053
  %2055 = vmatmul.f32.gmra.mxu0 %v1997
  %v2056 = vpop.f32.mrf.mxu0
  %v2057 = vadd.f32 0.0, %v2056
  %2058 = vmatmul.f32.gmra.mxu0 %v1999
  %v2059 = vpop.f32.mrf.mxu0
  %v2060 = vadd.f32 0.0, %v2059
  %2061 = vmatmul.f32.gmra.mxu0 %v2001
  %v2062 = vpop.f32.mrf.mxu0
  %v2063 = vadd.f32 0.0, %v2062
  %2064 = vdwg.mxu0
  %v2065 = vmul.f32 %v2039, 0.35355338
  %v2066 = vmul.f32 %v2042, 0.35355338
  %v2067 = vmul.f32 %v2045, 0.35355338
  %v2068 = vmul.f32 %v2048, 0.35355338
  %v2069 = vmul.f32 %v2051, 0.35355338
  %v2070 = vmul.f32 %v2054, 0.35355338
  %v2071 = vmul.f32 %v2057, 0.35355338
  %v2072 = vmul.f32 %v2060, 0.35355338
  %v2073 = vmul.f32 %v2063, 0.35355338
  %v2074 = vsel %vm1006, %v2065, -inf
  %2075 = vmax.xlane.f32.xlu0 %v2074
  %v2076 = vpop.xlane.xlu0 %2075
  %v2077 = vsel %vm1006, %v2066, -inf
  %2078 = vmax.xlane.f32.xlu0 %v2077
  %v2079 = vpop.xlane.xlu0 %2078
  %v2080 = vsel %vm1006, %v2067, -inf
  %2081 = vmax.xlane.f32.xlu0 %v2080
  %v2082 = vpop.xlane.xlu0 %2081
  %v2083 = vsel %vm1006, %v2068, -inf
  %2084 = vmax.xlane.f32.xlu0 %v2083
  %v2085 = vpop.xlane.xlu0 %2084
  %v2086 = vsel %vm1006, %v2069, -inf
  %2087 = vmax.xlane.f32.xlu0 %v2086
  %v2088 = vpop.xlane.xlu0 %2087
  %v2089 = vsel %vm1006, %v2070, -inf
  %2090 = vmax.xlane.f32.xlu0 %v2089
  %v2091 = vpop.xlane.xlu0 %2090
  %v2092 = vsel %vm1006, %v2071, -inf
  %2093 = vmax.xlane.f32.xlu0 %v2092
  %v2094 = vpop.xlane.xlu0 %2093
  %v2095 = vsel %vm1006, %v2072, -inf
  %2096 = vmax.xlane.f32.xlu0 %v2095
  %v2097 = vpop.xlane.xlu0 %2096
  %v2098 = vsel %vm1006, %v2073, -inf
  %2099 = vmax.xlane.f32.xlu0 %v2098
  %v2100 = vpop.xlane.xlu0 %2099
  %v2101 = vsub.f32 %v2065, %v2076
  %v2102 = vsub.f32 %v2066, %v2079
  %v2103 = vsub.f32 %v2067, %v2082
  %v2104 = vsub.f32 %v2068, %v2085
  %v2105 = vsub.f32 %v2069, %v2088
  %v2106 = vsub.f32 %v2070, %v2091
  %v2107 = vsub.f32 %v2071, %v2094
  %v2108 = vsub.f32 %v2072, %v2097
  %v2109 = vsub.f32 %v2073, %v2100
  %v2110 = vmul.f32 %v2101, 1.442695
  %v2111 = vpow.pop %v2110
  %v2112 = vmul.f32 %v2102, 1.442695
  %v2113 = vpow.pop %v2112
  %v2114 = vmul.f32 %v2103, 1.442695
  %v2115 = vpow.pop %v2114
  %v2116 = vmul.f32 %v2104, 1.442695
  %v2117 = vpow.pop %v2116
  %v2118 = vmul.f32 %v2105, 1.442695
  %v2119 = vpow.pop %v2118
  %v2120 = vmul.f32 %v2106, 1.442695
  %v2121 = vpow.pop %v2120
  %v2122 = vmul.f32 %v2107, 1.442695
  %v2123 = vpow.pop %v2122
  %v2124 = vmul.f32 %v2108, 1.442695
  %v2125 = vpow.pop %v2124
  %v2126 = vmul.f32 %v2109, 1.442695
  %v2127 = vpow.pop %v2126
  %v2128 = vsel %vm1006, %v2111, 0.0
  %2129 = vadd.xlane.f32.xlu0 %v2128
  %v2130 = vpop.xlane.xlu0 %2129
  %v2131 = vsel %vm1006, %v2113, 0.0
  %2132 = vadd.xlane.f32.xlu0 %v2131
  %v2133 = vpop.xlane.xlu0 %2132
  %v2134 = vsel %vm1006, %v2115, 0.0
  %2135 = vadd.xlane.f32.xlu0 %v2134
  %v2136 = vpop.xlane.xlu0 %2135
  %v2137 = vsel %vm1006, %v2117, 0.0
  %2138 = vadd.xlane.f32.xlu0 %v2137
  %v2139 = vpop.xlane.xlu0 %2138
  %v2140 = vsel %vm1006, %v2119, 0.0
  %2141 = vadd.xlane.f32.xlu0 %v2140
  %v2142 = vpop.xlane.xlu0 %2141
  %v2143 = vsel %vm1006, %v2121, 0.0
  %2144 = vadd.xlane.f32.xlu0 %v2143
  %v2145 = vpop.xlane.xlu0 %2144
  %v2146 = vsel %vm1006, %v2123, 0.0
  %2147 = vadd.xlane.f32.xlu0 %v2146
  %v2148 = vpop.xlane.xlu0 %2147
  %v2149 = vsel %vm1006, %v2125, 0.0
  %2150 = vadd.xlane.f32.xlu0 %v2149
  %v2151 = vpop.xlane.xlu0 %2150
  %v2152 = vsel %vm1006, %v2127, 0.0
  %2153 = vadd.xlane.f32.xlu0 %v2152
  %v2154 = vpop.xlane.xlu0 %2153
  %v2155 = vrcp.pop %v2130
  %v2156 = vrcp.pop %v2133
  %v2157 = vrcp.pop %v2136
  %v2158 = vrcp.pop %v2139
  %v2159 = vrcp.pop %v2142
  %v2160 = vrcp.pop %v2145
  %v2161 = vrcp.pop %v2148
  %v2162 = vrcp.pop %v2151
  %v2163 = vrcp.pop %v2154
  %v2164 = vmul.f32 %v2111, %v2155
  %v2165 = vmul.f32 %v2113, %v2156
  %v2166 = vmul.f32 %v2115, %v2157
  %v2167 = vmul.f32 %v2117, %v2158
  %v2168 = vmul.f32 %v2119, %v2159
  %v2169 = vmul.f32 %v2121, %v2160
  %v2170 = vmul.f32 %v2123, %v2161
  %v2171 = vmul.f32 %v2125, %v2162
  %v2172 = vmul.f32 %v2127, %v2163
  %2173 = vrot.lane.b32.xlu0 %v836, 40
  %v2174 = vpop.permute.xlu0 %2173
  %2175 = vrot.lane.b32.xlu0 %v839, 40
  %v2176 = vpop.permute.xlu0 %2175
  %2177 = vrot.lane.b32.xlu0 %v842, 40
  %v2178 = vpop.permute.xlu0 %2177
  %2179 = vrot.lane.b32.xlu0 %v845, 40
  %v2180 = vpop.permute.xlu0 %2179
  %2181 = vrot.lane.b32.xlu0 %v848, 40
  %v2182 = vpop.permute.xlu0 %2181
  %2183 = vrot.lane.b32.xlu0 %v851, 40
  %v2184 = vpop.permute.xlu0 %2183
  %2185 = vrot.lane.b32.xlu0 %v854, 40
  %v2186 = vpop.permute.xlu0 %2185
  %2187 = vrot.lane.b32.xlu0 %v857, 40
  %v2188 = vpop.permute.xlu0 %2187
  %2189 = vrot.lane.b32.xlu0 %v860, 40
  %v2190 = vpop.permute.xlu0 %2189
  %v2201 = vsel %vm1006, %v2164, 0
  %v2204 = vsel %vm1006, %v2165, 0
  %v2207 = vsel %vm1006, %v2166, 0
  %v2210 = vsel %vm1006, %v2167, 0
  %v2213 = vsel %vm1006, %v2168, 0
  %v2216 = vsel %vm1006, %v2169, 0
  %v2219 = vsel %vm1006, %v2170, 0
  %v2222 = vsel %vm1006, %v2171, 0
  %v2225 = vsel %vm1006, %v2172, 0
  %2227 = vmatpush.msra.mxu0 0.0
  %2228 = vmatpush.msra.mxu0 0.0
  %2229 = vmatpush.msra.mxu0 0.0
  %2230 = vmatpush.msra.mxu0 0.0
  %2231 = vmatpush.msra.mxu0 0.0
  %2232 = vmatpush.msra.mxu0 0.0
  %2233 = vmatpush.msra.mxu0 0.0
  %2234 = vmatpush.msra.mxu0 %v2190
  %2235 = vmatpush.msra.mxu0 %v2188
  %2236 = vmatpush.msra.mxu0 %v2186
  %2237 = vmatpush.msra.mxu0 %v2184
  %2238 = vmatpush.msra.mxu0 %v2182
  %2239 = vmatpush.msra.mxu0 %v2180
  %2240 = vmatpush.msra.mxu0 %v2178
  %2241 = vmatpush.msra.mxu0 %v2176
  %2242 = vmatpush.msra.mxu0 %v2174
  %2243 = vmatmul.f32.gmra.mxu0 %v2201
  %v2244 = vpop.f32.mrf.mxu0
  %v2245 = vadd.f32 0.0, %v2244
  %2246 = vmatmul.f32.gmra.mxu0 %v2204
  %v2247 = vpop.f32.mrf.mxu0
  %v2248 = vadd.f32 0.0, %v2247
  %2249 = vmatmul.f32.gmra.mxu0 %v2207
  %v2250 = vpop.f32.mrf.mxu0
  %v2251 = vadd.f32 0.0, %v2250
  %2252 = vmatmul.f32.gmra.mxu0 %v2210
  %v2253 = vpop.f32.mrf.mxu0
  %v2254 = vadd.f32 0.0, %v2253
  %2255 = vmatmul.f32.gmra.mxu0 %v2213
  %v2256 = vpop.f32.mrf.mxu0
  %v2257 = vadd.f32 0.0, %v2256
  %2258 = vmatmul.f32.gmra.mxu0 %v2216
  %v2259 = vpop.f32.mrf.mxu0
  %v2260 = vadd.f32 0.0, %v2259
  %2261 = vmatmul.f32.gmra.mxu0 %v2219
  %v2262 = vpop.f32.mrf.mxu0
  %v2263 = vadd.f32 0.0, %v2262
  %2264 = vmatmul.f32.gmra.mxu0 %v2222
  %v2265 = vpop.f32.mrf.mxu0
  %v2266 = vadd.f32 0.0, %v2265
  %2267 = vmatmul.f32.gmra.mxu0 %v2225
  %v2268 = vpop.f32.mrf.mxu0
  %v2269 = vadd.f32 0.0, %v2268
  %2270 = vdwg.mxu0
  %2280 = vrot.lane.b32.xlu0 %v2245, 24
  %v2281 = vpop.permute.xlu0 %2280
  %2282 = vrot.lane.b32.xlu0 %v2248, 24
  %v2283 = vpop.permute.xlu0 %2282
  %2284 = vrot.lane.b32.xlu0 %v2251, 24
  %v2285 = vpop.permute.xlu0 %2284
  %2286 = vrot.lane.b32.xlu0 %v2254, 24
  %v2287 = vpop.permute.xlu0 %2286
  %2288 = vrot.lane.b32.xlu0 %v2257, 24
  %v2289 = vpop.permute.xlu0 %2288
  %2290 = vrot.lane.b32.xlu0 %v2260, 24
  %v2291 = vpop.permute.xlu0 %2290
  %2292 = vrot.lane.b32.xlu0 %v2263, 24
  %v2293 = vpop.permute.xlu0 %2292
  %2294 = vrot.lane.b32.xlu0 %v2266, 24
  %v2295 = vpop.permute.xlu0 %2294
  %2296 = vrot.lane.b32.xlu0 %v2269, 24
  %v2297 = vpop.permute.xlu0 %2296
  %vm2307 = vcmask 261312
  %2308 = vst.msk [vmem:[#allocation3] sm:$0xff] %vm2307, %v2281
  %2309 = vst.msk [vmem:[#allocation3 + $0x8] sm:$0xff] %vm2307, %v2283
  %2310 = vst.msk [vmem:[#allocation3 + $0x10] sm:$0xff] %vm2307, %v2285
  %2311 = vst.msk [vmem:[#allocation3 + $0x18] sm:$0xff] %vm2307, %v2287
  %2312 = vst.msk [vmem:[#allocation3 + $0x20] sm:$0xff] %vm2307, %v2289
  %2313 = vst.msk [vmem:[#allocation3 + $0x28] sm:$0xff] %vm2307, %v2291
  %2314 = vst.msk [vmem:[#allocation3 + $0x30] sm:$0xff] %vm2307, %v2293
  %2315 = vst.msk [vmem:[#allocation3 + $0x38] sm:$0xff] %vm2307, %v2295
  %2316 = vst.msk [vmem:[#allocation3 + $0x40] sm:$0xff] %vm2307, %v2297
  %2326 = vrot.lane.b32.xlu0 %v863, 96
  %v2327 = vpop.permute.xlu0 %2326
  %2328 = vrot.lane.b32.xlu0 %v866, 96
  %v2329 = vpop.permute.xlu0 %2328
  %2330 = vrot.lane.b32.xlu0 %v869, 96
  %v2331 = vpop.permute.xlu0 %2330
  %2332 = vrot.lane.b32.xlu0 %v872, 96
  %v2333 = vpop.permute.xlu0 %2332
  %2334 = vrot.lane.b32.xlu0 %v875, 96
  %v2335 = vpop.permute.xlu0 %2334
  %2336 = vrot.lane.b32.xlu0 %v878, 96
  %v2337 = vpop.permute.xlu0 %2336
  %2338 = vrot.lane.b32.xlu0 %v881, 96
  %v2339 = vpop.permute.xlu0 %2338
  %2340 = vrot.lane.b32.xlu0 %v884, 96
  %v2341 = vpop.permute.xlu0 %2340
  %2342 = vrot.lane.b32.xlu0 %v887, 96
  %v2343 = vpop.permute.xlu0 %2342
  %v2344 = vsel %vm916, %v863, 0
  %v2346 = vsel %vm916, %v866, 0
  %v2348 = vsel %vm916, %v869, 0
  %v2350 = vsel %vm916, %v872, 0
  %v2352 = vsel %vm916, %v875, 0
  %v2354 = vsel %vm916, %v878, 0
  %v2356 = vsel %vm916, %v881, 0
  %v2358 = vsel %vm916, %v884, 0
  %v2360 = vsel %vm916, %v887, 0
  %v2362 = vsel %vm916, %v2327, 0
  %v2364 = vsel %vm916, %v2329, 0
  %v2366 = vsel %vm916, %v2331, 0
  %v2368 = vsel %vm916, %v2333, 0
  %v2370 = vsel %vm916, %v2335, 0
  %v2372 = vsel %vm916, %v2337, 0
  %v2374 = vsel %vm916, %v2339, 0
  %v2376 = vsel %vm916, %v2341, 0
  %v2378 = vsel %vm916, %v2343, 0
  %2380 = vmatpush.xpose.msra.mxu0 0.0
  %2381 = vmatpush.xpose.msra.mxu0 0.0
  %2382 = vmatpush.xpose.msra.mxu0 0.0
  %2383 = vmatpush.xpose.msra.mxu0 0.0
  %2384 = vmatpush.xpose.msra.mxu0 0.0
  %2385 = vmatpush.xpose.msra.mxu0 0.0
  %2386 = vmatpush.xpose.msra.mxu0 0.0
  %2387 = vmatpush.xpose.msra.mxu0 %v2378
  %2388 = vmatpush.xpose.msra.mxu0 %v2376
  %2389 = vmatpush.xpose.msra.mxu0 %v2374
  %2390 = vmatpush.xpose.msra.mxu0 %v2372
  %2391 = vmatpush.xpose.msra.mxu0 %v2370
  %2392 = vmatpush.xpose.msra.mxu0 %v2368
  %2393 = vmatpush.xpose.msra.mxu0 %v2366
  %2394 = vmatpush.xpose.msra.mxu0 %v2364
  %2395 = vmatpush.xpose.msra.mxu0 %v2362
  %2396 = vmatmul.f32.gmra.mxu0 %v2344
  %v2397 = vpop.f32.mrf.mxu0
  %v2398 = vadd.f32 0.0, %v2397
  %2399 = vmatmul.f32.gmra.mxu0 %v2346
  %v2400 = vpop.f32.mrf.mxu0
  %v2401 = vadd.f32 0.0, %v2400
  %2402 = vmatmul.f32.gmra.mxu0 %v2348
  %v2403 = vpop.f32.mrf.mxu0
  %v2404 = vadd.f32 0.0, %v2403
  %2405 = vmatmul.f32.gmra.mxu0 %v2350
  %v2406 = vpop.f32.mrf.mxu0
  %v2407 = vadd.f32 0.0, %v2406
  %2408 = vmatmul.f32.gmra.mxu0 %v2352
  %v2409 = vpop.f32.mrf.mxu0
  %v2410 = vadd.f32 0.0, %v2409
  %2411 = vmatmul.f32.gmra.mxu0 %v2354
  %v2412 = vpop.f32.mrf.mxu0
  %v2413 = vadd.f32 0.0, %v2412
  %2414 = vmatmul.f32.gmra.mxu0 %v2356
  %v2415 = vpop.f32.mrf.mxu0
  %v2416 = vadd.f32 0.0, %v2415
  %2417 = vmatmul.f32.gmra.mxu0 %v2358
  %v2418 = vpop.f32.mrf.mxu0
  %v2419 = vadd.f32 0.0, %v2418
  %2420 = vmatmul.f32.gmra.mxu0 %v2360
  %v2421 = vpop.f32.mrf.mxu0
  %v2422 = vadd.f32 0.0, %v2421
  %2423 = vdwg.mxu0
  %v2424 = vmul.f32 %v2398, 0.35355338
  %v2425 = vmul.f32 %v2401, 0.35355338
  %v2426 = vmul.f32 %v2404, 0.35355338
  %v2427 = vmul.f32 %v2407, 0.35355338
  %v2428 = vmul.f32 %v2410, 0.35355338
  %v2429 = vmul.f32 %v2413, 0.35355338
  %v2430 = vmul.f32 %v2416, 0.35355338
  %v2431 = vmul.f32 %v2419, 0.35355338
  %v2432 = vmul.f32 %v2422, 0.35355338
  %v2433 = vsel %vm1006, %v2424, -inf
  %2434 = vmax.xlane.f32.xlu0 %v2433
  %v2435 = vpop.xlane.xlu0 %2434
  %v2436 = vsel %vm1006, %v2425, -inf
  %2437 = vmax.xlane.f32.xlu0 %v2436
  %v2438 = vpop.xlane.xlu0 %2437
  %v2439 = vsel %vm1006, %v2426, -inf
  %2440 = vmax.xlane.f32.xlu0 %v2439
  %v2441 = vpop.xlane.xlu0 %2440
  %v2442 = vsel %vm1006, %v2427, -inf
  %2443 = vmax.xlane.f32.xlu0 %v2442
  %v2444 = vpop.xlane.xlu0 %2443
  %v2445 = vsel %vm1006, %v2428, -inf
  %2446 = vmax.xlane.f32.xlu0 %v2445
  %v2447 = vpop.xlane.xlu0 %2446
  %v2448 = vsel %vm1006, %v2429, -inf
  %2449 = vmax.xlane.f32.xlu0 %v2448
  %v2450 = vpop.xlane.xlu0 %2449
  %v2451 = vsel %vm1006, %v2430, -inf
  %2452 = vmax.xlane.f32.xlu0 %v2451
  %v2453 = vpop.xlane.xlu0 %2452
  %v2454 = vsel %vm1006, %v2431, -inf
  %2455 = vmax.xlane.f32.xlu0 %v2454
  %v2456 = vpop.xlane.xlu0 %2455
  %v2457 = vsel %vm1006, %v2432, -inf
  %2458 = vmax.xlane.f32.xlu0 %v2457
  %v2459 = vpop.xlane.xlu0 %2458
  %v2460 = vsub.f32 %v2424, %v2435
  %v2461 = vsub.f32 %v2425, %v2438
  %v2462 = vsub.f32 %v2426, %v2441
  %v2463 = vsub.f32 %v2427, %v2444
  %v2464 = vsub.f32 %v2428, %v2447
  %v2465 = vsub.f32 %v2429, %v2450
  %v2466 = vsub.f32 %v2430, %v2453
  %v2467 = vsub.f32 %v2431, %v2456
  %v2468 = vsub.f32 %v2432, %v2459
  %v2469 = vmul.f32 %v2460, 1.442695
  %v2470 = vpow.pop %v2469
  %v2471 = vmul.f32 %v2461, 1.442695
  %v2472 = vpow.pop %v2471
  %v2473 = vmul.f32 %v2462, 1.442695
  %v2474 = vpow.pop %v2473
  %v2475 = vmul.f32 %v2463, 1.442695
  %v2476 = vpow.pop %v2475
  %v2477 = vmul.f32 %v2464, 1.442695
  %v2478 = vpow.pop %v2477
  %v2479 = vmul.f32 %v2465, 1.442695
  %v2480 = vpow.pop %v2479
  %v2481 = vmul.f32 %v2466, 1.442695
  %v2482 = vpow.pop %v2481
  %v2483 = vmul.f32 %v2467, 1.442695
  %v2484 = vpow.pop %v2483
  %v2485 = vmul.f32 %v2468, 1.442695
  %v2486 = vpow.pop %v2485
  %v2487 = vsel %vm1006, %v2470, 0.0
  %2488 = vadd.xlane.f32.xlu0 %v2487
  %v2489 = vpop.xlane.xlu0 %2488
  %v2490 = vsel %vm1006, %v2472, 0.0
  %2491 = vadd.xlane.f32.xlu0 %v2490
  %v2492 = vpop.xlane.xlu0 %2491
  %v2493 = vsel %vm1006, %v2474, 0.0
  %2494 = vadd.xlane.f32.xlu0 %v2493
  %v2495 = vpop.xlane.xlu0 %2494
  %v2496 = vsel %vm1006, %v2476, 0.0
  %2497 = vadd.xlane.f32.xlu0 %v2496
  %v2498 = vpop.xlane.xlu0 %2497
  %v2499 = vsel %vm1006, %v2478, 0.0
  %2500 = vadd.xlane.f32.xlu0 %v2499
  %v2501 = vpop.xlane.xlu0 %2500
  %v2502 = vsel %vm1006, %v2480, 0.0
  %2503 = vadd.xlane.f32.xlu0 %v2502
  %v2504 = vpop.xlane.xlu0 %2503
  %v2505 = vsel %vm1006, %v2482, 0.0
  %2506 = vadd.xlane.f32.xlu0 %v2505
  %v2507 = vpop.xlane.xlu0 %2506
  %v2508 = vsel %vm1006, %v2484, 0.0
  %2509 = vadd.xlane.f32.xlu0 %v2508
  %v2510 = vpop.xlane.xlu0 %2509
  %v2511 = vsel %vm1006, %v2486, 0.0
  %2512 = vadd.xlane.f32.xlu0 %v2511
  %v2513 = vpop.xlane.xlu0 %2512
  %v2514 = vrcp.pop %v2489
  %v2515 = vrcp.pop %v2492
  %v2516 = vrcp.pop %v2495
  %v2517 = vrcp.pop %v2498
  %v2518 = vrcp.pop %v2501
  %v2519 = vrcp.pop %v2504
  %v2520 = vrcp.pop %v2507
  %v2521 = vrcp.pop %v2510
  %v2522 = vrcp.pop %v2513
  %v2523 = vmul.f32 %v2470, %v2514
  %v2524 = vmul.f32 %v2472, %v2515
  %v2525 = vmul.f32 %v2474, %v2516
  %v2526 = vmul.f32 %v2476, %v2517
  %v2527 = vmul.f32 %v2478, %v2518
  %v2528 = vmul.f32 %v2480, %v2519
  %v2529 = vmul.f32 %v2482, %v2520
  %v2530 = vmul.f32 %v2484, %v2521
  %v2531 = vmul.f32 %v2486, %v2522
  %2532 = vrot.lane.b32.xlu0 %v863, 64
  %v2533 = vpop.permute.xlu0 %2532
  %2534 = vrot.lane.b32.xlu0 %v866, 64
  %v2535 = vpop.permute.xlu0 %2534
  %2536 = vrot.lane.b32.xlu0 %v869, 64
  %v2537 = vpop.permute.xlu0 %2536
  %2538 = vrot.lane.b32.xlu0 %v872, 64
  %v2539 = vpop.permute.xlu0 %2538
  %2540 = vrot.lane.b32.xlu0 %v875, 64
  %v2541 = vpop.permute.xlu0 %2540
  %2542 = vrot.lane.b32.xlu0 %v878, 64
  %v2543 = vpop.permute.xlu0 %2542
  %2544 = vrot.lane.b32.xlu0 %v881, 64
  %v2545 = vpop.permute.xlu0 %2544
  %2546 = vrot.lane.b32.xlu0 %v884, 64
  %v2547 = vpop.permute.xlu0 %2546
  %2548 = vrot.lane.b32.xlu0 %v887, 64
  %v2549 = vpop.permute.xlu0 %2548
  %v2560 = vsel %vm1006, %v2523, 0
  %v2563 = vsel %vm1006, %v2524, 0
  %v2566 = vsel %vm1006, %v2525, 0
  %v2569 = vsel %vm1006, %v2526, 0
  %v2572 = vsel %vm1006, %v2527, 0
  %v2575 = vsel %vm1006, %v2528, 0
  %v2578 = vsel %vm1006, %v2529, 0
  %v2581 = vsel %vm1006, %v2530, 0
  %v2584 = vsel %vm1006, %v2531, 0
  %2586 = vmatpush.msra.mxu0 0.0
  %2587 = vmatpush.msra.mxu0 0.0
  %2588 = vmatpush.msra.mxu0 0.0
  %2589 = vmatpush.msra.mxu0 0.0
  %2590 = vmatpush.msra.mxu0 0.0
  %2591 = vmatpush.msra.mxu0 0.0
  %2592 = vmatpush.msra.mxu0 0.0
  %2593 = vmatpush.msra.mxu0 %v2549
  %2594 = vmatpush.msra.mxu0 %v2547
  %2595 = vmatpush.msra.mxu0 %v2545
  %2596 = vmatpush.msra.mxu0 %v2543
  %2597 = vmatpush.msra.mxu0 %v2541
  %2598 = vmatpush.msra.mxu0 %v2539
  %2599 = vmatpush.msra.mxu0 %v2537
  %2600 = vmatpush.msra.mxu0 %v2535
  %2601 = vmatpush.msra.mxu0 %v2533
  %2602 = vmatmul.f32.gmra.mxu0 %v2560
  %v2603 = vpop.f32.mrf.mxu0
  %v2604 = vadd.f32 0.0, %v2603
  %2605 = vmatmul.f32.gmra.mxu0 %v2563
  %v2606 = vpop.f32.mrf.mxu0
  %v2607 = vadd.f32 0.0, %v2606
  %2608 = vmatmul.f32.gmra.mxu0 %v2566
  %v2609 = vpop.f32.mrf.mxu0
  %v2610 = vadd.f32 0.0, %v2609
  %2611 = vmatmul.f32.gmra.mxu0 %v2569
  %v2612 = vpop.f32.mrf.mxu0
  %v2613 = vadd.f32 0.0, %v2612
  %2614 = vmatmul.f32.gmra.mxu0 %v2572
  %v2615 = vpop.f32.mrf.mxu0
  %v2616 = vadd.f32 0.0, %v2615
  %2617 = vmatmul.f32.gmra.mxu0 %v2575
  %v2618 = vpop.f32.mrf.mxu0
  %v2619 = vadd.f32 0.0, %v2618
  %2620 = vmatmul.f32.gmra.mxu0 %v2578
  %v2621 = vpop.f32.mrf.mxu0
  %v2622 = vadd.f32 0.0, %v2621
  %2623 = vmatmul.f32.gmra.mxu0 %v2581
  %v2624 = vpop.f32.mrf.mxu0
  %v2625 = vadd.f32 0.0, %v2624
  %2626 = vmatmul.f32.gmra.mxu0 %v2584
  %v2627 = vpop.f32.mrf.mxu0
  %v2628 = vadd.f32 0.0, %v2627
  %2629 = vdwg.mxu0
  %2630 = vst.msk [vmem:[#allocation3 + $0x48] sm:$0xff] %vm916, %v2604
  %2631 = vst.msk [vmem:[#allocation3 + $0x50] sm:$0xff] %vm916, %v2607
  %2632 = vst.msk [vmem:[#allocation3 + $0x58] sm:$0xff] %vm916, %v2610
  %2633 = vst.msk [vmem:[#allocation3 + $0x60] sm:$0xff] %vm916, %v2613
  %2634 = vst.msk [vmem:[#allocation3 + $0x68] sm:$0xff] %vm916, %v2616
  %2635 = vst.msk [vmem:[#allocation3 + $0x70] sm:$0xff] %vm916, %v2619
  %2636 = vst.msk [vmem:[#allocation3 + $0x78] sm:$0xff] %vm916, %v2622
  %2637 = vst.msk [vmem:[#allocation3 + $0x80] sm:$0xff] %vm916, %v2625
  %2638 = vst.msk [vmem:[#allocation3 + $0x88] sm:$0xff] %vm916, %v2628
  %2639 = vrot.lane.b32.xlu0 %v863, 120
  %v2640 = vpop.permute.xlu0 %2639
  %2641 = vrot.lane.b32.xlu0 %v866, 120
  %v2642 = vpop.permute.xlu0 %2641
  %2643 = vrot.lane.b32.xlu0 %v869, 120
  %v2644 = vpop.permute.xlu0 %2643
  %2645 = vrot.lane.b32.xlu0 %v872, 120
  %v2646 = vpop.permute.xlu0 %2645
  %2647 = vrot.lane.b32.xlu0 %v875, 120
  %v2648 = vpop.permute.xlu0 %2647
  %2649 = vrot.lane.b32.xlu0 %v878, 120
  %v2650 = vpop.permute.xlu0 %2649
  %2651 = vrot.lane.b32.xlu0 %v881, 120
  %v2652 = vpop.permute.xlu0 %2651
  %2653 = vrot.lane.b32.xlu0 %v884, 120
  %v2654 = vpop.permute.xlu0 %2653
  %2655 = vrot.lane.b32.xlu0 %v887, 120
  %v2656 = vpop.permute.xlu0 %2655
  %2657 = vrot.lane.b32.xlu0 %v863, 88
  %v2658 = vpop.permute.xlu0 %2657
  %2659 = vrot.lane.b32.xlu0 %v866, 88
  %v2660 = vpop.permute.xlu0 %2659
  %2661 = vrot.lane.b32.xlu0 %v869, 88
  %v2662 = vpop.permute.xlu0 %2661
  %2663 = vrot.lane.b32.xlu0 %v872, 88
  %v2664 = vpop.permute.xlu0 %2663
  %2665 = vrot.lane.b32.xlu0 %v875, 88
  %v2666 = vpop.permute.xlu0 %2665
  %2667 = vrot.lane.b32.xlu0 %v878, 88
  %v2668 = vpop.permute.xlu0 %2667
  %2669 = vrot.lane.b32.xlu0 %v881, 88
  %v2670 = vpop.permute.xlu0 %2669
  %2671 = vrot.lane.b32.xlu0 %v884, 88
  %v2672 = vpop.permute.xlu0 %2671
  %2673 = vrot.lane.b32.xlu0 %v887, 88
  %v2674 = vpop.permute.xlu0 %2673
  %v2675 = vsel %vm916, %v2640, 0
  %v2677 = vsel %vm916, %v2642, 0
  %v2679 = vsel %vm916, %v2644, 0
  %v2681 = vsel %vm916, %v2646, 0
  %v2683 = vsel %vm916, %v2648, 0
  %v2685 = vsel %vm916, %v2650, 0
  %v2687 = vsel %vm916, %v2652, 0
  %v2689 = vsel %vm916, %v2654, 0
  %v2691 = vsel %vm916, %v2656, 0
  %v2693 = vsel %vm916, %v2658, 0
  %v2695 = vsel %vm916, %v2660, 0
  %v2697 = vsel %vm916, %v2662, 0
  %v2699 = vsel %vm916, %v2664, 0
  %v2701 = vsel %vm916, %v2666, 0
  %v2703 = vsel %vm916, %v2668, 0
  %v2705 = vsel %vm916, %v2670, 0
  %v2707 = vsel %vm916, %v2672, 0
  %v2709 = vsel %vm916, %v2674, 0
  %2711 = vmatpush.xpose.msra.mxu0 0.0
  %2712 = vmatpush.xpose.msra.mxu0 0.0
  %2713 = vmatpush.xpose.msra.mxu0 0.0
  %2714 = vmatpush.xpose.msra.mxu0 0.0
  %2715 = vmatpush.xpose.msra.mxu0 0.0
  %2716 = vmatpush.xpose.msra.mxu0 0.0
  %2717 = vmatpush.xpose.msra.mxu0 0.0
  %2718 = vmatpush.xpose.msra.mxu0 %v2709
  %2719 = vmatpush.xpose.msra.mxu0 %v2707
  %2720 = vmatpush.xpose.msra.mxu0 %v2705
  %2721 = vmatpush.xpose.msra.mxu0 %v2703
  %2722 = vmatpush.xpose.msra.mxu0 %v2701
  %2723 = vmatpush.xpose.msra.mxu0 %v2699
  %2724 = vmatpush.xpose.msra.mxu0 %v2697
  %2725 = vmatpush.xpose.msra.mxu0 %v2695
  %2726 = vmatpush.xpose.msra.mxu0 %v2693
  %2727 = vmatmul.f32.gmra.mxu0 %v2675
  %v2728 = vpop.f32.mrf.mxu0
  %v2729 = vadd.f32 0.0, %v2728
  %2730 = vmatmul.f32.gmra.mxu0 %v2677
  %v2731 = vpop.f32.mrf.mxu0
  %v2732 = vadd.f32 0.0, %v2731
  %2733 = vmatmul.f32.gmra.mxu0 %v2679
  %v2734 = vpop.f32.mrf.mxu0
  %v2735 = vadd.f32 0.0, %v2734
  %2736 = vmatmul.f32.gmra.mxu0 %v2681
  %v2737 = vpop.f32.mrf.mxu0
  %v2738 = vadd.f32 0.0, %v2737
  %2739 = vmatmul.f32.gmra.mxu0 %v2683
  %v2740 = vpop.f32.mrf.mxu0
  %v2741 = vadd.f32 0.0, %v2740
  %2742 = vmatmul.f32.gmra.mxu0 %v2685
  %v2743 = vpop.f32.mrf.mxu0
  %v2744 = vadd.f32 0.0, %v2743
  %2745 = vmatmul.f32.gmra.mxu0 %v2687
  %v2746 = vpop.f32.mrf.mxu0
  %v2747 = vadd.f32 0.0, %v2746
  %2748 = vmatmul.f32.gmra.mxu0 %v2689
  %v2749 = vpop.f32.mrf.mxu0
  %v2750 = vadd.f32 0.0, %v2749
  %2751 = vmatmul.f32.gmra.mxu0 %v2691
  %v2752 = vpop.f32.mrf.mxu0
  %v2753 = vadd.f32 0.0, %v2752
  %2754 = vdwg.mxu0
  %v2755 = vmul.f32 %v2729, 0.35355338
  %v2756 = vmul.f32 %v2732, 0.35355338
  %v2757 = vmul.f32 %v2735, 0.35355338
  %v2758 = vmul.f32 %v2738, 0.35355338
  %v2759 = vmul.f32 %v2741, 0.35355338
  %v2760 = vmul.f32 %v2744, 0.35355338
  %v2761 = vmul.f32 %v2747, 0.35355338
  %v2762 = vmul.f32 %v2750, 0.35355338
  %v2763 = vmul.f32 %v2753, 0.35355338
  %v2764 = vsel %vm1006, %v2755, -inf
  %2765 = vmax.xlane.f32.xlu0 %v2764
  %v2766 = vpop.xlane.xlu0 %2765
  %v2767 = vsel %vm1006, %v2756, -inf
  %2768 = vmax.xlane.f32.xlu0 %v2767
  %v2769 = vpop.xlane.xlu0 %2768
  %v2770 = vsel %vm1006, %v2757, -inf
  %2771 = vmax.xlane.f32.xlu0 %v2770
  %v2772 = vpop.xlane.xlu0 %2771
  %v2773 = vsel %vm1006, %v2758, -inf
  %2774 = vmax.xlane.f32.xlu0 %v2773
  %v2775 = vpop.xlane.xlu0 %2774
  %v2776 = vsel %vm1006, %v2759, -inf
  %2777 = vmax.xlane.f32.xlu0 %v2776
  %v2778 = vpop.xlane.xlu0 %2777
  %v2779 = vsel %vm1006, %v2760, -inf
  %2780 = vmax.xlane.f32.xlu0 %v2779
  %v2781 = vpop.xlane.xlu0 %2780
  %v2782 = vsel %vm1006, %v2761, -inf
  %2783 = vmax.xlane.f32.xlu0 %v2782
  %v2784 = vpop.xlane.xlu0 %2783
  %v2785 = vsel %vm1006, %v2762, -inf
  %2786 = vmax.xlane.f32.xlu0 %v2785
  %v2787 = vpop.xlane.xlu0 %2786
  %v2788 = vsel %vm1006, %v2763, -inf
  %2789 = vmax.xlane.f32.xlu0 %v2788
  %v2790 = vpop.xlane.xlu0 %2789
  %v2791 = vsub.f32 %v2755, %v2766
  %v2792 = vsub.f32 %v2756, %v2769
  %v2793 = vsub.f32 %v2757, %v2772
  %v2794 = vsub.f32 %v2758, %v2775
  %v2795 = vsub.f32 %v2759, %v2778
  %v2796 = vsub.f32 %v2760, %v2781
  %v2797 = vsub.f32 %v2761, %v2784
  %v2798 = vsub.f32 %v2762, %v2787
  %v2799 = vsub.f32 %v2763, %v2790
  %v2800 = vmul.f32 %v2791, 1.442695
  %v2801 = vpow.pop %v2800
  %v2802 = vmul.f32 %v2792, 1.442695
  %v2803 = vpow.pop %v2802
  %v2804 = vmul.f32 %v2793, 1.442695
  %v2805 = vpow.pop %v2804
  %v2806 = vmul.f32 %v2794, 1.442695
  %v2807 = vpow.pop %v2806
  %v2808 = vmul.f32 %v2795, 1.442695
  %v2809 = vpow.pop %v2808
  %v2810 = vmul.f32 %v2796, 1.442695
  %v2811 = vpow.pop %v2810
  %v2812 = vmul.f32 %v2797, 1.442695
  %v2813 = vpow.pop %v2812
  %v2814 = vmul.f32 %v2798, 1.442695
  %v2815 = vpow.pop %v2814
  %v2816 = vmul.f32 %v2799, 1.442695
  %v2817 = vpow.pop %v2816
  %v2818 = vsel %vm1006, %v2801, 0.0
  %2819 = vadd.xlane.f32.xlu0 %v2818
  %v2820 = vpop.xlane.xlu0 %2819
  %v2821 = vsel %vm1006, %v2803, 0.0
  %2822 = vadd.xlane.f32.xlu0 %v2821
  %v2823 = vpop.xlane.xlu0 %2822
  %v2824 = vsel %vm1006, %v2805, 0.0
  %2825 = vadd.xlane.f32.xlu0 %v2824
  %v2826 = vpop.xlane.xlu0 %2825
  %v2827 = vsel %vm1006, %v2807, 0.0
  %2828 = vadd.xlane.f32.xlu0 %v2827
  %v2829 = vpop.xlane.xlu0 %2828
  %v2830 = vsel %vm1006, %v2809, 0.0
  %2831 = vadd.xlane.f32.xlu0 %v2830
  %v2832 = vpop.xlane.xlu0 %2831
  %v2833 = vsel %vm1006, %v2811, 0.0
  %2834 = vadd.xlane.f32.xlu0 %v2833
  %v2835 = vpop.xlane.xlu0 %2834
  %v2836 = vsel %vm1006, %v2813, 0.0
  %2837 = vadd.xlane.f32.xlu0 %v2836
  %v2838 = vpop.xlane.xlu0 %2837
  %v2839 = vsel %vm1006, %v2815, 0.0
  %2840 = vadd.xlane.f32.xlu0 %v2839
  %v2841 = vpop.xlane.xlu0 %2840
  %v2842 = vsel %vm1006, %v2817, 0.0
  %2843 = vadd.xlane.f32.xlu0 %v2842
  %v2844 = vpop.xlane.xlu0 %2843
  %v2845 = vrcp.pop %v2820
  %v2846 = vrcp.pop %v2823
  %v2847 = vrcp.pop %v2826
  %v2848 = vrcp.pop %v2829
  %v2849 = vrcp.pop %v2832
  %v2850 = vrcp.pop %v2835
  %v2851 = vrcp.pop %v2838
  %v2852 = vrcp.pop %v2841
  %v2853 = vrcp.pop %v2844
  %v2854 = vmul.f32 %v2801, %v2845
  %v2855 = vmul.f32 %v2803, %v2846
  %v2856 = vmul.f32 %v2805, %v2847
  %v2857 = vmul.f32 %v2807, %v2848
  %v2858 = vmul.f32 %v2809, %v2849
  %v2859 = vmul.f32 %v2811, %v2850
  %v2860 = vmul.f32 %v2813, %v2851
  %v2861 = vmul.f32 %v2815, %v2852
  %v2862 = vmul.f32 %v2817, %v2853
  %2863 = vrot.lane.b32.xlu0 %v863, 56
  %v2864 = vpop.permute.xlu0 %2863
  %2865 = vrot.lane.b32.xlu0 %v866, 56
  %v2866 = vpop.permute.xlu0 %2865
  %2867 = vrot.lane.b32.xlu0 %v869, 56
  %v2868 = vpop.permute.xlu0 %2867
  %2869 = vrot.lane.b32.xlu0 %v872, 56
  %v2870 = vpop.permute.xlu0 %2869
  %2871 = vrot.lane.b32.xlu0 %v875, 56
  %v2872 = vpop.permute.xlu0 %2871
  %2873 = vrot.lane.b32.xlu0 %v878, 56
  %v2874 = vpop.permute.xlu0 %2873
  %2875 = vrot.lane.b32.xlu0 %v881, 56
  %v2876 = vpop.permute.xlu0 %2875
  %2877 = vrot.lane.b32.xlu0 %v884, 56
  %v2878 = vpop.permute.xlu0 %2877
  %2879 = vrot.lane.b32.xlu0 %v887, 56
  %v2880 = vpop.permute.xlu0 %2879
  %v2891 = vsel %vm1006, %v2854, 0
  %v2894 = vsel %vm1006, %v2855, 0
  %v2897 = vsel %vm1006, %v2856, 0
  %v2900 = vsel %vm1006, %v2857, 0
  %v2903 = vsel %vm1006, %v2858, 0
  %v2906 = vsel %vm1006, %v2859, 0
  %v2909 = vsel %vm1006, %v2860, 0
  %v2912 = vsel %vm1006, %v2861, 0
  %v2915 = vsel %vm1006, %v2862, 0
  %2917 = vmatpush.msra.mxu0 0.0
  %2918 = vmatpush.msra.mxu0 0.0
  %2919 = vmatpush.msra.mxu0 0.0
  %2920 = vmatpush.msra.mxu0 0.0
  %2921 = vmatpush.msra.mxu0 0.0
  %2922 = vmatpush.msra.mxu0 0.0
  %2923 = vmatpush.msra.mxu0 0.0
  %2924 = vmatpush.msra.mxu0 %v2880
  %2925 = vmatpush.msra.mxu0 %v2878
  %2926 = vmatpush.msra.mxu0 %v2876
  %2927 = vmatpush.msra.mxu0 %v2874
  %2928 = vmatpush.msra.mxu0 %v2872
  %2929 = vmatpush.msra.mxu0 %v2870
  %2930 = vmatpush.msra.mxu0 %v2868
  %2931 = vmatpush.msra.mxu0 %v2866
  %2932 = vmatpush.msra.mxu0 %v2864
  %2933 = vmatmul.f32.gmra.mxu0 %v2891
  %v2934 = vpop.f32.mrf.mxu0
  %v2935 = vadd.f32 0.0, %v2934
  %2936 = vmatmul.f32.gmra.mxu0 %v2894
  %v2937 = vpop.f32.mrf.mxu0
  %v2938 = vadd.f32 0.0, %v2937
  %2939 = vmatmul.f32.gmra.mxu0 %v2897
  %v2940 = vpop.f32.mrf.mxu0
  %v2941 = vadd.f32 0.0, %v2940
  %2942 = vmatmul.f32.gmra.mxu0 %v2900
  %v2943 = vpop.f32.mrf.mxu0
  %v2944 = vadd.f32 0.0, %v2943
  %2945 = vmatmul.f32.gmra.mxu0 %v2903
  %v2946 = vpop.f32.mrf.mxu0
  %v2947 = vadd.f32 0.0, %v2946
  %2948 = vmatmul.f32.gmra.mxu0 %v2906
  %v2949 = vpop.f32.mrf.mxu0
  %v2950 = vadd.f32 0.0, %v2949
  %2951 = vmatmul.f32.gmra.mxu0 %v2909
  %v2952 = vpop.f32.mrf.mxu0
  %v2953 = vadd.f32 0.0, %v2952
  %2954 = vmatmul.f32.gmra.mxu0 %v2912
  %v2955 = vpop.f32.mrf.mxu0
  %v2956 = vadd.f32 0.0, %v2955
  %2957 = vmatmul.f32.gmra.mxu0 %v2915
  %v2958 = vpop.f32.mrf.mxu0
  %v2959 = vadd.f32 0.0, %v2958
  %2960 = vdwg.mxu0
  %2970 = vrot.lane.b32.xlu0 %v2935, 8
  %v2971 = vpop.permute.xlu0 %2970
  %2972 = vrot.lane.b32.xlu0 %v2938, 8
  %v2973 = vpop.permute.xlu0 %2972
  %2974 = vrot.lane.b32.xlu0 %v2941, 8
  %v2975 = vpop.permute.xlu0 %2974
  %2976 = vrot.lane.b32.xlu0 %v2944, 8
  %v2977 = vpop.permute.xlu0 %2976
  %2978 = vrot.lane.b32.xlu0 %v2947, 8
  %v2979 = vpop.permute.xlu0 %2978
  %2980 = vrot.lane.b32.xlu0 %v2950, 8
  %v2981 = vpop.permute.xlu0 %2980
  %2982 = vrot.lane.b32.xlu0 %v2953, 8
  %v2983 = vpop.permute.xlu0 %2982
  %2984 = vrot.lane.b32.xlu0 %v2956, 8
  %v2985 = vpop.permute.xlu0 %2984
  %2986 = vrot.lane.b32.xlu0 %v2959, 8
  %v2987 = vpop.permute.xlu0 %2986
  %2997 = vst.msk [vmem:[#allocation3 + $0x48] sm:$0xff] %vm1571, %v2971
  %2998 = vst.msk [vmem:[#allocation3 + $0x50] sm:$0xff] %vm1571, %v2973
  %2999 = vst.msk [vmem:[#allocation3 + $0x58] sm:$0xff] %vm1571, %v2975
  %3000 = vst.msk [vmem:[#allocation3 + $0x60] sm:$0xff] %vm1571, %v2977
  %3001 = vst.msk [vmem:[#allocation3 + $0x68] sm:$0xff] %vm1571, %v2979
  %3002 = vst.msk [vmem:[#allocation3 + $0x70] sm:$0xff] %vm1571, %v2981
  %3003 = vst.msk [vmem:[#allocation3 + $0x78] sm:$0xff] %vm1571, %v2983
  %3004 = vst.msk [vmem:[#allocation3 + $0x80] sm:$0xff] %vm1571, %v2985
  %3005 = vst.msk [vmem:[#allocation3 + $0x88] sm:$0xff] %vm1571, %v2987
  %3006 = vrot.lane.b32.xlu0 %v863, 112
  %v3007 = vpop.permute.xlu0 %3006
  %3008 = vrot.lane.b32.xlu0 %v866, 112
  %v3009 = vpop.permute.xlu0 %3008
  %3010 = vrot.lane.b32.xlu0 %v869, 112
  %v3011 = vpop.permute.xlu0 %3010
  %3012 = vrot.lane.b32.xlu0 %v872, 112
  %v3013 = vpop.permute.xlu0 %3012
  %3014 = vrot.lane.b32.xlu0 %v875, 112
  %v3015 = vpop.permute.xlu0 %3014
  %3016 = vrot.lane.b32.xlu0 %v878, 112
  %v3017 = vpop.permute.xlu0 %3016
  %3018 = vrot.lane.b32.xlu0 %v881, 112
  %v3019 = vpop.permute.xlu0 %3018
  %3020 = vrot.lane.b32.xlu0 %v884, 112
  %v3021 = vpop.permute.xlu0 %3020
  %3022 = vrot.lane.b32.xlu0 %v887, 112
  %v3023 = vpop.permute.xlu0 %3022
  %3024 = vrot.lane.b32.xlu0 %v863, 80
  %v3025 = vpop.permute.xlu0 %3024
  %3026 = vrot.lane.b32.xlu0 %v866, 80
  %v3027 = vpop.permute.xlu0 %3026
  %3028 = vrot.lane.b32.xlu0 %v869, 80
  %v3029 = vpop.permute.xlu0 %3028
  %3030 = vrot.lane.b32.xlu0 %v872, 80
  %v3031 = vpop.permute.xlu0 %3030
  %3032 = vrot.lane.b32.xlu0 %v875, 80
  %v3033 = vpop.permute.xlu0 %3032
  %3034 = vrot.lane.b32.xlu0 %v878, 80
  %v3035 = vpop.permute.xlu0 %3034
  %3036 = vrot.lane.b32.xlu0 %v881, 80
  %v3037 = vpop.permute.xlu0 %3036
  %3038 = vrot.lane.b32.xlu0 %v884, 80
  %v3039 = vpop.permute.xlu0 %3038
  %3040 = vrot.lane.b32.xlu0 %v887, 80
  %v3041 = vpop.permute.xlu0 %3040
  %v3042 = vsel %vm916, %v3007, 0
  %v3044 = vsel %vm916, %v3009, 0
  %v3046 = vsel %vm916, %v3011, 0
  %v3048 = vsel %vm916, %v3013, 0
  %v3050 = vsel %vm916, %v3015, 0
  %v3052 = vsel %vm916, %v3017, 0
  %v3054 = vsel %vm916, %v3019, 0
  %v3056 = vsel %vm916, %v3021, 0
  %v3058 = vsel %vm916, %v3023, 0
  %v3060 = vsel %vm916, %v3025, 0
  %v3062 = vsel %vm916, %v3027, 0
  %v3064 = vsel %vm916, %v3029, 0
  %v3066 = vsel %vm916, %v3031, 0
  %v3068 = vsel %vm916, %v3033, 0
  %v3070 = vsel %vm916, %v3035, 0
  %v3072 = vsel %vm916, %v3037, 0
  %v3074 = vsel %vm916, %v3039, 0
  %v3076 = vsel %vm916, %v3041, 0
  %3078 = vmatpush.xpose.msra.mxu0 0.0
  %3079 = vmatpush.xpose.msra.mxu0 0.0
  %3080 = vmatpush.xpose.msra.mxu0 0.0
  %3081 = vmatpush.xpose.msra.mxu0 0.0
  %3082 = vmatpush.xpose.msra.mxu0 0.0
  %3083 = vmatpush.xpose.msra.mxu0 0.0
  %3084 = vmatpush.xpose.msra.mxu0 0.0
  %3085 = vmatpush.xpose.msra.mxu0 %v3076
  %3086 = vmatpush.xpose.msra.mxu0 %v3074
  %3087 = vmatpush.xpose.msra.mxu0 %v3072
  %3088 = vmatpush.xpose.msra.mxu0 %v3070
  %3089 = vmatpush.xpose.msra.mxu0 %v3068
  %3090 = vmatpush.xpose.msra.mxu0 %v3066
  %3091 = vmatpush.xpose.msra.mxu0 %v3064
  %3092 = vmatpush.xpose.msra.mxu0 %v3062
  %3093 = vmatpush.xpose.msra.mxu0 %v3060
  %3094 = vmatmul.f32.gmra.mxu0 %v3042
  %v3095 = vpop.f32.mrf.mxu0
  %v3096 = vadd.f32 0.0, %v3095
  %3097 = vmatmul.f32.gmra.mxu0 %v3044
  %v3098 = vpop.f32.mrf.mxu0
  %v3099 = vadd.f32 0.0, %v3098
  %3100 = vmatmul.f32.gmra.mxu0 %v3046
  %v3101 = vpop.f32.mrf.mxu0
  %v3102 = vadd.f32 0.0, %v3101
  %3103 = vmatmul.f32.gmra.mxu0 %v3048
  %v3104 = vpop.f32.mrf.mxu0
  %v3105 = vadd.f32 0.0, %v3104
  %3106 = vmatmul.f32.gmra.mxu0 %v3050
  %v3107 = vpop.f32.mrf.mxu0
  %v3108 = vadd.f32 0.0, %v3107
  %3109 = vmatmul.f32.gmra.mxu0 %v3052
  %v3110 = vpop.f32.mrf.mxu0
  %v3111 = vadd.f32 0.0, %v3110
  %3112 = vmatmul.f32.gmra.mxu0 %v3054
  %v3113 = vpop.f32.mrf.mxu0
  %v3114 = vadd.f32 0.0, %v3113
  %3115 = vmatmul.f32.gmra.mxu0 %v3056
  %v3116 = vpop.f32.mrf.mxu0
  %v3117 = vadd.f32 0.0, %v3116
  %3118 = vmatmul.f32.gmra.mxu0 %v3058
  %v3119 = vpop.f32.mrf.mxu0
  %v3120 = vadd.f32 0.0, %v3119
  %3121 = vdwg.mxu0
  %v3122 = vmul.f32 %v3096, 0.35355338
  %v3123 = vmul.f32 %v3099, 0.35355338
  %v3124 = vmul.f32 %v3102, 0.35355338
  %v3125 = vmul.f32 %v3105, 0.35355338
  %v3126 = vmul.f32 %v3108, 0.35355338
  %v3127 = vmul.f32 %v3111, 0.35355338
  %v3128 = vmul.f32 %v3114, 0.35355338
  %v3129 = vmul.f32 %v3117, 0.35355338
  %v3130 = vmul.f32 %v3120, 0.35355338
  %v3131 = vsel %vm1006, %v3122, -inf
  %3132 = vmax.xlane.f32.xlu0 %v3131
  %v3133 = vpop.xlane.xlu0 %3132
  %v3134 = vsel %vm1006, %v3123, -inf
  %3135 = vmax.xlane.f32.xlu0 %v3134
  %v3136 = vpop.xlane.xlu0 %3135
  %v3137 = vsel %vm1006, %v3124, -inf
  %3138 = vmax.xlane.f32.xlu0 %v3137
  %v3139 = vpop.xlane.xlu0 %3138
  %v3140 = vsel %vm1006, %v3125, -inf
  %3141 = vmax.xlane.f32.xlu0 %v3140
  %v3142 = vpop.xlane.xlu0 %3141
  %v3143 = vsel %vm1006, %v3126, -inf
  %3144 = vmax.xlane.f32.xlu0 %v3143
  %v3145 = vpop.xlane.xlu0 %3144
  %v3146 = vsel %vm1006, %v3127, -inf
  %3147 = vmax.xlane.f32.xlu0 %v3146
  %v3148 = vpop.xlane.xlu0 %3147
  %v3149 = vsel %vm1006, %v3128, -inf
  %3150 = vmax.xlane.f32.xlu0 %v3149
  %v3151 = vpop.xlane.xlu0 %3150
  %v3152 = vsel %vm1006, %v3129, -inf
  %3153 = vmax.xlane.f32.xlu0 %v3152
  %v3154 = vpop.xlane.xlu0 %3153
  %v3155 = vsel %vm1006, %v3130, -inf
  %3156 = vmax.xlane.f32.xlu0 %v3155
  %v3157 = vpop.xlane.xlu0 %3156
  %v3158 = vsub.f32 %v3122, %v3133
  %v3159 = vsub.f32 %v3123, %v3136
  %v3160 = vsub.f32 %v3124, %v3139
  %v3161 = vsub.f32 %v3125, %v3142
  %v3162 = vsub.f32 %v3126, %v3145
  %v3163 = vsub.f32 %v3127, %v3148
  %v3164 = vsub.f32 %v3128, %v3151
  %v3165 = vsub.f32 %v3129, %v3154
  %v3166 = vsub.f32 %v3130, %v3157
  %v3167 = vmul.f32 %v3158, 1.442695
  %v3168 = vpow.pop %v3167
  %v3169 = vmul.f32 %v3159, 1.442695
  %v3170 = vpow.pop %v3169
  %v3171 = vmul.f32 %v3160, 1.442695
  %v3172 = vpow.pop %v3171
  %v3173 = vmul.f32 %v3161, 1.442695
  %v3174 = vpow.pop %v3173
  %v3175 = vmul.f32 %v3162, 1.442695
  %v3176 = vpow.pop %v3175
  %v3177 = vmul.f32 %v3163, 1.442695
  %v3178 = vpow.pop %v3177
  %v3179 = vmul.f32 %v3164, 1.442695
  %v3180 = vpow.pop %v3179
  %v3181 = vmul.f32 %v3165, 1.442695
  %v3182 = vpow.pop %v3181
  %v3183 = vmul.f32 %v3166, 1.442695
  %v3184 = vpow.pop %v3183
  %v3185 = vsel %vm1006, %v3168, 0.0
  %3186 = vadd.xlane.f32.xlu0 %v3185
  %v3187 = vpop.xlane.xlu0 %3186
  %v3188 = vsel %vm1006, %v3170, 0.0
  %3189 = vadd.xlane.f32.xlu0 %v3188
  %v3190 = vpop.xlane.xlu0 %3189
  %v3191 = vsel %vm1006, %v3172, 0.0
  %3192 = vadd.xlane.f32.xlu0 %v3191
  %v3193 = vpop.xlane.xlu0 %3192
  %v3194 = vsel %vm1006, %v3174, 0.0
  %3195 = vadd.xlane.f32.xlu0 %v3194
  %v3196 = vpop.xlane.xlu0 %3195
  %v3197 = vsel %vm1006, %v3176, 0.0
  %3198 = vadd.xlane.f32.xlu0 %v3197
  %v3199 = vpop.xlane.xlu0 %3198
  %v3200 = vsel %vm1006, %v3178, 0.0
  %3201 = vadd.xlane.f32.xlu0 %v3200
  %v3202 = vpop.xlane.xlu0 %3201
  %v3203 = vsel %vm1006, %v3180, 0.0
  %3204 = vadd.xlane.f32.xlu0 %v3203
  %v3205 = vpop.xlane.xlu0 %3204
  %v3206 = vsel %vm1006, %v3182, 0.0
  %3207 = vadd.xlane.f32.xlu0 %v3206
  %v3208 = vpop.xlane.xlu0 %3207
  %v3209 = vsel %vm1006, %v3184, 0.0
  %3210 = vadd.xlane.f32.xlu0 %v3209
  %v3211 = vpop.xlane.xlu0 %3210
  %v3212 = vrcp.pop %v3187
  %v3213 = vrcp.pop %v3190
  %v3214 = vrcp.pop %v3193
  %v3215 = vrcp.pop %v3196
  %v3216 = vrcp.pop %v3199
  %v3217 = vrcp.pop %v3202
  %v3218 = vrcp.pop %v3205
  %v3219 = vrcp.pop %v3208
  %v3220 = vrcp.pop %v3211
  %v3221 = vmul.f32 %v3168, %v3212
  %v3222 = vmul.f32 %v3170, %v3213
  %v3223 = vmul.f32 %v3172, %v3214
  %v3224 = vmul.f32 %v3174, %v3215
  %v3225 = vmul.f32 %v3176, %v3216
  %v3226 = vmul.f32 %v3178, %v3217
  %v3227 = vmul.f32 %v3180, %v3218
  %v3228 = vmul.f32 %v3182, %v3219
  %v3229 = vmul.f32 %v3184, %v3220
  %3230 = vrot.lane.b32.xlu0 %v863, 48
  %v3231 = vpop.permute.xlu0 %3230
  %3232 = vrot.lane.b32.xlu0 %v866, 48
  %v3233 = vpop.permute.xlu0 %3232
  %3234 = vrot.lane.b32.xlu0 %v869, 48
  %v3235 = vpop.permute.xlu0 %3234
  %3236 = vrot.lane.b32.xlu0 %v872, 48
  %v3237 = vpop.permute.xlu0 %3236
  %3238 = vrot.lane.b32.xlu0 %v875, 48
  %v3239 = vpop.permute.xlu0 %3238
  %3240 = vrot.lane.b32.xlu0 %v878, 48
  %v3241 = vpop.permute.xlu0 %3240
  %3242 = vrot.lane.b32.xlu0 %v881, 48
  %v3243 = vpop.permute.xlu0 %3242
  %3244 = vrot.lane.b32.xlu0 %v884, 48
  %v3245 = vpop.permute.xlu0 %3244
  %3246 = vrot.lane.b32.xlu0 %v887, 48
  %v3247 = vpop.permute.xlu0 %3246
  %v3258 = vsel %vm1006, %v3221, 0
  %v3261 = vsel %vm1006, %v3222, 0
  %v3264 = vsel %vm1006, %v3223, 0
  %v3267 = vsel %vm1006, %v3224, 0
  %v3270 = vsel %vm1006, %v3225, 0
  %v3273 = vsel %vm1006, %v3226, 0
  %v3276 = vsel %vm1006, %v3227, 0
  %v3279 = vsel %vm1006, %v3228, 0
  %v3282 = vsel %vm1006, %v3229, 0
  %3284 = vmatpush.msra.mxu0 0.0
  %3285 = vmatpush.msra.mxu0 0.0
  %3286 = vmatpush.msra.mxu0 0.0
  %3287 = vmatpush.msra.mxu0 0.0
  %3288 = vmatpush.msra.mxu0 0.0
  %3289 = vmatpush.msra.mxu0 0.0
  %3290 = vmatpush.msra.mxu0 0.0
  %3291 = vmatpush.msra.mxu0 %v3247
  %3292 = vmatpush.msra.mxu0 %v3245
  %3293 = vmatpush.msra.mxu0 %v3243
  %3294 = vmatpush.msra.mxu0 %v3241
  %3295 = vmatpush.msra.mxu0 %v3239
  %3296 = vmatpush.msra.mxu0 %v3237
  %3297 = vmatpush.msra.mxu0 %v3235
  %3298 = vmatpush.msra.mxu0 %v3233
  %3299 = vmatpush.msra.mxu0 %v3231
  %3300 = vmatmul.f32.gmra.mxu0 %v3258
  %v3301 = vpop.f32.mrf.mxu0
  %v3302 = vadd.f32 0.0, %v3301
  %3303 = vmatmul.f32.gmra.mxu0 %v3261
  %v3304 = vpop.f32.mrf.mxu0
  %v3305 = vadd.f32 0.0, %v3304
  %3306 = vmatmul.f32.gmra.mxu0 %v3264
  %v3307 = vpop.f32.mrf.mxu0
  %v3308 = vadd.f32 0.0, %v3307
  %3309 = vmatmul.f32.gmra.mxu0 %v3267
  %v3310 = vpop.f32.mrf.mxu0
  %v3311 = vadd.f32 0.0, %v3310
  %3312 = vmatmul.f32.gmra.mxu0 %v3270
  %v3313 = vpop.f32.mrf.mxu0
  %v3314 = vadd.f32 0.0, %v3313
  %3315 = vmatmul.f32.gmra.mxu0 %v3273
  %v3316 = vpop.f32.mrf.mxu0
  %v3317 = vadd.f32 0.0, %v3316
  %3318 = vmatmul.f32.gmra.mxu0 %v3276
  %v3319 = vpop.f32.mrf.mxu0
  %v3320 = vadd.f32 0.0, %v3319
  %3321 = vmatmul.f32.gmra.mxu0 %v3279
  %v3322 = vpop.f32.mrf.mxu0
  %v3323 = vadd.f32 0.0, %v3322
  %3324 = vmatmul.f32.gmra.mxu0 %v3282
  %v3325 = vpop.f32.mrf.mxu0
  %v3326 = vadd.f32 0.0, %v3325
  %3327 = vdwg.mxu0
  %3337 = vrot.lane.b32.xlu0 %v3302, 16
  %v3338 = vpop.permute.xlu0 %3337
  %3339 = vrot.lane.b32.xlu0 %v3305, 16
  %v3340 = vpop.permute.xlu0 %3339
  %3341 = vrot.lane.b32.xlu0 %v3308, 16
  %v3342 = vpop.permute.xlu0 %3341
  %3343 = vrot.lane.b32.xlu0 %v3311, 16
  %v3344 = vpop.permute.xlu0 %3343
  %3345 = vrot.lane.b32.xlu0 %v3314, 16
  %v3346 = vpop.permute.xlu0 %3345
  %3347 = vrot.lane.b32.xlu0 %v3317, 16
  %v3348 = vpop.permute.xlu0 %3347
  %3349 = vrot.lane.b32.xlu0 %v3320, 16
  %v3350 = vpop.permute.xlu0 %3349
  %3351 = vrot.lane.b32.xlu0 %v3323, 16
  %v3352 = vpop.permute.xlu0 %3351
  %3353 = vrot.lane.b32.xlu0 %v3326, 16
  %v3354 = vpop.permute.xlu0 %3353
  %3364 = vst.msk [vmem:[#allocation3 + $0x48] sm:$0xff] %vm1939, %v3338
  %3365 = vst.msk [vmem:[#allocation3 + $0x50] sm:$0xff] %vm1939, %v3340
  %3366 = vst.msk [vmem:[#allocation3 + $0x58] sm:$0xff] %vm1939, %v3342
  %3367 = vst.msk [vmem:[#allocation3 + $0x60] sm:$0xff] %vm1939, %v3344
  %3368 = vst.msk [vmem:[#allocation3 + $0x68] sm:$0xff] %vm1939, %v3346
  %3369 = vst.msk [vmem:[#allocation3 + $0x70] sm:$0xff] %vm1939, %v3348
  %3370 = vst.msk [vmem:[#allocation3 + $0x78] sm:$0xff] %vm1939, %v3350
  %3371 = vst.msk [vmem:[#allocation3 + $0x80] sm:$0xff] %vm1939, %v3352
  %3372 = vst.msk [vmem:[#allocation3 + $0x88] sm:$0xff] %vm1939, %v3354
  %3373 = vrot.lane.b32.xlu0 %v863, 104
  %v3374 = vpop.permute.xlu0 %3373
  %3375 = vrot.lane.b32.xlu0 %v866, 104
  %v3376 = vpop.permute.xlu0 %3375
  %3377 = vrot.lane.b32.xlu0 %v869, 104
  %v3378 = vpop.permute.xlu0 %3377
  %3379 = vrot.lane.b32.xlu0 %v872, 104
  %v3380 = vpop.permute.xlu0 %3379
  %3381 = vrot.lane.b32.xlu0 %v875, 104
  %v3382 = vpop.permute.xlu0 %3381
  %3383 = vrot.lane.b32.xlu0 %v878, 104
  %v3384 = vpop.permute.xlu0 %3383
  %3385 = vrot.lane.b32.xlu0 %v881, 104
  %v3386 = vpop.permute.xlu0 %3385
  %3387 = vrot.lane.b32.xlu0 %v884, 104
  %v3388 = vpop.permute.xlu0 %3387
  %3389 = vrot.lane.b32.xlu0 %v887, 104
  %v3390 = vpop.permute.xlu0 %3389
  %3391 = vrot.lane.b32.xlu0 %v863, 72
  %v3392 = vpop.permute.xlu0 %3391
  %3393 = vrot.lane.b32.xlu0 %v866, 72
  %v3394 = vpop.permute.xlu0 %3393
  %3395 = vrot.lane.b32.xlu0 %v869, 72
  %v3396 = vpop.permute.xlu0 %3395
  %3397 = vrot.lane.b32.xlu0 %v872, 72
  %v3398 = vpop.permute.xlu0 %3397
  %3399 = vrot.lane.b32.xlu0 %v875, 72
  %v3400 = vpop.permute.xlu0 %3399
  %3401 = vrot.lane.b32.xlu0 %v878, 72
  %v3402 = vpop.permute.xlu0 %3401
  %3403 = vrot.lane.b32.xlu0 %v881, 72
  %v3404 = vpop.permute.xlu0 %3403
  %3405 = vrot.lane.b32.xlu0 %v884, 72
  %v3406 = vpop.permute.xlu0 %3405
  %3407 = vrot.lane.b32.xlu0 %v887, 72
  %v3408 = vpop.permute.xlu0 %3407
  %v3409 = vsel %vm916, %v3374, 0
  %v3411 = vsel %vm916, %v3376, 0
  %v3413 = vsel %vm916, %v3378, 0
  %v3415 = vsel %vm916, %v3380, 0
  %v3417 = vsel %vm916, %v3382, 0
  %v3419 = vsel %vm916, %v3384, 0
  %v3421 = vsel %vm916, %v3386, 0
  %v3423 = vsel %vm916, %v3388, 0
  %v3425 = vsel %vm916, %v3390, 0
  %v3427 = vsel %vm916, %v3392, 0
  %v3429 = vsel %vm916, %v3394, 0
  %v3431 = vsel %vm916, %v3396, 0
  %v3433 = vsel %vm916, %v3398, 0
  %v3435 = vsel %vm916, %v3400, 0
  %v3437 = vsel %vm916, %v3402, 0
  %v3439 = vsel %vm916, %v3404, 0
  %v3441 = vsel %vm916, %v3406, 0
  %v3443 = vsel %vm916, %v3408, 0
  %3445 = vmatpush.xpose.msra.mxu0 0.0
  %3446 = vmatpush.xpose.msra.mxu0 0.0
  %3447 = vmatpush.xpose.msra.mxu0 0.0
  %3448 = vmatpush.xpose.msra.mxu0 0.0
  %3449 = vmatpush.xpose.msra.mxu0 0.0
  %3450 = vmatpush.xpose.msra.mxu0 0.0
  %3451 = vmatpush.xpose.msra.mxu0 0.0
  %3452 = vmatpush.xpose.msra.mxu0 %v3443
  %3453 = vmatpush.xpose.msra.mxu0 %v3441
  %3454 = vmatpush.xpose.msra.mxu0 %v3439
  %3455 = vmatpush.xpose.msra.mxu0 %v3437
  %3456 = vmatpush.xpose.msra.mxu0 %v3435
  %3457 = vmatpush.xpose.msra.mxu0 %v3433
  %3458 = vmatpush.xpose.msra.mxu0 %v3431
  %3459 = vmatpush.xpose.msra.mxu0 %v3429
  %3460 = vmatpush.xpose.msra.mxu0 %v3427
  %3461 = vmatmul.f32.gmra.mxu0 %v3409
  %v3462 = vpop.f32.mrf.mxu0
  %v3463 = vadd.f32 0.0, %v3462
  %3464 = vmatmul.f32.gmra.mxu0 %v3411
  %v3465 = vpop.f32.mrf.mxu0
  %v3466 = vadd.f32 0.0, %v3465
  %3467 = vmatmul.f32.gmra.mxu0 %v3413
  %v3468 = vpop.f32.mrf.mxu0
  %v3469 = vadd.f32 0.0, %v3468
  %3470 = vmatmul.f32.gmra.mxu0 %v3415
  %v3471 = vpop.f32.mrf.mxu0
  %v3472 = vadd.f32 0.0, %v3471
  %3473 = vmatmul.f32.gmra.mxu0 %v3417
  %v3474 = vpop.f32.mrf.mxu0
  %v3475 = vadd.f32 0.0, %v3474
  %3476 = vmatmul.f32.gmra.mxu0 %v3419
  %v3477 = vpop.f32.mrf.mxu0
  %v3478 = vadd.f32 0.0, %v3477
  %3479 = vmatmul.f32.gmra.mxu0 %v3421
  %v3480 = vpop.f32.mrf.mxu0
  %v3481 = vadd.f32 0.0, %v3480
  %3482 = vmatmul.f32.gmra.mxu0 %v3423
  %v3483 = vpop.f32.mrf.mxu0
  %v3484 = vadd.f32 0.0, %v3483
  %3485 = vmatmul.f32.gmra.mxu0 %v3425
  %v3486 = vpop.f32.mrf.mxu0
  %v3487 = vadd.f32 0.0, %v3486
  %3488 = vdwg.mxu0
  %v3489 = vmul.f32 %v3463, 0.35355338
  %v3490 = vmul.f32 %v3466, 0.35355338
  %v3491 = vmul.f32 %v3469, 0.35355338
  %v3492 = vmul.f32 %v3472, 0.35355338
  %v3493 = vmul.f32 %v3475, 0.35355338
  %v3494 = vmul.f32 %v3478, 0.35355338
  %v3495 = vmul.f32 %v3481, 0.35355338
  %v3496 = vmul.f32 %v3484, 0.35355338
  %v3497 = vmul.f32 %v3487, 0.35355338
  %v3498 = vsel %vm1006, %v3489, -inf
  %3499 = vmax.xlane.f32.xlu0 %v3498
  %v3500 = vpop.xlane.xlu0 %3499
  %v3501 = vsel %vm1006, %v3490, -inf
  %3502 = vmax.xlane.f32.xlu0 %v3501
  %v3503 = vpop.xlane.xlu0 %3502
  %v3504 = vsel %vm1006, %v3491, -inf
  %3505 = vmax.xlane.f32.xlu0 %v3504
  %v3506 = vpop.xlane.xlu0 %3505
  %v3507 = vsel %vm1006, %v3492, -inf
  %3508 = vmax.xlane.f32.xlu0 %v3507
  %v3509 = vpop.xlane.xlu0 %3508
  %v3510 = vsel %vm1006, %v3493, -inf
  %3511 = vmax.xlane.f32.xlu0 %v3510
  %v3512 = vpop.xlane.xlu0 %3511
  %v3513 = vsel %vm1006, %v3494, -inf
  %3514 = vmax.xlane.f32.xlu0 %v3513
  %v3515 = vpop.xlane.xlu0 %3514
  %v3516 = vsel %vm1006, %v3495, -inf
  %3517 = vmax.xlane.f32.xlu0 %v3516
  %v3518 = vpop.xlane.xlu0 %3517
  %v3519 = vsel %vm1006, %v3496, -inf
  %3520 = vmax.xlane.f32.xlu0 %v3519
  %v3521 = vpop.xlane.xlu0 %3520
  %v3522 = vsel %vm1006, %v3497, -inf
  %3523 = vmax.xlane.f32.xlu0 %v3522
  %v3524 = vpop.xlane.xlu0 %3523
  %v3525 = vsub.f32 %v3489, %v3500
  %v3526 = vsub.f32 %v3490, %v3503
  %v3527 = vsub.f32 %v3491, %v3506
  %v3528 = vsub.f32 %v3492, %v3509
  %v3529 = vsub.f32 %v3493, %v3512
  %v3530 = vsub.f32 %v3494, %v3515
  %v3531 = vsub.f32 %v3495, %v3518
  %v3532 = vsub.f32 %v3496, %v3521
  %v3533 = vsub.f32 %v3497, %v3524
  %v3534 = vmul.f32 %v3525, 1.442695
  %v3535 = vpow.pop %v3534
  %v3536 = vmul.f32 %v3526, 1.442695
  %v3537 = vpow.pop %v3536
  %v3538 = vmul.f32 %v3527, 1.442695
  %v3539 = vpow.pop %v3538
  %v3540 = vmul.f32 %v3528, 1.442695
  %v3541 = vpow.pop %v3540
  %v3542 = vmul.f32 %v3529, 1.442695
  %v3543 = vpow.pop %v3542
  %v3544 = vmul.f32 %v3530, 1.442695
  %v3545 = vpow.pop %v3544
  %v3546 = vmul.f32 %v3531, 1.442695
  %v3547 = vpow.pop %v3546
  %v3548 = vmul.f32 %v3532, 1.442695
  %v3549 = vpow.pop %v3548
  %v3550 = vmul.f32 %v3533, 1.442695
  %v3551 = vpow.pop %v3550
  %v3552 = vsel %vm1006, %v3535, 0.0
  %3553 = vadd.xlane.f32.xlu0 %v3552
  %v3554 = vpop.xlane.xlu0 %3553
  %v3555 = vsel %vm1006, %v3537, 0.0
  %3556 = vadd.xlane.f32.xlu0 %v3555
  %v3557 = vpop.xlane.xlu0 %3556
  %v3558 = vsel %vm1006, %v3539, 0.0
  %3559 = vadd.xlane.f32.xlu0 %v3558
  %v3560 = vpop.xlane.xlu0 %3559
  %v3561 = vsel %vm1006, %v3541, 0.0
  %3562 = vadd.xlane.f32.xlu0 %v3561
  %v3563 = vpop.xlane.xlu0 %3562
  %v3564 = vsel %vm1006, %v3543, 0.0
  %3565 = vadd.xlane.f32.xlu0 %v3564
  %v3566 = vpop.xlane.xlu0 %3565
  %v3567 = vsel %vm1006, %v3545, 0.0
  %3568 = vadd.xlane.f32.xlu0 %v3567
  %v3569 = vpop.xlane.xlu0 %3568
  %v3570 = vsel %vm1006, %v3547, 0.0
  %3571 = vadd.xlane.f32.xlu0 %v3570
  %v3572 = vpop.xlane.xlu0 %3571
  %v3573 = vsel %vm1006, %v3549, 0.0
  %3574 = vadd.xlane.f32.xlu0 %v3573
  %v3575 = vpop.xlane.xlu0 %3574
  %v3576 = vsel %vm1006, %v3551, 0.0
  %3577 = vadd.xlane.f32.xlu0 %v3576
  %v3578 = vpop.xlane.xlu0 %3577
  %v3579 = vrcp.pop %v3554
  %v3580 = vrcp.pop %v3557
  %v3581 = vrcp.pop %v3560
  %v3582 = vrcp.pop %v3563
  %v3583 = vrcp.pop %v3566
  %v3584 = vrcp.pop %v3569
  %v3585 = vrcp.pop %v3572
  %v3586 = vrcp.pop %v3575
  %v3587 = vrcp.pop %v3578
  %v3588 = vmul.f32 %v3535, %v3579
  %v3589 = vmul.f32 %v3537, %v3580
  %v3590 = vmul.f32 %v3539, %v3581
  %v3591 = vmul.f32 %v3541, %v3582
  %v3592 = vmul.f32 %v3543, %v3583
  %v3593 = vmul.f32 %v3545, %v3584
  %v3594 = vmul.f32 %v3547, %v3585
  %v3595 = vmul.f32 %v3549, %v3586
  %v3596 = vmul.f32 %v3551, %v3587
  %3597 = vrot.lane.b32.xlu0 %v863, 40
  %v3598 = vpop.permute.xlu0 %3597
  %3599 = vrot.lane.b32.xlu0 %v866, 40
  %v3600 = vpop.permute.xlu0 %3599
  %3601 = vrot.lane.b32.xlu0 %v869, 40
  %v3602 = vpop.permute.xlu0 %3601
  %3603 = vrot.lane.b32.xlu0 %v872, 40
  %v3604 = vpop.permute.xlu0 %3603
  %3605 = vrot.lane.b32.xlu0 %v875, 40
  %v3606 = vpop.permute.xlu0 %3605
  %3607 = vrot.lane.b32.xlu0 %v878, 40
  %v3608 = vpop.permute.xlu0 %3607
  %3609 = vrot.lane.b32.xlu0 %v881, 40
  %v3610 = vpop.permute.xlu0 %3609
  %3611 = vrot.lane.b32.xlu0 %v884, 40
  %v3612 = vpop.permute.xlu0 %3611
  %3613 = vrot.lane.b32.xlu0 %v887, 40
  %v3614 = vpop.permute.xlu0 %3613
  %v3625 = vsel %vm1006, %v3588, 0
  %v3628 = vsel %vm1006, %v3589, 0
  %v3631 = vsel %vm1006, %v3590, 0
  %v3634 = vsel %vm1006, %v3591, 0
  %v3637 = vsel %vm1006, %v3592, 0
  %v3640 = vsel %vm1006, %v3593, 0
  %v3643 = vsel %vm1006, %v3594, 0
  %v3646 = vsel %vm1006, %v3595, 0
  %v3649 = vsel %vm1006, %v3596, 0
  %3651 = vmatpush.msra.mxu0 0.0
  %3652 = vmatpush.msra.mxu0 0.0
  %3653 = vmatpush.msra.mxu0 0.0
  %3654 = vmatpush.msra.mxu0 0.0
  %3655 = vmatpush.msra.mxu0 0.0
  %3656 = vmatpush.msra.mxu0 0.0
  %3657 = vmatpush.msra.mxu0 0.0
  %3658 = vmatpush.msra.mxu0 %v3614
  %3659 = vmatpush.msra.mxu0 %v3612
  %3660 = vmatpush.msra.mxu0 %v3610
  %3661 = vmatpush.msra.mxu0 %v3608
  %3662 = vmatpush.msra.mxu0 %v3606
  %3663 = vmatpush.msra.mxu0 %v3604
  %3664 = vmatpush.msra.mxu0 %v3602
  %3665 = vmatpush.msra.mxu0 %v3600
  %3666 = vmatpush.msra.mxu0 %v3598
  %3667 = vmatmul.f32.gmra.mxu0 %v3625
  %v3668 = vpop.f32.mrf.mxu0
  %v3669 = vadd.f32 0.0, %v3668
  %3670 = vmatmul.f32.gmra.mxu0 %v3628
  %v3671 = vpop.f32.mrf.mxu0
  %v3672 = vadd.f32 0.0, %v3671
  %3673 = vmatmul.f32.gmra.mxu0 %v3631
  %v3674 = vpop.f32.mrf.mxu0
  %v3675 = vadd.f32 0.0, %v3674
  %3676 = vmatmul.f32.gmra.mxu0 %v3634
  %v3677 = vpop.f32.mrf.mxu0
  %v3678 = vadd.f32 0.0, %v3677
  %3679 = vmatmul.f32.gmra.mxu0 %v3637
  %v3680 = vpop.f32.mrf.mxu0
  %v3681 = vadd.f32 0.0, %v3680
  %3682 = vmatmul.f32.gmra.mxu0 %v3640
  %v3683 = vpop.f32.mrf.mxu0
  %v3684 = vadd.f32 0.0, %v3683
  %3685 = vmatmul.f32.gmra.mxu0 %v3643
  %v3686 = vpop.f32.mrf.mxu0
  %v3687 = vadd.f32 0.0, %v3686
  %3688 = vmatmul.f32.gmra.mxu0 %v3646
  %v3689 = vpop.f32.mrf.mxu0
  %v3690 = vadd.f32 0.0, %v3689
  %3691 = vmatmul.f32.gmra.mxu0 %v3649
  %v3692 = vpop.f32.mrf.mxu0
  %v3693 = vadd.f32 0.0, %v3692
  %3694 = vdwg.mxu0
  %3704 = vrot.lane.b32.xlu0 %v3669, 24
  %v3705 = vpop.permute.xlu0 %3704
  %3706 = vrot.lane.b32.xlu0 %v3672, 24
  %v3707 = vpop.permute.xlu0 %3706
  %3708 = vrot.lane.b32.xlu0 %v3675, 24
  %v3709 = vpop.permute.xlu0 %3708
  %3710 = vrot.lane.b32.xlu0 %v3678, 24
  %v3711 = vpop.permute.xlu0 %3710
  %3712 = vrot.lane.b32.xlu0 %v3681, 24
  %v3713 = vpop.permute.xlu0 %3712
  %3714 = vrot.lane.b32.xlu0 %v3684, 24
  %v3715 = vpop.permute.xlu0 %3714
  %3716 = vrot.lane.b32.xlu0 %v3687, 24
  %v3717 = vpop.permute.xlu0 %3716
  %3718 = vrot.lane.b32.xlu0 %v3690, 24
  %v3719 = vpop.permute.xlu0 %3718
  %3720 = vrot.lane.b32.xlu0 %v3693, 24
  %v3721 = vpop.permute.xlu0 %3720
  %3731 = vst.msk [vmem:[#allocation3 + $0x48] sm:$0xff] %vm2307, %v3705
  %3732 = vst.msk [vmem:[#allocation3 + $0x50] sm:$0xff] %vm2307, %v3707
  %3733 = vst.msk [vmem:[#allocation3 + $0x58] sm:$0xff] %vm2307, %v3709
  %3734 = vst.msk [vmem:[#allocation3 + $0x60] sm:$0xff] %vm2307, %v3711
  %3735 = vst.msk [vmem:[#allocation3 + $0x68] sm:$0xff] %vm2307, %v3713
  %3736 = vst.msk [vmem:[#allocation3 + $0x70] sm:$0xff] %vm2307, %v3715
  %3737 = vst.msk [vmem:[#allocation3 + $0x78] sm:$0xff] %vm2307, %v3717
  %3738 = vst.msk [vmem:[#allocation3 + $0x80] sm:$0xff] %vm2307, %v3719
  %3739 = vst.msk [vmem:[#allocation3 + $0x88] sm:$0xff] %vm2307, %v3721
  %v3740 = vld [vmem:[#allocation3] sm:$0xff]
  %v3741 = vld [vmem:[#allocation3 + $0x8] sm:$0xff]
  %v3742 = vld [vmem:[#allocation3 + $0x10] sm:$0xff]
  %v3743 = vld [vmem:[#allocation3 + $0x18] sm:$0xff]
  %v3744 = vld [vmem:[#allocation3 + $0x20] sm:$0xff]
  %v3745 = vld [vmem:[#allocation3 + $0x28] sm:$0xff]
  %v3746 = vld [vmem:[#allocation3 + $0x30] sm:$0xff]
  %v3747 = vld [vmem:[#allocation3 + $0x38] sm:$0xff]
  %v3748 = vld [vmem:[#allocation3 + $0x40] sm:$0xff]
  %v3749 = vld [vmem:[#allocation3 + $0x48] sm:$0xff]
  %v3750 = vld [vmem:[#allocation3 + $0x50] sm:$0xff]
  %v3751 = vld [vmem:[#allocation3 + $0x58] sm:$0xff]
  %v3752 = vld [vmem:[#allocation3 + $0x60] sm:$0xff]
  %v3753 = vld [vmem:[#allocation3 + $0x68] sm:$0xff]
  %v3754 = vld [vmem:[#allocation3 + $0x70] sm:$0xff]
  %v3755 = vld [vmem:[#allocation3 + $0x78] sm:$0xff]
  %v3756 = vld [vmem:[#allocation3 + $0x80] sm:$0xff]
  %v3757 = vld [vmem:[#allocation3 + $0x88] sm:$0xff]
  %v3758 = vld [vmem:[%s7] sm:$0xff]
  %v3759 = vld [vmem:[%s7 + $0x8] sm:$0xff]
  %v3760 = vld [vmem:[%s7 + $0x10] sm:$0xff]
  %v3761 = vld [vmem:[%s7 + $0x18] sm:$0xff]
  %v3763 = vsel %vm72, %v3740, 0
  %v3766 = vsel %vm72, %v3741, 0
  %v3769 = vsel %vm72, %v3742, 0
  %v3772 = vsel %vm72, %v3743, 0
  %v3775 = vsel %vm72, %v3744, 0
  %v3778 = vsel %vm72, %v3745, 0
  %v3781 = vsel %vm72, %v3746, 0
  %v3784 = vsel %vm72, %v3747, 0
  %v3787 = vsel %vm72, %v3748, 0
  %v3790 = vsel %vm72, %v3749, 0
  %v3793 = vsel %vm72, %v3750, 0
  %v3796 = vsel %vm72, %v3751, 0
  %v3799 = vsel %vm72, %v3752, 0
  %v3802 = vsel %vm72, %v3753, 0
  %v3805 = vsel %vm72, %v3754, 0
  %v3808 = vsel %vm72, %v3755, 0
  %v3811 = vsel %vm72, %v3756, 0
  %v3814 = vsel %vm72, %v3757, 0
  %3816 = vmatpush.msra.mxu0 0.0
  %3817 = vmatpush.msra.mxu0 0.0
  %3818 = vmatpush.msra.mxu0 0.0
  %3819 = vmatpush.msra.mxu0 0.0
  %3820 = vmatpush.msra.mxu0 0.0
  %3821 = vmatpush.msra.mxu0 0.0
  %3822 = vmatpush.msra.mxu0 0.0
  %3823 = vmatpush.msra.mxu0 0.0
  %3824 = vmatpush.msra.mxu0 0.0
  %3825 = vmatpush.msra.mxu0 0.0
  %3826 = vmatpush.msra.mxu0 0.0
  %3827 = vmatpush.msra.mxu0 0.0
  %3828 = vmatpush.msra.mxu0 %v3761
  %3829 = vmatpush.msra.mxu0 %v3760
  %3830 = vmatpush.msra.mxu0 %v3759
  %3831 = vmatpush.msra.mxu0 %v3758
  %3832 = vmatmul.f32.gmra.mxu0 %v3763
  %v3833 = vpop.f32.mrf.mxu0
  %v3834 = vadd.f32 0.0, %v3833
  %3835 = vmatmul.f32.gmra.mxu0 %v3766
  %v3836 = vpop.f32.mrf.mxu0
  %v3837 = vadd.f32 0.0, %v3836
  %3838 = vmatmul.f32.gmra.mxu0 %v3769
  %v3839 = vpop.f32.mrf.mxu0
  %v3840 = vadd.f32 0.0, %v3839
  %3841 = vmatmul.f32.gmra.mxu0 %v3772
  %v3842 = vpop.f32.mrf.mxu0
  %v3843 = vadd.f32 0.0, %v3842
  %3844 = vmatmul.f32.gmra.mxu0 %v3775
  %v3845 = vpop.f32.mrf.mxu0
  %v3846 = vadd.f32 0.0, %v3845
  %3847 = vmatmul.f32.gmra.mxu0 %v3778
  %v3848 = vpop.f32.mrf.mxu0
  %v3849 = vadd.f32 0.0, %v3848
  %3850 = vmatmul.f32.gmra.mxu0 %v3781
  %v3851 = vpop.f32.mrf.mxu0
  %v3852 = vadd.f32 0.0, %v3851
  %3853 = vmatmul.f32.gmra.mxu0 %v3784
  %v3854 = vpop.f32.mrf.mxu0
  %v3855 = vadd.f32 0.0, %v3854
  %3856 = vmatmul.f32.gmra.mxu0 %v3787
  %v3857 = vpop.f32.mrf.mxu0
  %v3858 = vadd.f32 0.0, %v3857
  %3859 = vmatmul.f32.gmra.mxu0 %v3790
  %v3860 = vpop.f32.mrf.mxu0
  %v3861 = vadd.f32 0.0, %v3860
  %3862 = vmatmul.f32.gmra.mxu0 %v3793
  %v3863 = vpop.f32.mrf.mxu0
  %v3864 = vadd.f32 0.0, %v3863
  %3865 = vmatmul.f32.gmra.mxu0 %v3796
  %v3866 = vpop.f32.mrf.mxu0
  %v3867 = vadd.f32 0.0, %v3866
  %3868 = vmatmul.f32.gmra.mxu0 %v3799
  %v3869 = vpop.f32.mrf.mxu0
  %v3870 = vadd.f32 0.0, %v3869
  %3871 = vmatmul.f32.gmra.mxu0 %v3802
  %v3872 = vpop.f32.mrf.mxu0
  %v3873 = vadd.f32 0.0, %v3872
  %3874 = vmatmul.f32.gmra.mxu0 %v3805
  %v3875 = vpop.f32.mrf.mxu0
  %v3876 = vadd.f32 0.0, %v3875
  %3877 = vmatmul.f32.gmra.mxu0 %v3808
  %v3878 = vpop.f32.mrf.mxu0
  %v3879 = vadd.f32 0.0, %v3878
  %3880 = vmatmul.f32.gmra.mxu0 %v3811
  %v3881 = vpop.f32.mrf.mxu0
  %v3882 = vadd.f32 0.0, %v3881
  %3883 = vmatmul.f32.gmra.mxu0 %v3814
  %v3884 = vpop.f32.mrf.mxu0
  %v3885 = vadd.f32 0.0, %v3884
  %3886 = vdwg.mxu0
  %v3887 = vadd.f32 %v246, %v3834
  %v3888 = vadd.f32 %v247, %v3837
  %v3889 = vadd.f32 %v248, %v3840
  %v3890 = vadd.f32 %v249, %v3843
  %v3891 = vadd.f32 %v250, %v3846
  %v3892 = vadd.f32 %v251, %v3849
  %v3893 = vadd.f32 %v252, %v3852
  %v3894 = vadd.f32 %v253, %v3855
  %v3895 = vadd.f32 %v254, %v3858
  %v3896 = vadd.f32 %v255, %v3861
  %v3897 = vadd.f32 %v256, %v3864
  %v3898 = vadd.f32 %v257, %v3867
  %v3899 = vadd.f32 %v258, %v3870
  %v3900 = vadd.f32 %v259, %v3873
  %v3901 = vadd.f32 %v260, %v3876
  %v3902 = vadd.f32 %v261, %v3879
  %v3903 = vadd.f32 %v262, %v3882
  %v3904 = vadd.f32 %v263, %v3885
  %v3906 = vperm.slane %v268, 0
  %v3908 = vadd.f32 %v3887, %v3906
  %v3909 = vadd.f32 %v3888, %v3906
  %v3910 = vadd.f32 %v3889, %v3906
  %v3911 = vadd.f32 %v3890, %v3906
  %v3912 = vadd.f32 %v3891, %v3906
  %v3913 = vadd.f32 %v3892, %v3906
  %v3914 = vadd.f32 %v3893, %v3906
  %v3915 = vadd.f32 %v3894, %v3906
  %v3916 = vadd.f32 %v3895, %v3906
  %v3917 = vadd.f32 %v3896, %v3906
  %v3918 = vadd.f32 %v3897, %v3906
  %v3919 = vadd.f32 %v3898, %v3906
  %v3920 = vadd.f32 %v3899, %v3906
  %v3921 = vadd.f32 %v3900, %v3906
  %v3922 = vadd.f32 %v3901, %v3906
  %v3923 = vadd.f32 %v3902, %v3906
  %v3924 = vadd.f32 %v3903, %v3906
  %v3925 = vadd.f32 %v3904, %v3906
  %v3926 = vsel %vm72, %v3908, 0.0
  %3927 = vadd.xlane.f32.xlu0 %v3926
  %v3928 = vpop.xlane.xlu0 %3927
  %v3929 = vsel %vm72, %v3909, 0.0
  %3930 = vadd.xlane.f32.xlu0 %v3929
  %v3931 = vpop.xlane.xlu0 %3930
  %v3932 = vsel %vm72, %v3910, 0.0
  %3933 = vadd.xlane.f32.xlu0 %v3932
  %v3934 = vpop.xlane.xlu0 %3933
  %v3935 = vsel %vm72, %v3911, 0.0
  %3936 = vadd.xlane.f32.xlu0 %v3935
  %v3937 = vpop.xlane.xlu0 %3936
  %v3938 = vsel %vm72, %v3912, 0.0
  %3939 = vadd.xlane.f32.xlu0 %v3938
  %v3940 = vpop.xlane.xlu0 %3939
  %v3941 = vsel %vm72, %v3913, 0.0
  %3942 = vadd.xlane.f32.xlu0 %v3941
  %v3943 = vpop.xlane.xlu0 %3942
  %v3944 = vsel %vm72, %v3914, 0.0
  %3945 = vadd.xlane.f32.xlu0 %v3944
  %v3946 = vpop.xlane.xlu0 %3945
  %v3947 = vsel %vm72, %v3915, 0.0
  %3948 = vadd.xlane.f32.xlu0 %v3947
  %v3949 = vpop.xlane.xlu0 %3948
  %v3950 = vsel %vm72, %v3916, 0.0
  %3951 = vadd.xlane.f32.xlu0 %v3950
  %v3952 = vpop.xlane.xlu0 %3951
  %v3953 = vsel %vm72, %v3917, 0.0
  %3954 = vadd.xlane.f32.xlu0 %v3953
  %v3955 = vpop.xlane.xlu0 %3954
  %v3956 = vsel %vm72, %v3918, 0.0
  %3957 = vadd.xlane.f32.xlu0 %v3956
  %v3958 = vpop.xlane.xlu0 %3957
  %v3959 = vsel %vm72, %v3919, 0.0
  %3960 = vadd.xlane.f32.xlu0 %v3959
  %v3961 = vpop.xlane.xlu0 %3960
  %v3962 = vsel %vm72, %v3920, 0.0
  %3963 = vadd.xlane.f32.xlu0 %v3962
  %v3964 = vpop.xlane.xlu0 %3963
  %v3965 = vsel %vm72, %v3921, 0.0
  %3966 = vadd.xlane.f32.xlu0 %v3965
  %v3967 = vpop.xlane.xlu0 %3966
  %v3968 = vsel %vm72, %v3922, 0.0
  %3969 = vadd.xlane.f32.xlu0 %v3968
  %v3970 = vpop.xlane.xlu0 %3969
  %v3971 = vsel %vm72, %v3923, 0.0
  %3972 = vadd.xlane.f32.xlu0 %v3971
  %v3973 = vpop.xlane.xlu0 %3972
  %v3974 = vsel %vm72, %v3924, 0.0
  %3975 = vadd.xlane.f32.xlu0 %v3974
  %v3976 = vpop.xlane.xlu0 %3975
  %v3977 = vsel %vm72, %v3925, 0.0
  %3978 = vadd.xlane.f32.xlu0 %v3977
  %v3979 = vpop.xlane.xlu0 %3978
  %v3980 = vmul.f32 %v3928, %v335
  %v3981 = vmul.f32 %v3931, %v335
  %v3982 = vmul.f32 %v3934, %v335
  %v3983 = vmul.f32 %v3937, %v335
  %v3984 = vmul.f32 %v3940, %v335
  %v3985 = vmul.f32 %v3943, %v335
  %v3986 = vmul.f32 %v3946, %v335
  %v3987 = vmul.f32 %v3949, %v335
  %v3988 = vmul.f32 %v3952, %v335
  %v3989 = vmul.f32 %v3955, %v335
  %v3990 = vmul.f32 %v3958, %v335
  %v3991 = vmul.f32 %v3961, %v335
  %v3992 = vmul.f32 %v3964, %v335
  %v3993 = vmul.f32 %v3967, %v335
  %v3994 = vmul.f32 %v3970, %v335
  %v3995 = vmul.f32 %v3973, %v335
  %v3996 = vmul.f32 %v3976, %v335
  %v3997 = vmul.f32 %v3979, %v335
  %v3998 = vmul.f32 %v3908, %v3908
  %v3999 = vmul.f32 %v3909, %v3909
  %v4000 = vmul.f32 %v3910, %v3910
  %v4001 = vmul.f32 %v3911, %v3911
  %v4002 = vmul.f32 %v3912, %v3912
  %v4003 = vmul.f32 %v3913, %v3913
  %v4004 = vmul.f32 %v3914, %v3914
  %v4005 = vmul.f32 %v3915, %v3915
  %v4006 = vmul.f32 %v3916, %v3916
  %v4007 = vmul.f32 %v3917, %v3917
  %v4008 = vmul.f32 %v3918, %v3918
  %v4009 = vmul.f32 %v3919, %v3919
  %v4010 = vmul.f32 %v3920, %v3920
  %v4011 = vmul.f32 %v3921, %v3921
  %v4012 = vmul.f32 %v3922, %v3922
  %v4013 = vmul.f32 %v3923, %v3923
  %v4014 = vmul.f32 %v3924, %v3924
  %v4015 = vmul.f32 %v3925, %v3925
  %v4016 = vsel %vm72, %v3998, 0.0
  %4017 = vadd.xlane.f32.xlu0 %v4016
  %v4018 = vpop.xlane.xlu0 %4017
  %v4019 = vsel %vm72, %v3999, 0.0
  %4020 = vadd.xlane.f32.xlu0 %v4019
  %v4021 = vpop.xlane.xlu0 %4020
  %v4022 = vsel %vm72, %v4000, 0.0
  %4023 = vadd.xlane.f32.xlu0 %v4022
  %v4024 = vpop.xlane.xlu0 %4023
  %v4025 = vsel %vm72, %v4001, 0.0
  %4026 = vadd.xlane.f32.xlu0 %v4025
  %v4027 = vpop.xlane.xlu0 %4026
  %v4028 = vsel %vm72, %v4002, 0.0
  %4029 = vadd.xlane.f32.xlu0 %v4028
  %v4030 = vpop.xlane.xlu0 %4029
  %v4031 = vsel %vm72, %v4003, 0.0
  %4032 = vadd.xlane.f32.xlu0 %v4031
  %v4033 = vpop.xlane.xlu0 %4032
  %v4034 = vsel %vm72, %v4004, 0.0
  %4035 = vadd.xlane.f32.xlu0 %v4034
  %v4036 = vpop.xlane.xlu0 %4035
  %v4037 = vsel %vm72, %v4005, 0.0
  %4038 = vadd.xlane.f32.xlu0 %v4037
  %v4039 = vpop.xlane.xlu0 %4038
  %v4040 = vsel %vm72, %v4006, 0.0
  %4041 = vadd.xlane.f32.xlu0 %v4040
  %v4042 = vpop.xlane.xlu0 %4041
  %v4043 = vsel %vm72, %v4007, 0.0
  %4044 = vadd.xlane.f32.xlu0 %v4043
  %v4045 = vpop.xlane.xlu0 %4044
  %v4046 = vsel %vm72, %v4008, 0.0
  %4047 = vadd.xlane.f32.xlu0 %v4046
  %v4048 = vpop.xlane.xlu0 %4047
  %v4049 = vsel %vm72, %v4009, 0.0
  %4050 = vadd.xlane.f32.xlu0 %v4049
  %v4051 = vpop.xlane.xlu0 %4050
  %v4052 = vsel %vm72, %v4010, 0.0
  %4053 = vadd.xlane.f32.xlu0 %v4052
  %v4054 = vpop.xlane.xlu0 %4053
  %v4055 = vsel %vm72, %v4011, 0.0
  %4056 = vadd.xlane.f32.xlu0 %v4055
  %v4057 = vpop.xlane.xlu0 %4056
  %v4058 = vsel %vm72, %v4012, 0.0
  %4059 = vadd.xlane.f32.xlu0 %v4058
  %v4060 = vpop.xlane.xlu0 %4059
  %v4061 = vsel %vm72, %v4013, 0.0
  %4062 = vadd.xlane.f32.xlu0 %v4061
  %v4063 = vpop.xlane.xlu0 %4062
  %v4064 = vsel %vm72, %v4014, 0.0
  %4065 = vadd.xlane.f32.xlu0 %v4064
  %v4066 = vpop.xlane.xlu0 %4065
  %v4067 = vsel %vm72, %v4015, 0.0
  %4068 = vadd.xlane.f32.xlu0 %v4067
  %v4069 = vpop.xlane.xlu0 %4068
  %v4070 = vmul.f32 %v4018, %v335
  %v4071 = vmul.f32 %v4021, %v335
  %v4072 = vmul.f32 %v4024, %v335
  %v4073 = vmul.f32 %v4027, %v335
  %v4074 = vmul.f32 %v4030, %v335
  %v4075 = vmul.f32 %v4033, %v335
  %v4076 = vmul.f32 %v4036, %v335
  %v4077 = vmul.f32 %v4039, %v335
  %v4078 = vmul.f32 %v4042, %v335
  %v4079 = vmul.f32 %v4045, %v335
  %v4080 = vmul.f32 %v4048, %v335
  %v4081 = vmul.f32 %v4051, %v335
  %v4082 = vmul.f32 %v4054, %v335
  %v4083 = vmul.f32 %v4057, %v335
  %v4084 = vmul.f32 %v4060, %v335
  %v4085 = vmul.f32 %v4063, %v335
  %v4086 = vmul.f32 %v4066, %v335
  %v4087 = vmul.f32 %v4069, %v335
  %v4088 = vmul.f32 %v3980, %v3980
  %v4089 = vmul.f32 %v3981, %v3981
  %v4090 = vmul.f32 %v3982, %v3982
  %v4091 = vmul.f32 %v3983, %v3983
  %v4092 = vmul.f32 %v3984, %v3984
  %v4093 = vmul.f32 %v3985, %v3985
  %v4094 = vmul.f32 %v3986, %v3986
  %v4095 = vmul.f32 %v3987, %v3987
  %v4096 = vmul.f32 %v3988, %v3988
  %v4097 = vmul.f32 %v3989, %v3989
  %v4098 = vmul.f32 %v3990, %v3990
  %v4099 = vmul.f32 %v3991, %v3991
  %v4100 = vmul.f32 %v3992, %v3992
  %v4101 = vmul.f32 %v3993, %v3993
  %v4102 = vmul.f32 %v3994, %v3994
  %v4103 = vmul.f32 %v3995, %v3995
  %v4104 = vmul.f32 %v3996, %v3996
  %v4105 = vmul.f32 %v3997, %v3997
  %v4106 = vsub.f32 %v4070, %v4088
  %v4107 = vsub.f32 %v4071, %v4089
  %v4108 = vsub.f32 %v4072, %v4090
  %v4109 = vsub.f32 %v4073, %v4091
  %v4110 = vsub.f32 %v4074, %v4092
  %v4111 = vsub.f32 %v4075, %v4093
  %v4112 = vsub.f32 %v4076, %v4094
  %v4113 = vsub.f32 %v4077, %v4095
  %v4114 = vsub.f32 %v4078, %v4096
  %v4115 = vsub.f32 %v4079, %v4097
  %v4116 = vsub.f32 %v4080, %v4098
  %v4117 = vsub.f32 %v4081, %v4099
  %v4118 = vsub.f32 %v4082, %v4100
  %v4119 = vsub.f32 %v4083, %v4101
  %v4120 = vsub.f32 %v4084, %v4102
  %v4121 = vsub.f32 %v4085, %v4103
  %v4122 = vsub.f32 %v4086, %v4104
  %v4123 = vsub.f32 %v4087, %v4105
  %v4124 = vsub.f32 %v3908, %v3980
  %v4125 = vsub.f32 %v3909, %v3981
  %v4126 = vsub.f32 %v3910, %v3982
  %v4127 = vsub.f32 %v3911, %v3983
  %v4128 = vsub.f32 %v3912, %v3984
  %v4129 = vsub.f32 %v3913, %v3985
  %v4130 = vsub.f32 %v3914, %v3986
  %v4131 = vsub.f32 %v3915, %v3987
  %v4132 = vsub.f32 %v3916, %v3988
  %v4133 = vsub.f32 %v3917, %v3989
  %v4134 = vsub.f32 %v3918, %v3990
  %v4135 = vsub.f32 %v3919, %v3991
  %v4136 = vsub.f32 %v3920, %v3992
  %v4137 = vsub.f32 %v3921, %v3993
  %v4138 = vsub.f32 %v3922, %v3994
  %v4139 = vsub.f32 %v3923, %v3995
  %v4140 = vsub.f32 %v3924, %v3996
  %v4141 = vsub.f32 %v3925, %v3997
  %v4142 = vadd.f32 %v4106, 1e-05
  %v4143 = vadd.f32 %v4107, 1e-05
  %v4144 = vadd.f32 %v4108, 1e-05
  %v4145 = vadd.f32 %v4109, 1e-05
  %v4146 = vadd.f32 %v4110, 1e-05
  %v4147 = vadd.f32 %v4111, 1e-05
  %v4148 = vadd.f32 %v4112, 1e-05
  %v4149 = vadd.f32 %v4113, 1e-05
  %v4150 = vadd.f32 %v4114, 1e-05
  %v4151 = vadd.f32 %v4115, 1e-05
  %v4152 = vadd.f32 %v4116, 1e-05
  %v4153 = vadd.f32 %v4117, 1e-05
  %v4154 = vadd.f32 %v4118, 1e-05
  %v4155 = vadd.f32 %v4119, 1e-05
  %v4156 = vadd.f32 %v4120, 1e-05
  %v4157 = vadd.f32 %v4121, 1e-05
  %v4158 = vadd.f32 %v4122, 1e-05
  %v4159 = vadd.f32 %v4123, 1e-05
  %v4160 = vrsqrt.pop %v4142
  %v4161 = vmul.f32 %v4160, %v4142
  %v4162 = vmul.f32 %v4161, %v4160
  %v4163 = vmul.f32 0.5, %v4162
  %v4164 = vsub.f32 1.5, %v4163
  %v4165 = vmul.f32 %v4160, %v4164
  %vm4166 = vweird.f32 %v4142
  %vm4167 = vweird.f32 %v4160
  %vm4168 = vmor %vm4166, %vm4167
  %v4169 = vsel %vm4168, %v4160, %v4165
  %v4170 = vrsqrt.pop %v4143
  %v4171 = vmul.f32 %v4170, %v4143
  %v4172 = vmul.f32 %v4171, %v4170
  %v4173 = vmul.f32 0.5, %v4172
  %v4174 = vsub.f32 1.5, %v4173
  %v4175 = vmul.f32 %v4170, %v4174
  %vm4176 = vweird.f32 %v4143
  %vm4177 = vweird.f32 %v4170
  %vm4178 = vmor %vm4176, %vm4177
  %v4179 = vsel %vm4178, %v4170, %v4175
  %v4180 = vrsqrt.pop %v4144
  %v4181 = vmul.f32 %v4180, %v4144
  %v4182 = vmul.f32 %v4181, %v4180
  %v4183 = vmul.f32 0.5, %v4182
  %v4184 = vsub.f32 1.5, %v4183
  %v4185 = vmul.f32 %v4180, %v4184
  %vm4186 = vweird.f32 %v4144
  %vm4187 = vweird.f32 %v4180
  %vm4188 = vmor %vm4186, %vm4187
  %v4189 = vsel %vm4188, %v4180, %v4185
  %v4190 = vrsqrt.pop %v4145
  %v4191 = vmul.f32 %v4190, %v4145
  %v4192 = vmul.f32 %v4191, %v4190
  %v4193 = vmul.f32 0.5, %v4192
  %v4194 = vsub.f32 1.5, %v4193
  %v4195 = vmul.f32 %v4190, %v4194
  %vm4196 = vweird.f32 %v4145
  %vm4197 = vweird.f32 %v4190
  %vm4198 = vmor %vm4196, %vm4197
  %v4199 = vsel %vm4198, %v4190, %v4195
  %v4200 = vrsqrt.pop %v4146
  %v4201 = vmul.f32 %v4200, %v4146
  %v4202 = vmul.f32 %v4201, %v4200
  %v4203 = vmul.f32 0.5, %v4202
  %v4204 = vsub.f32 1.5, %v4203
  %v4205 = vmul.f32 %v4200, %v4204
  %vm4206 = vweird.f32 %v4146
  %vm4207 = vweird.f32 %v4200
  %vm4208 = vmor %vm4206, %vm4207
  %v4209 = vsel %vm4208, %v4200, %v4205
  %v4210 = vrsqrt.pop %v4147
  %v4211 = vmul.f32 %v4210, %v4147
  %v4212 = vmul.f32 %v4211, %v4210
  %v4213 = vmul.f32 0.5, %v4212
  %v4214 = vsub.f32 1.5, %v4213
  %v4215 = vmul.f32 %v4210, %v4214
  %vm4216 = vweird.f32 %v4147
  %vm4217 = vweird.f32 %v4210
  %vm4218 = vmor %vm4216, %vm4217
  %v4219 = vsel %vm4218, %v4210, %v4215
  %v4220 = vrsqrt.pop %v4148
  %v4221 = vmul.f32 %v4220, %v4148
  %v4222 = vmul.f32 %v4221, %v4220
  %v4223 = vmul.f32 0.5, %v4222
  %v4224 = vsub.f32 1.5, %v4223
  %v4225 = vmul.f32 %v4220, %v4224
  %vm4226 = vweird.f32 %v4148
  %vm4227 = vweird.f32 %v4220
  %vm4228 = vmor %vm4226, %vm4227
  %v4229 = vsel %vm4228, %v4220, %v4225
  %v4230 = vrsqrt.pop %v4149
  %v4231 = vmul.f32 %v4230, %v4149
  %v4232 = vmul.f32 %v4231, %v4230
  %v4233 = vmul.f32 0.5, %v4232
  %v4234 = vsub.f32 1.5, %v4233
  %v4235 = vmul.f32 %v4230, %v4234
  %vm4236 = vweird.f32 %v4149
  %vm4237 = vweird.f32 %v4230
  %vm4238 = vmor %vm4236, %vm4237
  %v4239 = vsel %vm4238, %v4230, %v4235
  %v4240 = vrsqrt.pop %v4150
  %v4241 = vmul.f32 %v4240, %v4150
  %v4242 = vmul.f32 %v4241, %v4240
  %v4243 = vmul.f32 0.5, %v4242
  %v4244 = vsub.f32 1.5, %v4243
  %v4245 = vmul.f32 %v4240, %v4244
  %vm4246 = vweird.f32 %v4150
  %vm4247 = vweird.f32 %v4240
  %vm4248 = vmor %vm4246, %vm4247
  %v4249 = vsel %vm4248, %v4240, %v4245
  %v4250 = vrsqrt.pop %v4151
  %v4251 = vmul.f32 %v4250, %v4151
  %v4252 = vmul.f32 %v4251, %v4250
  %v4253 = vmul.f32 0.5, %v4252
  %v4254 = vsub.f32 1.5, %v4253
  %v4255 = vmul.f32 %v4250, %v4254
  %vm4256 = vweird.f32 %v4151
  %vm4257 = vweird.f32 %v4250
  %vm4258 = vmor %vm4256, %vm4257
  %v4259 = vsel %vm4258, %v4250, %v4255
  %v4260 = vrsqrt.pop %v4152
  %v4261 = vmul.f32 %v4260, %v4152
  %v4262 = vmul.f32 %v4261, %v4260
  %v4263 = vmul.f32 0.5, %v4262
  %v4264 = vsub.f32 1.5, %v4263
  %v4265 = vmul.f32 %v4260, %v4264
  %vm4266 = vweird.f32 %v4152
  %vm4267 = vweird.f32 %v4260
  %vm4268 = vmor %vm4266, %vm4267
  %v4269 = vsel %vm4268, %v4260, %v4265
  %v4270 = vrsqrt.pop %v4153
  %v4271 = vmul.f32 %v4270, %v4153
  %v4272 = vmul.f32 %v4271, %v4270
  %v4273 = vmul.f32 0.5, %v4272
  %v4274 = vsub.f32 1.5, %v4273
  %v4275 = vmul.f32 %v4270, %v4274
  %vm4276 = vweird.f32 %v4153
  %vm4277 = vweird.f32 %v4270
  %vm4278 = vmor %vm4276, %vm4277
  %v4279 = vsel %vm4278, %v4270, %v4275
  %v4280 = vrsqrt.pop %v4154
  %v4281 = vmul.f32 %v4280, %v4154
  %v4282 = vmul.f32 %v4281, %v4280
  %v4283 = vmul.f32 0.5, %v4282
  %v4284 = vsub.f32 1.5, %v4283
  %v4285 = vmul.f32 %v4280, %v4284
  %vm4286 = vweird.f32 %v4154
  %vm4287 = vweird.f32 %v4280
  %vm4288 = vmor %vm4286, %vm4287
  %v4289 = vsel %vm4288, %v4280, %v4285
  %v4290 = vrsqrt.pop %v4155
  %v4291 = vmul.f32 %v4290, %v4155
  %v4292 = vmul.f32 %v4291, %v4290
  %v4293 = vmul.f32 0.5, %v4292
  %v4294 = vsub.f32 1.5, %v4293
  %v4295 = vmul.f32 %v4290, %v4294
  %vm4296 = vweird.f32 %v4155
  %vm4297 = vweird.f32 %v4290
  %vm4298 = vmor %vm4296, %vm4297
  %v4299 = vsel %vm4298, %v4290, %v4295
  %v4300 = vrsqrt.pop %v4156
  %v4301 = vmul.f32 %v4300, %v4156
  %v4302 = vmul.f32 %v4301, %v4300
  %v4303 = vmul.f32 0.5, %v4302
  %v4304 = vsub.f32 1.5, %v4303
  %v4305 = vmul.f32 %v4300, %v4304
  %vm4306 = vweird.f32 %v4156
  %vm4307 = vweird.f32 %v4300
  %vm4308 = vmor %vm4306, %vm4307
  %v4309 = vsel %vm4308, %v4300, %v4305
  %v4310 = vrsqrt.pop %v4157
  %v4311 = vmul.f32 %v4310, %v4157
  %v4312 = vmul.f32 %v4311, %v4310
  %v4313 = vmul.f32 0.5, %v4312
  %v4314 = vsub.f32 1.5, %v4313
  %v4315 = vmul.f32 %v4310, %v4314
  %vm4316 = vweird.f32 %v4157
  %vm4317 = vweird.f32 %v4310
  %vm4318 = vmor %vm4316, %vm4317
  %v4319 = vsel %vm4318, %v4310, %v4315
  %v4320 = vrsqrt.pop %v4158
  %v4321 = vmul.f32 %v4320, %v4158
  %v4322 = vmul.f32 %v4321, %v4320
  %v4323 = vmul.f32 0.5, %v4322
  %v4324 = vsub.f32 1.5, %v4323
  %v4325 = vmul.f32 %v4320, %v4324
  %vm4326 = vweird.f32 %v4158
  %vm4327 = vweird.f32 %v4320
  %vm4328 = vmor %vm4326, %vm4327
  %v4329 = vsel %vm4328, %v4320, %v4325
  %v4330 = vrsqrt.pop %v4159
  %v4331 = vmul.f32 %v4330, %v4159
  %v4332 = vmul.f32 %v4331, %v4330
  %v4333 = vmul.f32 0.5, %v4332
  %v4334 = vsub.f32 1.5, %v4333
  %v4335 = vmul.f32 %v4330, %v4334
  %vm4336 = vweird.f32 %v4159
  %vm4337 = vweird.f32 %v4330
  %vm4338 = vmor %vm4336, %vm4337
  %v4339 = vsel %vm4338, %v4330, %v4335
  %v4340 = vmul.f32 %v4124, %v4169
  %v4341 = vmul.f32 %v4125, %v4179
  %v4342 = vmul.f32 %v4126, %v4189
  %v4343 = vmul.f32 %v4127, %v4199
  %v4344 = vmul.f32 %v4128, %v4209
  %v4345 = vmul.f32 %v4129, %v4219
  %v4346 = vmul.f32 %v4130, %v4229
  %v4347 = vmul.f32 %v4131, %v4239
  %v4348 = vmul.f32 %v4132, %v4249
  %v4349 = vmul.f32 %v4133, %v4259
  %v4350 = vmul.f32 %v4134, %v4269
  %v4351 = vmul.f32 %v4135, %v4279
  %v4352 = vmul.f32 %v4136, %v4289
  %v4353 = vmul.f32 %v4137, %v4299
  %v4354 = vmul.f32 %v4138, %v4309
  %v4355 = vmul.f32 %v4139, %v4319
  %v4356 = vmul.f32 %v4140, %v4329
  %v4357 = vmul.f32 %v4141, %v4339
  %v4359 = vperm.slane %v270, 0
  %v4361 = vmul.f32 %v4340, %v4359
  %v4362 = vmul.f32 %v4341, %v4359
  %v4363 = vmul.f32 %v4342, %v4359
  %v4364 = vmul.f32 %v4343, %v4359
  %v4365 = vmul.f32 %v4344, %v4359
  %v4366 = vmul.f32 %v4345, %v4359
  %v4367 = vmul.f32 %v4346, %v4359
  %v4368 = vmul.f32 %v4347, %v4359
  %v4369 = vmul.f32 %v4348, %v4359
  %v4370 = vmul.f32 %v4349, %v4359
  %v4371 = vmul.f32 %v4350, %v4359
  %v4372 = vmul.f32 %v4351, %v4359
  %v4373 = vmul.f32 %v4352, %v4359
  %v4374 = vmul.f32 %v4353, %v4359
  %v4375 = vmul.f32 %v4354, %v4359
  %v4376 = vmul.f32 %v4355, %v4359
  %v4377 = vmul.f32 %v4356, %v4359
  %v4378 = vmul.f32 %v4357, %v4359
  %v4380 = vperm.slane %v272, 0
  %v4382 = vadd.f32 %v4361, %v4380
  %v4383 = vadd.f32 %v4362, %v4380
  %v4384 = vadd.f32 %v4363, %v4380
  %v4385 = vadd.f32 %v4364, %v4380
  %v4386 = vadd.f32 %v4365, %v4380
  %v4387 = vadd.f32 %v4366, %v4380
  %v4388 = vadd.f32 %v4367, %v4380
  %v4389 = vadd.f32 %v4368, %v4380
  %v4390 = vadd.f32 %v4369, %v4380
  %v4391 = vadd.f32 %v4370, %v4380
  %v4392 = vadd.f32 %v4371, %v4380
  %v4393 = vadd.f32 %v4372, %v4380
  %v4394 = vadd.f32 %v4373, %v4380
  %v4395 = vadd.f32 %v4374, %v4380
  %v4396 = vadd.f32 %v4375, %v4380
  %v4397 = vadd.f32 %v4376, %v4380
  %v4398 = vadd.f32 %v4377, %v4380
  %v4399 = vadd.f32 %v4378, %v4380
  %v4400 = vld [vmem:[%s8] sm:$0xff]
  %v4401 = vld [vmem:[%s8 + $0x8] sm:$0xff]
  %v4402 = vld [vmem:[%s8 + $0x10] sm:$0xff]
  %v4403 = vld [vmem:[%s8 + $0x18] sm:$0xff]
  %v4404 = vld [vmem:[%s9] sm:$0x1]
  %v4406 = vperm.slane %v4404, 0
  %v4409 = vsel %vm72, %v4382, 0
  %v4412 = vsel %vm72, %v4383, 0
  %v4415 = vsel %vm72, %v4384, 0
  %v4418 = vsel %vm72, %v4385, 0
  %v4421 = vsel %vm72, %v4386, 0
  %v4424 = vsel %vm72, %v4387, 0
  %v4427 = vsel %vm72, %v4388, 0
  %v4430 = vsel %vm72, %v4389, 0
  %v4433 = vsel %vm72, %v4390, 0
  %v4436 = vsel %vm72, %v4391, 0
  %v4439 = vsel %vm72, %v4392, 0
  %v4442 = vsel %vm72, %v4393, 0
  %v4445 = vsel %vm72, %v4394, 0
  %v4448 = vsel %vm72, %v4395, 0
  %v4451 = vsel %vm72, %v4396, 0
  %v4454 = vsel %vm72, %v4397, 0
  %v4457 = vsel %vm72, %v4398, 0
  %v4460 = vsel %vm72, %v4399, 0
  %4462 = vmatpush.msra.mxu0 0.0
  %4463 = vmatpush.msra.mxu0 0.0
  %4464 = vmatpush.msra.mxu0 0.0
  %4465 = vmatpush.msra.mxu0 0.0
  %4466 = vmatpush.msra.mxu0 0.0
  %4467 = vmatpush.msra.mxu0 0.0
  %4468 = vmatpush.msra.mxu0 0.0
  %4469 = vmatpush.msra.mxu0 0.0
  %4470 = vmatpush.msra.mxu0 0.0
  %4471 = vmatpush.msra.mxu0 0.0
  %4472 = vmatpush.msra.mxu0 0.0
  %4473 = vmatpush.msra.mxu0 0.0
  %4474 = vmatpush.msra.mxu0 %v4403
  %4475 = vmatpush.msra.mxu0 %v4402
  %4476 = vmatpush.msra.mxu0 %v4401
  %4477 = vmatpush.msra.mxu0 %v4400
  %4478 = vmatmul.f32.gmra.mxu0 %v4409
  %v4479 = vpop.f32.mrf.mxu0
  %v4480 = vadd.f32 %v4406, %v4479
  %4481 = vmatmul.f32.gmra.mxu0 %v4412
  %v4482 = vpop.f32.mrf.mxu0
  %v4483 = vadd.f32 %v4406, %v4482
  %4484 = vmatmul.f32.gmra.mxu0 %v4415
  %v4485 = vpop.f32.mrf.mxu0
  %v4486 = vadd.f32 %v4406, %v4485
  %4487 = vmatmul.f32.gmra.mxu0 %v4418
  %v4488 = vpop.f32.mrf.mxu0
  %v4489 = vadd.f32 %v4406, %v4488
  %4490 = vmatmul.f32.gmra.mxu0 %v4421
  %v4491 = vpop.f32.mrf.mxu0
  %v4492 = vadd.f32 %v4406, %v4491
  %4493 = vmatmul.f32.gmra.mxu0 %v4424
  %v4494 = vpop.f32.mrf.mxu0
  %v4495 = vadd.f32 %v4406, %v4494
  %4496 = vmatmul.f32.gmra.mxu0 %v4427
  %v4497 = vpop.f32.mrf.mxu0
  %v4498 = vadd.f32 %v4406, %v4497
  %4499 = vmatmul.f32.gmra.mxu0 %v4430
  %v4500 = vpop.f32.mrf.mxu0
  %v4501 = vadd.f32 %v4406, %v4500
  %4502 = vmatmul.f32.gmra.mxu0 %v4433
  %v4503 = vpop.f32.mrf.mxu0
  %v4504 = vadd.f32 %v4406, %v4503
  %4505 = vmatmul.f32.gmra.mxu0 %v4436
  %v4506 = vpop.f32.mrf.mxu0
  %v4507 = vadd.f32 %v4406, %v4506
  %4508 = vmatmul.f32.gmra.mxu0 %v4439
  %v4509 = vpop.f32.mrf.mxu0
  %v4510 = vadd.f32 %v4406, %v4509
  %4511 = vmatmul.f32.gmra.mxu0 %v4442
  %v4512 = vpop.f32.mrf.mxu0
  %v4513 = vadd.f32 %v4406, %v4512
  %4514 = vmatmul.f32.gmra.mxu0 %v4445
  %v4515 = vpop.f32.mrf.mxu0
  %v4516 = vadd.f32 %v4406, %v4515
  %4517 = vmatmul.f32.gmra.mxu0 %v4448
  %v4518 = vpop.f32.mrf.mxu0
  %v4519 = vadd.f32 %v4406, %v4518
  %4520 = vmatmul.f32.gmra.mxu0 %v4451
  %v4521 = vpop.f32.mrf.mxu0
  %v4522 = vadd.f32 %v4406, %v4521
  %4523 = vmatmul.f32.gmra.mxu0 %v4454
  %v4524 = vpop.f32.mrf.mxu0
  %v4525 = vadd.f32 %v4406, %v4524
  %4526 = vmatmul.f32.gmra.mxu0 %v4457
  %v4527 = vpop.f32.mrf.mxu0
  %v4528 = vadd.f32 %v4406, %v4527
  %4529 = vmatmul.f32.gmra.mxu0 %v4460
  %v4530 = vpop.f32.mrf.mxu0
  %v4531 = vadd.f32 %v4406, %v4530
  %4532 = vdwg.mxu0
  %v4533 = vmul.f32 %v4480, 1.702
  %v4534 = vmul.f32 %v4483, 1.702
  %v4535 = vmul.f32 %v4486, 1.702
  %v4536 = vmul.f32 %v4489, 1.702
  %v4537 = vmul.f32 %v4492, 1.702
  %v4538 = vmul.f32 %v4495, 1.702
  %v4539 = vmul.f32 %v4498, 1.702
  %v4540 = vmul.f32 %v4501, 1.702
  %v4541 = vmul.f32 %v4504, 1.702
  %v4542 = vmul.f32 %v4507, 1.702
  %v4543 = vmul.f32 %v4510, 1.702
  %v4544 = vmul.f32 %v4513, 1.702
  %v4545 = vmul.f32 %v4516, 1.702
  %v4546 = vmul.f32 %v4519, 1.702
  %v4547 = vmul.f32 %v4522, 1.702
  %v4548 = vmul.f32 %v4525, 1.702
  %v4549 = vmul.f32 %v4528, 1.702
  %v4550 = vmul.f32 %v4531, 1.702
  %v4551 = vxor.u32 %v4533, 2147483648
  %v4552 = vxor.u32 %v4534, 2147483648
  %v4553 = vxor.u32 %v4535, 2147483648
  %v4554 = vxor.u32 %v4536, 2147483648
  %v4555 = vxor.u32 %v4537, 2147483648
  %v4556 = vxor.u32 %v4538, 2147483648
  %v4557 = vxor.u32 %v4539, 2147483648
  %v4558 = vxor.u32 %v4540, 2147483648
  %v4559 = vxor.u32 %v4541, 2147483648
  %v4560 = vxor.u32 %v4542, 2147483648
  %v4561 = vxor.u32 %v4543, 2147483648
  %v4562 = vxor.u32 %v4544, 2147483648
  %v4563 = vxor.u32 %v4545, 2147483648
  %v4564 = vxor.u32 %v4546, 2147483648
  %v4565 = vxor.u32 %v4547, 2147483648
  %v4566 = vxor.u32 %v4548, 2147483648
  %v4567 = vxor.u32 %v4549, 2147483648
  %v4568 = vxor.u32 %v4550, 2147483648
  %v4569 = vmul.f32 %v4551, 1.442695
  %v4570 = vpow.pop %v4569
  %v4571 = vmul.f32 %v4552, 1.442695
  %v4572 = vpow.pop %v4571
  %v4573 = vmul.f32 %v4553, 1.442695
  %v4574 = vpow.pop %v4573
  %v4575 = vmul.f32 %v4554, 1.442695
  %v4576 = vpow.pop %v4575
  %v4577 = vmul.f32 %v4555, 1.442695
  %v4578 = vpow.pop %v4577
  %v4579 = vmul.f32 %v4556, 1.442695
  %v4580 = vpow.pop %v4579
  %v4581 = vmul.f32 %v4557, 1.442695
  %v4582 = vpow.pop %v4581
  %v4583 = vmul.f32 %v4558, 1.442695
  %v4584 = vpow.pop %v4583
  %v4585 = vmul.f32 %v4559, 1.442695
  %v4586 = vpow.pop %v4585
  %v4587 = vmul.f32 %v4560, 1.442695
  %v4588 = vpow.pop %v4587
  %v4589 = vmul.f32 %v4561, 1.442695
  %v4590 = vpow.pop %v4589
  %v4591 = vmul.f32 %v4562, 1.442695
  %v4592 = vpow.pop %v4591
  %v4593 = vmul.f32 %v4563, 1.442695
  %v4594 = vpow.pop %v4593
  %v4595 = vmul.f32 %v4564, 1.442695
  %v4596 = vpow.pop %v4595
  %v4597 = vmul.f32 %v4565, 1.442695
  %v4598 = vpow.pop %v4597
  %v4599 = vmul.f32 %v4566, 1.442695
  %v4600 = vpow.pop %v4599
  %v4601 = vmul.f32 %v4567, 1.442695
  %v4602 = vpow.pop %v4601
  %v4603 = vmul.f32 %v4568, 1.442695
  %v4604 = vpow.pop %v4603
  %v4605 = vadd.f32 %v4570, 1.0
  %v4606 = vadd.f32 %v4572, 1.0
  %v4607 = vadd.f32 %v4574, 1.0
  %v4608 = vadd.f32 %v4576, 1.0
  %v4609 = vadd.f32 %v4578, 1.0
  %v4610 = vadd.f32 %v4580, 1.0
  %v4611 = vadd.f32 %v4582, 1.0
  %v4612 = vadd.f32 %v4584, 1.0
  %v4613 = vadd.f32 %v4586, 1.0
  %v4614 = vadd.f32 %v4588, 1.0
  %v4615 = vadd.f32 %v4590, 1.0
  %v4616 = vadd.f32 %v4592, 1.0
  %v4617 = vadd.f32 %v4594, 1.0
  %v4618 = vadd.f32 %v4596, 1.0
  %v4619 = vadd.f32 %v4598, 1.0
  %v4620 = vadd.f32 %v4600, 1.0
  %v4621 = vadd.f32 %v4602, 1.0
  %v4622 = vadd.f32 %v4604, 1.0
  %v4623 = vrcp.pop %v4605
  %v4624 = vmul.f32 %v4605, %v4623
  %v4625 = vsub.f32 1.0, %v4624
  %v4626 = vmul.f32 %v4623, %v4625
  %v4627 = vadd.f32 %v4623, %v4626
  %vm4628 = vweird.f32 %v4605
  %vm4629 = vweird.f32 %v4623
  %vm4630 = vmor %vm4628, %vm4629
  %v4631 = vsel %vm4630, %v4623, %v4627
  %v4632 = vand.u32 2147483647, %v4605
  %vm4633 = vcmp.eq.f32.partialorder %v4632, 8.507059e+37
  %v4634 = vand.u32 %v4605, 2147483648
  %v4635 = vor.u32 1.1754944e-38, %v4634
  %v4636 = vsel %vm4633, %v4635, %v4631
  %v4637 = vmul.f32 1.0, %v4636
  %v4638 = vrcp.pop %v4606
  %v4639 = vmul.f32 %v4606, %v4638
  %v4640 = vsub.f32 1.0, %v4639
  %v4641 = vmul.f32 %v4638, %v4640
  %v4642 = vadd.f32 %v4638, %v4641
  %vm4643 = vweird.f32 %v4606
  %vm4644 = vweird.f32 %v4638
  %vm4645 = vmor %vm4643, %vm4644
  %v4646 = vsel %vm4645, %v4638, %v4642
  %v4647 = vand.u32 2147483647, %v4606
  %vm4648 = vcmp.eq.f32.partialorder %v4647, 8.507059e+37
  %v4649 = vand.u32 %v4606, 2147483648
  %v4650 = vor.u32 1.1754944e-38, %v4649
  %v4651 = vsel %vm4648, %v4650, %v4646
  %v4652 = vmul.f32 1.0, %v4651
  %v4653 = vrcp.pop %v4607
  %v4654 = vmul.f32 %v4607, %v4653
  %v4655 = vsub.f32 1.0, %v4654
  %v4656 = vmul.f32 %v4653, %v4655
  %v4657 = vadd.f32 %v4653, %v4656
  %vm4658 = vweird.f32 %v4607
  %vm4659 = vweird.f32 %v4653
  %vm4660 = vmor %vm4658, %vm4659
  %v4661 = vsel %vm4660, %v4653, %v4657
  %v4662 = vand.u32 2147483647, %v4607
  %vm4663 = vcmp.eq.f32.partialorder %v4662, 8.507059e+37
  %v4664 = vand.u32 %v4607, 2147483648
  %v4665 = vor.u32 1.1754944e-38, %v4664
  %v4666 = vsel %vm4663, %v4665, %v4661
  %v4667 = vmul.f32 1.0, %v4666
  %v4668 = vrcp.pop %v4608
  %v4669 = vmul.f32 %v4608, %v4668
  %v4670 = vsub.f32 1.0, %v4669
  %v4671 = vmul.f32 %v4668, %v4670
  %v4672 = vadd.f32 %v4668, %v4671
  %vm4673 = vweird.f32 %v4608
  %vm4674 = vweird.f32 %v4668
  %vm4675 = vmor %vm4673, %vm4674
  %v4676 = vsel %vm4675, %v4668, %v4672
  %v4677 = vand.u32 2147483647, %v4608
  %vm4678 = vcmp.eq.f32.partialorder %v4677, 8.507059e+37
  %v4679 = vand.u32 %v4608, 2147483648
  %v4680 = vor.u32 1.1754944e-38, %v4679
  %v4681 = vsel %vm4678, %v4680, %v4676
  %v4682 = vmul.f32 1.0, %v4681
  %v4683 = vrcp.pop %v4609
  %v4684 = vmul.f32 %v4609, %v4683
  %v4685 = vsub.f32 1.0, %v4684
  %v4686 = vmul.f32 %v4683, %v4685
  %v4687 = vadd.f32 %v4683, %v4686
  %vm4688 = vweird.f32 %v4609
  %vm4689 = vweird.f32 %v4683
  %vm4690 = vmor %vm4688, %vm4689
  %v4691 = vsel %vm4690, %v4683, %v4687
  %v4692 = vand.u32 2147483647, %v4609
  %vm4693 = vcmp.eq.f32.partialorder %v4692, 8.507059e+37
  %v4694 = vand.u32 %v4609, 2147483648
  %v4695 = vor.u32 1.1754944e-38, %v4694
  %v4696 = vsel %vm4693, %v4695, %v4691
  %v4697 = vmul.f32 1.0, %v4696
  %v4698 = vrcp.pop %v4610
  %v4699 = vmul.f32 %v4610, %v4698
  %v4700 = vsub.f32 1.0, %v4699
  %v4701 = vmul.f32 %v4698, %v4700
  %v4702 = vadd.f32 %v4698, %v4701
  %vm4703 = vweird.f32 %v4610
  %vm4704 = vweird.f32 %v4698
  %vm4705 = vmor %vm4703, %vm4704
  %v4706 = vsel %vm4705, %v4698, %v4702
  %v4707 = vand.u32 2147483647, %v4610
  %vm4708 = vcmp.eq.f32.partialorder %v4707, 8.507059e+37
  %v4709 = vand.u32 %v4610, 2147483648
  %v4710 = vor.u32 1.1754944e-38, %v4709
  %v4711 = vsel %vm4708, %v4710, %v4706
  %v4712 = vmul.f32 1.0, %v4711
  %v4713 = vrcp.pop %v4611
  %v4714 = vmul.f32 %v4611, %v4713
  %v4715 = vsub.f32 1.0, %v4714
  %v4716 = vmul.f32 %v4713, %v4715
  %v4717 = vadd.f32 %v4713, %v4716
  %vm4718 = vweird.f32 %v4611
  %vm4719 = vweird.f32 %v4713
  %vm4720 = vmor %vm4718, %vm4719
  %v4721 = vsel %vm4720, %v4713, %v4717
  %v4722 = vand.u32 2147483647, %v4611
  %vm4723 = vcmp.eq.f32.partialorder %v4722, 8.507059e+37
  %v4724 = vand.u32 %v4611, 2147483648
  %v4725 = vor.u32 1.1754944e-38, %v4724
  %v4726 = vsel %vm4723, %v4725, %v4721
  %v4727 = vmul.f32 1.0, %v4726
  %v4728 = vrcp.pop %v4612
  %v4729 = vmul.f32 %v4612, %v4728
  %v4730 = vsub.f32 1.0, %v4729
  %v4731 = vmul.f32 %v4728, %v4730
  %v4732 = vadd.f32 %v4728, %v4731
  %vm4733 = vweird.f32 %v4612
  %vm4734 = vweird.f32 %v4728
  %vm4735 = vmor %vm4733, %vm4734
  %v4736 = vsel %vm4735, %v4728, %v4732
  %v4737 = vand.u32 2147483647, %v4612
  %vm4738 = vcmp.eq.f32.partialorder %v4737, 8.507059e+37
  %v4739 = vand.u32 %v4612, 2147483648
  %v4740 = vor.u32 1.1754944e-38, %v4739
  %v4741 = vsel %vm4738, %v4740, %v4736
  %v4742 = vmul.f32 1.0, %v4741
  %v4743 = vrcp.pop %v4613
  %v4744 = vmul.f32 %v4613, %v4743
  %v4745 = vsub.f32 1.0, %v4744
  %v4746 = vmul.f32 %v4743, %v4745
  %v4747 = vadd.f32 %v4743, %v4746
  %vm4748 = vweird.f32 %v4613
  %vm4749 = vweird.f32 %v4743
  %vm4750 = vmor %vm4748, %vm4749
  %v4751 = vsel %vm4750, %v4743, %v4747
  %v4752 = vand.u32 2147483647, %v4613
  %vm4753 = vcmp.eq.f32.partialorder %v4752, 8.507059e+37
  %v4754 = vand.u32 %v4613, 2147483648
  %v4755 = vor.u32 1.1754944e-38, %v4754
  %v4756 = vsel %vm4753, %v4755, %v4751
  %v4757 = vmul.f32 1.0, %v4756
  %v4758 = vrcp.pop %v4614
  %v4759 = vmul.f32 %v4614, %v4758
  %v4760 = vsub.f32 1.0, %v4759
  %v4761 = vmul.f32 %v4758, %v4760
  %v4762 = vadd.f32 %v4758, %v4761
  %vm4763 = vweird.f32 %v4614
  %vm4764 = vweird.f32 %v4758
  %vm4765 = vmor %vm4763, %vm4764
  %v4766 = vsel %vm4765, %v4758, %v4762
  %v4767 = vand.u32 2147483647, %v4614
  %vm4768 = vcmp.eq.f32.partialorder %v4767, 8.507059e+37
  %v4769 = vand.u32 %v4614, 2147483648
  %v4770 = vor.u32 1.1754944e-38, %v4769
  %v4771 = vsel %vm4768, %v4770, %v4766
  %v4772 = vmul.f32 1.0, %v4771
  %v4773 = vrcp.pop %v4615
  %v4774 = vmul.f32 %v4615, %v4773
  %v4775 = vsub.f32 1.0, %v4774
  %v4776 = vmul.f32 %v4773, %v4775
  %v4777 = vadd.f32 %v4773, %v4776
  %vm4778 = vweird.f32 %v4615
  %vm4779 = vweird.f32 %v4773
  %vm4780 = vmor %vm4778, %vm4779
  %v4781 = vsel %vm4780, %v4773, %v4777
  %v4782 = vand.u32 2147483647, %v4615
  %vm4783 = vcmp.eq.f32.partialorder %v4782, 8.507059e+37
  %v4784 = vand.u32 %v4615, 2147483648
  %v4785 = vor.u32 1.1754944e-38, %v4784
  %v4786 = vsel %vm4783, %v4785, %v4781
  %v4787 = vmul.f32 1.0, %v4786
  %v4788 = vrcp.pop %v4616
  %v4789 = vmul.f32 %v4616, %v4788
  %v4790 = vsub.f32 1.0, %v4789
  %v4791 = vmul.f32 %v4788, %v4790
  %v4792 = vadd.f32 %v4788, %v4791
  %vm4793 = vweird.f32 %v4616
  %vm4794 = vweird.f32 %v4788
  %vm4795 = vmor %vm4793, %vm4794
  %v4796 = vsel %vm4795, %v4788, %v4792
  %v4797 = vand.u32 2147483647, %v4616
  %vm4798 = vcmp.eq.f32.partialorder %v4797, 8.507059e+37
  %v4799 = vand.u32 %v4616, 2147483648
  %v4800 = vor.u32 1.1754944e-38, %v4799
  %v4801 = vsel %vm4798, %v4800, %v4796
  %v4802 = vmul.f32 1.0, %v4801
  %v4803 = vrcp.pop %v4617
  %v4804 = vmul.f32 %v4617, %v4803
  %v4805 = vsub.f32 1.0, %v4804
  %v4806 = vmul.f32 %v4803, %v4805
  %v4807 = vadd.f32 %v4803, %v4806
  %vm4808 = vweird.f32 %v4617
  %vm4809 = vweird.f32 %v4803
  %vm4810 = vmor %vm4808, %vm4809
  %v4811 = vsel %vm4810, %v4803, %v4807
  %v4812 = vand.u32 2147483647, %v4617
  %vm4813 = vcmp.eq.f32.partialorder %v4812, 8.507059e+37
  %v4814 = vand.u32 %v4617, 2147483648
  %v4815 = vor.u32 1.1754944e-38, %v4814
  %v4816 = vsel %vm4813, %v4815, %v4811
  %v4817 = vmul.f32 1.0, %v4816
  %v4818 = vrcp.pop %v4618
  %v4819 = vmul.f32 %v4618, %v4818
  %v4820 = vsub.f32 1.0, %v4819
  %v4821 = vmul.f32 %v4818, %v4820
  %v4822 = vadd.f32 %v4818, %v4821
  %vm4823 = vweird.f32 %v4618
  %vm4824 = vweird.f32 %v4818
  %vm4825 = vmor %vm4823, %vm4824
  %v4826 = vsel %vm4825, %v4818, %v4822
  %v4827 = vand.u32 2147483647, %v4618
  %vm4828 = vcmp.eq.f32.partialorder %v4827, 8.507059e+37
  %v4829 = vand.u32 %v4618, 2147483648
  %v4830 = vor.u32 1.1754944e-38, %v4829
  %v4831 = vsel %vm4828, %v4830, %v4826
  %v4832 = vmul.f32 1.0, %v4831
  %v4833 = vrcp.pop %v4619
  %v4834 = vmul.f32 %v4619, %v4833
  %v4835 = vsub.f32 1.0, %v4834
  %v4836 = vmul.f32 %v4833, %v4835
  %v4837 = vadd.f32 %v4833, %v4836
  %vm4838 = vweird.f32 %v4619
  %vm4839 = vweird.f32 %v4833
  %vm4840 = vmor %vm4838, %vm4839
  %v4841 = vsel %vm4840, %v4833, %v4837
  %v4842 = vand.u32 2147483647, %v4619
  %vm4843 = vcmp.eq.f32.partialorder %v4842, 8.507059e+37
  %v4844 = vand.u32 %v4619, 2147483648
  %v4845 = vor.u32 1.1754944e-38, %v4844
  %v4846 = vsel %vm4843, %v4845, %v4841
  %v4847 = vmul.f32 1.0, %v4846
  %v4848 = vrcp.pop %v4620
  %v4849 = vmul.f32 %v4620, %v4848
  %v4850 = vsub.f32 1.0, %v4849
  %v4851 = vmul.f32 %v4848, %v4850
  %v4852 = vadd.f32 %v4848, %v4851
  %vm4853 = vweird.f32 %v4620
  %vm4854 = vweird.f32 %v4848
  %vm4855 = vmor %vm4853, %vm4854
  %v4856 = vsel %vm4855, %v4848, %v4852
  %v4857 = vand.u32 2147483647, %v4620
  %vm4858 = vcmp.eq.f32.partialorder %v4857, 8.507059e+37
  %v4859 = vand.u32 %v4620, 2147483648
  %v4860 = vor.u32 1.1754944e-38, %v4859
  %v4861 = vsel %vm4858, %v4860, %v4856
  %v4862 = vmul.f32 1.0, %v4861
  %v4863 = vrcp.pop %v4621
  %v4864 = vmul.f32 %v4621, %v4863
  %v4865 = vsub.f32 1.0, %v4864
  %v4866 = vmul.f32 %v4863, %v4865
  %v4867 = vadd.f32 %v4863, %v4866
  %vm4868 = vweird.f32 %v4621
  %vm4869 = vweird.f32 %v4863
  %vm4870 = vmor %vm4868, %vm4869
  %v4871 = vsel %vm4870, %v4863, %v4867
  %v4872 = vand.u32 2147483647, %v4621
  %vm4873 = vcmp.eq.f32.partialorder %v4872, 8.507059e+37
  %v4874 = vand.u32 %v4621, 2147483648
  %v4875 = vor.u32 1.1754944e-38, %v4874
  %v4876 = vsel %vm4873, %v4875, %v4871
  %v4877 = vmul.f32 1.0, %v4876
  %v4878 = vrcp.pop %v4622
  %v4879 = vmul.f32 %v4622, %v4878
  %v4880 = vsub.f32 1.0, %v4879
  %v4881 = vmul.f32 %v4878, %v4880
  %v4882 = vadd.f32 %v4878, %v4881
  %vm4883 = vweird.f32 %v4622
  %vm4884 = vweird.f32 %v4878
  %vm4885 = vmor %vm4883, %vm4884
  %v4886 = vsel %vm4885, %v4878, %v4882
  %v4887 = vand.u32 2147483647, %v4622
  %vm4888 = vcmp.eq.f32.partialorder %v4887, 8.507059e+37
  %v4889 = vand.u32 %v4622, 2147483648
  %v4890 = vor.u32 1.1754944e-38, %v4889
  %v4891 = vsel %vm4888, %v4890, %v4886
  %v4892 = vmul.f32 1.0, %v4891
  %v4893 = vmul.f32 %v4480, %v4637
  %v4894 = vmul.f32 %v4483, %v4652
  %v4895 = vmul.f32 %v4486, %v4667
  %v4896 = vmul.f32 %v4489, %v4682
  %v4897 = vmul.f32 %v4492, %v4697
  %v4898 = vmul.f32 %v4495, %v4712
  %v4899 = vmul.f32 %v4498, %v4727
  %v4900 = vmul.f32 %v4501, %v4742
  %v4901 = vmul.f32 %v4504, %v4757
  %v4902 = vmul.f32 %v4507, %v4772
  %v4903 = vmul.f32 %v4510, %v4787
  %v4904 = vmul.f32 %v4513, %v4802
  %v4905 = vmul.f32 %v4516, %v4817
  %v4906 = vmul.f32 %v4519, %v4832
  %v4907 = vmul.f32 %v4522, %v4847
  %v4908 = vmul.f32 %v4525, %v4862
  %v4909 = vmul.f32 %v4528, %v4877
  %v4910 = vmul.f32 %v4531, %v4892
  %v4911 = vld [vmem:[%s10] sm:$0xff]
  %v4912 = vld [vmem:[%s10 + $0x8] sm:$0xff]
  %v4913 = vld [vmem:[%s10 + $0x10] sm:$0xff]
  %v4914 = vld [vmem:[%s10 + $0x18] sm:$0xff]
  %v4915 = vld [vmem:[%s10 + $0x20] sm:$0xff]
  %v4916 = vld [vmem:[%s10 + $0x28] sm:$0xff]
  %v4917 = vld [vmem:[%s10 + $0x30] sm:$0xff]
  %v4918 = vld [vmem:[%s10 + $0x38] sm:$0xff]
  %v4919 = vld [vmem:[%s10 + $0x40] sm:$0xff]
  %v4920 = vld [vmem:[%s10 + $0x48] sm:$0xff]
  %v4921 = vld [vmem:[%s10 + $0x50] sm:$0xff]
  %v4922 = vld [vmem:[%s10 + $0x58] sm:$0xff]
  %v4923 = vld [vmem:[%s10 + $0x60] sm:$0xff]
  %v4924 = vld [vmem:[%s10 + $0x68] sm:$0xff]
  %v4925 = vld [vmem:[%s10 + $0x70] sm:$0xff]
  %v4926 = vld [vmem:[%s10 + $0x78] sm:$0xff]
  %v4928 = vperm.slane %v274, 0
  %4930 = vmatpush.msra.mxu0 %v4926
  %4931 = vmatpush.msra.mxu0 %v4925
  %4932 = vmatpush.msra.mxu0 %v4924
  %4933 = vmatpush.msra.mxu0 %v4923
  %4934 = vmatpush.msra.mxu0 %v4922
  %4935 = vmatpush.msra.mxu0 %v4921
  %4936 = vmatpush.msra.mxu0 %v4920
  %4937 = vmatpush.msra.mxu0 %v4919
  %4938 = vmatpush.msra.mxu0 %v4918
  %4939 = vmatpush.msra.mxu0 %v4917
  %4940 = vmatpush.msra.mxu0 %v4916
  %4941 = vmatpush.msra.mxu0 %v4915
  %4942 = vmatpush.msra.mxu0 %v4914
  %4943 = vmatpush.msra.mxu0 %v4913
  %4944 = vmatpush.msra.mxu0 %v4912
  %4945 = vmatpush.msra.mxu0 %v4911
  %4946 = vmatmul.f32.gmra.mxu0 %v4893
  %v4947 = vpop.f32.mrf.mxu0
  %v4948 = vadd.f32 %v4928, %v4947
  %4949 = vmatmul.f32.gmra.mxu0 %v4894
  %v4950 = vpop.f32.mrf.mxu0
  %v4951 = vadd.f32 %v4928, %v4950
  %4952 = vmatmul.f32.gmra.mxu0 %v4895
  %v4953 = vpop.f32.mrf.mxu0
  %v4954 = vadd.f32 %v4928, %v4953
  %4955 = vmatmul.f32.gmra.mxu0 %v4896
  %v4956 = vpop.f32.mrf.mxu0
  %v4957 = vadd.f32 %v4928, %v4956
  %4958 = vmatmul.f32.gmra.mxu0 %v4897
  %v4959 = vpop.f32.mrf.mxu0
  %v4960 = vadd.f32 %v4928, %v4959
  %4961 = vmatmul.f32.gmra.mxu0 %v4898
  %v4962 = vpop.f32.mrf.mxu0
  %v4963 = vadd.f32 %v4928, %v4962
  %4964 = vmatmul.f32.gmra.mxu0 %v4899
  %v4965 = vpop.f32.mrf.mxu0
  %v4966 = vadd.f32 %v4928, %v4965
  %4967 = vmatmul.f32.gmra.mxu0 %v4900
  %v4968 = vpop.f32.mrf.mxu0
  %v4969 = vadd.f32 %v4928, %v4968
  %4970 = vmatmul.f32.gmra.mxu0 %v4901
  %v4971 = vpop.f32.mrf.mxu0
  %v4972 = vadd.f32 %v4928, %v4971
  %4973 = vmatmul.f32.gmra.mxu0 %v4902
  %v4974 = vpop.f32.mrf.mxu0
  %v4975 = vadd.f32 %v4928, %v4974
  %4976 = vmatmul.f32.gmra.mxu0 %v4903
  %v4977 = vpop.f32.mrf.mxu0
  %v4978 = vadd.f32 %v4928, %v4977
  %4979 = vmatmul.f32.gmra.mxu0 %v4904
  %v4980 = vpop.f32.mrf.mxu0
  %v4981 = vadd.f32 %v4928, %v4980
  %4982 = vmatmul.f32.gmra.mxu0 %v4905
  %v4983 = vpop.f32.mrf.mxu0
  %v4984 = vadd.f32 %v4928, %v4983
  %4985 = vmatmul.f32.gmra.mxu0 %v4906
  %v4986 = vpop.f32.mrf.mxu0
  %v4987 = vadd.f32 %v4928, %v4986
  %4988 = vmatmul.f32.gmra.mxu0 %v4907
  %v4989 = vpop.f32.mrf.mxu0
  %v4990 = vadd.f32 %v4928, %v4989
  %4991 = vmatmul.f32.gmra.mxu0 %v4908
  %v4992 = vpop.f32.mrf.mxu0
  %v4993 = vadd.f32 %v4928, %v4992
  %4994 = vmatmul.f32.gmra.mxu0 %v4909
  %v4995 = vpop.f32.mrf.mxu0
  %v4996 = vadd.f32 %v4928, %v4995
  %4997 = vmatmul.f32.gmra.mxu0 %v4910
  %v4998 = vpop.f32.mrf.mxu0
  %v4999 = vadd.f32 %v4928, %v4998
  %5000 = vdwg.mxu0
  %v5001 = vadd.f32 %v3908, %v4948
  %v5002 = vadd.f32 %v3909, %v4951
  %v5003 = vadd.f32 %v3910, %v4954
  %v5004 = vadd.f32 %v3911, %v4957
  %v5005 = vadd.f32 %v3912, %v4960
  %v5006 = vadd.f32 %v3913, %v4963
  %v5007 = vadd.f32 %v3914, %v4966
  %v5008 = vadd.f32 %v3915, %v4969
  %v5009 = vadd.f32 %v3916, %v4972
  %v5010 = vadd.f32 %v3917, %v4975
  %v5011 = vadd.f32 %v3918, %v4978
  %v5012 = vadd.f32 %v3919, %v4981
  %v5013 = vadd.f32 %v3920, %v4984
  %v5014 = vadd.f32 %v3921, %v4987
  %v5015 = vadd.f32 %v3922, %v4990
  %v5016 = vadd.f32 %v3923, %v4993
  %v5017 = vadd.f32 %v3924, %v4996
  %v5018 = vadd.f32 %v3925, %v4999
  %s5019 = scalar_lea.vmem %s11, 6
  %v5020 = vld [vmem:[%s5019] sm:$0x1]
  %s5021 = scalar_lea.vmem %s11, 7
  %v5022 = vld [vmem:[%s5021] sm:$0x1]
  %s5023 = scalar_lea.vmem %s11, 8
  %v5024 = vld [vmem:[%s5023] sm:$0x1]
  %s5025 = scalar_lea.vmem %s11, 9
  %v5026 = vld [vmem:[%s5025] sm:$0x1]
  %s5027 = scalar_lea.vmem %s11, 10
  %v5028 = vld [vmem:[%s5027] sm:$0x1]
  %s5029 = scalar_lea.vmem %s11, 11
  %v5030 = vld [vmem:[%s5029] sm:$0x1]
  %v5031 = vsel %vm72, %v5001, 0.0
  %5032 = vadd.xlane.f32.xlu0 %v5031
  %v5033 = vpop.xlane.xlu0 %5032
  %v5034 = vsel %vm72, %v5002, 0.0
  %5035 = vadd.xlane.f32.xlu0 %v5034
  %v5036 = vpop.xlane.xlu0 %5035
  %v5037 = vsel %vm72, %v5003, 0.0
  %5038 = vadd.xlane.f32.xlu0 %v5037
  %v5039 = vpop.xlane.xlu0 %5038
  %v5040 = vsel %vm72, %v5004, 0.0
  %5041 = vadd.xlane.f32.xlu0 %v5040
  %v5042 = vpop.xlane.xlu0 %5041
  %v5043 = vsel %vm72, %v5005, 0.0
  %5044 = vadd.xlane.f32.xlu0 %v5043
  %v5045 = vpop.xlane.xlu0 %5044
  %v5046 = vsel %vm72, %v5006, 0.0
  %5047 = vadd.xlane.f32.xlu0 %v5046
  %v5048 = vpop.xlane.xlu0 %5047
  %v5049 = vsel %vm72, %v5007, 0.0
  %5050 = vadd.xlane.f32.xlu0 %v5049
  %v5051 = vpop.xlane.xlu0 %5050
  %v5052 = vsel %vm72, %v5008, 0.0
  %5053 = vadd.xlane.f32.xlu0 %v5052
  %v5054 = vpop.xlane.xlu0 %5053
  %v5055 = vsel %vm72, %v5009, 0.0
  %5056 = vadd.xlane.f32.xlu0 %v5055
  %v5057 = vpop.xlane.xlu0 %5056
  %v5058 = vsel %vm72, %v5010, 0.0
  %5059 = vadd.xlane.f32.xlu0 %v5058
  %v5060 = vpop.xlane.xlu0 %5059
  %v5061 = vsel %vm72, %v5011, 0.0
  %5062 = vadd.xlane.f32.xlu0 %v5061
  %v5063 = vpop.xlane.xlu0 %5062
  %v5064 = vsel %vm72, %v5012, 0.0
  %5065 = vadd.xlane.f32.xlu0 %v5064
  %v5066 = vpop.xlane.xlu0 %5065
  %v5067 = vsel %vm72, %v5013, 0.0
  %5068 = vadd.xlane.f32.xlu0 %v5067
  %v5069 = vpop.xlane.xlu0 %5068
  %v5070 = vsel %vm72, %v5014, 0.0
  %5071 = vadd.xlane.f32.xlu0 %v5070
  %v5072 = vpop.xlane.xlu0 %5071
  %v5073 = vsel %vm72, %v5015, 0.0
  %5074 = vadd.xlane.f32.xlu0 %v5073
  %v5075 = vpop.xlane.xlu0 %5074
  %v5076 = vsel %vm72, %v5016, 0.0
  %5077 = vadd.xlane.f32.xlu0 %v5076
  %v5078 = vpop.xlane.xlu0 %5077
  %v5079 = vsel %vm72, %v5017, 0.0
  %5080 = vadd.xlane.f32.xlu0 %v5079
  %v5081 = vpop.xlane.xlu0 %5080
  %v5082 = vsel %vm72, %v5018, 0.0
  %5083 = vadd.xlane.f32.xlu0 %v5082
  %v5084 = vpop.xlane.xlu0 %5083
  %v5085 = vmul.f32 %v5033, %v335
  %v5086 = vmul.f32 %v5036, %v335
  %v5087 = vmul.f32 %v5039, %v335
  %v5088 = vmul.f32 %v5042, %v335
  %v5089 = vmul.f32 %v5045, %v335
  %v5090 = vmul.f32 %v5048, %v335
  %v5091 = vmul.f32 %v5051, %v335
  %v5092 = vmul.f32 %v5054, %v335
  %v5093 = vmul.f32 %v5057, %v335
  %v5094 = vmul.f32 %v5060, %v335
  %v5095 = vmul.f32 %v5063, %v335
  %v5096 = vmul.f32 %v5066, %v335
  %v5097 = vmul.f32 %v5069, %v335
  %v5098 = vmul.f32 %v5072, %v335
  %v5099 = vmul.f32 %v5075, %v335
  %v5100 = vmul.f32 %v5078, %v335
  %v5101 = vmul.f32 %v5081, %v335
  %v5102 = vmul.f32 %v5084, %v335
  %v5103 = vmul.f32 %v5001, %v5001
  %v5104 = vmul.f32 %v5002, %v5002
  %v5105 = vmul.f32 %v5003, %v5003
  %v5106 = vmul.f32 %v5004, %v5004
  %v5107 = vmul.f32 %v5005, %v5005
  %v5108 = vmul.f32 %v5006, %v5006
  %v5109 = vmul.f32 %v5007, %v5007
  %v5110 = vmul.f32 %v5008, %v5008
  %v5111 = vmul.f32 %v5009, %v5009
  %v5112 = vmul.f32 %v5010, %v5010
  %v5113 = vmul.f32 %v5011, %v5011
  %v5114 = vmul.f32 %v5012, %v5012
  %v5115 = vmul.f32 %v5013, %v5013
  %v5116 = vmul.f32 %v5014, %v5014
  %v5117 = vmul.f32 %v5015, %v5015
  %v5118 = vmul.f32 %v5016, %v5016
  %v5119 = vmul.f32 %v5017, %v5017
  %v5120 = vmul.f32 %v5018, %v5018
  %v5121 = vsel %vm72, %v5103, 0.0
  %5122 = vadd.xlane.f32.xlu0 %v5121
  %v5123 = vpop.xlane.xlu0 %5122
  %v5124 = vsel %vm72, %v5104, 0.0
  %5125 = vadd.xlane.f32.xlu0 %v5124
  %v5126 = vpop.xlane.xlu0 %5125
  %v5127 = vsel %vm72, %v5105, 0.0
  %5128 = vadd.xlane.f32.xlu0 %v5127
  %v5129 = vpop.xlane.xlu0 %5128
  %v5130 = vsel %vm72, %v5106, 0.0
  %5131 = vadd.xlane.f32.xlu0 %v5130
  %v5132 = vpop.xlane.xlu0 %5131
  %v5133 = vsel %vm72, %v5107, 0.0
  %5134 = vadd.xlane.f32.xlu0 %v5133
  %v5135 = vpop.xlane.xlu0 %5134
  %v5136 = vsel %vm72, %v5108, 0.0
  %5137 = vadd.xlane.f32.xlu0 %v5136
  %v5138 = vpop.xlane.xlu0 %5137
  %v5139 = vsel %vm72, %v5109, 0.0
  %5140 = vadd.xlane.f32.xlu0 %v5139
  %v5141 = vpop.xlane.xlu0 %5140
  %v5142 = vsel %vm72, %v5110, 0.0
  %5143 = vadd.xlane.f32.xlu0 %v5142
  %v5144 = vpop.xlane.xlu0 %5143
  %v5145 = vsel %vm72, %v5111, 0.0
  %5146 = vadd.xlane.f32.xlu0 %v5145
  %v5147 = vpop.xlane.xlu0 %5146
  %v5148 = vsel %vm72, %v5112, 0.0
  %5149 = vadd.xlane.f32.xlu0 %v5148
  %v5150 = vpop.xlane.xlu0 %5149
  %v5151 = vsel %vm72, %v5113, 0.0
  %5152 = vadd.xlane.f32.xlu0 %v5151
  %v5153 = vpop.xlane.xlu0 %5152
  %v5154 = vsel %vm72, %v5114, 0.0
  %5155 = vadd.xlane.f32.xlu0 %v5154
  %v5156 = vpop.xlane.xlu0 %5155
  %v5157 = vsel %vm72, %v5115, 0.0
  %5158 = vadd.xlane.f32.xlu0 %v5157
  %v5159 = vpop.xlane.xlu0 %5158
  %v5160 = vsel %vm72, %v5116, 0.0
  %5161 = vadd.xlane.f32.xlu0 %v5160
  %v5162 = vpop.xlane.xlu0 %5161
  %v5163 = vsel %vm72, %v5117, 0.0
  %5164 = vadd.xlane.f32.xlu0 %v5163
  %v5165 = vpop.xlane.xlu0 %5164
  %v5166 = vsel %vm72, %v5118, 0.0
  %5167 = vadd.xlane.f32.xlu0 %v5166
  %v5168 = vpop.xlane.xlu0 %5167
  %v5169 = vsel %vm72, %v5119, 0.0
  %5170 = vadd.xlane.f32.xlu0 %v5169
  %v5171 = vpop.xlane.xlu0 %5170
  %v5172 = vsel %vm72, %v5120, 0.0
  %5173 = vadd.xlane.f32.xlu0 %v5172
  %v5174 = vpop.xlane.xlu0 %5173
  %v5175 = vmul.f32 %v5123, %v335
  %v5176 = vmul.f32 %v5126, %v335
  %v5177 = vmul.f32 %v5129, %v335
  %v5178 = vmul.f32 %v5132, %v335
  %v5179 = vmul.f32 %v5135, %v335
  %v5180 = vmul.f32 %v5138, %v335
  %v5181 = vmul.f32 %v5141, %v335
  %v5182 = vmul.f32 %v5144, %v335
  %v5183 = vmul.f32 %v5147, %v335
  %v5184 = vmul.f32 %v5150, %v335
  %v5185 = vmul.f32 %v5153, %v335
  %v5186 = vmul.f32 %v5156, %v335
  %v5187 = vmul.f32 %v5159, %v335
  %v5188 = vmul.f32 %v5162, %v335
  %v5189 = vmul.f32 %v5165, %v335
  %v5190 = vmul.f32 %v5168, %v335
  %v5191 = vmul.f32 %v5171, %v335
  %v5192 = vmul.f32 %v5174, %v335
  %v5193 = vmul.f32 %v5085, %v5085
  %v5194 = vmul.f32 %v5086, %v5086
  %v5195 = vmul.f32 %v5087, %v5087
  %v5196 = vmul.f32 %v5088, %v5088
  %v5197 = vmul.f32 %v5089, %v5089
  %v5198 = vmul.f32 %v5090, %v5090
  %v5199 = vmul.f32 %v5091, %v5091
  %v5200 = vmul.f32 %v5092, %v5092
  %v5201 = vmul.f32 %v5093, %v5093
  %v5202 = vmul.f32 %v5094, %v5094
  %v5203 = vmul.f32 %v5095, %v5095
  %v5204 = vmul.f32 %v5096, %v5096
  %v5205 = vmul.f32 %v5097, %v5097
  %v5206 = vmul.f32 %v5098, %v5098
  %v5207 = vmul.f32 %v5099, %v5099
  %v5208 = vmul.f32 %v5100, %v5100
  %v5209 = vmul.f32 %v5101, %v5101
  %v5210 = vmul.f32 %v5102, %v5102
  %v5211 = vsub.f32 %v5175, %v5193
  %v5212 = vsub.f32 %v5176, %v5194
  %v5213 = vsub.f32 %v5177, %v5195
  %v5214 = vsub.f32 %v5178, %v5196
  %v5215 = vsub.f32 %v5179, %v5197
  %v5216 = vsub.f32 %v5180, %v5198
  %v5217 = vsub.f32 %v5181, %v5199
  %v5218 = vsub.f32 %v5182, %v5200
  %v5219 = vsub.f32 %v5183, %v5201
  %v5220 = vsub.f32 %v5184, %v5202
  %v5221 = vsub.f32 %v5185, %v5203
  %v5222 = vsub.f32 %v5186, %v5204
  %v5223 = vsub.f32 %v5187, %v5205
  %v5224 = vsub.f32 %v5188, %v5206
  %v5225 = vsub.f32 %v5189, %v5207
  %v5226 = vsub.f32 %v5190, %v5208
  %v5227 = vsub.f32 %v5191, %v5209
  %v5228 = vsub.f32 %v5192, %v5210
  %v5229 = vsub.f32 %v5001, %v5085
  %v5230 = vsub.f32 %v5002, %v5086
  %v5231 = vsub.f32 %v5003, %v5087
  %v5232 = vsub.f32 %v5004, %v5088
  %v5233 = vsub.f32 %v5005, %v5089
  %v5234 = vsub.f32 %v5006, %v5090
  %v5235 = vsub.f32 %v5007, %v5091
  %v5236 = vsub.f32 %v5008, %v5092
  %v5237 = vsub.f32 %v5009, %v5093
  %v5238 = vsub.f32 %v5010, %v5094
  %v5239 = vsub.f32 %v5011, %v5095
  %v5240 = vsub.f32 %v5012, %v5096
  %v5241 = vsub.f32 %v5013, %v5097
  %v5242 = vsub.f32 %v5014, %v5098
  %v5243 = vsub.f32 %v5015, %v5099
  %v5244 = vsub.f32 %v5016, %v5100
  %v5245 = vsub.f32 %v5017, %v5101
  %v5246 = vsub.f32 %v5018, %v5102
  %v5247 = vadd.f32 %v5211, 1e-05
  %v5248 = vadd.f32 %v5212, 1e-05
  %v5249 = vadd.f32 %v5213, 1e-05
  %v5250 = vadd.f32 %v5214, 1e-05
  %v5251 = vadd.f32 %v5215, 1e-05
  %v5252 = vadd.f32 %v5216, 1e-05
  %v5253 = vadd.f32 %v5217, 1e-05
  %v5254 = vadd.f32 %v5218, 1e-05
  %v5255 = vadd.f32 %v5219, 1e-05
  %v5256 = vadd.f32 %v5220, 1e-05
  %v5257 = vadd.f32 %v5221, 1e-05
  %v5258 = vadd.f32 %v5222, 1e-05
  %v5259 = vadd.f32 %v5223, 1e-05
  %v5260 = vadd.f32 %v5224, 1e-05
  %v5261 = vadd.f32 %v5225, 1e-05
  %v5262 = vadd.f32 %v5226, 1e-05
  %v5263 = vadd.f32 %v5227, 1e-05
  %v5264 = vadd.f32 %v5228, 1e-05
  %v5265 = vrsqrt.pop %v5247
  %v5266 = vmul.f32 %v5265, %v5247
  %v5267 = vmul.f32 %v5266, %v5265
  %v5268 = vmul.f32 0.5, %v5267
  %v5269 = vsub.f32 1.5, %v5268
  %v5270 = vmul.f32 %v5265, %v5269
  %vm5271 = vweird.f32 %v5247
  %vm5272 = vweird.f32 %v5265
  %vm5273 = vmor %vm5271, %vm5272
  %v5274 = vsel %vm5273, %v5265, %v5270
  %v5275 = vrsqrt.pop %v5248
  %v5276 = vmul.f32 %v5275, %v5248
  %v5277 = vmul.f32 %v5276, %v5275
  %v5278 = vmul.f32 0.5, %v5277
  %v5279 = vsub.f32 1.5, %v5278
  %v5280 = vmul.f32 %v5275, %v5279
  %vm5281 = vweird.f32 %v5248
  %vm5282 = vweird.f32 %v5275
  %vm5283 = vmor %vm5281, %vm5282
  %v5284 = vsel %vm5283, %v5275, %v5280
  %v5285 = vrsqrt.pop %v5249
  %v5286 = vmul.f32 %v5285, %v5249
  %v5287 = vmul.f32 %v5286, %v5285
  %v5288 = vmul.f32 0.5, %v5287
  %v5289 = vsub.f32 1.5, %v5288
  %v5290 = vmul.f32 %v5285, %v5289
  %vm5291 = vweird.f32 %v5249
  %vm5292 = vweird.f32 %v5285
  %vm5293 = vmor %vm5291, %vm5292
  %v5294 = vsel %vm5293, %v5285, %v5290
  %v5295 = vrsqrt.pop %v5250
  %v5296 = vmul.f32 %v5295, %v5250
  %v5297 = vmul.f32 %v5296, %v5295
  %v5298 = vmul.f32 0.5, %v5297
  %v5299 = vsub.f32 1.5, %v5298
  %v5300 = vmul.f32 %v5295, %v5299
  %vm5301 = vweird.f32 %v5250
  %vm5302 = vweird.f32 %v5295
  %vm5303 = vmor %vm5301, %vm5302
  %v5304 = vsel %vm5303, %v5295, %v5300
  %v5305 = vrsqrt.pop %v5251
  %v5306 = vmul.f32 %v5305, %v5251
  %v5307 = vmul.f32 %v5306, %v5305
  %v5308 = vmul.f32 0.5, %v5307
  %v5309 = vsub.f32 1.5, %v5308
  %v5310 = vmul.f32 %v5305, %v5309
  %vm5311 = vweird.f32 %v5251
  %vm5312 = vweird.f32 %v5305
  %vm5313 = vmor %vm5311, %vm5312
  %v5314 = vsel %vm5313, %v5305, %v5310
  %v5315 = vrsqrt.pop %v5252
  %v5316 = vmul.f32 %v5315, %v5252
  %v5317 = vmul.f32 %v5316, %v5315
  %v5318 = vmul.f32 0.5, %v5317
  %v5319 = vsub.f32 1.5, %v5318
  %v5320 = vmul.f32 %v5315, %v5319
  %vm5321 = vweird.f32 %v5252
  %vm5322 = vweird.f32 %v5315
  %vm5323 = vmor %vm5321, %vm5322
  %v5324 = vsel %vm5323, %v5315, %v5320
  %v5325 = vrsqrt.pop %v5253
  %v5326 = vmul.f32 %v5325, %v5253
  %v5327 = vmul.f32 %v5326, %v5325
  %v5328 = vmul.f32 0.5, %v5327
  %v5329 = vsub.f32 1.5, %v5328
  %v5330 = vmul.f32 %v5325, %v5329
  %vm5331 = vweird.f32 %v5253
  %vm5332 = vweird.f32 %v5325
  %vm5333 = vmor %vm5331, %vm5332
  %v5334 = vsel %vm5333, %v5325, %v5330
  %v5335 = vrsqrt.pop %v5254
  %v5336 = vmul.f32 %v5335, %v5254
  %v5337 = vmul.f32 %v5336, %v5335
  %v5338 = vmul.f32 0.5, %v5337
  %v5339 = vsub.f32 1.5, %v5338
  %v5340 = vmul.f32 %v5335, %v5339
  %vm5341 = vweird.f32 %v5254
  %vm5342 = vweird.f32 %v5335
  %vm5343 = vmor %vm5341, %vm5342
  %v5344 = vsel %vm5343, %v5335, %v5340
  %v5345 = vrsqrt.pop %v5255
  %v5346 = vmul.f32 %v5345, %v5255
  %v5347 = vmul.f32 %v5346, %v5345
  %v5348 = vmul.f32 0.5, %v5347
  %v5349 = vsub.f32 1.5, %v5348
  %v5350 = vmul.f32 %v5345, %v5349
  %vm5351 = vweird.f32 %v5255
  %vm5352 = vweird.f32 %v5345
  %vm5353 = vmor %vm5351, %vm5352
  %v5354 = vsel %vm5353, %v5345, %v5350
  %v5355 = vrsqrt.pop %v5256
  %v5356 = vmul.f32 %v5355, %v5256
  %v5357 = vmul.f32 %v5356, %v5355
  %v5358 = vmul.f32 0.5, %v5357
  %v5359 = vsub.f32 1.5, %v5358
  %v5360 = vmul.f32 %v5355, %v5359
  %vm5361 = vweird.f32 %v5256
  %vm5362 = vweird.f32 %v5355
  %vm5363 = vmor %vm5361, %vm5362
  %v5364 = vsel %vm5363, %v5355, %v5360
  %v5365 = vrsqrt.pop %v5257
  %v5366 = vmul.f32 %v5365, %v5257
  %v5367 = vmul.f32 %v5366, %v5365
  %v5368 = vmul.f32 0.5, %v5367
  %v5369 = vsub.f32 1.5, %v5368
  %v5370 = vmul.f32 %v5365, %v5369
  %vm5371 = vweird.f32 %v5257
  %vm5372 = vweird.f32 %v5365
  %vm5373 = vmor %vm5371, %vm5372
  %v5374 = vsel %vm5373, %v5365, %v5370
  %v5375 = vrsqrt.pop %v5258
  %v5376 = vmul.f32 %v5375, %v5258
  %v5377 = vmul.f32 %v5376, %v5375
  %v5378 = vmul.f32 0.5, %v5377
  %v5379 = vsub.f32 1.5, %v5378
  %v5380 = vmul.f32 %v5375, %v5379
  %vm5381 = vweird.f32 %v5258
  %vm5382 = vweird.f32 %v5375
  %vm5383 = vmor %vm5381, %vm5382
  %v5384 = vsel %vm5383, %v5375, %v5380
  %v5385 = vrsqrt.pop %v5259
  %v5386 = vmul.f32 %v5385, %v5259
  %v5387 = vmul.f32 %v5386, %v5385
  %v5388 = vmul.f32 0.5, %v5387
  %v5389 = vsub.f32 1.5, %v5388
  %v5390 = vmul.f32 %v5385, %v5389
  %vm5391 = vweird.f32 %v5259
  %vm5392 = vweird.f32 %v5385
  %vm5393 = vmor %vm5391, %vm5392
  %v5394 = vsel %vm5393, %v5385, %v5390
  %v5395 = vrsqrt.pop %v5260
  %v5396 = vmul.f32 %v5395, %v5260
  %v5397 = vmul.f32 %v5396, %v5395
  %v5398 = vmul.f32 0.5, %v5397
  %v5399 = vsub.f32 1.5, %v5398
  %v5400 = vmul.f32 %v5395, %v5399
  %vm5401 = vweird.f32 %v5260
  %vm5402 = vweird.f32 %v5395
  %vm5403 = vmor %vm5401, %vm5402
  %v5404 = vsel %vm5403, %v5395, %v5400
  %v5405 = vrsqrt.pop %v5261
  %v5406 = vmul.f32 %v5405, %v5261
  %v5407 = vmul.f32 %v5406, %v5405
  %v5408 = vmul.f32 0.5, %v5407
  %v5409 = vsub.f32 1.5, %v5408
  %v5410 = vmul.f32 %v5405, %v5409
  %vm5411 = vweird.f32 %v5261
  %vm5412 = vweird.f32 %v5405
  %vm5413 = vmor %vm5411, %vm5412
  %v5414 = vsel %vm5413, %v5405, %v5410
  %v5415 = vrsqrt.pop %v5262
  %v5416 = vmul.f32 %v5415, %v5262
  %v5417 = vmul.f32 %v5416, %v5415
  %v5418 = vmul.f32 0.5, %v5417
  %v5419 = vsub.f32 1.5, %v5418
  %v5420 = vmul.f32 %v5415, %v5419
  %vm5421 = vweird.f32 %v5262
  %vm5422 = vweird.f32 %v5415
  %vm5423 = vmor %vm5421, %vm5422
  %v5424 = vsel %vm5423, %v5415, %v5420
  %v5425 = vrsqrt.pop %v5263
  %v5426 = vmul.f32 %v5425, %v5263
  %v5427 = vmul.f32 %v5426, %v5425
  %v5428 = vmul.f32 0.5, %v5427
  %v5429 = vsub.f32 1.5, %v5428
  %v5430 = vmul.f32 %v5425, %v5429
  %vm5431 = vweird.f32 %v5263
  %vm5432 = vweird.f32 %v5425
  %vm5433 = vmor %vm5431, %vm5432
  %v5434 = vsel %vm5433, %v5425, %v5430
  %v5435 = vrsqrt.pop %v5264
  %v5436 = vmul.f32 %v5435, %v5264
  %v5437 = vmul.f32 %v5436, %v5435
  %v5438 = vmul.f32 0.5, %v5437
  %v5439 = vsub.f32 1.5, %v5438
  %v5440 = vmul.f32 %v5435, %v5439
  %vm5441 = vweird.f32 %v5264
  %vm5442 = vweird.f32 %v5435
  %vm5443 = vmor %vm5441, %vm5442
  %v5444 = vsel %vm5443, %v5435, %v5440
  %v5445 = vmul.f32 %v5229, %v5274
  %v5446 = vmul.f32 %v5230, %v5284
  %v5447 = vmul.f32 %v5231, %v5294
  %v5448 = vmul.f32 %v5232, %v5304
  %v5449 = vmul.f32 %v5233, %v5314
  %v5450 = vmul.f32 %v5234, %v5324
  %v5451 = vmul.f32 %v5235, %v5334
  %v5452 = vmul.f32 %v5236, %v5344
  %v5453 = vmul.f32 %v5237, %v5354
  %v5454 = vmul.f32 %v5238, %v5364
  %v5455 = vmul.f32 %v5239, %v5374
  %v5456 = vmul.f32 %v5240, %v5384
  %v5457 = vmul.f32 %v5241, %v5394
  %v5458 = vmul.f32 %v5242, %v5404
  %v5459 = vmul.f32 %v5243, %v5414
  %v5460 = vmul.f32 %v5244, %v5424
  %v5461 = vmul.f32 %v5245, %v5434
  %v5462 = vmul.f32 %v5246, %v5444
  %v5464 = vperm.slane %v5020, 0
  %v5466 = vmul.f32 %v5445, %v5464
  %v5467 = vmul.f32 %v5446, %v5464
  %v5468 = vmul.f32 %v5447, %v5464
  %v5469 = vmul.f32 %v5448, %v5464
  %v5470 = vmul.f32 %v5449, %v5464
  %v5471 = vmul.f32 %v5450, %v5464
  %v5472 = vmul.f32 %v5451, %v5464
  %v5473 = vmul.f32 %v5452, %v5464
  %v5474 = vmul.f32 %v5453, %v5464
  %v5475 = vmul.f32 %v5454, %v5464
  %v5476 = vmul.f32 %v5455, %v5464
  %v5477 = vmul.f32 %v5456, %v5464
  %v5478 = vmul.f32 %v5457, %v5464
  %v5479 = vmul.f32 %v5458, %v5464
  %v5480 = vmul.f32 %v5459, %v5464
  %v5481 = vmul.f32 %v5460, %v5464
  %v5482 = vmul.f32 %v5461, %v5464
  %v5483 = vmul.f32 %v5462, %v5464
  %v5485 = vperm.slane %v5022, 0
  %v5487 = vadd.f32 %v5466, %v5485
  %v5488 = vadd.f32 %v5467, %v5485
  %v5489 = vadd.f32 %v5468, %v5485
  %v5490 = vadd.f32 %v5469, %v5485
  %v5491 = vadd.f32 %v5470, %v5485
  %v5492 = vadd.f32 %v5471, %v5485
  %v5493 = vadd.f32 %v5472, %v5485
  %v5494 = vadd.f32 %v5473, %v5485
  %v5495 = vadd.f32 %v5474, %v5485
  %v5496 = vadd.f32 %v5475, %v5485
  %v5497 = vadd.f32 %v5476, %v5485
  %v5498 = vadd.f32 %v5477, %v5485
  %v5499 = vadd.f32 %v5478, %v5485
  %v5500 = vadd.f32 %v5479, %v5485
  %v5501 = vadd.f32 %v5480, %v5485
  %v5502 = vadd.f32 %v5481, %v5485
  %v5503 = vadd.f32 %v5482, %v5485
  %v5504 = vadd.f32 %v5483, %v5485
  %s5505 = scalar_lea.vmem %s5, 32
  %v5506 = vld [vmem:[%s5505] sm:$0xff]
  %v5507 = vld [vmem:[%s5505 + $0x8] sm:$0xff]
  %v5508 = vld [vmem:[%s5505 + $0x10] sm:$0xff]
  %v5509 = vld [vmem:[%s5505 + $0x18] sm:$0xff]
  %s5510 = scalar_lea.vmem %s6, 1
  %v5511 = vld [vmem:[%s5510] sm:$0x1]
  %v5513 = vperm.slane %v5511, 0
  %v5516 = vsel %vm72, %v5487, 0
  %v5519 = vsel %vm72, %v5488, 0
  %v5522 = vsel %vm72, %v5489, 0
  %v5525 = vsel %vm72, %v5490, 0
  %v5528 = vsel %vm72, %v5491, 0
  %v5531 = vsel %vm72, %v5492, 0
  %v5534 = vsel %vm72, %v5493, 0
  %v5537 = vsel %vm72, %v5494, 0
  %v5540 = vsel %vm72, %v5495, 0
  %v5543 = vsel %vm72, %v5496, 0
  %v5546 = vsel %vm72, %v5497, 0
  %v5549 = vsel %vm72, %v5498, 0
  %v5552 = vsel %vm72, %v5499, 0
  %v5555 = vsel %vm72, %v5500, 0
  %v5558 = vsel %vm72, %v5501, 0
  %v5561 = vsel %vm72, %v5502, 0
  %v5564 = vsel %vm72, %v5503, 0
  %v5567 = vsel %vm72, %v5504, 0
  %5569 = vmatpush.msra.mxu0 0.0
  %5570 = vmatpush.msra.mxu0 0.0
  %5571 = vmatpush.msra.mxu0 0.0
  %5572 = vmatpush.msra.mxu0 0.0
  %5573 = vmatpush.msra.mxu0 0.0
  %5574 = vmatpush.msra.mxu0 0.0
  %5575 = vmatpush.msra.mxu0 0.0
  %5576 = vmatpush.msra.mxu0 0.0
  %5577 = vmatpush.msra.mxu0 0.0
  %5578 = vmatpush.msra.mxu0 0.0
  %5579 = vmatpush.msra.mxu0 0.0
  %5580 = vmatpush.msra.mxu0 0.0
  %5581 = vmatpush.msra.mxu0 %v5509
  %5582 = vmatpush.msra.mxu0 %v5508
  %5583 = vmatpush.msra.mxu0 %v5507
  %5584 = vmatpush.msra.mxu0 %v5506
  %5585 = vmatmul.f32.gmra.mxu0 %v5516
  %v5586 = vpop.f32.mrf.mxu0
  %v5587 = vadd.f32 %v5513, %v5586
  %5588 = vmatmul.f32.gmra.mxu0 %v5519
  %v5589 = vpop.f32.mrf.mxu0
  %v5590 = vadd.f32 %v5513, %v5589
  %5591 = vmatmul.f32.gmra.mxu0 %v5522
  %v5592 = vpop.f32.mrf.mxu0
  %v5593 = vadd.f32 %v5513, %v5592
  %5594 = vmatmul.f32.gmra.mxu0 %v5525
  %v5595 = vpop.f32.mrf.mxu0
  %v5596 = vadd.f32 %v5513, %v5595
  %5597 = vmatmul.f32.gmra.mxu0 %v5528
  %v5598 = vpop.f32.mrf.mxu0
  %v5599 = vadd.f32 %v5513, %v5598
  %5600 = vmatmul.f32.gmra.mxu0 %v5531
  %v5601 = vpop.f32.mrf.mxu0
  %v5602 = vadd.f32 %v5513, %v5601
  %5603 = vmatmul.f32.gmra.mxu0 %v5534
  %v5604 = vpop.f32.mrf.mxu0
  %v5605 = vadd.f32 %v5513, %v5604
  %5606 = vmatmul.f32.gmra.mxu0 %v5537
  %v5607 = vpop.f32.mrf.mxu0
  %v5608 = vadd.f32 %v5513, %v5607
  %5609 = vmatmul.f32.gmra.mxu0 %v5540
  %v5610 = vpop.f32.mrf.mxu0
  %v5611 = vadd.f32 %v5513, %v5610
  %5612 = vmatmul.f32.gmra.mxu0 %v5543
  %v5613 = vpop.f32.mrf.mxu0
  %v5614 = vadd.f32 %v5513, %v5613
  %5615 = vmatmul.f32.gmra.mxu0 %v5546
  %v5616 = vpop.f32.mrf.mxu0
  %v5617 = vadd.f32 %v5513, %v5616
  %5618 = vmatmul.f32.gmra.mxu0 %v5549
  %v5619 = vpop.f32.mrf.mxu0
  %v5620 = vadd.f32 %v5513, %v5619
  %5621 = vmatmul.f32.gmra.mxu0 %v5552
  %v5622 = vpop.f32.mrf.mxu0
  %v5623 = vadd.f32 %v5513, %v5622
  %5624 = vmatmul.f32.gmra.mxu0 %v5555
  %v5625 = vpop.f32.mrf.mxu0
  %v5626 = vadd.f32 %v5513, %v5625
  %5627 = vmatmul.f32.gmra.mxu0 %v5558
  %v5628 = vpop.f32.mrf.mxu0
  %v5629 = vadd.f32 %v5513, %v5628
  %5630 = vmatmul.f32.gmra.mxu0 %v5561
  %v5631 = vpop.f32.mrf.mxu0
  %v5632 = vadd.f32 %v5513, %v5631
  %5633 = vmatmul.f32.gmra.mxu0 %v5564
  %v5634 = vpop.f32.mrf.mxu0
  %v5635 = vadd.f32 %v5513, %v5634
  %5636 = vmatmul.f32.gmra.mxu0 %v5567
  %v5637 = vpop.f32.mrf.mxu0
  %v5638 = vadd.f32 %v5513, %v5637
  %5639 = vdwg.mxu0
  %5649 = vrot.lane.b32.xlu0 %v5587, 96
  %v5650 = vpop.permute.xlu0 %5649
  %5651 = vrot.lane.b32.xlu0 %v5590, 96
  %v5652 = vpop.permute.xlu0 %5651
  %5653 = vrot.lane.b32.xlu0 %v5593, 96
  %v5654 = vpop.permute.xlu0 %5653
  %5655 = vrot.lane.b32.xlu0 %v5596, 96
  %v5656 = vpop.permute.xlu0 %5655
  %5657 = vrot.lane.b32.xlu0 %v5599, 96
  %v5658 = vpop.permute.xlu0 %5657
  %5659 = vrot.lane.b32.xlu0 %v5602, 96
  %v5660 = vpop.permute.xlu0 %5659
  %5661 = vrot.lane.b32.xlu0 %v5605, 96
  %v5662 = vpop.permute.xlu0 %5661
  %5663 = vrot.lane.b32.xlu0 %v5608, 96
  %v5664 = vpop.permute.xlu0 %5663
  %5665 = vrot.lane.b32.xlu0 %v5611, 96
  %v5666 = vpop.permute.xlu0 %5665
  %v5667 = vsel %vm916, %v5587, 0
  %v5669 = vsel %vm916, %v5590, 0
  %v5671 = vsel %vm916, %v5593, 0
  %v5673 = vsel %vm916, %v5596, 0
  %v5675 = vsel %vm916, %v5599, 0
  %v5677 = vsel %vm916, %v5602, 0
  %v5679 = vsel %vm916, %v5605, 0
  %v5681 = vsel %vm916, %v5608, 0
  %v5683 = vsel %vm916, %v5611, 0
  %v5685 = vsel %vm916, %v5650, 0
  %v5687 = vsel %vm916, %v5652, 0
  %v5689 = vsel %vm916, %v5654, 0
  %v5691 = vsel %vm916, %v5656, 0
  %v5693 = vsel %vm916, %v5658, 0
  %v5695 = vsel %vm916, %v5660, 0
  %v5697 = vsel %vm916, %v5662, 0
  %v5699 = vsel %vm916, %v5664, 0
  %v5701 = vsel %vm916, %v5666, 0
  %5703 = vmatpush.xpose.msra.mxu0 0.0
  %5704 = vmatpush.xpose.msra.mxu0 0.0
  %5705 = vmatpush.xpose.msra.mxu0 0.0
  %5706 = vmatpush.xpose.msra.mxu0 0.0
  %5707 = vmatpush.xpose.msra.mxu0 0.0
  %5708 = vmatpush.xpose.msra.mxu0 0.0
  %5709 = vmatpush.xpose.msra.mxu0 0.0
  %5710 = vmatpush.xpose.msra.mxu0 %v5701
  %5711 = vmatpush.xpose.msra.mxu0 %v5699
  %5712 = vmatpush.xpose.msra.mxu0 %v5697
  %5713 = vmatpush.xpose.msra.mxu0 %v5695
  %5714 = vmatpush.xpose.msra.mxu0 %v5693
  %5715 = vmatpush.xpose.msra.mxu0 %v5691
  %5716 = vmatpush.xpose.msra.mxu0 %v5689
  %5717 = vmatpush.xpose.msra.mxu0 %v5687
  %5718 = vmatpush.xpose.msra.mxu0 %v5685
  %5719 = vmatmul.f32.gmra.mxu0 %v5667
  %v5720 = vpop.f32.mrf.mxu0
  %v5721 = vadd.f32 0.0, %v5720
  %5722 = vmatmul.f32.gmra.mxu0 %v5669
  %v5723 = vpop.f32.mrf.mxu0
  %v5724 = vadd.f32 0.0, %v5723
  %5725 = vmatmul.f32.gmra.mxu0 %v5671
  %v5726 = vpop.f32.mrf.mxu0
  %v5727 = vadd.f32 0.0, %v5726
  %5728 = vmatmul.f32.gmra.mxu0 %v5673
  %v5729 = vpop.f32.mrf.mxu0
  %v5730 = vadd.f32 0.0, %v5729
  %5731 = vmatmul.f32.gmra.mxu0 %v5675
  %v5732 = vpop.f32.mrf.mxu0
  %v5733 = vadd.f32 0.0, %v5732
  %5734 = vmatmul.f32.gmra.mxu0 %v5677
  %v5735 = vpop.f32.mrf.mxu0
  %v5736 = vadd.f32 0.0, %v5735
  %5737 = vmatmul.f32.gmra.mxu0 %v5679
  %v5738 = vpop.f32.mrf.mxu0
  %v5739 = vadd.f32 0.0, %v5738
  %5740 = vmatmul.f32.gmra.mxu0 %v5681
  %v5741 = vpop.f32.mrf.mxu0
  %v5742 = vadd.f32 0.0, %v5741
  %5743 = vmatmul.f32.gmra.mxu0 %v5683
  %v5744 = vpop.f32.mrf.mxu0
  %v5745 = vadd.f32 0.0, %v5744
  %5746 = vdwg.mxu0
  %v5747 = vmul.f32 %v5721, 0.35355338
  %v5748 = vmul.f32 %v5724, 0.35355338
  %v5749 = vmul.f32 %v5727, 0.35355338
  %v5750 = vmul.f32 %v5730, 0.35355338
  %v5751 = vmul.f32 %v5733, 0.35355338
  %v5752 = vmul.f32 %v5736, 0.35355338
  %v5753 = vmul.f32 %v5739, 0.35355338
  %v5754 = vmul.f32 %v5742, 0.35355338
  %v5755 = vmul.f32 %v5745, 0.35355338
  %v5756 = vsel %vm1006, %v5747, -inf
  %5757 = vmax.xlane.f32.xlu0 %v5756
  %v5758 = vpop.xlane.xlu0 %5757
  %v5759 = vsel %vm1006, %v5748, -inf
  %5760 = vmax.xlane.f32.xlu0 %v5759
  %v5761 = vpop.xlane.xlu0 %5760
  %v5762 = vsel %vm1006, %v5749, -inf
  %5763 = vmax.xlane.f32.xlu0 %v5762
  %v5764 = vpop.xlane.xlu0 %5763
  %v5765 = vsel %vm1006, %v5750, -inf
  %5766 = vmax.xlane.f32.xlu0 %v5765
  %v5767 = vpop.xlane.xlu0 %5766
  %v5768 = vsel %vm1006, %v5751, -inf
  %5769 = vmax.xlane.f32.xlu0 %v5768
  %v5770 = vpop.xlane.xlu0 %5769
  %v5771 = vsel %vm1006, %v5752, -inf
  %5772 = vmax.xlane.f32.xlu0 %v5771
  %v5773 = vpop.xlane.xlu0 %5772
  %v5774 = vsel %vm1006, %v5753, -inf
  %5775 = vmax.xlane.f32.xlu0 %v5774
  %v5776 = vpop.xlane.xlu0 %5775
  %v5777 = vsel %vm1006, %v5754, -inf
  %5778 = vmax.xlane.f32.xlu0 %v5777
  %v5779 = vpop.xlane.xlu0 %5778
  %v5780 = vsel %vm1006, %v5755, -inf
  %5781 = vmax.xlane.f32.xlu0 %v5780
  %v5782 = vpop.xlane.xlu0 %5781
  %v5783 = vsub.f32 %v5747, %v5758
  %v5784 = vsub.f32 %v5748, %v5761
  %v5785 = vsub.f32 %v5749, %v5764
  %v5786 = vsub.f32 %v5750, %v5767
  %v5787 = vsub.f32 %v5751, %v5770
  %v5788 = vsub.f32 %v5752, %v5773
  %v5789 = vsub.f32 %v5753, %v5776
  %v5790 = vsub.f32 %v5754, %v5779
  %v5791 = vsub.f32 %v5755, %v5782
  %v5792 = vmul.f32 %v5783, 1.442695
  %v5793 = vpow.pop %v5792
  %v5794 = vmul.f32 %v5784, 1.442695
  %v5795 = vpow.pop %v5794
  %v5796 = vmul.f32 %v5785, 1.442695
  %v5797 = vpow.pop %v5796
  %v5798 = vmul.f32 %v5786, 1.442695
  %v5799 = vpow.pop %v5798
  %v5800 = vmul.f32 %v5787, 1.442695
  %v5801 = vpow.pop %v5800
  %v5802 = vmul.f32 %v5788, 1.442695
  %v5803 = vpow.pop %v5802
  %v5804 = vmul.f32 %v5789, 1.442695
  %v5805 = vpow.pop %v5804
  %v5806 = vmul.f32 %v5790, 1.442695
  %v5807 = vpow.pop %v5806
  %v5808 = vmul.f32 %v5791, 1.442695
  %v5809 = vpow.pop %v5808
  %v5810 = vsel %vm1006, %v5793, 0.0
  %5811 = vadd.xlane.f32.xlu0 %v5810
  %v5812 = vpop.xlane.xlu0 %5811
  %v5813 = vsel %vm1006, %v5795, 0.0
  %5814 = vadd.xlane.f32.xlu0 %v5813
  %v5815 = vpop.xlane.xlu0 %5814
  %v5816 = vsel %vm1006, %v5797, 0.0
  %5817 = vadd.xlane.f32.xlu0 %v5816
  %v5818 = vpop.xlane.xlu0 %5817
  %v5819 = vsel %vm1006, %v5799, 0.0
  %5820 = vadd.xlane.f32.xlu0 %v5819
  %v5821 = vpop.xlane.xlu0 %5820
  %v5822 = vsel %vm1006, %v5801, 0.0
  %5823 = vadd.xlane.f32.xlu0 %v5822
  %v5824 = vpop.xlane.xlu0 %5823
  %v5825 = vsel %vm1006, %v5803, 0.0
  %5826 = vadd.xlane.f32.xlu0 %v5825
  %v5827 = vpop.xlane.xlu0 %5826
  %v5828 = vsel %vm1006, %v5805, 0.0
  %5829 = vadd.xlane.f32.xlu0 %v5828
  %v5830 = vpop.xlane.xlu0 %5829
  %v5831 = vsel %vm1006, %v5807, 0.0
  %5832 = vadd.xlane.f32.xlu0 %v5831
  %v5833 = vpop.xlane.xlu0 %5832
  %v5834 = vsel %vm1006, %v5809, 0.0
  %5835 = vadd.xlane.f32.xlu0 %v5834
  %v5836 = vpop.xlane.xlu0 %5835
  %v5837 = vrcp.pop %v5812
  %v5838 = vrcp.pop %v5815
  %v5839 = vrcp.pop %v5818
  %v5840 = vrcp.pop %v5821
  %v5841 = vrcp.pop %v5824
  %v5842 = vrcp.pop %v5827
  %v5843 = vrcp.pop %v5830
  %v5844 = vrcp.pop %v5833
  %v5845 = vrcp.pop %v5836
  %v5846 = vmul.f32 %v5793, %v5837
  %v5847 = vmul.f32 %v5795, %v5838
  %v5848 = vmul.f32 %v5797, %v5839
  %v5849 = vmul.f32 %v5799, %v5840
  %v5850 = vmul.f32 %v5801, %v5841
  %v5851 = vmul.f32 %v5803, %v5842
  %v5852 = vmul.f32 %v5805, %v5843
  %v5853 = vmul.f32 %v5807, %v5844
  %v5854 = vmul.f32 %v5809, %v5845
  %5855 = vrot.lane.b32.xlu0 %v5587, 64
  %v5856 = vpop.permute.xlu0 %5855
  %5857 = vrot.lane.b32.xlu0 %v5590, 64
  %v5858 = vpop.permute.xlu0 %5857
  %5859 = vrot.lane.b32.xlu0 %v5593, 64
  %v5860 = vpop.permute.xlu0 %5859
  %5861 = vrot.lane.b32.xlu0 %v5596, 64
  %v5862 = vpop.permute.xlu0 %5861
  %5863 = vrot.lane.b32.xlu0 %v5599, 64
  %v5864 = vpop.permute.xlu0 %5863
  %5865 = vrot.lane.b32.xlu0 %v5602, 64
  %v5866 = vpop.permute.xlu0 %5865
  %5867 = vrot.lane.b32.xlu0 %v5605, 64
  %v5868 = vpop.permute.xlu0 %5867
  %5869 = vrot.lane.b32.xlu0 %v5608, 64
  %v5870 = vpop.permute.xlu0 %5869
  %5871 = vrot.lane.b32.xlu0 %v5611, 64
  %v5872 = vpop.permute.xlu0 %5871
  %v5883 = vsel %vm1006, %v5846, 0
  %v5886 = vsel %vm1006, %v5847, 0
  %v5889 = vsel %vm1006, %v5848, 0
  %v5892 = vsel %vm1006, %v5849, 0
  %v5895 = vsel %vm1006, %v5850, 0
  %v5898 = vsel %vm1006, %v5851, 0
  %v5901 = vsel %vm1006, %v5852, 0
  %v5904 = vsel %vm1006, %v5853, 0
  %v5907 = vsel %vm1006, %v5854, 0
  %5909 = vmatpush.msra.mxu0 0.0
  %5910 = vmatpush.msra.mxu0 0.0
  %5911 = vmatpush.msra.mxu0 0.0
  %5912 = vmatpush.msra.mxu0 0.0
  %5913 = vmatpush.msra.mxu0 0.0
  %5914 = vmatpush.msra.mxu0 0.0
  %5915 = vmatpush.msra.mxu0 0.0
  %5916 = vmatpush.msra.mxu0 %v5872
  %5917 = vmatpush.msra.mxu0 %v5870
  %5918 = vmatpush.msra.mxu0 %v5868
  %5919 = vmatpush.msra.mxu0 %v5866
  %5920 = vmatpush.msra.mxu0 %v5864
  %5921 = vmatpush.msra.mxu0 %v5862
  %5922 = vmatpush.msra.mxu0 %v5860
  %5923 = vmatpush.msra.mxu0 %v5858
  %5924 = vmatpush.msra.mxu0 %v5856
  %5925 = vmatmul.f32.gmra.mxu0 %v5883
  %v5926 = vpop.f32.mrf.mxu0
  %v5927 = vadd.f32 0.0, %v5926
  %5928 = vmatmul.f32.gmra.mxu0 %v5886
  %v5929 = vpop.f32.mrf.mxu0
  %v5930 = vadd.f32 0.0, %v5929
  %5931 = vmatmul.f32.gmra.mxu0 %v5889
  %v5932 = vpop.f32.mrf.mxu0
  %v5933 = vadd.f32 0.0, %v5932
  %5934 = vmatmul.f32.gmra.mxu0 %v5892
  %v5935 = vpop.f32.mrf.mxu0
  %v5936 = vadd.f32 0.0, %v5935
  %5937 = vmatmul.f32.gmra.mxu0 %v5895
  %v5938 = vpop.f32.mrf.mxu0
  %v5939 = vadd.f32 0.0, %v5938
  %5940 = vmatmul.f32.gmra.mxu0 %v5898
  %v5941 = vpop.f32.mrf.mxu0
  %v5942 = vadd.f32 0.0, %v5941
  %5943 = vmatmul.f32.gmra.mxu0 %v5901
  %v5944 = vpop.f32.mrf.mxu0
  %v5945 = vadd.f32 0.0, %v5944
  %5946 = vmatmul.f32.gmra.mxu0 %v5904
  %v5947 = vpop.f32.mrf.mxu0
  %v5948 = vadd.f32 0.0, %v5947
  %5949 = vmatmul.f32.gmra.mxu0 %v5907
  %v5950 = vpop.f32.mrf.mxu0
  %v5951 = vadd.f32 0.0, %v5950
  %5952 = vdwg.mxu0
  %5953 = vst.msk [vmem:[#allocation3] sm:$0xff] %vm916, %v5927
  %5954 = vst.msk [vmem:[#allocation3 + $0x8] sm:$0xff] %vm916, %v5930
  %5955 = vst.msk [vmem:[#allocation3 + $0x10] sm:$0xff] %vm916, %v5933
  %5956 = vst.msk [vmem:[#allocation3 + $0x18] sm:$0xff] %vm916, %v5936
  %5957 = vst.msk [vmem:[#allocation3 + $0x20] sm:$0xff] %vm916, %v5939
  %5958 = vst.msk [vmem:[#allocation3 + $0x28] sm:$0xff] %vm916, %v5942
  %5959 = vst.msk [vmem:[#allocation3 + $0x30] sm:$0xff] %vm916, %v5945
  %5960 = vst.msk [vmem:[#allocation3 + $0x38] sm:$0xff] %vm916, %v5948
  %5961 = vst.msk [vmem:[#allocation3 + $0x40] sm:$0xff] %vm916, %v5951
  %5962 = vrot.lane.b32.xlu0 %v5587, 120
  %v5963 = vpop.permute.xlu0 %5962
  %5964 = vrot.lane.b32.xlu0 %v5590, 120
  %v5965 = vpop.permute.xlu0 %5964
  %5966 = vrot.lane.b32.xlu0 %v5593, 120
  %v5967 = vpop.permute.xlu0 %5966
  %5968 = vrot.lane.b32.xlu0 %v5596, 120
  %v5969 = vpop.permute.xlu0 %5968
  %5970 = vrot.lane.b32.xlu0 %v5599, 120
  %v5971 = vpop.permute.xlu0 %5970
  %5972 = vrot.lane.b32.xlu0 %v5602, 120
  %v5973 = vpop.permute.xlu0 %5972
  %5974 = vrot.lane.b32.xlu0 %v5605, 120
  %v5975 = vpop.permute.xlu0 %5974
  %5976 = vrot.lane.b32.xlu0 %v5608, 120
  %v5977 = vpop.permute.xlu0 %5976
  %5978 = vrot.lane.b32.xlu0 %v5611, 120
  %v5979 = vpop.permute.xlu0 %5978
  %5980 = vrot.lane.b32.xlu0 %v5587, 88
  %v5981 = vpop.permute.xlu0 %5980
  %5982 = vrot.lane.b32.xlu0 %v5590, 88
  %v5983 = vpop.permute.xlu0 %5982
  %5984 = vrot.lane.b32.xlu0 %v5593, 88
  %v5985 = vpop.permute.xlu0 %5984
  %5986 = vrot.lane.b32.xlu0 %v5596, 88
  %v5987 = vpop.permute.xlu0 %5986
  %5988 = vrot.lane.b32.xlu0 %v5599, 88
  %v5989 = vpop.permute.xlu0 %5988
  %5990 = vrot.lane.b32.xlu0 %v5602, 88
  %v5991 = vpop.permute.xlu0 %5990
  %5992 = vrot.lane.b32.xlu0 %v5605, 88
  %v5993 = vpop.permute.xlu0 %5992
  %5994 = vrot.lane.b32.xlu0 %v5608, 88
  %v5995 = vpop.permute.xlu0 %5994
  %5996 = vrot.lane.b32.xlu0 %v5611, 88
  %v5997 = vpop.permute.xlu0 %5996
  %v5998 = vsel %vm916, %v5963, 0
  %v6000 = vsel %vm916, %v5965, 0
  %v6002 = vsel %vm916, %v5967, 0
  %v6004 = vsel %vm916, %v5969, 0
  %v6006 = vsel %vm916, %v5971, 0
  %v6008 = vsel %vm916, %v5973, 0
  %v6010 = vsel %vm916, %v5975, 0
  %v6012 = vsel %vm916, %v5977, 0
  %v6014 = vsel %vm916, %v5979, 0
  %v6016 = vsel %vm916, %v5981, 0
  %v6018 = vsel %vm916, %v5983, 0
  %v6020 = vsel %vm916, %v5985, 0
  %v6022 = vsel %vm916, %v5987, 0
  %v6024 = vsel %vm916, %v5989, 0
  %v6026 = vsel %vm916, %v5991, 0
  %v6028 = vsel %vm916, %v5993, 0
  %v6030 = vsel %vm916, %v5995, 0
  %v6032 = vsel %vm916, %v5997, 0
  %6034 = vmatpush.xpose.msra.mxu0 0.0
  %6035 = vmatpush.xpose.msra.mxu0 0.0
  %6036 = vmatpush.xpose.msra.mxu0 0.0
  %6037 = vmatpush.xpose.msra.mxu0 0.0
  %6038 = vmatpush.xpose.msra.mxu0 0.0
  %6039 = vmatpush.xpose.msra.mxu0 0.0
  %6040 = vmatpush.xpose.msra.mxu0 0.0
  %6041 = vmatpush.xpose.msra.mxu0 %v6032
  %6042 = vmatpush.xpose.msra.mxu0 %v6030
  %6043 = vmatpush.xpose.msra.mxu0 %v6028
  %6044 = vmatpush.xpose.msra.mxu0 %v6026
  %6045 = vmatpush.xpose.msra.mxu0 %v6024
  %6046 = vmatpush.xpose.msra.mxu0 %v6022
  %6047 = vmatpush.xpose.msra.mxu0 %v6020
  %6048 = vmatpush.xpose.msra.mxu0 %v6018
  %6049 = vmatpush.xpose.msra.mxu0 %v6016
  %6050 = vmatmul.f32.gmra.mxu0 %v5998
  %v6051 = vpop.f32.mrf.mxu0
  %v6052 = vadd.f32 0.0, %v6051
  %6053 = vmatmul.f32.gmra.mxu0 %v6000
  %v6054 = vpop.f32.mrf.mxu0
  %v6055 = vadd.f32 0.0, %v6054
  %6056 = vmatmul.f32.gmra.mxu0 %v6002
  %v6057 = vpop.f32.mrf.mxu0
  %v6058 = vadd.f32 0.0, %v6057
  %6059 = vmatmul.f32.gmra.mxu0 %v6004
  %v6060 = vpop.f32.mrf.mxu0
  %v6061 = vadd.f32 0.0, %v6060
  %6062 = vmatmul.f32.gmra.mxu0 %v6006
  %v6063 = vpop.f32.mrf.mxu0
  %v6064 = vadd.f32 0.0, %v6063
  %6065 = vmatmul.f32.gmra.mxu0 %v6008
  %v6066 = vpop.f32.mrf.mxu0
  %v6067 = vadd.f32 0.0, %v6066
  %6068 = vmatmul.f32.gmra.mxu0 %v6010
  %v6069 = vpop.f32.mrf.mxu0
  %v6070 = vadd.f32 0.0, %v6069
  %6071 = vmatmul.f32.gmra.mxu0 %v6012
  %v6072 = vpop.f32.mrf.mxu0
  %v6073 = vadd.f32 0.0, %v6072
  %6074 = vmatmul.f32.gmra.mxu0 %v6014
  %v6075 = vpop.f32.mrf.mxu0
  %v6076 = vadd.f32 0.0, %v6075
  %6077 = vdwg.mxu0
  %v6078 = vmul.f32 %v6052, 0.35355338
  %v6079 = vmul.f32 %v6055, 0.35355338
  %v6080 = vmul.f32 %v6058, 0.35355338
  %v6081 = vmul.f32 %v6061, 0.35355338
  %v6082 = vmul.f32 %v6064, 0.35355338
  %v6083 = vmul.f32 %v6067, 0.35355338
  %v6084 = vmul.f32 %v6070, 0.35355338
  %v6085 = vmul.f32 %v6073, 0.35355338
  %v6086 = vmul.f32 %v6076, 0.35355338
  %v6087 = vsel %vm1006, %v6078, -inf
  %6088 = vmax.xlane.f32.xlu0 %v6087
  %v6089 = vpop.xlane.xlu0 %6088
  %v6090 = vsel %vm1006, %v6079, -inf
  %6091 = vmax.xlane.f32.xlu0 %v6090
  %v6092 = vpop.xlane.xlu0 %6091
  %v6093 = vsel %vm1006, %v6080, -inf
  %6094 = vmax.xlane.f32.xlu0 %v6093
  %v6095 = vpop.xlane.xlu0 %6094
  %v6096 = vsel %vm1006, %v6081, -inf
  %6097 = vmax.xlane.f32.xlu0 %v6096
  %v6098 = vpop.xlane.xlu0 %6097
  %v6099 = vsel %vm1006, %v6082, -inf
  %6100 = vmax.xlane.f32.xlu0 %v6099
  %v6101 = vpop.xlane.xlu0 %6100
  %v6102 = vsel %vm1006, %v6083, -inf
  %6103 = vmax.xlane.f32.xlu0 %v6102
  %v6104 = vpop.xlane.xlu0 %6103
  %v6105 = vsel %vm1006, %v6084, -inf
  %6106 = vmax.xlane.f32.xlu0 %v6105
  %v6107 = vpop.xlane.xlu0 %6106
  %v6108 = vsel %vm1006, %v6085, -inf
  %6109 = vmax.xlane.f32.xlu0 %v6108
  %v6110 = vpop.xlane.xlu0 %6109
  %v6111 = vsel %vm1006, %v6086, -inf
  %6112 = vmax.xlane.f32.xlu0 %v6111
  %v6113 = vpop.xlane.xlu0 %6112
  %v6114 = vsub.f32 %v6078, %v6089
  %v6115 = vsub.f32 %v6079, %v6092
  %v6116 = vsub.f32 %v6080, %v6095
  %v6117 = vsub.f32 %v6081, %v6098
  %v6118 = vsub.f32 %v6082, %v6101
  %v6119 = vsub.f32 %v6083, %v6104
  %v6120 = vsub.f32 %v6084, %v6107
  %v6121 = vsub.f32 %v6085, %v6110
  %v6122 = vsub.f32 %v6086, %v6113
  %v6123 = vmul.f32 %v6114, 1.442695
  %v6124 = vpow.pop %v6123
  %v6125 = vmul.f32 %v6115, 1.442695
  %v6126 = vpow.pop %v6125
  %v6127 = vmul.f32 %v6116, 1.442695
  %v6128 = vpow.pop %v6127
  %v6129 = vmul.f32 %v6117, 1.442695
  %v6130 = vpow.pop %v6129
  %v6131 = vmul.f32 %v6118, 1.442695
  %v6132 = vpow.pop %v6131
  %v6133 = vmul.f32 %v6119, 1.442695
  %v6134 = vpow.pop %v6133
  %v6135 = vmul.f32 %v6120, 1.442695
  %v6136 = vpow.pop %v6135
  %v6137 = vmul.f32 %v6121, 1.442695
  %v6138 = vpow.pop %v6137
  %v6139 = vmul.f32 %v6122, 1.442695
  %v6140 = vpow.pop %v6139
  %v6141 = vsel %vm1006, %v6124, 0.0
  %6142 = vadd.xlane.f32.xlu0 %v6141
  %v6143 = vpop.xlane.xlu0 %6142
  %v6144 = vsel %vm1006, %v6126, 0.0
  %6145 = vadd.xlane.f32.xlu0 %v6144
  %v6146 = vpop.xlane.xlu0 %6145
  %v6147 = vsel %vm1006, %v6128, 0.0
  %6148 = vadd.xlane.f32.xlu0 %v6147
  %v6149 = vpop.xlane.xlu0 %6148
  %v6150 = vsel %vm1006, %v6130, 0.0
  %6151 = vadd.xlane.f32.xlu0 %v6150
  %v6152 = vpop.xlane.xlu0 %6151
  %v6153 = vsel %vm1006, %v6132, 0.0
  %6154 = vadd.xlane.f32.xlu0 %v6153
  %v6155 = vpop.xlane.xlu0 %6154
  %v6156 = vsel %vm1006, %v6134, 0.0
  %6157 = vadd.xlane.f32.xlu0 %v6156
  %v6158 = vpop.xlane.xlu0 %6157
  %v6159 = vsel %vm1006, %v6136, 0.0
  %6160 = vadd.xlane.f32.xlu0 %v6159
  %v6161 = vpop.xlane.xlu0 %6160
  %v6162 = vsel %vm1006, %v6138, 0.0
  %6163 = vadd.xlane.f32.xlu0 %v6162
  %v6164 = vpop.xlane.xlu0 %6163
  %v6165 = vsel %vm1006, %v6140, 0.0
  %6166 = vadd.xlane.f32.xlu0 %v6165
  %v6167 = vpop.xlane.xlu0 %6166
  %v6168 = vrcp.pop %v6143
  %v6169 = vrcp.pop %v6146
  %v6170 = vrcp.pop %v6149
  %v6171 = vrcp.pop %v6152
  %v6172 = vrcp.pop %v6155
  %v6173 = vrcp.pop %v6158
  %v6174 = vrcp.pop %v6161
  %v6175 = vrcp.pop %v6164
  %v6176 = vrcp.pop %v6167
  %v6177 = vmul.f32 %v6124, %v6168
  %v6178 = vmul.f32 %v6126, %v6169
  %v6179 = vmul.f32 %v6128, %v6170
  %v6180 = vmul.f32 %v6130, %v6171
  %v6181 = vmul.f32 %v6132, %v6172
  %v6182 = vmul.f32 %v6134, %v6173
  %v6183 = vmul.f32 %v6136, %v6174
  %v6184 = vmul.f32 %v6138, %v6175
  %v6185 = vmul.f32 %v6140, %v6176
  %6186 = vrot.lane.b32.xlu0 %v5587, 56
  %v6187 = vpop.permute.xlu0 %6186
  %6188 = vrot.lane.b32.xlu0 %v5590, 56
  %v6189 = vpop.permute.xlu0 %6188
  %6190 = vrot.lane.b32.xlu0 %v5593, 56
  %v6191 = vpop.permute.xlu0 %6190
  %6192 = vrot.lane.b32.xlu0 %v5596, 56
  %v6193 = vpop.permute.xlu0 %6192
  %6194 = vrot.lane.b32.xlu0 %v5599, 56
  %v6195 = vpop.permute.xlu0 %6194
  %6196 = vrot.lane.b32.xlu0 %v5602, 56
  %v6197 = vpop.permute.xlu0 %6196
  %6198 = vrot.lane.b32.xlu0 %v5605, 56
  %v6199 = vpop.permute.xlu0 %6198
  %6200 = vrot.lane.b32.xlu0 %v5608, 56
  %v6201 = vpop.permute.xlu0 %6200
  %6202 = vrot.lane.b32.xlu0 %v5611, 56
  %v6203 = vpop.permute.xlu0 %6202
  %v6214 = vsel %vm1006, %v6177, 0
  %v6217 = vsel %vm1006, %v6178, 0
  %v6220 = vsel %vm1006, %v6179, 0
  %v6223 = vsel %vm1006, %v6180, 0
  %v6226 = vsel %vm1006, %v6181, 0
  %v6229 = vsel %vm1006, %v6182, 0
  %v6232 = vsel %vm1006, %v6183, 0
  %v6235 = vsel %vm1006, %v6184, 0
  %v6238 = vsel %vm1006, %v6185, 0
  %6240 = vmatpush.msra.mxu0 0.0
  %6241 = vmatpush.msra.mxu0 0.0
  %6242 = vmatpush.msra.mxu0 0.0
  %6243 = vmatpush.msra.mxu0 0.0
  %6244 = vmatpush.msra.mxu0 0.0
  %6245 = vmatpush.msra.mxu0 0.0
  %6246 = vmatpush.msra.mxu0 0.0
  %6247 = vmatpush.msra.mxu0 %v6203
  %6248 = vmatpush.msra.mxu0 %v6201
  %6249 = vmatpush.msra.mxu0 %v6199
  %6250 = vmatpush.msra.mxu0 %v6197
  %6251 = vmatpush.msra.mxu0 %v6195
  %6252 = vmatpush.msra.mxu0 %v6193
  %6253 = vmatpush.msra.mxu0 %v6191
  %6254 = vmatpush.msra.mxu0 %v6189
  %6255 = vmatpush.msra.mxu0 %v6187
  %6256 = vmatmul.f32.gmra.mxu0 %v6214
  %v6257 = vpop.f32.mrf.mxu0
  %v6258 = vadd.f32 0.0, %v6257
  %6259 = vmatmul.f32.gmra.mxu0 %v6217
  %v6260 = vpop.f32.mrf.mxu0
  %v6261 = vadd.f32 0.0, %v6260
  %6262 = vmatmul.f32.gmra.mxu0 %v6220
  %v6263 = vpop.f32.mrf.mxu0
  %v6264 = vadd.f32 0.0, %v6263
  %6265 = vmatmul.f32.gmra.mxu0 %v6223
  %v6266 = vpop.f32.mrf.mxu0
  %v6267 = vadd.f32 0.0, %v6266
  %6268 = vmatmul.f32.gmra.mxu0 %v6226
  %v6269 = vpop.f32.mrf.mxu0
  %v6270 = vadd.f32 0.0, %v6269
  %6271 = vmatmul.f32.gmra.mxu0 %v6229
  %v6272 = vpop.f32.mrf.mxu0
  %v6273 = vadd.f32 0.0, %v6272
  %6274 = vmatmul.f32.gmra.mxu0 %v6232
  %v6275 = vpop.f32.mrf.mxu0
  %v6276 = vadd.f32 0.0, %v6275
  %6277 = vmatmul.f32.gmra.mxu0 %v6235
  %v6278 = vpop.f32.mrf.mxu0
  %v6279 = vadd.f32 0.0, %v6278
  %6280 = vmatmul.f32.gmra.mxu0 %v6238
  %v6281 = vpop.f32.mrf.mxu0
  %v6282 = vadd.f32 0.0, %v6281
  %6283 = vdwg.mxu0
  %6293 = vrot.lane.b32.xlu0 %v6258, 8
  %v6294 = vpop.permute.xlu0 %6293
  %6295 = vrot.lane.b32.xlu0 %v6261, 8
  %v6296 = vpop.permute.xlu0 %6295
  %6297 = vrot.lane.b32.xlu0 %v6264, 8
  %v6298 = vpop.permute.xlu0 %6297
  %6299 = vrot.lane.b32.xlu0 %v6267, 8
  %v6300 = vpop.permute.xlu0 %6299
  %6301 = vrot.lane.b32.xlu0 %v6270, 8
  %v6302 = vpop.permute.xlu0 %6301
  %6303 = vrot.lane.b32.xlu0 %v6273, 8
  %v6304 = vpop.permute.xlu0 %6303
  %6305 = vrot.lane.b32.xlu0 %v6276, 8
  %v6306 = vpop.permute.xlu0 %6305
  %6307 = vrot.lane.b32.xlu0 %v6279, 8
  %v6308 = vpop.permute.xlu0 %6307
  %6309 = vrot.lane.b32.xlu0 %v6282, 8
  %v6310 = vpop.permute.xlu0 %6309
  %6320 = vst.msk [vmem:[#allocation3] sm:$0xff] %vm1571, %v6294
  %6321 = vst.msk [vmem:[#allocation3 + $0x8] sm:$0xff] %vm1571, %v6296
  %6322 = vst.msk [vmem:[#allocation3 + $0x10] sm:$0xff] %vm1571, %v6298
  %6323 = vst.msk [vmem:[#allocation3 + $0x18] sm:$0xff] %vm1571, %v6300
  %6324 = vst.msk [vmem:[#allocation3 + $0x20] sm:$0xff] %vm1571, %v6302
  %6325 = vst.msk [vmem:[#allocation3 + $0x28] sm:$0xff] %vm1571, %v6304
  %6326 = vst.msk [vmem:[#allocation3 + $0x30] sm:$0xff] %vm1571, %v6306
  %6327 = vst.msk [vmem:[#allocation3 + $0x38] sm:$0xff] %vm1571, %v6308
  %6328 = vst.msk [vmem:[#allocation3 + $0x40] sm:$0xff] %vm1571, %v6310
  %6329 = vrot.lane.b32.xlu0 %v5587, 112
  %v6330 = vpop.permute.xlu0 %6329
  %6331 = vrot.lane.b32.xlu0 %v5590, 112
  %v6332 = vpop.permute.xlu0 %6331
  %6333 = vrot.lane.b32.xlu0 %v5593, 112
  %v6334 = vpop.permute.xlu0 %6333
  %6335 = vrot.lane.b32.xlu0 %v5596, 112
  %v6336 = vpop.permute.xlu0 %6335
  %6337 = vrot.lane.b32.xlu0 %v5599, 112
  %v6338 = vpop.permute.xlu0 %6337
  %6339 = vrot.lane.b32.xlu0 %v5602, 112
  %v6340 = vpop.permute.xlu0 %6339
  %6341 = vrot.lane.b32.xlu0 %v5605, 112
  %v6342 = vpop.permute.xlu0 %6341
  %6343 = vrot.lane.b32.xlu0 %v5608, 112
  %v6344 = vpop.permute.xlu0 %6343
  %6345 = vrot.lane.b32.xlu0 %v5611, 112
  %v6346 = vpop.permute.xlu0 %6345
  %6347 = vrot.lane.b32.xlu0 %v5587, 80
  %v6348 = vpop.permute.xlu0 %6347
  %6349 = vrot.lane.b32.xlu0 %v5590, 80
  %v6350 = vpop.permute.xlu0 %6349
  %6351 = vrot.lane.b32.xlu0 %v5593, 80
  %v6352 = vpop.permute.xlu0 %6351
  %6353 = vrot.lane.b32.xlu0 %v5596, 80
  %v6354 = vpop.permute.xlu0 %6353
  %6355 = vrot.lane.b32.xlu0 %v5599, 80
  %v6356 = vpop.permute.xlu0 %6355
  %6357 = vrot.lane.b32.xlu0 %v5602, 80
  %v6358 = vpop.permute.xlu0 %6357
  %6359 = vrot.lane.b32.xlu0 %v5605, 80
  %v6360 = vpop.permute.xlu0 %6359
  %6361 = vrot.lane.b32.xlu0 %v5608, 80
  %v6362 = vpop.permute.xlu0 %6361
  %6363 = vrot.lane.b32.xlu0 %v5611, 80
  %v6364 = vpop.permute.xlu0 %6363
  %v6365 = vsel %vm916, %v6330, 0
  %v6367 = vsel %vm916, %v6332, 0
  %v6369 = vsel %vm916, %v6334, 0
  %v6371 = vsel %vm916, %v6336, 0
  %v6373 = vsel %vm916, %v6338, 0
  %v6375 = vsel %vm916, %v6340, 0
  %v6377 = vsel %vm916, %v6342, 0
  %v6379 = vsel %vm916, %v6344, 0
  %v6381 = vsel %vm916, %v6346, 0
  %v6383 = vsel %vm916, %v6348, 0
  %v6385 = vsel %vm916, %v6350, 0
  %v6387 = vsel %vm916, %v6352, 0
  %v6389 = vsel %vm916, %v6354, 0
  %v6391 = vsel %vm916, %v6356, 0
  %v6393 = vsel %vm916, %v6358, 0
  %v6395 = vsel %vm916, %v6360, 0
  %v6397 = vsel %vm916, %v6362, 0
  %v6399 = vsel %vm916, %v6364, 0
  %6401 = vmatpush.xpose.msra.mxu0 0.0
  %6402 = vmatpush.xpose.msra.mxu0 0.0
  %6403 = vmatpush.xpose.msra.mxu0 0.0
  %6404 = vmatpush.xpose.msra.mxu0 0.0
  %6405 = vmatpush.xpose.msra.mxu0 0.0
  %6406 = vmatpush.xpose.msra.mxu0 0.0
  %6407 = vmatpush.xpose.msra.mxu0 0.0
  %6408 = vmatpush.xpose.msra.mxu0 %v6399
  %6409 = vmatpush.xpose.msra.mxu0 %v6397
  %6410 = vmatpush.xpose.msra.mxu0 %v6395
  %6411 = vmatpush.xpose.msra.mxu0 %v6393
  %6412 = vmatpush.xpose.msra.mxu0 %v6391
  %6413 = vmatpush.xpose.msra.mxu0 %v6389
  %6414 = vmatpush.xpose.msra.mxu0 %v6387
  %6415 = vmatpush.xpose.msra.mxu0 %v6385
  %6416 = vmatpush.xpose.msra.mxu0 %v6383
  %6417 = vmatmul.f32.gmra.mxu0 %v6365
  %v6418 = vpop.f32.mrf.mxu0
  %v6419 = vadd.f32 0.0, %v6418
  %6420 = vmatmul.f32.gmra.mxu0 %v6367
  %v6421 = vpop.f32.mrf.mxu0
  %v6422 = vadd.f32 0.0, %v6421
  %6423 = vmatmul.f32.gmra.mxu0 %v6369
  %v6424 = vpop.f32.mrf.mxu0
  %v6425 = vadd.f32 0.0, %v6424
  %6426 = vmatmul.f32.gmra.mxu0 %v6371
  %v6427 = vpop.f32.mrf.mxu0
  %v6428 = vadd.f32 0.0, %v6427
  %6429 = vmatmul.f32.gmra.mxu0 %v6373
  %v6430 = vpop.f32.mrf.mxu0
  %v6431 = vadd.f32 0.0, %v6430
  %6432 = vmatmul.f32.gmra.mxu0 %v6375
  %v6433 = vpop.f32.mrf.mxu0
  %v6434 = vadd.f32 0.0, %v6433
  %6435 = vmatmul.f32.gmra.mxu0 %v6377
  %v6436 = vpop.f32.mrf.mxu0
  %v6437 = vadd.f32 0.0, %v6436
  %6438 = vmatmul.f32.gmra.mxu0 %v6379
  %v6439 = vpop.f32.mrf.mxu0
  %v6440 = vadd.f32 0.0, %v6439
  %6441 = vmatmul.f32.gmra.mxu0 %v6381
  %v6442 = vpop.f32.mrf.mxu0
  %v6443 = vadd.f32 0.0, %v6442
  %6444 = vdwg.mxu0
  %v6445 = vmul.f32 %v6419, 0.35355338
  %v6446 = vmul.f32 %v6422, 0.35355338
  %v6447 = vmul.f32 %v6425, 0.35355338
  %v6448 = vmul.f32 %v6428, 0.35355338
  %v6449 = vmul.f32 %v6431, 0.35355338
  %v6450 = vmul.f32 %v6434, 0.35355338
  %v6451 = vmul.f32 %v6437, 0.35355338
  %v6452 = vmul.f32 %v6440, 0.35355338
  %v6453 = vmul.f32 %v6443, 0.35355338
  %v6454 = vsel %vm1006, %v6445, -inf
  %6455 = vmax.xlane.f32.xlu0 %v6454
  %v6456 = vpop.xlane.xlu0 %6455
  %v6457 = vsel %vm1006, %v6446, -inf
  %6458 = vmax.xlane.f32.xlu0 %v6457
  %v6459 = vpop.xlane.xlu0 %6458
  %v6460 = vsel %vm1006, %v6447, -inf
  %6461 = vmax.xlane.f32.xlu0 %v6460
  %v6462 = vpop.xlane.xlu0 %6461
  %v6463 = vsel %vm1006, %v6448, -inf
  %6464 = vmax.xlane.f32.xlu0 %v6463
  %v6465 = vpop.xlane.xlu0 %6464
  %v6466 = vsel %vm1006, %v6449, -inf
  %6467 = vmax.xlane.f32.xlu0 %v6466
  %v6468 = vpop.xlane.xlu0 %6467
  %v6469 = vsel %vm1006, %v6450, -inf
  %6470 = vmax.xlane.f32.xlu0 %v6469
  %v6471 = vpop.xlane.xlu0 %6470
  %v6472 = vsel %vm1006, %v6451, -inf
  %6473 = vmax.xlane.f32.xlu0 %v6472
  %v6474 = vpop.xlane.xlu0 %6473
  %v6475 = vsel %vm1006, %v6452, -inf
  %6476 = vmax.xlane.f32.xlu0 %v6475
  %v6477 = vpop.xlane.xlu0 %6476
  %v6478 = vsel %vm1006, %v6453, -inf
  %6479 = vmax.xlane.f32.xlu0 %v6478
  %v6480 = vpop.xlane.xlu0 %6479
  %v6481 = vsub.f32 %v6445, %v6456
  %v6482 = vsub.f32 %v6446, %v6459
  %v6483 = vsub.f32 %v6447, %v6462
  %v6484 = vsub.f32 %v6448, %v6465
  %v6485 = vsub.f32 %v6449, %v6468
  %v6486 = vsub.f32 %v6450, %v6471
  %v6487 = vsub.f32 %v6451, %v6474
  %v6488 = vsub.f32 %v6452, %v6477
  %v6489 = vsub.f32 %v6453, %v6480
  %v6490 = vmul.f32 %v6481, 1.442695
  %v6491 = vpow.pop %v6490
  %v6492 = vmul.f32 %v6482, 1.442695
  %v6493 = vpow.pop %v6492
  %v6494 = vmul.f32 %v6483, 1.442695
  %v6495 = vpow.pop %v6494
  %v6496 = vmul.f32 %v6484, 1.442695
  %v6497 = vpow.pop %v6496
  %v6498 = vmul.f32 %v6485, 1.442695
  %v6499 = vpow.pop %v6498
  %v6500 = vmul.f32 %v6486, 1.442695
  %v6501 = vpow.pop %v6500
  %v6502 = vmul.f32 %v6487, 1.442695
  %v6503 = vpow.pop %v6502
  %v6504 = vmul.f32 %v6488, 1.442695
  %v6505 = vpow.pop %v6504
  %v6506 = vmul.f32 %v6489, 1.442695
  %v6507 = vpow.pop %v6506
  %v6508 = vsel %vm1006, %v6491, 0.0
  %6509 = vadd.xlane.f32.xlu0 %v6508
  %v6510 = vpop.xlane.xlu0 %6509
  %v6511 = vsel %vm1006, %v6493, 0.0
  %6512 = vadd.xlane.f32.xlu0 %v6511
  %v6513 = vpop.xlane.xlu0 %6512
  %v6514 = vsel %vm1006, %v6495, 0.0
  %6515 = vadd.xlane.f32.xlu0 %v6514
  %v6516 = vpop.xlane.xlu0 %6515
  %v6517 = vsel %vm1006, %v6497, 0.0
  %6518 = vadd.xlane.f32.xlu0 %v6517
  %v6519 = vpop.xlane.xlu0 %6518
  %v6520 = vsel %vm1006, %v6499, 0.0
  %6521 = vadd.xlane.f32.xlu0 %v6520
  %v6522 = vpop.xlane.xlu0 %6521
  %v6523 = vsel %vm1006, %v6501, 0.0
  %6524 = vadd.xlane.f32.xlu0 %v6523
  %v6525 = vpop.xlane.xlu0 %6524
  %v6526 = vsel %vm1006, %v6503, 0.0
  %6527 = vadd.xlane.f32.xlu0 %v6526
  %v6528 = vpop.xlane.xlu0 %6527
  %v6529 = vsel %vm1006, %v6505, 0.0
  %6530 = vadd.xlane.f32.xlu0 %v6529
  %v6531 = vpop.xlane.xlu0 %6530
  %v6532 = vsel %vm1006, %v6507, 0.0
  %6533 = vadd.xlane.f32.xlu0 %v6532
  %v6534 = vpop.xlane.xlu0 %6533
  %v6535 = vrcp.pop %v6510
  %v6536 = vrcp.pop %v6513
  %v6537 = vrcp.pop %v6516
  %v6538 = vrcp.pop %v6519
  %v6539 = vrcp.pop %v6522
  %v6540 = vrcp.pop %v6525
  %v6541 = vrcp.pop %v6528
  %v6542 = vrcp.pop %v6531
  %v6543 = vrcp.pop %v6534
  %v6544 = vmul.f32 %v6491, %v6535
  %v6545 = vmul.f32 %v6493, %v6536
  %v6546 = vmul.f32 %v6495, %v6537
  %v6547 = vmul.f32 %v6497, %v6538
  %v6548 = vmul.f32 %v6499, %v6539
  %v6549 = vmul.f32 %v6501, %v6540
  %v6550 = vmul.f32 %v6503, %v6541
  %v6551 = vmul.f32 %v6505, %v6542
  %v6552 = vmul.f32 %v6507, %v6543
  %6553 = vrot.lane.b32.xlu0 %v5587, 48
  %v6554 = vpop.permute.xlu0 %6553
  %6555 = vrot.lane.b32.xlu0 %v5590, 48
  %v6556 = vpop.permute.xlu0 %6555
  %6557 = vrot.lane.b32.xlu0 %v5593, 48
  %v6558 = vpop.permute.xlu0 %6557
  %6559 = vrot.lane.b32.xlu0 %v5596, 48
  %v6560 = vpop.permute.xlu0 %6559
  %6561 = vrot.lane.b32.xlu0 %v5599, 48
  %v6562 = vpop.permute.xlu0 %6561
  %6563 = vrot.lane.b32.xlu0 %v5602, 48
  %v6564 = vpop.permute.xlu0 %6563
  %6565 = vrot.lane.b32.xlu0 %v5605, 48
  %v6566 = vpop.permute.xlu0 %6565
  %6567 = vrot.lane.b32.xlu0 %v5608, 48
  %v6568 = vpop.permute.xlu0 %6567
  %6569 = vrot.lane.b32.xlu0 %v5611, 48
  %v6570 = vpop.permute.xlu0 %6569
  %v6581 = vsel %vm1006, %v6544, 0
  %v6584 = vsel %vm1006, %v6545, 0
  %v6587 = vsel %vm1006, %v6546, 0
  %v6590 = vsel %vm1006, %v6547, 0
  %v6593 = vsel %vm1006, %v6548, 0
  %v6596 = vsel %vm1006, %v6549, 0
  %v6599 = vsel %vm1006, %v6550, 0
  %v6602 = vsel %vm1006, %v6551, 0
  %v6605 = vsel %vm1006, %v6552, 0
  %6607 = vmatpush.msra.mxu0 0.0
  %6608 = vmatpush.msra.mxu0 0.0
  %6609 = vmatpush.msra.mxu0 0.0
  %6610 = vmatpush.msra.mxu0 0.0
  %6611 = vmatpush.msra.mxu0 0.0
  %6612 = vmatpush.msra.mxu0 0.0
  %6613 = vmatpush.msra.mxu0 0.0
  %6614 = vmatpush.msra.mxu0 %v6570
  %6615 = vmatpush.msra.mxu0 %v6568
  %6616 = vmatpush.msra.mxu0 %v6566
  %6617 = vmatpush.msra.mxu0 %v6564
  %6618 = vmatpush.msra.mxu0 %v6562
  %6619 = vmatpush.msra.mxu0 %v6560
  %6620 = vmatpush.msra.mxu0 %v6558
  %6621 = vmatpush.msra.mxu0 %v6556
  %6622 = vmatpush.msra.mxu0 %v6554
  %6623 = vmatmul.f32.gmra.mxu0 %v6581
  %v6624 = vpop.f32.mrf.mxu0
  %v6625 = vadd.f32 0.0, %v6624
  %6626 = vmatmul.f32.gmra.mxu0 %v6584
  %v6627 = vpop.f32.mrf.mxu0
  %v6628 = vadd.f32 0.0, %v6627
  %6629 = vmatmul.f32.gmra.mxu0 %v6587
  %v6630 = vpop.f32.mrf.mxu0
  %v6631 = vadd.f32 0.0, %v6630
  %6632 = vmatmul.f32.gmra.mxu0 %v6590
  %v6633 = vpop.f32.mrf.mxu0
  %v6634 = vadd.f32 0.0, %v6633
  %6635 = vmatmul.f32.gmra.mxu0 %v6593
  %v6636 = vpop.f32.mrf.mxu0
  %v6637 = vadd.f32 0.0, %v6636
  %6638 = vmatmul.f32.gmra.mxu0 %v6596
  %v6639 = vpop.f32.mrf.mxu0
  %v6640 = vadd.f32 0.0, %v6639
  %6641 = vmatmul.f32.gmra.mxu0 %v6599
  %v6642 = vpop.f32.mrf.mxu0
  %v6643 = vadd.f32 0.0, %v6642
  %6644 = vmatmul.f32.gmra.mxu0 %v6602
  %v6645 = vpop.f32.mrf.mxu0
  %v6646 = vadd.f32 0.0, %v6645
  %6647 = vmatmul.f32.gmra.mxu0 %v6605
  %v6648 = vpop.f32.mrf.mxu0
  %v6649 = vadd.f32 0.0, %v6648
  %6650 = vdwg.mxu0
  %6660 = vrot.lane.b32.xlu0 %v6625, 16
  %v6661 = vpop.permute.xlu0 %6660
  %6662 = vrot.lane.b32.xlu0 %v6628, 16
  %v6663 = vpop.permute.xlu0 %6662
  %6664 = vrot.lane.b32.xlu0 %v6631, 16
  %v6665 = vpop.permute.xlu0 %6664
  %6666 = vrot.lane.b32.xlu0 %v6634, 16
  %v6667 = vpop.permute.xlu0 %6666
  %6668 = vrot.lane.b32.xlu0 %v6637, 16
  %v6669 = vpop.permute.xlu0 %6668
  %6670 = vrot.lane.b32.xlu0 %v6640, 16
  %v6671 = vpop.permute.xlu0 %6670
  %6672 = vrot.lane.b32.xlu0 %v6643, 16
  %v6673 = vpop.permute.xlu0 %6672
  %6674 = vrot.lane.b32.xlu0 %v6646, 16
  %v6675 = vpop.permute.xlu0 %6674
  %6676 = vrot.lane.b32.xlu0 %v6649, 16
  %v6677 = vpop.permute.xlu0 %6676
  %6687 = vst.msk [vmem:[#allocation3] sm:$0xff] %vm1939, %v6661
  %6688 = vst.msk [vmem:[#allocation3 + $0x8] sm:$0xff] %vm1939, %v6663
  %6689 = vst.msk [vmem:[#allocation3 + $0x10] sm:$0xff] %vm1939, %v6665
  %6690 = vst.msk [vmem:[#allocation3 + $0x18] sm:$0xff] %vm1939, %v6667
  %6691 = vst.msk [vmem:[#allocation3 + $0x20] sm:$0xff] %vm1939, %v6669
  %6692 = vst.msk [vmem:[#allocation3 + $0x28] sm:$0xff] %vm1939, %v6671
  %6693 = vst.msk [vmem:[#allocation3 + $0x30] sm:$0xff] %vm1939, %v6673
  %6694 = vst.msk [vmem:[#allocation3 + $0x38] sm:$0xff] %vm1939, %v6675
  %6695 = vst.msk [vmem:[#allocation3 + $0x40] sm:$0xff] %vm1939, %v6677
  %6696 = vrot.lane.b32.xlu0 %v5587, 104
  %v6697 = vpop.permute.xlu0 %6696
  %6698 = vrot.lane.b32.xlu0 %v5590, 104
  %v6699 = vpop.permute.xlu0 %6698
  %6700 = vrot.lane.b32.xlu0 %v5593, 104
  %v6701 = vpop.permute.xlu0 %6700
  %6702 = vrot.lane.b32.xlu0 %v5596, 104
  %v6703 = vpop.permute.xlu0 %6702
  %6704 = vrot.lane.b32.xlu0 %v5599, 104
  %v6705 = vpop.permute.xlu0 %6704
  %6706 = vrot.lane.b32.xlu0 %v5602, 104
  %v6707 = vpop.permute.xlu0 %6706
  %6708 = vrot.lane.b32.xlu0 %v5605, 104
  %v6709 = vpop.permute.xlu0 %6708
  %6710 = vrot.lane.b32.xlu0 %v5608, 104
  %v6711 = vpop.permute.xlu0 %6710
  %6712 = vrot.lane.b32.xlu0 %v5611, 104
  %v6713 = vpop.permute.xlu0 %6712
  %6714 = vrot.lane.b32.xlu0 %v5587, 72
  %v6715 = vpop.permute.xlu0 %6714
  %6716 = vrot.lane.b32.xlu0 %v5590, 72
  %v6717 = vpop.permute.xlu0 %6716
  %6718 = vrot.lane.b32.xlu0 %v5593, 72
  %v6719 = vpop.permute.xlu0 %6718
  %6720 = vrot.lane.b32.xlu0 %v5596, 72
  %v6721 = vpop.permute.xlu0 %6720
  %6722 = vrot.lane.b32.xlu0 %v5599, 72
  %v6723 = vpop.permute.xlu0 %6722
  %6724 = vrot.lane.b32.xlu0 %v5602, 72
  %v6725 = vpop.permute.xlu0 %6724
  %6726 = vrot.lane.b32.xlu0 %v5605, 72
  %v6727 = vpop.permute.xlu0 %6726
  %6728 = vrot.lane.b32.xlu0 %v5608, 72
  %v6729 = vpop.permute.xlu0 %6728
  %6730 = vrot.lane.b32.xlu0 %v5611, 72
  %v6731 = vpop.permute.xlu0 %6730
  %v6732 = vsel %vm916, %v6697, 0
  %v6734 = vsel %vm916, %v6699, 0
  %v6736 = vsel %vm916, %v6701, 0
  %v6738 = vsel %vm916, %v6703, 0
  %v6740 = vsel %vm916, %v6705, 0
  %v6742 = vsel %vm916, %v6707, 0
  %v6744 = vsel %vm916, %v6709, 0
  %v6746 = vsel %vm916, %v6711, 0
  %v6748 = vsel %vm916, %v6713, 0
  %v6750 = vsel %vm916, %v6715, 0
  %v6752 = vsel %vm916, %v6717, 0
  %v6754 = vsel %vm916, %v6719, 0
  %v6756 = vsel %vm916, %v6721, 0
  %v6758 = vsel %vm916, %v6723, 0
  %v6760 = vsel %vm916, %v6725, 0
  %v6762 = vsel %vm916, %v6727, 0
  %v6764 = vsel %vm916, %v6729, 0
  %v6766 = vsel %vm916, %v6731, 0
  %6768 = vmatpush.xpose.msra.mxu0 0.0
  %6769 = vmatpush.xpose.msra.mxu0 0.0
  %6770 = vmatpush.xpose.msra.mxu0 0.0
  %6771 = vmatpush.xpose.msra.mxu0 0.0
  %6772 = vmatpush.xpose.msra.mxu0 0.0
  %6773 = vmatpush.xpose.msra.mxu0 0.0
  %6774 = vmatpush.xpose.msra.mxu0 0.0
  %6775 = vmatpush.xpose.msra.mxu0 %v6766
  %6776 = vmatpush.xpose.msra.mxu0 %v6764
  %6777 = vmatpush.xpose.msra.mxu0 %v6762
  %6778 = vmatpush.xpose.msra.mxu0 %v6760
  %6779 = vmatpush.xpose.msra.mxu0 %v6758
  %6780 = vmatpush.xpose.msra.mxu0 %v6756
  %6781 = vmatpush.xpose.msra.mxu0 %v6754
  %6782 = vmatpush.xpose.msra.mxu0 %v6752
  %6783 = vmatpush.xpose.msra.mxu0 %v6750
  %6784 = vmatmul.f32.gmra.mxu0 %v6732
  %v6785 = vpop.f32.mrf.mxu0
  %v6786 = vadd.f32 0.0, %v6785
  %6787 = vmatmul.f32.gmra.mxu0 %v6734
  %v6788 = vpop.f32.mrf.mxu0
  %v6789 = vadd.f32 0.0, %v6788
  %6790 = vmatmul.f32.gmra.mxu0 %v6736
  %v6791 = vpop.f32.mrf.mxu0
  %v6792 = vadd.f32 0.0, %v6791
  %6793 = vmatmul.f32.gmra.mxu0 %v6738
  %v6794 = vpop.f32.mrf.mxu0
  %v6795 = vadd.f32 0.0, %v6794
  %6796 = vmatmul.f32.gmra.mxu0 %v6740
  %v6797 = vpop.f32.mrf.mxu0
  %v6798 = vadd.f32 0.0, %v6797
  %6799 = vmatmul.f32.gmra.mxu0 %v6742
  %v6800 = vpop.f32.mrf.mxu0
  %v6801 = vadd.f32 0.0, %v6800
  %6802 = vmatmul.f32.gmra.mxu0 %v6744
  %v6803 = vpop.f32.mrf.mxu0
  %v6804 = vadd.f32 0.0, %v6803
  %6805 = vmatmul.f32.gmra.mxu0 %v6746
  %v6806 = vpop.f32.mrf.mxu0
  %v6807 = vadd.f32 0.0, %v6806
  %6808 = vmatmul.f32.gmra.mxu0 %v6748
  %v6809 = vpop.f32.mrf.mxu0
  %v6810 = vadd.f32 0.0, %v6809
  %6811 = vdwg.mxu0
  %v6812 = vmul.f32 %v6786, 0.35355338
  %v6813 = vmul.f32 %v6789, 0.35355338
  %v6814 = vmul.f32 %v6792, 0.35355338
  %v6815 = vmul.f32 %v6795, 0.35355338
  %v6816 = vmul.f32 %v6798, 0.35355338
  %v6817 = vmul.f32 %v6801, 0.35355338
  %v6818 = vmul.f32 %v6804, 0.35355338
  %v6819 = vmul.f32 %v6807, 0.35355338
  %v6820 = vmul.f32 %v6810, 0.35355338
  %v6821 = vsel %vm1006, %v6812, -inf
  %6822 = vmax.xlane.f32.xlu0 %v6821
  %v6823 = vpop.xlane.xlu0 %6822
  %v6824 = vsel %vm1006, %v6813, -inf
  %6825 = vmax.xlane.f32.xlu0 %v6824
  %v6826 = vpop.xlane.xlu0 %6825
  %v6827 = vsel %vm1006, %v6814, -inf
  %6828 = vmax.xlane.f32.xlu0 %v6827
  %v6829 = vpop.xlane.xlu0 %6828
  %v6830 = vsel %vm1006, %v6815, -inf
  %6831 = vmax.xlane.f32.xlu0 %v6830
  %v6832 = vpop.xlane.xlu0 %6831
  %v6833 = vsel %vm1006, %v6816, -inf
  %6834 = vmax.xlane.f32.xlu0 %v6833
  %v6835 = vpop.xlane.xlu0 %6834
  %v6836 = vsel %vm1006, %v6817, -inf
  %6837 = vmax.xlane.f32.xlu0 %v6836
  %v6838 = vpop.xlane.xlu0 %6837
  %v6839 = vsel %vm1006, %v6818, -inf
  %6840 = vmax.xlane.f32.xlu0 %v6839
  %v6841 = vpop.xlane.xlu0 %6840
  %v6842 = vsel %vm1006, %v6819, -inf
  %6843 = vmax.xlane.f32.xlu0 %v6842
  %v6844 = vpop.xlane.xlu0 %6843
  %v6845 = vsel %vm1006, %v6820, -inf
  %6846 = vmax.xlane.f32.xlu0 %v6845
  %v6847 = vpop.xlane.xlu0 %6846
  %v6848 = vsub.f32 %v6812, %v6823
  %v6849 = vsub.f32 %v6813, %v6826
  %v6850 = vsub.f32 %v6814, %v6829
  %v6851 = vsub.f32 %v6815, %v6832
  %v6852 = vsub.f32 %v6816, %v6835
  %v6853 = vsub.f32 %v6817, %v6838
  %v6854 = vsub.f32 %v6818, %v6841
  %v6855 = vsub.f32 %v6819, %v6844
  %v6856 = vsub.f32 %v6820, %v6847
  %v6857 = vmul.f32 %v6848, 1.442695
  %v6858 = vpow.pop %v6857
  %v6859 = vmul.f32 %v6849, 1.442695
  %v6860 = vpow.pop %v6859
  %v6861 = vmul.f32 %v6850, 1.442695
  %v6862 = vpow.pop %v6861
  %v6863 = vmul.f32 %v6851, 1.442695
  %v6864 = vpow.pop %v6863
  %v6865 = vmul.f32 %v6852, 1.442695
  %v6866 = vpow.pop %v6865
  %v6867 = vmul.f32 %v6853, 1.442695
  %v6868 = vpow.pop %v6867
  %v6869 = vmul.f32 %v6854, 1.442695
  %v6870 = vpow.pop %v6869
  %v6871 = vmul.f32 %v6855, 1.442695
  %v6872 = vpow.pop %v6871
  %v6873 = vmul.f32 %v6856, 1.442695
  %v6874 = vpow.pop %v6873
  %v6875 = vsel %vm1006, %v6858, 0.0
  %6876 = vadd.xlane.f32.xlu0 %v6875
  %v6877 = vpop.xlane.xlu0 %6876
  %v6878 = vsel %vm1006, %v6860, 0.0
  %6879 = vadd.xlane.f32.xlu0 %v6878
  %v6880 = vpop.xlane.xlu0 %6879
  %v6881 = vsel %vm1006, %v6862, 0.0
  %6882 = vadd.xlane.f32.xlu0 %v6881
  %v6883 = vpop.xlane.xlu0 %6882
  %v6884 = vsel %vm1006, %v6864, 0.0
  %6885 = vadd.xlane.f32.xlu0 %v6884
  %v6886 = vpop.xlane.xlu0 %6885
  %v6887 = vsel %vm1006, %v6866, 0.0
  %6888 = vadd.xlane.f32.xlu0 %v6887
  %v6889 = vpop.xlane.xlu0 %6888
  %v6890 = vsel %vm1006, %v6868, 0.0
  %6891 = vadd.xlane.f32.xlu0 %v6890
  %v6892 = vpop.xlane.xlu0 %6891
  %v6893 = vsel %vm1006, %v6870, 0.0
  %6894 = vadd.xlane.f32.xlu0 %v6893
  %v6895 = vpop.xlane.xlu0 %6894
  %v6896 = vsel %vm1006, %v6872, 0.0
  %6897 = vadd.xlane.f32.xlu0 %v6896
  %v6898 = vpop.xlane.xlu0 %6897
  %v6899 = vsel %vm1006, %v6874, 0.0
  %6900 = vadd.xlane.f32.xlu0 %v6899
  %v6901 = vpop.xlane.xlu0 %6900
  %v6902 = vrcp.pop %v6877
  %v6903 = vrcp.pop %v6880
  %v6904 = vrcp.pop %v6883
  %v6905 = vrcp.pop %v6886
  %v6906 = vrcp.pop %v6889
  %v6907 = vrcp.pop %v6892
  %v6908 = vrcp.pop %v6895
  %v6909 = vrcp.pop %v6898
  %v6910 = vrcp.pop %v6901
  %v6911 = vmul.f32 %v6858, %v6902
  %v6912 = vmul.f32 %v6860, %v6903
  %v6913 = vmul.f32 %v6862, %v6904
  %v6914 = vmul.f32 %v6864, %v6905
  %v6915 = vmul.f32 %v6866, %v6906
  %v6916 = vmul.f32 %v6868, %v6907
  %v6917 = vmul.f32 %v6870, %v6908
  %v6918 = vmul.f32 %v6872, %v6909
  %v6919 = vmul.f32 %v6874, %v6910
  %6920 = vrot.lane.b32.xlu0 %v5587, 40
  %v6921 = vpop.permute.xlu0 %6920
  %6922 = vrot.lane.b32.xlu0 %v5590, 40
  %v6923 = vpop.permute.xlu0 %6922
  %6924 = vrot.lane.b32.xlu0 %v5593, 40
  %v6925 = vpop.permute.xlu0 %6924
  %6926 = vrot.lane.b32.xlu0 %v5596, 40
  %v6927 = vpop.permute.xlu0 %6926
  %6928 = vrot.lane.b32.xlu0 %v5599, 40
  %v6929 = vpop.permute.xlu0 %6928
  %6930 = vrot.lane.b32.xlu0 %v5602, 40
  %v6931 = vpop.permute.xlu0 %6930
  %6932 = vrot.lane.b32.xlu0 %v5605, 40
  %v6933 = vpop.permute.xlu0 %6932
  %6934 = vrot.lane.b32.xlu0 %v5608, 40
  %v6935 = vpop.permute.xlu0 %6934
  %6936 = vrot.lane.b32.xlu0 %v5611, 40
  %v6937 = vpop.permute.xlu0 %6936
  %v6948 = vsel %vm1006, %v6911, 0
  %v6951 = vsel %vm1006, %v6912, 0
  %v6954 = vsel %vm1006, %v6913, 0
  %v6957 = vsel %vm1006, %v6914, 0
  %v6960 = vsel %vm1006, %v6915, 0
  %v6963 = vsel %vm1006, %v6916, 0
  %v6966 = vsel %vm1006, %v6917, 0
  %v6969 = vsel %vm1006, %v6918, 0
  %v6972 = vsel %vm1006, %v6919, 0
  %6974 = vmatpush.msra.mxu0 0.0
  %6975 = vmatpush.msra.mxu0 0.0
  %6976 = vmatpush.msra.mxu0 0.0
  %6977 = vmatpush.msra.mxu0 0.0
  %6978 = vmatpush.msra.mxu0 0.0
  %6979 = vmatpush.msra.mxu0 0.0
  %6980 = vmatpush.msra.mxu0 0.0
  %6981 = vmatpush.msra.mxu0 %v6937
  %6982 = vmatpush.msra.mxu0 %v6935
  %6983 = vmatpush.msra.mxu0 %v6933
  %6984 = vmatpush.msra.mxu0 %v6931
  %6985 = vmatpush.msra.mxu0 %v6929
  %6986 = vmatpush.msra.mxu0 %v6927
  %6987 = vmatpush.msra.mxu0 %v6925
  %6988 = vmatpush.msra.mxu0 %v6923
  %6989 = vmatpush.msra.mxu0 %v6921
  %6990 = vmatmul.f32.gmra.mxu0 %v6948
  %v6991 = vpop.f32.mrf.mxu0
  %v6992 = vadd.f32 0.0, %v6991
  %6993 = vmatmul.f32.gmra.mxu0 %v6951
  %v6994 = vpop.f32.mrf.mxu0
  %v6995 = vadd.f32 0.0, %v6994
  %6996 = vmatmul.f32.gmra.mxu0 %v6954
  %v6997 = vpop.f32.mrf.mxu0
  %v6998 = vadd.f32 0.0, %v6997
  %6999 = vmatmul.f32.gmra.mxu0 %v6957
  %v7000 = vpop.f32.mrf.mxu0
  %v7001 = vadd.f32 0.0, %v7000
  %7002 = vmatmul.f32.gmra.mxu0 %v6960
  %v7003 = vpop.f32.mrf.mxu0
  %v7004 = vadd.f32 0.0, %v7003
  %7005 = vmatmul.f32.gmra.mxu0 %v6963
  %v7006 = vpop.f32.mrf.mxu0
  %v7007 = vadd.f32 0.0, %v7006
  %7008 = vmatmul.f32.gmra.mxu0 %v6966
  %v7009 = vpop.f32.mrf.mxu0
  %v7010 = vadd.f32 0.0, %v7009
  %7011 = vmatmul.f32.gmra.mxu0 %v6969
  %v7012 = vpop.f32.mrf.mxu0
  %v7013 = vadd.f32 0.0, %v7012
  %7014 = vmatmul.f32.gmra.mxu0 %v6972
  %v7015 = vpop.f32.mrf.mxu0
  %v7016 = vadd.f32 0.0, %v7015
  %7017 = vdwg.mxu0
  %7027 = vrot.lane.b32.xlu0 %v6992, 24
  %v7028 = vpop.permute.xlu0 %7027
  %7029 = vrot.lane.b32.xlu0 %v6995, 24
  %v7030 = vpop.permute.xlu0 %7029
  %7031 = vrot.lane.b32.xlu0 %v6998, 24
  %v7032 = vpop.permute.xlu0 %7031
  %7033 = vrot.lane.b32.xlu0 %v7001, 24
  %v7034 = vpop.permute.xlu0 %7033
  %7035 = vrot.lane.b32.xlu0 %v7004, 24
  %v7036 = vpop.permute.xlu0 %7035
  %7037 = vrot.lane.b32.xlu0 %v7007, 24
  %v7038 = vpop.permute.xlu0 %7037
  %7039 = vrot.lane.b32.xlu0 %v7010, 24
  %v7040 = vpop.permute.xlu0 %7039
  %7041 = vrot.lane.b32.xlu0 %v7013, 24
  %v7042 = vpop.permute.xlu0 %7041
  %7043 = vrot.lane.b32.xlu0 %v7016, 24
  %v7044 = vpop.permute.xlu0 %7043
  %7054 = vst.msk [vmem:[#allocation3] sm:$0xff] %vm2307, %v7028
  %7055 = vst.msk [vmem:[#allocation3 + $0x8] sm:$0xff] %vm2307, %v7030
  %7056 = vst.msk [vmem:[#allocation3 + $0x10] sm:$0xff] %vm2307, %v7032
  %7057 = vst.msk [vmem:[#allocation3 + $0x18] sm:$0xff] %vm2307, %v7034
  %7058 = vst.msk [vmem:[#allocation3 + $0x20] sm:$0xff] %vm2307, %v7036
  %7059 = vst.msk [vmem:[#allocation3 + $0x28] sm:$0xff] %vm2307, %v7038
  %7060 = vst.msk [vmem:[#allocation3 + $0x30] sm:$0xff] %vm2307, %v7040
  %7061 = vst.msk [vmem:[#allocation3 + $0x38] sm:$0xff] %vm2307, %v7042
  %7062 = vst.msk [vmem:[#allocation3 + $0x40] sm:$0xff] %vm2307, %v7044
  %7072 = vrot.lane.b32.xlu0 %v5614, 96
  %v7073 = vpop.permute.xlu0 %7072
  %7074 = vrot.lane.b32.xlu0 %v5617, 96
  %v7075 = vpop.permute.xlu0 %7074
  %7076 = vrot.lane.b32.xlu0 %v5620, 96
  %v7077 = vpop.permute.xlu0 %7076
  %7078 = vrot.lane.b32.xlu0 %v5623, 96
  %v7079 = vpop.permute.xlu0 %7078
  %7080 = vrot.lane.b32.xlu0 %v5626, 96
  %v7081 = vpop.permute.xlu0 %7080
  %7082 = vrot.lane.b32.xlu0 %v5629, 96
  %v7083 = vpop.permute.xlu0 %7082
  %7084 = vrot.lane.b32.xlu0 %v5632, 96
  %v7085 = vpop.permute.xlu0 %7084
  %7086 = vrot.lane.b32.xlu0 %v5635, 96
  %v7087 = vpop.permute.xlu0 %7086
  %7088 = vrot.lane.b32.xlu0 %v5638, 96
  %v7089 = vpop.permute.xlu0 %7088
  %v7090 = vsel %vm916, %v5614, 0
  %v7092 = vsel %vm916, %v5617, 0
  %v7094 = vsel %vm916, %v5620, 0
  %v7096 = vsel %vm916, %v5623, 0
  %v7098 = vsel %vm916, %v5626, 0
  %v7100 = vsel %vm916, %v5629, 0
  %v7102 = vsel %vm916, %v5632, 0
  %v7104 = vsel %vm916, %v5635, 0
  %v7106 = vsel %vm916, %v5638, 0
  %v7108 = vsel %vm916, %v7073, 0
  %v7110 = vsel %vm916, %v7075, 0
  %v7112 = vsel %vm916, %v7077, 0
  %v7114 = vsel %vm916, %v7079, 0
  %v7116 = vsel %vm916, %v7081, 0
  %v7118 = vsel %vm916, %v7083, 0
  %v7120 = vsel %vm916, %v7085, 0
  %v7122 = vsel %vm916, %v7087, 0
  %v7124 = vsel %vm916, %v7089, 0
  %7126 = vmatpush.xpose.msra.mxu0 0.0
  %7127 = vmatpush.xpose.msra.mxu0 0.0
  %7128 = vmatpush.xpose.msra.mxu0 0.0
  %7129 = vmatpush.xpose.msra.mxu0 0.0
  %7130 = vmatpush.xpose.msra.mxu0 0.0
  %7131 = vmatpush.xpose.msra.mxu0 0.0
  %7132 = vmatpush.xpose.msra.mxu0 0.0
  %7133 = vmatpush.xpose.msra.mxu0 %v7124
  %7134 = vmatpush.xpose.msra.mxu0 %v7122
  %7135 = vmatpush.xpose.msra.mxu0 %v7120
  %7136 = vmatpush.xpose.msra.mxu0 %v7118
  %7137 = vmatpush.xpose.msra.mxu0 %v7116
  %7138 = vmatpush.xpose.msra.mxu0 %v7114
  %7139 = vmatpush.xpose.msra.mxu0 %v7112
  %7140 = vmatpush.xpose.msra.mxu0 %v7110
  %7141 = vmatpush.xpose.msra.mxu0 %v7108
  %7142 = vmatmul.f32.gmra.mxu0 %v7090
  %v7143 = vpop.f32.mrf.mxu0
  %v7144 = vadd.f32 0.0, %v7143
  %7145 = vmatmul.f32.gmra.mxu0 %v7092
  %v7146 = vpop.f32.mrf.mxu0
  %v7147 = vadd.f32 0.0, %v7146
  %7148 = vmatmul.f32.gmra.mxu0 %v7094
  %v7149 = vpop.f32.mrf.mxu0
  %v7150 = vadd.f32 0.0, %v7149
  %7151 = vmatmul.f32.gmra.mxu0 %v7096
  %v7152 = vpop.f32.mrf.mxu0
  %v7153 = vadd.f32 0.0, %v7152
  %7154 = vmatmul.f32.gmra.mxu0 %v7098
  %v7155 = vpop.f32.mrf.mxu0
  %v7156 = vadd.f32 0.0, %v7155
  %7157 = vmatmul.f32.gmra.mxu0 %v7100
  %v7158 = vpop.f32.mrf.mxu0
  %v7159 = vadd.f32 0.0, %v7158
  %7160 = vmatmul.f32.gmra.mxu0 %v7102
  %v7161 = vpop.f32.mrf.mxu0
  %v7162 = vadd.f32 0.0, %v7161
  %7163 = vmatmul.f32.gmra.mxu0 %v7104
  %v7164 = vpop.f32.mrf.mxu0
  %v7165 = vadd.f32 0.0, %v7164
  %7166 = vmatmul.f32.gmra.mxu0 %v7106
  %v7167 = vpop.f32.mrf.mxu0
  %v7168 = vadd.f32 0.0, %v7167
  %7169 = vdwg.mxu0
  %v7170 = vmul.f32 %v7144, 0.35355338
  %v7171 = vmul.f32 %v7147, 0.35355338
  %v7172 = vmul.f32 %v7150, 0.35355338
  %v7173 = vmul.f32 %v7153, 0.35355338
  %v7174 = vmul.f32 %v7156, 0.35355338
  %v7175 = vmul.f32 %v7159, 0.35355338
  %v7176 = vmul.f32 %v7162, 0.35355338
  %v7177 = vmul.f32 %v7165, 0.35355338
  %v7178 = vmul.f32 %v7168, 0.35355338
  %v7179 = vsel %vm1006, %v7170, -inf
  %7180 = vmax.xlane.f32.xlu0 %v7179
  %v7181 = vpop.xlane.xlu0 %7180
  %v7182 = vsel %vm1006, %v7171, -inf
  %7183 = vmax.xlane.f32.xlu0 %v7182
  %v7184 = vpop.xlane.xlu0 %7183
  %v7185 = vsel %vm1006, %v7172, -inf
  %7186 = vmax.xlane.f32.xlu0 %v7185
  %v7187 = vpop.xlane.xlu0 %7186
  %v7188 = vsel %vm1006, %v7173, -inf
  %7189 = vmax.xlane.f32.xlu0 %v7188
  %v7190 = vpop.xlane.xlu0 %7189
  %v7191 = vsel %vm1006, %v7174, -inf
  %7192 = vmax.xlane.f32.xlu0 %v7191
  %v7193 = vpop.xlane.xlu0 %7192
  %v7194 = vsel %vm1006, %v7175, -inf
  %7195 = vmax.xlane.f32.xlu0 %v7194
  %v7196 = vpop.xlane.xlu0 %7195
  %v7197 = vsel %vm1006, %v7176, -inf
  %7198 = vmax.xlane.f32.xlu0 %v7197
  %v7199 = vpop.xlane.xlu0 %7198
  %v7200 = vsel %vm1006, %v7177, -inf
  %7201 = vmax.xlane.f32.xlu0 %v7200
  %v7202 = vpop.xlane.xlu0 %7201
  %v7203 = vsel %vm1006, %v7178, -inf
  %7204 = vmax.xlane.f32.xlu0 %v7203
  %v7205 = vpop.xlane.xlu0 %7204
  %v7206 = vsub.f32 %v7170, %v7181
  %v7207 = vsub.f32 %v7171, %v7184
  %v7208 = vsub.f32 %v7172, %v7187
  %v7209 = vsub.f32 %v7173, %v7190
  %v7210 = vsub.f32 %v7174, %v7193
  %v7211 = vsub.f32 %v7175, %v7196
  %v7212 = vsub.f32 %v7176, %v7199
  %v7213 = vsub.f32 %v7177, %v7202
  %v7214 = vsub.f32 %v7178, %v7205
  %v7215 = vmul.f32 %v7206, 1.442695
  %v7216 = vpow.pop %v7215
  %v7217 = vmul.f32 %v7207, 1.442695
  %v7218 = vpow.pop %v7217
  %v7219 = vmul.f32 %v7208, 1.442695
  %v7220 = vpow.pop %v7219
  %v7221 = vmul.f32 %v7209, 1.442695
  %v7222 = vpow.pop %v7221
  %v7223 = vmul.f32 %v7210, 1.442695
  %v7224 = vpow.pop %v7223
  %v7225 = vmul.f32 %v7211, 1.442695
  %v7226 = vpow.pop %v7225
  %v7227 = vmul.f32 %v7212, 1.442695
  %v7228 = vpow.pop %v7227
  %v7229 = vmul.f32 %v7213, 1.442695
  %v7230 = vpow.pop %v7229
  %v7231 = vmul.f32 %v7214, 1.442695
  %v7232 = vpow.pop %v7231
  %v7233 = vsel %vm1006, %v7216, 0.0
  %7234 = vadd.xlane.f32.xlu0 %v7233
  %v7235 = vpop.xlane.xlu0 %7234
  %v7236 = vsel %vm1006, %v7218, 0.0
  %7237 = vadd.xlane.f32.xlu0 %v7236
  %v7238 = vpop.xlane.xlu0 %7237
  %v7239 = vsel %vm1006, %v7220, 0.0
  %7240 = vadd.xlane.f32.xlu0 %v7239
  %v7241 = vpop.xlane.xlu0 %7240
  %v7242 = vsel %vm1006, %v7222, 0.0
  %7243 = vadd.xlane.f32.xlu0 %v7242
  %v7244 = vpop.xlane.xlu0 %7243
  %v7245 = vsel %vm1006, %v7224, 0.0
  %7246 = vadd.xlane.f32.xlu0 %v7245
  %v7247 = vpop.xlane.xlu0 %7246
  %v7248 = vsel %vm1006, %v7226, 0.0
  %7249 = vadd.xlane.f32.xlu0 %v7248
  %v7250 = vpop.xlane.xlu0 %7249
  %v7251 = vsel %vm1006, %v7228, 0.0
  %7252 = vadd.xlane.f32.xlu0 %v7251
  %v7253 = vpop.xlane.xlu0 %7252
  %v7254 = vsel %vm1006, %v7230, 0.0
  %7255 = vadd.xlane.f32.xlu0 %v7254
  %v7256 = vpop.xlane.xlu0 %7255
  %v7257 = vsel %vm1006, %v7232, 0.0
  %7258 = vadd.xlane.f32.xlu0 %v7257
  %v7259 = vpop.xlane.xlu0 %7258
  %v7260 = vrcp.pop %v7235
  %v7261 = vrcp.pop %v7238
  %v7262 = vrcp.pop %v7241
  %v7263 = vrcp.pop %v7244
  %v7264 = vrcp.pop %v7247
  %v7265 = vrcp.pop %v7250
  %v7266 = vrcp.pop %v7253
  %v7267 = vrcp.pop %v7256
  %v7268 = vrcp.pop %v7259
  %v7269 = vmul.f32 %v7216, %v7260
  %v7270 = vmul.f32 %v7218, %v7261
  %v7271 = vmul.f32 %v7220, %v7262
  %v7272 = vmul.f32 %v7222, %v7263
  %v7273 = vmul.f32 %v7224, %v7264
  %v7274 = vmul.f32 %v7226, %v7265
  %v7275 = vmul.f32 %v7228, %v7266
  %v7276 = vmul.f32 %v7230, %v7267
  %v7277 = vmul.f32 %v7232, %v7268
  %7278 = vrot.lane.b32.xlu0 %v5614, 64
  %v7279 = vpop.permute.xlu0 %7278
  %7280 = vrot.lane.b32.xlu0 %v5617, 64
  %v7281 = vpop.permute.xlu0 %7280
  %7282 = vrot.lane.b32.xlu0 %v5620, 64
  %v7283 = vpop.permute.xlu0 %7282
  %7284 = vrot.lane.b32.xlu0 %v5623, 64
  %v7285 = vpop.permute.xlu0 %7284
  %7286 = vrot.lane.b32.xlu0 %v5626, 64
  %v7287 = vpop.permute.xlu0 %7286
  %7288 = vrot.lane.b32.xlu0 %v5629, 64
  %v7289 = vpop.permute.xlu0 %7288
  %7290 = vrot.lane.b32.xlu0 %v5632, 64
  %v7291 = vpop.permute.xlu0 %7290
  %7292 = vrot.lane.b32.xlu0 %v5635, 64
  %v7293 = vpop.permute.xlu0 %7292
  %7294 = vrot.lane.b32.xlu0 %v5638, 64
  %v7295 = vpop.permute.xlu0 %7294
  %v7306 = vsel %vm1006, %v7269, 0
  %v7309 = vsel %vm1006, %v7270, 0
  %v7312 = vsel %vm1006, %v7271, 0
  %v7315 = vsel %vm1006, %v7272, 0
  %v7318 = vsel %vm1006, %v7273, 0
  %v7321 = vsel %vm1006, %v7274, 0
  %v7324 = vsel %vm1006, %v7275, 0
  %v7327 = vsel %vm1006, %v7276, 0
  %v7330 = vsel %vm1006, %v7277, 0
  %7332 = vmatpush.msra.mxu0 0.0
  %7333 = vmatpush.msra.mxu0 0.0
  %7334 = vmatpush.msra.mxu0 0.0
  %7335 = vmatpush.msra.mxu0 0.0
  %7336 = vmatpush.msra.mxu0 0.0
  %7337 = vmatpush.msra.mxu0 0.0
  %7338 = vmatpush.msra.mxu0 0.0
  %7339 = vmatpush.msra.mxu0 %v7295
  %7340 = vmatpush.msra.mxu0 %v7293
  %7341 = vmatpush.msra.mxu0 %v7291
  %7342 = vmatpush.msra.mxu0 %v7289
  %7343 = vmatpush.msra.mxu0 %v7287
  %7344 = vmatpush.msra.mxu0 %v7285
  %7345 = vmatpush.msra.mxu0 %v7283
  %7346 = vmatpush.msra.mxu0 %v7281
  %7347 = vmatpush.msra.mxu0 %v7279
  %7348 = vmatmul.f32.gmra.mxu0 %v7306
  %v7349 = vpop.f32.mrf.mxu0
  %v7350 = vadd.f32 0.0, %v7349
  %7351 = vmatmul.f32.gmra.mxu0 %v7309
  %v7352 = vpop.f32.mrf.mxu0
  %v7353 = vadd.f32 0.0, %v7352
  %7354 = vmatmul.f32.gmra.mxu0 %v7312
  %v7355 = vpop.f32.mrf.mxu0
  %v7356 = vadd.f32 0.0, %v7355
  %7357 = vmatmul.f32.gmra.mxu0 %v7315
  %v7358 = vpop.f32.mrf.mxu0
  %v7359 = vadd.f32 0.0, %v7358
  %7360 = vmatmul.f32.gmra.mxu0 %v7318
  %v7361 = vpop.f32.mrf.mxu0
  %v7362 = vadd.f32 0.0, %v7361
  %7363 = vmatmul.f32.gmra.mxu0 %v7321
  %v7364 = vpop.f32.mrf.mxu0
  %v7365 = vadd.f32 0.0, %v7364
  %7366 = vmatmul.f32.gmra.mxu0 %v7324
  %v7367 = vpop.f32.mrf.mxu0
  %v7368 = vadd.f32 0.0, %v7367
  %7369 = vmatmul.f32.gmra.mxu0 %v7327
  %v7370 = vpop.f32.mrf.mxu0
  %v7371 = vadd.f32 0.0, %v7370
  %7372 = vmatmul.f32.gmra.mxu0 %v7330
  %v7373 = vpop.f32.mrf.mxu0
  %v7374 = vadd.f32 0.0, %v7373
  %7375 = vdwg.mxu0
  %7376 = vst.msk [vmem:[#allocation3 + $0x48] sm:$0xff] %vm916, %v7350
  %7377 = vst.msk [vmem:[#allocation3 + $0x50] sm:$0xff] %vm916, %v7353
  %7378 = vst.msk [vmem:[#allocation3 + $0x58] sm:$0xff] %vm916, %v7356
  %7379 = vst.msk [vmem:[#allocation3 + $0x60] sm:$0xff] %vm916, %v7359
  %7380 = vst.msk [vmem:[#allocation3 + $0x68] sm:$0xff] %vm916, %v7362
  %7381 = vst.msk [vmem:[#allocation3 + $0x70] sm:$0xff] %vm916, %v7365
  %7382 = vst.msk [vmem:[#allocation3 + $0x78] sm:$0xff] %vm916, %v7368
  %7383 = vst.msk [vmem:[#allocation3 + $0x80] sm:$0xff] %vm916, %v7371
  %7384 = vst.msk [vmem:[#allocation3 + $0x88] sm:$0xff] %vm916, %v7374
  %7385 = vrot.lane.b32.xlu0 %v5614, 120
  %v7386 = vpop.permute.xlu0 %7385
  %7387 = vrot.lane.b32.xlu0 %v5617, 120
  %v7388 = vpop.permute.xlu0 %7387
  %7389 = vrot.lane.b32.xlu0 %v5620, 120
  %v7390 = vpop.permute.xlu0 %7389
  %7391 = vrot.lane.b32.xlu0 %v5623, 120
  %v7392 = vpop.permute.xlu0 %7391
  %7393 = vrot.lane.b32.xlu0 %v5626, 120
  %v7394 = vpop.permute.xlu0 %7393
  %7395 = vrot.lane.b32.xlu0 %v5629, 120
  %v7396 = vpop.permute.xlu0 %7395
  %7397 = vrot.lane.b32.xlu0 %v5632, 120
  %v7398 = vpop.permute.xlu0 %7397
  %7399 = vrot.lane.b32.xlu0 %v5635, 120
  %v7400 = vpop.permute.xlu0 %7399
  %7401 = vrot.lane.b32.xlu0 %v5638, 120
  %v7402 = vpop.permute.xlu0 %7401
  %7403 = vrot.lane.b32.xlu0 %v5614, 88
  %v7404 = vpop.permute.xlu0 %7403
  %7405 = vrot.lane.b32.xlu0 %v5617, 88
  %v7406 = vpop.permute.xlu0 %7405
  %7407 = vrot.lane.b32.xlu0 %v5620, 88
  %v7408 = vpop.permute.xlu0 %7407
  %7409 = vrot.lane.b32.xlu0 %v5623, 88
  %v7410 = vpop.permute.xlu0 %7409
  %7411 = vrot.lane.b32.xlu0 %v5626, 88
  %v7412 = vpop.permute.xlu0 %7411
  %7413 = vrot.lane.b32.xlu0 %v5629, 88
  %v7414 = vpop.permute.xlu0 %7413
  %7415 = vrot.lane.b32.xlu0 %v5632, 88
  %v7416 = vpop.permute.xlu0 %7415
  %7417 = vrot.lane.b32.xlu0 %v5635, 88
  %v7418 = vpop.permute.xlu0 %7417
  %7419 = vrot.lane.b32.xlu0 %v5638, 88
  %v7420 = vpop.permute.xlu0 %7419
  %v7421 = vsel %vm916, %v7386, 0
  %v7423 = vsel %vm916, %v7388, 0
  %v7425 = vsel %vm916, %v7390, 0
  %v7427 = vsel %vm916, %v7392, 0
  %v7429 = vsel %vm916, %v7394, 0
  %v7431 = vsel %vm916, %v7396, 0
  %v7433 = vsel %vm916, %v7398, 0
  %v7435 = vsel %vm916, %v7400, 0
  %v7437 = vsel %vm916, %v7402, 0
  %v7439 = vsel %vm916, %v7404, 0
  %v7441 = vsel %vm916, %v7406, 0
  %v7443 = vsel %vm916, %v7408, 0
  %v7445 = vsel %vm916, %v7410, 0
  %v7447 = vsel %vm916, %v7412, 0
  %v7449 = vsel %vm916, %v7414, 0
  %v7451 = vsel %vm916, %v7416, 0
  %v7453 = vsel %vm916, %v7418, 0
  %v7455 = vsel %vm916, %v7420, 0
  %7457 = vmatpush.xpose.msra.mxu0 0.0
  %7458 = vmatpush.xpose.msra.mxu0 0.0
  %7459 = vmatpush.xpose.msra.mxu0 0.0
  %7460 = vmatpush.xpose.msra.mxu0 0.0
  %7461 = vmatpush.xpose.msra.mxu0 0.0
  %7462 = vmatpush.xpose.msra.mxu0 0.0
  %7463 = vmatpush.xpose.msra.mxu0 0.0
  %7464 = vmatpush.xpose.msra.mxu0 %v7455
  %7465 = vmatpush.xpose.msra.mxu0 %v7453
  %7466 = vmatpush.xpose.msra.mxu0 %v7451
  %7467 = vmatpush.xpose.msra.mxu0 %v7449
  %7468 = vmatpush.xpose.msra.mxu0 %v7447
  %7469 = vmatpush.xpose.msra.mxu0 %v7445
  %7470 = vmatpush.xpose.msra.mxu0 %v7443
  %7471 = vmatpush.xpose.msra.mxu0 %v7441
  %7472 = vmatpush.xpose.msra.mxu0 %v7439
  %7473 = vmatmul.f32.gmra.mxu0 %v7421
  %v7474 = vpop.f32.mrf.mxu0
  %v7475 = vadd.f32 0.0, %v7474
  %7476 = vmatmul.f32.gmra.mxu0 %v7423
  %v7477 = vpop.f32.mrf.mxu0
  %v7478 = vadd.f32 0.0, %v7477
  %7479 = vmatmul.f32.gmra.mxu0 %v7425
  %v7480 = vpop.f32.mrf.mxu0
  %v7481 = vadd.f32 0.0, %v7480
  %7482 = vmatmul.f32.gmra.mxu0 %v7427
  %v7483 = vpop.f32.mrf.mxu0
  %v7484 = vadd.f32 0.0, %v7483
  %7485 = vmatmul.f32.gmra.mxu0 %v7429
  %v7486 = vpop.f32.mrf.mxu0
  %v7487 = vadd.f32 0.0, %v7486
  %7488 = vmatmul.f32.gmra.mxu0 %v7431
  %v7489 = vpop.f32.mrf.mxu0
  %v7490 = vadd.f32 0.0, %v7489
  %7491 = vmatmul.f32.gmra.mxu0 %v7433
  %v7492 = vpop.f32.mrf.mxu0
  %v7493 = vadd.f32 0.0, %v7492
  %7494 = vmatmul.f32.gmra.mxu0 %v7435
  %v7495 = vpop.f32.mrf.mxu0
  %v7496 = vadd.f32 0.0, %v7495
  %7497 = vmatmul.f32.gmra.mxu0 %v7437
  %v7498 = vpop.f32.mrf.mxu0
  %v7499 = vadd.f32 0.0, %v7498
  %7500 = vdwg.mxu0
  %v7501 = vmul.f32 %v7475, 0.35355338
  %v7502 = vmul.f32 %v7478, 0.35355338
  %v7503 = vmul.f32 %v7481, 0.35355338
  %v7504 = vmul.f32 %v7484, 0.35355338
  %v7505 = vmul.f32 %v7487, 0.35355338
  %v7506 = vmul.f32 %v7490, 0.35355338
  %v7507 = vmul.f32 %v7493, 0.35355338
  %v7508 = vmul.f32 %v7496, 0.35355338
  %v7509 = vmul.f32 %v7499, 0.35355338
  %v7510 = vsel %vm1006, %v7501, -inf
  %7511 = vmax.xlane.f32.xlu0 %v7510
  %v7512 = vpop.xlane.xlu0 %7511
  %v7513 = vsel %vm1006, %v7502, -inf
  %7514 = vmax.xlane.f32.xlu0 %v7513
  %v7515 = vpop.xlane.xlu0 %7514
  %v7516 = vsel %vm1006, %v7503, -inf
  %7517 = vmax.xlane.f32.xlu0 %v7516
  %v7518 = vpop.xlane.xlu0 %7517
  %v7519 = vsel %vm1006, %v7504, -inf
  %7520 = vmax.xlane.f32.xlu0 %v7519
  %v7521 = vpop.xlane.xlu0 %7520
  %v7522 = vsel %vm1006, %v7505, -inf
  %7523 = vmax.xlane.f32.xlu0 %v7522
  %v7524 = vpop.xlane.xlu0 %7523
  %v7525 = vsel %vm1006, %v7506, -inf
  %7526 = vmax.xlane.f32.xlu0 %v7525
  %v7527 = vpop.xlane.xlu0 %7526
  %v7528 = vsel %vm1006, %v7507, -inf
  %7529 = vmax.xlane.f32.xlu0 %v7528
  %v7530 = vpop.xlane.xlu0 %7529
  %v7531 = vsel %vm1006, %v7508, -inf
  %7532 = vmax.xlane.f32.xlu0 %v7531
  %v7533 = vpop.xlane.xlu0 %7532
  %v7534 = vsel %vm1006, %v7509, -inf
  %7535 = vmax.xlane.f32.xlu0 %v7534
  %v7536 = vpop.xlane.xlu0 %7535
  %v7537 = vsub.f32 %v7501, %v7512
  %v7538 = vsub.f32 %v7502, %v7515
  %v7539 = vsub.f32 %v7503, %v7518
  %v7540 = vsub.f32 %v7504, %v7521
  %v7541 = vsub.f32 %v7505, %v7524
  %v7542 = vsub.f32 %v7506, %v7527
  %v7543 = vsub.f32 %v7507, %v7530
  %v7544 = vsub.f32 %v7508, %v7533
  %v7545 = vsub.f32 %v7509, %v7536
  %v7546 = vmul.f32 %v7537, 1.442695
  %v7547 = vpow.pop %v7546
  %v7548 = vmul.f32 %v7538, 1.442695
  %v7549 = vpow.pop %v7548
  %v7550 = vmul.f32 %v7539, 1.442695
  %v7551 = vpow.pop %v7550
  %v7552 = vmul.f32 %v7540, 1.442695
  %v7553 = vpow.pop %v7552
  %v7554 = vmul.f32 %v7541, 1.442695
  %v7555 = vpow.pop %v7554
  %v7556 = vmul.f32 %v7542, 1.442695
  %v7557 = vpow.pop %v7556
  %v7558 = vmul.f32 %v7543, 1.442695
  %v7559 = vpow.pop %v7558
  %v7560 = vmul.f32 %v7544, 1.442695
  %v7561 = vpow.pop %v7560
  %v7562 = vmul.f32 %v7545, 1.442695
  %v7563 = vpow.pop %v7562
  %v7564 = vsel %vm1006, %v7547, 0.0
  %7565 = vadd.xlane.f32.xlu0 %v7564
  %v7566 = vpop.xlane.xlu0 %7565
  %v7567 = vsel %vm1006, %v7549, 0.0
  %7568 = vadd.xlane.f32.xlu0 %v7567
  %v7569 = vpop.xlane.xlu0 %7568
  %v7570 = vsel %vm1006, %v7551, 0.0
  %7571 = vadd.xlane.f32.xlu0 %v7570
  %v7572 = vpop.xlane.xlu0 %7571
  %v7573 = vsel %vm1006, %v7553, 0.0
  %7574 = vadd.xlane.f32.xlu0 %v7573
  %v7575 = vpop.xlane.xlu0 %7574
  %v7576 = vsel %vm1006, %v7555, 0.0
  %7577 = vadd.xlane.f32.xlu0 %v7576
  %v7578 = vpop.xlane.xlu0 %7577
  %v7579 = vsel %vm1006, %v7557, 0.0
  %7580 = vadd.xlane.f32.xlu0 %v7579
  %v7581 = vpop.xlane.xlu0 %7580
  %v7582 = vsel %vm1006, %v7559, 0.0
  %7583 = vadd.xlane.f32.xlu0 %v7582
  %v7584 = vpop.xlane.xlu0 %7583
  %v7585 = vsel %vm1006, %v7561, 0.0
  %7586 = vadd.xlane.f32.xlu0 %v7585
  %v7587 = vpop.xlane.xlu0 %7586
  %v7588 = vsel %vm1006, %v7563, 0.0
  %7589 = vadd.xlane.f32.xlu0 %v7588
  %v7590 = vpop.xlane.xlu0 %7589
  %v7591 = vrcp.pop %v7566
  %v7592 = vrcp.pop %v7569
  %v7593 = vrcp.pop %v7572
  %v7594 = vrcp.pop %v7575
  %v7595 = vrcp.pop %v7578
  %v7596 = vrcp.pop %v7581
  %v7597 = vrcp.pop %v7584
  %v7598 = vrcp.pop %v7587
  %v7599 = vrcp.pop %v7590
  %v7600 = vmul.f32 %v7547, %v7591
  %v7601 = vmul.f32 %v7549, %v7592
  %v7602 = vmul.f32 %v7551, %v7593
  %v7603 = vmul.f32 %v7553, %v7594
  %v7604 = vmul.f32 %v7555, %v7595
  %v7605 = vmul.f32 %v7557, %v7596
  %v7606 = vmul.f32 %v7559, %v7597
  %v7607 = vmul.f32 %v7561, %v7598
  %v7608 = vmul.f32 %v7563, %v7599
  %7609 = vrot.lane.b32.xlu0 %v5614, 56
  %v7610 = vpop.permute.xlu0 %7609
  %7611 = vrot.lane.b32.xlu0 %v5617, 56
  %v7612 = vpop.permute.xlu0 %7611
  %7613 = vrot.lane.b32.xlu0 %v5620, 56
  %v7614 = vpop.permute.xlu0 %7613
  %7615 = vrot.lane.b32.xlu0 %v5623, 56
  %v7616 = vpop.permute.xlu0 %7615
  %7617 = vrot.lane.b32.xlu0 %v5626, 56
  %v7618 = vpop.permute.xlu0 %7617
  %7619 = vrot.lane.b32.xlu0 %v5629, 56
  %v7620 = vpop.permute.xlu0 %7619
  %7621 = vrot.lane.b32.xlu0 %v5632, 56
  %v7622 = vpop.permute.xlu0 %7621
  %7623 = vrot.lane.b32.xlu0 %v5635, 56
  %v7624 = vpop.permute.xlu0 %7623
  %7625 = vrot.lane.b32.xlu0 %v5638, 56
  %v7626 = vpop.permute.xlu0 %7625
  %v7637 = vsel %vm1006, %v7600, 0
  %v7640 = vsel %vm1006, %v7601, 0
  %v7643 = vsel %vm1006, %v7602, 0
  %v7646 = vsel %vm1006, %v7603, 0
  %v7649 = vsel %vm1006, %v7604, 0
  %v7652 = vsel %vm1006, %v7605, 0
  %v7655 = vsel %vm1006, %v7606, 0
  %v7658 = vsel %vm1006, %v7607, 0
  %v7661 = vsel %vm1006, %v7608, 0
  %7663 = vmatpush.msra.mxu0 0.0
  %7664 = vmatpush.msra.mxu0 0.0
  %7665 = vmatpush.msra.mxu0 0.0
  %7666 = vmatpush.msra.mxu0 0.0
  %7667 = vmatpush.msra.mxu0 0.0
  %7668 = vmatpush.msra.mxu0 0.0
  %7669 = vmatpush.msra.mxu0 0.0
  %7670 = vmatpush.msra.mxu0 %v7626
  %7671 = vmatpush.msra.mxu0 %v7624
  %7672 = vmatpush.msra.mxu0 %v7622
  %7673 = vmatpush.msra.mxu0 %v7620
  %7674 = vmatpush.msra.mxu0 %v7618
  %7675 = vmatpush.msra.mxu0 %v7616
  %7676 = vmatpush.msra.mxu0 %v7614
  %7677 = vmatpush.msra.mxu0 %v7612
  %7678 = vmatpush.msra.mxu0 %v7610
  %7679 = vmatmul.f32.gmra.mxu0 %v7637
  %v7680 = vpop.f32.mrf.mxu0
  %v7681 = vadd.f32 0.0, %v7680
  %7682 = vmatmul.f32.gmra.mxu0 %v7640
  %v7683 = vpop.f32.mrf.mxu0
  %v7684 = vadd.f32 0.0, %v7683
  %7685 = vmatmul.f32.gmra.mxu0 %v7643
  %v7686 = vpop.f32.mrf.mxu0
  %v7687 = vadd.f32 0.0, %v7686
  %7688 = vmatmul.f32.gmra.mxu0 %v7646
  %v7689 = vpop.f32.mrf.mxu0
  %v7690 = vadd.f32 0.0, %v7689
  %7691 = vmatmul.f32.gmra.mxu0 %v7649
  %v7692 = vpop.f32.mrf.mxu0
  %v7693 = vadd.f32 0.0, %v7692
  %7694 = vmatmul.f32.gmra.mxu0 %v7652
  %v7695 = vpop.f32.mrf.mxu0
  %v7696 = vadd.f32 0.0, %v7695
  %7697 = vmatmul.f32.gmra.mxu0 %v7655
  %v7698 = vpop.f32.mrf.mxu0
  %v7699 = vadd.f32 0.0, %v7698
  %7700 = vmatmul.f32.gmra.mxu0 %v7658
  %v7701 = vpop.f32.mrf.mxu0
  %v7702 = vadd.f32 0.0, %v7701
  %7703 = vmatmul.f32.gmra.mxu0 %v7661
  %v7704 = vpop.f32.mrf.mxu0
  %v7705 = vadd.f32 0.0, %v7704
  %7706 = vdwg.mxu0
  %7716 = vrot.lane.b32.xlu0 %v7681, 8
  %v7717 = vpop.permute.xlu0 %7716
  %7718 = vrot.lane.b32.xlu0 %v7684, 8
  %v7719 = vpop.permute.xlu0 %7718
  %7720 = vrot.lane.b32.xlu0 %v7687, 8
  %v7721 = vpop.permute.xlu0 %7720
  %7722 = vrot.lane.b32.xlu0 %v7690, 8
  %v7723 = vpop.permute.xlu0 %7722
  %7724 = vrot.lane.b32.xlu0 %v7693, 8
  %v7725 = vpop.permute.xlu0 %7724
  %7726 = vrot.lane.b32.xlu0 %v7696, 8
  %v7727 = vpop.permute.xlu0 %7726
  %7728 = vrot.lane.b32.xlu0 %v7699, 8
  %v7729 = vpop.permute.xlu0 %7728
  %7730 = vrot.lane.b32.xlu0 %v7702, 8
  %v7731 = vpop.permute.xlu0 %7730
  %7732 = vrot.lane.b32.xlu0 %v7705, 8
  %v7733 = vpop.permute.xlu0 %7732
  %7743 = vst.msk [vmem:[#allocation3 + $0x48] sm:$0xff] %vm1571, %v7717
  %7744 = vst.msk [vmem:[#allocation3 + $0x50] sm:$0xff] %vm1571, %v7719
  %7745 = vst.msk [vmem:[#allocation3 + $0x58] sm:$0xff] %vm1571, %v7721
  %7746 = vst.msk [vmem:[#allocation3 + $0x60] sm:$0xff] %vm1571, %v7723
  %7747 = vst.msk [vmem:[#allocation3 + $0x68] sm:$0xff] %vm1571, %v7725
  %7748 = vst.msk [vmem:[#allocation3 + $0x70] sm:$0xff] %vm1571, %v7727
  %7749 = vst.msk [vmem:[#allocation3 + $0x78] sm:$0xff] %vm1571, %v7729
  %7750 = vst.msk [vmem:[#allocation3 + $0x80] sm:$0xff] %vm1571, %v7731
  %7751 = vst.msk [vmem:[#allocation3 + $0x88] sm:$0xff] %vm1571, %v7733
  %7752 = vrot.lane.b32.xlu0 %v5614, 112
  %v7753 = vpop.permute.xlu0 %7752
  %7754 = vrot.lane.b32.xlu0 %v5617, 112
  %v7755 = vpop.permute.xlu0 %7754
  %7756 = vrot.lane.b32.xlu0 %v5620, 112
  %v7757 = vpop.permute.xlu0 %7756
  %7758 = vrot.lane.b32.xlu0 %v5623, 112
  %v7759 = vpop.permute.xlu0 %7758
  %7760 = vrot.lane.b32.xlu0 %v5626, 112
  %v7761 = vpop.permute.xlu0 %7760
  %7762 = vrot.lane.b32.xlu0 %v5629, 112
  %v7763 = vpop.permute.xlu0 %7762
  %7764 = vrot.lane.b32.xlu0 %v5632, 112
  %v7765 = vpop.permute.xlu0 %7764
  %7766 = vrot.lane.b32.xlu0 %v5635, 112
  %v7767 = vpop.permute.xlu0 %7766
  %7768 = vrot.lane.b32.xlu0 %v5638, 112
  %v7769 = vpop.permute.xlu0 %7768
  %7770 = vrot.lane.b32.xlu0 %v5614, 80
  %v7771 = vpop.permute.xlu0 %7770
  %7772 = vrot.lane.b32.xlu0 %v5617, 80
  %v7773 = vpop.permute.xlu0 %7772
  %7774 = vrot.lane.b32.xlu0 %v5620, 80
  %v7775 = vpop.permute.xlu0 %7774
  %7776 = vrot.lane.b32.xlu0 %v5623, 80
  %v7777 = vpop.permute.xlu0 %7776
  %7778 = vrot.lane.b32.xlu0 %v5626, 80
  %v7779 = vpop.permute.xlu0 %7778
  %7780 = vrot.lane.b32.xlu0 %v5629, 80
  %v7781 = vpop.permute.xlu0 %7780
  %7782 = vrot.lane.b32.xlu0 %v5632, 80
  %v7783 = vpop.permute.xlu0 %7782
  %7784 = vrot.lane.b32.xlu0 %v5635, 80
  %v7785 = vpop.permute.xlu0 %7784
  %7786 = vrot.lane.b32.xlu0 %v5638, 80
  %v7787 = vpop.permute.xlu0 %7786
  %v7788 = vsel %vm916, %v7753, 0
  %v7790 = vsel %vm916, %v7755, 0
  %v7792 = vsel %vm916, %v7757, 0
  %v7794 = vsel %vm916, %v7759, 0
  %v7796 = vsel %vm916, %v7761, 0
  %v7798 = vsel %vm916, %v7763, 0
  %v7800 = vsel %vm916, %v7765, 0
  %v7802 = vsel %vm916, %v7767, 0
  %v7804 = vsel %vm916, %v7769, 0
  %v7806 = vsel %vm916, %v7771, 0
  %v7808 = vsel %vm916, %v7773, 0
  %v7810 = vsel %vm916, %v7775, 0
  %v7812 = vsel %vm916, %v7777, 0
  %v7814 = vsel %vm916, %v7779, 0
  %v7816 = vsel %vm916, %v7781, 0
  %v7818 = vsel %vm916, %v7783, 0
  %v7820 = vsel %vm916, %v7785, 0
  %v7822 = vsel %vm916, %v7787, 0
  %7824 = vmatpush.xpose.msra.mxu0 0.0
  %7825 = vmatpush.xpose.msra.mxu0 0.0
  %7826 = vmatpush.xpose.msra.mxu0 0.0
  %7827 = vmatpush.xpose.msra.mxu0 0.0
  %7828 = vmatpush.xpose.msra.mxu0 0.0
  %7829 = vmatpush.xpose.msra.mxu0 0.0
  %7830 = vmatpush.xpose.msra.mxu0 0.0
  %7831 = vmatpush.xpose.msra.mxu0 %v7822
  %7832 = vmatpush.xpose.msra.mxu0 %v7820
  %7833 = vmatpush.xpose.msra.mxu0 %v7818
  %7834 = vmatpush.xpose.msra.mxu0 %v7816
  %7835 = vmatpush.xpose.msra.mxu0 %v7814
  %7836 = vmatpush.xpose.msra.mxu0 %v7812
  %7837 = vmatpush.xpose.msra.mxu0 %v7810
  %7838 = vmatpush.xpose.msra.mxu0 %v7808
  %7839 = vmatpush.xpose.msra.mxu0 %v7806
  %7840 = vmatmul.f32.gmra.mxu0 %v7788
  %v7841 = vpop.f32.mrf.mxu0
  %v7842 = vadd.f32 0.0, %v7841
  %7843 = vmatmul.f32.gmra.mxu0 %v7790
  %v7844 = vpop.f32.mrf.mxu0
  %v7845 = vadd.f32 0.0, %v7844
  %7846 = vmatmul.f32.gmra.mxu0 %v7792
  %v7847 = vpop.f32.mrf.mxu0
  %v7848 = vadd.f32 0.0, %v7847
  %7849 = vmatmul.f32.gmra.mxu0 %v7794
  %v7850 = vpop.f32.mrf.mxu0
  %v7851 = vadd.f32 0.0, %v7850
  %7852 = vmatmul.f32.gmra.mxu0 %v7796
  %v7853 = vpop.f32.mrf.mxu0
  %v7854 = vadd.f32 0.0, %v7853
  %7855 = vmatmul.f32.gmra.mxu0 %v7798
  %v7856 = vpop.f32.mrf.mxu0
  %v7857 = vadd.f32 0.0, %v7856
  %7858 = vmatmul.f32.gmra.mxu0 %v7800
  %v7859 = vpop.f32.mrf.mxu0
  %v7860 = vadd.f32 0.0, %v7859
  %7861 = vmatmul.f32.gmra.mxu0 %v7802
  %v7862 = vpop.f32.mrf.mxu0
  %v7863 = vadd.f32 0.0, %v7862
  %7864 = vmatmul.f32.gmra.mxu0 %v7804
  %v7865 = vpop.f32.mrf.mxu0
  %v7866 = vadd.f32 0.0, %v7865
  %7867 = vdwg.mxu0
  %v7868 = vmul.f32 %v7842, 0.35355338
  %v7869 = vmul.f32 %v7845, 0.35355338
  %v7870 = vmul.f32 %v7848, 0.35355338
  %v7871 = vmul.f32 %v7851, 0.35355338
  %v7872 = vmul.f32 %v7854, 0.35355338
  %v7873 = vmul.f32 %v7857, 0.35355338
  %v7874 = vmul.f32 %v7860, 0.35355338
  %v7875 = vmul.f32 %v7863, 0.35355338
  %v7876 = vmul.f32 %v7866, 0.35355338
  %v7877 = vsel %vm1006, %v7868, -inf
  %7878 = vmax.xlane.f32.xlu0 %v7877
  %v7879 = vpop.xlane.xlu0 %7878
  %v7880 = vsel %vm1006, %v7869, -inf
  %7881 = vmax.xlane.f32.xlu0 %v7880
  %v7882 = vpop.xlane.xlu0 %7881
  %v7883 = vsel %vm1006, %v7870, -inf
  %7884 = vmax.xlane.f32.xlu0 %v7883
  %v7885 = vpop.xlane.xlu0 %7884
  %v7886 = vsel %vm1006, %v7871, -inf
  %7887 = vmax.xlane.f32.xlu0 %v7886
  %v7888 = vpop.xlane.xlu0 %7887
  %v7889 = vsel %vm1006, %v7872, -inf
  %7890 = vmax.xlane.f32.xlu0 %v7889
  %v7891 = vpop.xlane.xlu0 %7890
  %v7892 = vsel %vm1006, %v7873, -inf
  %7893 = vmax.xlane.f32.xlu0 %v7892
  %v7894 = vpop.xlane.xlu0 %7893
  %v7895 = vsel %vm1006, %v7874, -inf
  %7896 = vmax.xlane.f32.xlu0 %v7895
  %v7897 = vpop.xlane.xlu0 %7896
  %v7898 = vsel %vm1006, %v7875, -inf
  %7899 = vmax.xlane.f32.xlu0 %v7898
  %v7900 = vpop.xlane.xlu0 %7899
  %v7901 = vsel %vm1006, %v7876, -inf
  %7902 = vmax.xlane.f32.xlu0 %v7901
  %v7903 = vpop.xlane.xlu0 %7902
  %v7904 = vsub.f32 %v7868, %v7879
  %v7905 = vsub.f32 %v7869, %v7882
  %v7906 = vsub.f32 %v7870, %v7885
  %v7907 = vsub.f32 %v7871, %v7888
  %v7908 = vsub.f32 %v7872, %v7891
  %v7909 = vsub.f32 %v7873, %v7894
  %v7910 = vsub.f32 %v7874, %v7897
  %v7911 = vsub.f32 %v7875, %v7900
  %v7912 = vsub.f32 %v7876, %v7903
  %v7913 = vmul.f32 %v7904, 1.442695
  %v7914 = vpow.pop %v7913
  %v7915 = vmul.f32 %v7905, 1.442695
  %v7916 = vpow.pop %v7915
  %v7917 = vmul.f32 %v7906, 1.442695
  %v7918 = vpow.pop %v7917
  %v7919 = vmul.f32 %v7907, 1.442695
  %v7920 = vpow.pop %v7919
  %v7921 = vmul.f32 %v7908, 1.442695
  %v7922 = vpow.pop %v7921
  %v7923 = vmul.f32 %v7909, 1.442695
  %v7924 = vpow.pop %v7923
  %v7925 = vmul.f32 %v7910, 1.442695
  %v7926 = vpow.pop %v7925
  %v7927 = vmul.f32 %v7911, 1.442695
  %v7928 = vpow.pop %v7927
  %v7929 = vmul.f32 %v7912, 1.442695
  %v7930 = vpow.pop %v7929
  %v7931 = vsel %vm1006, %v7914, 0.0
  %7932 = vadd.xlane.f32.xlu0 %v7931
  %v7933 = vpop.xlane.xlu0 %7932
  %v7934 = vsel %vm1006, %v7916, 0.0
  %7935 = vadd.xlane.f32.xlu0 %v7934
  %v7936 = vpop.xlane.xlu0 %7935
  %v7937 = vsel %vm1006, %v7918, 0.0
  %7938 = vadd.xlane.f32.xlu0 %v7937
  %v7939 = vpop.xlane.xlu0 %7938
  %v7940 = vsel %vm1006, %v7920, 0.0
  %7941 = vadd.xlane.f32.xlu0 %v7940
  %v7942 = vpop.xlane.xlu0 %7941
  %v7943 = vsel %vm1006, %v7922, 0.0
  %7944 = vadd.xlane.f32.xlu0 %v7943
  %v7945 = vpop.xlane.xlu0 %7944
  %v7946 = vsel %vm1006, %v7924, 0.0
  %7947 = vadd.xlane.f32.xlu0 %v7946
  %v7948 = vpop.xlane.xlu0 %7947
  %v7949 = vsel %vm1006, %v7926, 0.0
  %7950 = vadd.xlane.f32.xlu0 %v7949
  %v7951 = vpop.xlane.xlu0 %7950
  %v7952 = vsel %vm1006, %v7928, 0.0
  %7953 = vadd.xlane.f32.xlu0 %v7952
  %v7954 = vpop.xlane.xlu0 %7953
  %v7955 = vsel %vm1006, %v7930, 0.0
  %7956 = vadd.xlane.f32.xlu0 %v7955
  %v7957 = vpop.xlane.xlu0 %7956
  %v7958 = vrcp.pop %v7933
  %v7959 = vrcp.pop %v7936
  %v7960 = vrcp.pop %v7939
  %v7961 = vrcp.pop %v7942
  %v7962 = vrcp.pop %v7945
  %v7963 = vrcp.pop %v7948
  %v7964 = vrcp.pop %v7951
  %v7965 = vrcp.pop %v7954
  %v7966 = vrcp.pop %v7957
  %v7967 = vmul.f32 %v7914, %v7958
  %v7968 = vmul.f32 %v7916, %v7959
  %v7969 = vmul.f32 %v7918, %v7960
  %v7970 = vmul.f32 %v7920, %v7961
  %v7971 = vmul.f32 %v7922, %v7962
  %v7972 = vmul.f32 %v7924, %v7963
  %v7973 = vmul.f32 %v7926, %v7964
  %v7974 = vmul.f32 %v7928, %v7965
  %v7975 = vmul.f32 %v7930, %v7966
  %7976 = vrot.lane.b32.xlu0 %v5614, 48
  %v7977 = vpop.permute.xlu0 %7976
  %7978 = vrot.lane.b32.xlu0 %v5617, 48
  %v7979 = vpop.permute.xlu0 %7978
  %7980 = vrot.lane.b32.xlu0 %v5620, 48
  %v7981 = vpop.permute.xlu0 %7980
  %7982 = vrot.lane.b32.xlu0 %v5623, 48
  %v7983 = vpop.permute.xlu0 %7982
  %7984 = vrot.lane.b32.xlu0 %v5626, 48
  %v7985 = vpop.permute.xlu0 %7984
  %7986 = vrot.lane.b32.xlu0 %v5629, 48
  %v7987 = vpop.permute.xlu0 %7986
  %7988 = vrot.lane.b32.xlu0 %v5632, 48
  %v7989 = vpop.permute.xlu0 %7988
  %7990 = vrot.lane.b32.xlu0 %v5635, 48
  %v7991 = vpop.permute.xlu0 %7990
  %7992 = vrot.lane.b32.xlu0 %v5638, 48
  %v7993 = vpop.permute.xlu0 %7992
  %v8004 = vsel %vm1006, %v7967, 0
  %v8007 = vsel %vm1006, %v7968, 0
  %v8010 = vsel %vm1006, %v7969, 0
  %v8013 = vsel %vm1006, %v7970, 0
  %v8016 = vsel %vm1006, %v7971, 0
  %v8019 = vsel %vm1006, %v7972, 0
  %v8022 = vsel %vm1006, %v7973, 0
  %v8025 = vsel %vm1006, %v7974, 0
  %v8028 = vsel %vm1006, %v7975, 0
  %8030 = vmatpush.msra.mxu0 0.0
  %8031 = vmatpush.msra.mxu0 0.0
  %8032 = vmatpush.msra.mxu0 0.0
  %8033 = vmatpush.msra.mxu0 0.0
  %8034 = vmatpush.msra.mxu0 0.0
  %8035 = vmatpush.msra.mxu0 0.0
  %8036 = vmatpush.msra.mxu0 0.0
  %8037 = vmatpush.msra.mxu0 %v7993
  %8038 = vmatpush.msra.mxu0 %v7991
  %8039 = vmatpush.msra.mxu0 %v7989
  %8040 = vmatpush.msra.mxu0 %v7987
  %8041 = vmatpush.msra.mxu0 %v7985
  %8042 = vmatpush.msra.mxu0 %v7983
  %8043 = vmatpush.msra.mxu0 %v7981
  %8044 = vmatpush.msra.mxu0 %v7979
  %8045 = vmatpush.msra.mxu0 %v7977
  %8046 = vmatmul.f32.gmra.mxu0 %v8004
  %v8047 = vpop.f32.mrf.mxu0
  %v8048 = vadd.f32 0.0, %v8047
  %8049 = vmatmul.f32.gmra.mxu0 %v8007
  %v8050 = vpop.f32.mrf.mxu0
  %v8051 = vadd.f32 0.0, %v8050
  %8052 = vmatmul.f32.gmra.mxu0 %v8010
  %v8053 = vpop.f32.mrf.mxu0
  %v8054 = vadd.f32 0.0, %v8053
  %8055 = vmatmul.f32.gmra.mxu0 %v8013
  %v8056 = vpop.f32.mrf.mxu0
  %v8057 = vadd.f32 0.0, %v8056
  %8058 = vmatmul.f32.gmra.mxu0 %v8016
  %v8059 = vpop.f32.mrf.mxu0
  %v8060 = vadd.f32 0.0, %v8059
  %8061 = vmatmul.f32.gmra.mxu0 %v8019
  %v8062 = vpop.f32.mrf.mxu0
  %v8063 = vadd.f32 0.0, %v8062
  %8064 = vmatmul.f32.gmra.mxu0 %v8022
  %v8065 = vpop.f32.mrf.mxu0
  %v8066 = vadd.f32 0.0, %v8065
  %8067 = vmatmul.f32.gmra.mxu0 %v8025
  %v8068 = vpop.f32.mrf.mxu0
  %v8069 = vadd.f32 0.0, %v8068
  %8070 = vmatmul.f32.gmra.mxu0 %v8028
  %v8071 = vpop.f32.mrf.mxu0
  %v8072 = vadd.f32 0.0, %v8071
  %8073 = vdwg.mxu0
  %8083 = vrot.lane.b32.xlu0 %v8048, 16
  %v8084 = vpop.permute.xlu0 %8083
  %8085 = vrot.lane.b32.xlu0 %v8051, 16
  %v8086 = vpop.permute.xlu0 %8085
  %8087 = vrot.lane.b32.xlu0 %v8054, 16
  %v8088 = vpop.permute.xlu0 %8087
  %8089 = vrot.lane.b32.xlu0 %v8057, 16
  %v8090 = vpop.permute.xlu0 %8089
  %8091 = vrot.lane.b32.xlu0 %v8060, 16
  %v8092 = vpop.permute.xlu0 %8091
  %8093 = vrot.lane.b32.xlu0 %v8063, 16
  %v8094 = vpop.permute.xlu0 %8093
  %8095 = vrot.lane.b32.xlu0 %v8066, 16
  %v8096 = vpop.permute.xlu0 %8095
  %8097 = vrot.lane.b32.xlu0 %v8069, 16
  %v8098 = vpop.permute.xlu0 %8097
  %8099 = vrot.lane.b32.xlu0 %v8072, 16
  %v8100 = vpop.permute.xlu0 %8099
  %8110 = vst.msk [vmem:[#allocation3 + $0x48] sm:$0xff] %vm1939, %v8084
  %8111 = vst.msk [vmem:[#allocation3 + $0x50] sm:$0xff] %vm1939, %v8086
  %8112 = vst.msk [vmem:[#allocation3 + $0x58] sm:$0xff] %vm1939, %v8088
  %8113 = vst.msk [vmem:[#allocation3 + $0x60] sm:$0xff] %vm1939, %v8090
  %8114 = vst.msk [vmem:[#allocation3 + $0x68] sm:$0xff] %vm1939, %v8092
  %8115 = vst.msk [vmem:[#allocation3 + $0x70] sm:$0xff] %vm1939, %v8094
  %8116 = vst.msk [vmem:[#allocation3 + $0x78] sm:$0xff] %vm1939, %v8096
  %8117 = vst.msk [vmem:[#allocation3 + $0x80] sm:$0xff] %vm1939, %v8098
  %8118 = vst.msk [vmem:[#allocation3 + $0x88] sm:$0xff] %vm1939, %v8100
  %8119 = vrot.lane.b32.xlu0 %v5614, 104
  %v8120 = vpop.permute.xlu0 %8119
  %8121 = vrot.lane.b32.xlu0 %v5617, 104
  %v8122 = vpop.permute.xlu0 %8121
  %8123 = vrot.lane.b32.xlu0 %v5620, 104
  %v8124 = vpop.permute.xlu0 %8123
  %8125 = vrot.lane.b32.xlu0 %v5623, 104
  %v8126 = vpop.permute.xlu0 %8125
  %8127 = vrot.lane.b32.xlu0 %v5626, 104
  %v8128 = vpop.permute.xlu0 %8127
  %8129 = vrot.lane.b32.xlu0 %v5629, 104
  %v8130 = vpop.permute.xlu0 %8129
  %8131 = vrot.lane.b32.xlu0 %v5632, 104
  %v8132 = vpop.permute.xlu0 %8131
  %8133 = vrot.lane.b32.xlu0 %v5635, 104
  %v8134 = vpop.permute.xlu0 %8133
  %8135 = vrot.lane.b32.xlu0 %v5638, 104
  %v8136 = vpop.permute.xlu0 %8135
  %8137 = vrot.lane.b32.xlu0 %v5614, 72
  %v8138 = vpop.permute.xlu0 %8137
  %8139 = vrot.lane.b32.xlu0 %v5617, 72
  %v8140 = vpop.permute.xlu0 %8139
  %8141 = vrot.lane.b32.xlu0 %v5620, 72
  %v8142 = vpop.permute.xlu0 %8141
  %8143 = vrot.lane.b32.xlu0 %v5623, 72
  %v8144 = vpop.permute.xlu0 %8143
  %8145 = vrot.lane.b32.xlu0 %v5626, 72
  %v8146 = vpop.permute.xlu0 %8145
  %8147 = vrot.lane.b32.xlu0 %v5629, 72
  %v8148 = vpop.permute.xlu0 %8147
  %8149 = vrot.lane.b32.xlu0 %v5632, 72
  %v8150 = vpop.permute.xlu0 %8149
  %8151 = vrot.lane.b32.xlu0 %v5635, 72
  %v8152 = vpop.permute.xlu0 %8151
  %8153 = vrot.lane.b32.xlu0 %v5638, 72
  %v8154 = vpop.permute.xlu0 %8153
  %v8155 = vsel %vm916, %v8120, 0
  %v8157 = vsel %vm916, %v8122, 0
  %v8159 = vsel %vm916, %v8124, 0
  %v8161 = vsel %vm916, %v8126, 0
  %v8163 = vsel %vm916, %v8128, 0
  %v8165 = vsel %vm916, %v8130, 0
  %v8167 = vsel %vm916, %v8132, 0
  %v8169 = vsel %vm916, %v8134, 0
  %v8171 = vsel %vm916, %v8136, 0
  %v8173 = vsel %vm916, %v8138, 0
  %v8175 = vsel %vm916, %v8140, 0
  %v8177 = vsel %vm916, %v8142, 0
  %v8179 = vsel %vm916, %v8144, 0
  %v8181 = vsel %vm916, %v8146, 0
  %v8183 = vsel %vm916, %v8148, 0
  %v8185 = vsel %vm916, %v8150, 0
  %v8187 = vsel %vm916, %v8152, 0
  %v8189 = vsel %vm916, %v8154, 0
  %8191 = vmatpush.xpose.msra.mxu0 0.0
  %8192 = vmatpush.xpose.msra.mxu0 0.0
  %8193 = vmatpush.xpose.msra.mxu0 0.0
  %8194 = vmatpush.xpose.msra.mxu0 0.0
  %8195 = vmatpush.xpose.msra.mxu0 0.0
  %8196 = vmatpush.xpose.msra.mxu0 0.0
  %8197 = vmatpush.xpose.msra.mxu0 0.0
  %8198 = vmatpush.xpose.msra.mxu0 %v8189
  %8199 = vmatpush.xpose.msra.mxu0 %v8187
  %8200 = vmatpush.xpose.msra.mxu0 %v8185
  %8201 = vmatpush.xpose.msra.mxu0 %v8183
  %8202 = vmatpush.xpose.msra.mxu0 %v8181
  %8203 = vmatpush.xpose.msra.mxu0 %v8179
  %8204 = vmatpush.xpose.msra.mxu0 %v8177
  %8205 = vmatpush.xpose.msra.mxu0 %v8175
  %8206 = vmatpush.xpose.msra.mxu0 %v8173
  %8207 = vmatmul.f32.gmra.mxu0 %v8155
  %v8208 = vpop.f32.mrf.mxu0
  %v8209 = vadd.f32 0.0, %v8208
  %8210 = vmatmul.f32.gmra.mxu0 %v8157
  %v8211 = vpop.f32.mrf.mxu0
  %v8212 = vadd.f32 0.0, %v8211
  %8213 = vmatmul.f32.gmra.mxu0 %v8159
  %v8214 = vpop.f32.mrf.mxu0
  %v8215 = vadd.f32 0.0, %v8214
  %8216 = vmatmul.f32.gmra.mxu0 %v8161
  %v8217 = vpop.f32.mrf.mxu0
  %v8218 = vadd.f32 0.0, %v8217
  %8219 = vmatmul.f32.gmra.mxu0 %v8163
  %v8220 = vpop.f32.mrf.mxu0
  %v8221 = vadd.f32 0.0, %v8220
  %8222 = vmatmul.f32.gmra.mxu0 %v8165
  %v8223 = vpop.f32.mrf.mxu0
  %v8224 = vadd.f32 0.0, %v8223
  %8225 = vmatmul.f32.gmra.mxu0 %v8167
  %v8226 = vpop.f32.mrf.mxu0
  %v8227 = vadd.f32 0.0, %v8226
  %8228 = vmatmul.f32.gmra.mxu0 %v8169
  %v8229 = vpop.f32.mrf.mxu0
  %v8230 = vadd.f32 0.0, %v8229
  %8231 = vmatmul.f32.gmra.mxu0 %v8171
  %v8232 = vpop.f32.mrf.mxu0
  %v8233 = vadd.f32 0.0, %v8232
  %8234 = vdwg.mxu0
  %v8235 = vmul.f32 %v8209, 0.35355338
  %v8236 = vmul.f32 %v8212, 0.35355338
  %v8237 = vmul.f32 %v8215, 0.35355338
  %v8238 = vmul.f32 %v8218, 0.35355338
  %v8239 = vmul.f32 %v8221, 0.35355338
  %v8240 = vmul.f32 %v8224, 0.35355338
  %v8241 = vmul.f32 %v8227, 0.35355338
  %v8242 = vmul.f32 %v8230, 0.35355338
  %v8243 = vmul.f32 %v8233, 0.35355338
  %v8244 = vsel %vm1006, %v8235, -inf
  %8245 = vmax.xlane.f32.xlu0 %v8244
  %v8246 = vpop.xlane.xlu0 %8245
  %v8247 = vsel %vm1006, %v8236, -inf
  %8248 = vmax.xlane.f32.xlu0 %v8247
  %v8249 = vpop.xlane.xlu0 %8248
  %v8250 = vsel %vm1006, %v8237, -inf
  %8251 = vmax.xlane.f32.xlu0 %v8250
  %v8252 = vpop.xlane.xlu0 %8251
  %v8253 = vsel %vm1006, %v8238, -inf
  %8254 = vmax.xlane.f32.xlu0 %v8253
  %v8255 = vpop.xlane.xlu0 %8254
  %v8256 = vsel %vm1006, %v8239, -inf
  %8257 = vmax.xlane.f32.xlu0 %v8256
  %v8258 = vpop.xlane.xlu0 %8257
  %v8259 = vsel %vm1006, %v8240, -inf
  %8260 = vmax.xlane.f32.xlu0 %v8259
  %v8261 = vpop.xlane.xlu0 %8260
  %v8262 = vsel %vm1006, %v8241, -inf
  %8263 = vmax.xlane.f32.xlu0 %v8262
  %v8264 = vpop.xlane.xlu0 %8263
  %v8265 = vsel %vm1006, %v8242, -inf
  %8266 = vmax.xlane.f32.xlu0 %v8265
  %v8267 = vpop.xlane.xlu0 %8266
  %v8268 = vsel %vm1006, %v8243, -inf
  %8269 = vmax.xlane.f32.xlu0 %v8268
  %v8270 = vpop.xlane.xlu0 %8269
  %v8271 = vsub.f32 %v8235, %v8246
  %v8272 = vsub.f32 %v8236, %v8249
  %v8273 = vsub.f32 %v8237, %v8252
  %v8274 = vsub.f32 %v8238, %v8255
  %v8275 = vsub.f32 %v8239, %v8258
  %v8276 = vsub.f32 %v8240, %v8261
  %v8277 = vsub.f32 %v8241, %v8264
  %v8278 = vsub.f32 %v8242, %v8267
  %v8279 = vsub.f32 %v8243, %v8270
  %v8280 = vmul.f32 %v8271, 1.442695
  %v8281 = vpow.pop %v8280
  %v8282 = vmul.f32 %v8272, 1.442695
  %v8283 = vpow.pop %v8282
  %v8284 = vmul.f32 %v8273, 1.442695
  %v8285 = vpow.pop %v8284
  %v8286 = vmul.f32 %v8274, 1.442695
  %v8287 = vpow.pop %v8286
  %v8288 = vmul.f32 %v8275, 1.442695
  %v8289 = vpow.pop %v8288
  %v8290 = vmul.f32 %v8276, 1.442695
  %v8291 = vpow.pop %v8290
  %v8292 = vmul.f32 %v8277, 1.442695
  %v8293 = vpow.pop %v8292
  %v8294 = vmul.f32 %v8278, 1.442695
  %v8295 = vpow.pop %v8294
  %v8296 = vmul.f32 %v8279, 1.442695
  %v8297 = vpow.pop %v8296
  %v8298 = vsel %vm1006, %v8281, 0.0
  %8299 = vadd.xlane.f32.xlu0 %v8298
  %v8300 = vpop.xlane.xlu0 %8299
  %v8301 = vsel %vm1006, %v8283, 0.0
  %8302 = vadd.xlane.f32.xlu0 %v8301
  %v8303 = vpop.xlane.xlu0 %8302
  %v8304 = vsel %vm1006, %v8285, 0.0
  %8305 = vadd.xlane.f32.xlu0 %v8304
  %v8306 = vpop.xlane.xlu0 %8305
  %v8307 = vsel %vm1006, %v8287, 0.0
  %8308 = vadd.xlane.f32.xlu0 %v8307
  %v8309 = vpop.xlane.xlu0 %8308
  %v8310 = vsel %vm1006, %v8289, 0.0
  %8311 = vadd.xlane.f32.xlu0 %v8310
  %v8312 = vpop.xlane.xlu0 %8311
  %v8313 = vsel %vm1006, %v8291, 0.0
  %8314 = vadd.xlane.f32.xlu0 %v8313
  %v8315 = vpop.xlane.xlu0 %8314
  %v8316 = vsel %vm1006, %v8293, 0.0
  %8317 = vadd.xlane.f32.xlu0 %v8316
  %v8318 = vpop.xlane.xlu0 %8317
  %v8319 = vsel %vm1006, %v8295, 0.0
  %8320 = vadd.xlane.f32.xlu0 %v8319
  %v8321 = vpop.xlane.xlu0 %8320
  %v8322 = vsel %vm1006, %v8297, 0.0
  %8323 = vadd.xlane.f32.xlu0 %v8322
  %v8324 = vpop.xlane.xlu0 %8323
  %v8325 = vrcp.pop %v8300
  %v8326 = vrcp.pop %v8303
  %v8327 = vrcp.pop %v8306
  %v8328 = vrcp.pop %v8309
  %v8329 = vrcp.pop %v8312
  %v8330 = vrcp.pop %v8315
  %v8331 = vrcp.pop %v8318
  %v8332 = vrcp.pop %v8321
  %v8333 = vrcp.pop %v8324
  %v8334 = vmul.f32 %v8281, %v8325
  %v8335 = vmul.f32 %v8283, %v8326
  %v8336 = vmul.f32 %v8285, %v8327
  %v8337 = vmul.f32 %v8287, %v8328
  %v8338 = vmul.f32 %v8289, %v8329
  %v8339 = vmul.f32 %v8291, %v8330
  %v8340 = vmul.f32 %v8293, %v8331
  %v8341 = vmul.f32 %v8295, %v8332
  %v8342 = vmul.f32 %v8297, %v8333
  %8343 = vrot.lane.b32.xlu0 %v5614, 40
  %v8344 = vpop.permute.xlu0 %8343
  %8345 = vrot.lane.b32.xlu0 %v5617, 40
  %v8346 = vpop.permute.xlu0 %8345
  %8347 = vrot.lane.b32.xlu0 %v5620, 40
  %v8348 = vpop.permute.xlu0 %8347
  %8349 = vrot.lane.b32.xlu0 %v5623, 40
  %v8350 = vpop.permute.xlu0 %8349
  %8351 = vrot.lane.b32.xlu0 %v5626, 40
  %v8352 = vpop.permute.xlu0 %8351
  %8353 = vrot.lane.b32.xlu0 %v5629, 40
  %v8354 = vpop.permute.xlu0 %8353
  %8355 = vrot.lane.b32.xlu0 %v5632, 40
  %v8356 = vpop.permute.xlu0 %8355
  %8357 = vrot.lane.b32.xlu0 %v5635, 40
  %v8358 = vpop.permute.xlu0 %8357
  %8359 = vrot.lane.b32.xlu0 %v5638, 40
  %v8360 = vpop.permute.xlu0 %8359
  %v8371 = vsel %vm1006, %v8334, 0
  %v8374 = vsel %vm1006, %v8335, 0
  %v8377 = vsel %vm1006, %v8336, 0
  %v8380 = vsel %vm1006, %v8337, 0
  %v8383 = vsel %vm1006, %v8338, 0
  %v8386 = vsel %vm1006, %v8339, 0
  %v8389 = vsel %vm1006, %v8340, 0
  %v8392 = vsel %vm1006, %v8341, 0
  %v8395 = vsel %vm1006, %v8342, 0
  %8397 = vmatpush.msra.mxu0 0.0
  %8398 = vmatpush.msra.mxu0 0.0
  %8399 = vmatpush.msra.mxu0 0.0
  %8400 = vmatpush.msra.mxu0 0.0
  %8401 = vmatpush.msra.mxu0 0.0
  %8402 = vmatpush.msra.mxu0 0.0
  %8403 = vmatpush.msra.mxu0 0.0
  %8404 = vmatpush.msra.mxu0 %v8360
  %8405 = vmatpush.msra.mxu0 %v8358
  %8406 = vmatpush.msra.mxu0 %v8356
  %8407 = vmatpush.msra.mxu0 %v8354
  %8408 = vmatpush.msra.mxu0 %v8352
  %8409 = vmatpush.msra.mxu0 %v8350
  %8410 = vmatpush.msra.mxu0 %v8348
  %8411 = vmatpush.msra.mxu0 %v8346
  %8412 = vmatpush.msra.mxu0 %v8344
  %8413 = vmatmul.f32.gmra.mxu0 %v8371
  %v8414 = vpop.f32.mrf.mxu0
  %v8415 = vadd.f32 0.0, %v8414
  %8416 = vmatmul.f32.gmra.mxu0 %v8374
  %v8417 = vpop.f32.mrf.mxu0
  %v8418 = vadd.f32 0.0, %v8417
  %8419 = vmatmul.f32.gmra.mxu0 %v8377
  %v8420 = vpop.f32.mrf.mxu0
  %v8421 = vadd.f32 0.0, %v8420
  %8422 = vmatmul.f32.gmra.mxu0 %v8380
  %v8423 = vpop.f32.mrf.mxu0
  %v8424 = vadd.f32 0.0, %v8423
  %8425 = vmatmul.f32.gmra.mxu0 %v8383
  %v8426 = vpop.f32.mrf.mxu0
  %v8427 = vadd.f32 0.0, %v8426
  %8428 = vmatmul.f32.gmra.mxu0 %v8386
  %v8429 = vpop.f32.mrf.mxu0
  %v8430 = vadd.f32 0.0, %v8429
  %8431 = vmatmul.f32.gmra.mxu0 %v8389
  %v8432 = vpop.f32.mrf.mxu0
  %v8433 = vadd.f32 0.0, %v8432
  %8434 = vmatmul.f32.gmra.mxu0 %v8392
  %v8435 = vpop.f32.mrf.mxu0
  %v8436 = vadd.f32 0.0, %v8435
  %8437 = vmatmul.f32.gmra.mxu0 %v8395
  %v8438 = vpop.f32.mrf.mxu0
  %v8439 = vadd.f32 0.0, %v8438
  %8440 = vdwg.mxu0
  %8450 = vrot.lane.b32.xlu0 %v8415, 24
  %v8451 = vpop.permute.xlu0 %8450
  %8452 = vrot.lane.b32.xlu0 %v8418, 24
  %v8453 = vpop.permute.xlu0 %8452
  %8454 = vrot.lane.b32.xlu0 %v8421, 24
  %v8455 = vpop.permute.xlu0 %8454
  %8456 = vrot.lane.b32.xlu0 %v8424, 24
  %v8457 = vpop.permute.xlu0 %8456
  %8458 = vrot.lane.b32.xlu0 %v8427, 24
  %v8459 = vpop.permute.xlu0 %8458
  %8460 = vrot.lane.b32.xlu0 %v8430, 24
  %v8461 = vpop.permute.xlu0 %8460
  %8462 = vrot.lane.b32.xlu0 %v8433, 24
  %v8463 = vpop.permute.xlu0 %8462
  %8464 = vrot.lane.b32.xlu0 %v8436, 24
  %v8465 = vpop.permute.xlu0 %8464
  %8466 = vrot.lane.b32.xlu0 %v8439, 24
  %v8467 = vpop.permute.xlu0 %8466
  %8477 = vst.msk [vmem:[#allocation3 + $0x48] sm:$0xff] %vm2307, %v8451
  %8478 = vst.msk [vmem:[#allocation3 + $0x50] sm:$0xff] %vm2307, %v8453
  %8479 = vst.msk [vmem:[#allocation3 + $0x58] sm:$0xff] %vm2307, %v8455
  %8480 = vst.msk [vmem:[#allocation3 + $0x60] sm:$0xff] %vm2307, %v8457
  %8481 = vst.msk [vmem:[#allocation3 + $0x68] sm:$0xff] %vm2307, %v8459
  %8482 = vst.msk [vmem:[#allocation3 + $0x70] sm:$0xff] %vm2307, %v8461
  %8483 = vst.msk [vmem:[#allocation3 + $0x78] sm:$0xff] %vm2307, %v8463
  %8484 = vst.msk [vmem:[#allocation3 + $0x80] sm:$0xff] %vm2307, %v8465
  %8485 = vst.msk [vmem:[#allocation3 + $0x88] sm:$0xff] %vm2307, %v8467
  %v8486 = vld [vmem:[#allocation3] sm:$0xff]
  %v8487 = vld [vmem:[#allocation3 + $0x8] sm:$0xff]
  %v8488 = vld [vmem:[#allocation3 + $0x10] sm:$0xff]
  %v8489 = vld [vmem:[#allocation3 + $0x18] sm:$0xff]
  %v8490 = vld [vmem:[#allocation3 + $0x20] sm:$0xff]
  %v8491 = vld [vmem:[#allocation3 + $0x28] sm:$0xff]
  %v8492 = vld [vmem:[#allocation3 + $0x30] sm:$0xff]
  %v8493 = vld [vmem:[#allocation3 + $0x38] sm:$0xff]
  %v8494 = vld [vmem:[#allocation3 + $0x40] sm:$0xff]
  %v8495 = vld [vmem:[#allocation3 + $0x48] sm:$0xff]
  %v8496 = vld [vmem:[#allocation3 + $0x50] sm:$0xff]
  %v8497 = vld [vmem:[#allocation3 + $0x58] sm:$0xff]
  %v8498 = vld [vmem:[#allocation3 + $0x60] sm:$0xff]
  %v8499 = vld [vmem:[#allocation3 + $0x68] sm:$0xff]
  %v8500 = vld [vmem:[#allocation3 + $0x70] sm:$0xff]
  %v8501 = vld [vmem:[#allocation3 + $0x78] sm:$0xff]
  %v8502 = vld [vmem:[#allocation3 + $0x80] sm:$0xff]
  %v8503 = vld [vmem:[#allocation3 + $0x88] sm:$0xff]
  %s8504 = scalar_lea.vmem %s7, 32
  %v8505 = vld [vmem:[%s8504] sm:$0xff]
  %v8506 = vld [vmem:[%s8504 + $0x8] sm:$0xff]
  %v8507 = vld [vmem:[%s8504 + $0x10] sm:$0xff]
  %v8508 = vld [vmem:[%s8504 + $0x18] sm:$0xff]
  %v8510 = vsel %vm72, %v8486, 0
  %v8513 = vsel %vm72, %v8487, 0
  %v8516 = vsel %vm72, %v8488, 0
  %v8519 = vsel %vm72, %v8489, 0
  %v8522 = vsel %vm72, %v8490, 0
  %v8525 = vsel %vm72, %v8491, 0
  %v8528 = vsel %vm72, %v8492, 0
  %v8531 = vsel %vm72, %v8493, 0
  %v8534 = vsel %vm72, %v8494, 0
  %v8537 = vsel %vm72, %v8495, 0
  %v8540 = vsel %vm72, %v8496, 0
  %v8543 = vsel %vm72, %v8497, 0
  %v8546 = vsel %vm72, %v8498, 0
  %v8549 = vsel %vm72, %v8499, 0
  %v8552 = vsel %vm72, %v8500, 0
  %v8555 = vsel %vm72, %v8501, 0
  %v8558 = vsel %vm72, %v8502, 0
  %v8561 = vsel %vm72, %v8503, 0
  %8563 = vmatpush.msra.mxu0 0.0
  %8564 = vmatpush.msra.mxu0 0.0
  %8565 = vmatpush.msra.mxu0 0.0
  %8566 = vmatpush.msra.mxu0 0.0
  %8567 = vmatpush.msra.mxu0 0.0
  %8568 = vmatpush.msra.mxu0 0.0
  %8569 = vmatpush.msra.mxu0 0.0
  %8570 = vmatpush.msra.mxu0 0.0
  %8571 = vmatpush.msra.mxu0 0.0
  %8572 = vmatpush.msra.mxu0 0.0
  %8573 = vmatpush.msra.mxu0 0.0
  %8574 = vmatpush.msra.mxu0 0.0
  %8575 = vmatpush.msra.mxu0 %v8508
  %8576 = vmatpush.msra.mxu0 %v8507
  %8577 = vmatpush.msra.mxu0 %v8506
  %8578 = vmatpush.msra.mxu0 %v8505
  %8579 = vmatmul.f32.gmra.mxu0 %v8510
  %v8580 = vpop.f32.mrf.mxu0
  %v8581 = vadd.f32 0.0, %v8580
  %8582 = vmatmul.f32.gmra.mxu0 %v8513
  %v8583 = vpop.f32.mrf.mxu0
  %v8584 = vadd.f32 0.0, %v8583
  %8585 = vmatmul.f32.gmra.mxu0 %v8516
  %v8586 = vpop.f32.mrf.mxu0
  %v8587 = vadd.f32 0.0, %v8586
  %8588 = vmatmul.f32.gmra.mxu0 %v8519
  %v8589 = vpop.f32.mrf.mxu0
  %v8590 = vadd.f32 0.0, %v8589
  %8591 = vmatmul.f32.gmra.mxu0 %v8522
  %v8592 = vpop.f32.mrf.mxu0
  %v8593 = vadd.f32 0.0, %v8592
  %8594 = vmatmul.f32.gmra.mxu0 %v8525
  %v8595 = vpop.f32.mrf.mxu0
  %v8596 = vadd.f32 0.0, %v8595
  %8597 = vmatmul.f32.gmra.mxu0 %v8528
  %v8598 = vpop.f32.mrf.mxu0
  %v8599 = vadd.f32 0.0, %v8598
  %8600 = vmatmul.f32.gmra.mxu0 %v8531
  %v8601 = vpop.f32.mrf.mxu0
  %v8602 = vadd.f32 0.0, %v8601
  %8603 = vmatmul.f32.gmra.mxu0 %v8534
  %v8604 = vpop.f32.mrf.mxu0
  %v8605 = vadd.f32 0.0, %v8604
  %8606 = vmatmul.f32.gmra.mxu0 %v8537
  %v8607 = vpop.f32.mrf.mxu0
  %v8608 = vadd.f32 0.0, %v8607
  %8609 = vmatmul.f32.gmra.mxu0 %v8540
  %v8610 = vpop.f32.mrf.mxu0
  %v8611 = vadd.f32 0.0, %v8610
  %8612 = vmatmul.f32.gmra.mxu0 %v8543
  %v8613 = vpop.f32.mrf.mxu0
  %v8614 = vadd.f32 0.0, %v8613
  %8615 = vmatmul.f32.gmra.mxu0 %v8546
  %v8616 = vpop.f32.mrf.mxu0
  %v8617 = vadd.f32 0.0, %v8616
  %8618 = vmatmul.f32.gmra.mxu0 %v8549
  %v8619 = vpop.f32.mrf.mxu0
  %v8620 = vadd.f32 0.0, %v8619
  %8621 = vmatmul.f32.gmra.mxu0 %v8552
  %v8622 = vpop.f32.mrf.mxu0
  %v8623 = vadd.f32 0.0, %v8622
  %8624 = vmatmul.f32.gmra.mxu0 %v8555
  %v8625 = vpop.f32.mrf.mxu0
  %v8626 = vadd.f32 0.0, %v8625
  %8627 = vmatmul.f32.gmra.mxu0 %v8558
  %v8628 = vpop.f32.mrf.mxu0
  %v8629 = vadd.f32 0.0, %v8628
  %8630 = vmatmul.f32.gmra.mxu0 %v8561
  %v8631 = vpop.f32.mrf.mxu0
  %v8632 = vadd.f32 0.0, %v8631
  %8633 = vdwg.mxu0
  %v8634 = vadd.f32 %v5001, %v8581
  %v8635 = vadd.f32 %v5002, %v8584
  %v8636 = vadd.f32 %v5003, %v8587
  %v8637 = vadd.f32 %v5004, %v8590
  %v8638 = vadd.f32 %v5005, %v8593
  %v8639 = vadd.f32 %v5006, %v8596
  %v8640 = vadd.f32 %v5007, %v8599
  %v8641 = vadd.f32 %v5008, %v8602
  %v8642 = vadd.f32 %v5009, %v8605
  %v8643 = vadd.f32 %v5010, %v8608
  %v8644 = vadd.f32 %v5011, %v8611
  %v8645 = vadd.f32 %v5012, %v8614
  %v8646 = vadd.f32 %v5013, %v8617
  %v8647 = vadd.f32 %v5014, %v8620
  %v8648 = vadd.f32 %v5015, %v8623
  %v8649 = vadd.f32 %v5016, %v8626
  %v8650 = vadd.f32 %v5017, %v8629
  %v8651 = vadd.f32 %v5018, %v8632
  %v8653 = vperm.slane %v5024, 0
  %v8655 = vadd.f32 %v8634, %v8653
  %v8656 = vadd.f32 %v8635, %v8653
  %v8657 = vadd.f32 %v8636, %v8653
  %v8658 = vadd.f32 %v8637, %v8653
  %v8659 = vadd.f32 %v8638, %v8653
  %v8660 = vadd.f32 %v8639, %v8653
  %v8661 = vadd.f32 %v8640, %v8653
  %v8662 = vadd.f32 %v8641, %v8653
  %v8663 = vadd.f32 %v8642, %v8653
  %v8664 = vadd.f32 %v8643, %v8653
  %v8665 = vadd.f32 %v8644, %v8653
  %v8666 = vadd.f32 %v8645, %v8653
  %v8667 = vadd.f32 %v8646, %v8653
  %v8668 = vadd.f32 %v8647, %v8653
  %v8669 = vadd.f32 %v8648, %v8653
  %v8670 = vadd.f32 %v8649, %v8653
  %v8671 = vadd.f32 %v8650, %v8653
  %v8672 = vadd.f32 %v8651, %v8653
  %v8673 = vsel %vm72, %v8655, 0.0
  %8674 = vadd.xlane.f32.xlu0 %v8673
  %v8675 = vpop.xlane.xlu0 %8674
  %v8676 = vsel %vm72, %v8656, 0.0
  %8677 = vadd.xlane.f32.xlu0 %v8676
  %v8678 = vpop.xlane.xlu0 %8677
  %v8679 = vsel %vm72, %v8657, 0.0
  %8680 = vadd.xlane.f32.xlu0 %v8679
  %v8681 = vpop.xlane.xlu0 %8680
  %v8682 = vsel %vm72, %v8658, 0.0
  %8683 = vadd.xlane.f32.xlu0 %v8682
  %v8684 = vpop.xlane.xlu0 %8683
  %v8685 = vsel %vm72, %v8659, 0.0
  %8686 = vadd.xlane.f32.xlu0 %v8685
  %v8687 = vpop.xlane.xlu0 %8686
  %v8688 = vsel %vm72, %v8660, 0.0
  %8689 = vadd.xlane.f32.xlu0 %v8688
  %v8690 = vpop.xlane.xlu0 %8689
  %v8691 = vsel %vm72, %v8661, 0.0
  %8692 = vadd.xlane.f32.xlu0 %v8691
  %v8693 = vpop.xlane.xlu0 %8692
  %v8694 = vsel %vm72, %v8662, 0.0
  %8695 = vadd.xlane.f32.xlu0 %v8694
  %v8696 = vpop.xlane.xlu0 %8695
  %v8697 = vsel %vm72, %v8663, 0.0
  %8698 = vadd.xlane.f32.xlu0 %v8697
  %v8699 = vpop.xlane.xlu0 %8698
  %v8700 = vsel %vm72, %v8664, 0.0
  %8701 = vadd.xlane.f32.xlu0 %v8700
  %v8702 = vpop.xlane.xlu0 %8701
  %v8703 = vsel %vm72, %v8665, 0.0
  %8704 = vadd.xlane.f32.xlu0 %v8703
  %v8705 = vpop.xlane.xlu0 %8704
  %v8706 = vsel %vm72, %v8666, 0.0
  %8707 = vadd.xlane.f32.xlu0 %v8706
  %v8708 = vpop.xlane.xlu0 %8707
  %v8709 = vsel %vm72, %v8667, 0.0
  %8710 = vadd.xlane.f32.xlu0 %v8709
  %v8711 = vpop.xlane.xlu0 %8710
  %v8712 = vsel %vm72, %v8668, 0.0
  %8713 = vadd.xlane.f32.xlu0 %v8712
  %v8714 = vpop.xlane.xlu0 %8713
  %v8715 = vsel %vm72, %v8669, 0.0
  %8716 = vadd.xlane.f32.xlu0 %v8715
  %v8717 = vpop.xlane.xlu0 %8716
  %v8718 = vsel %vm72, %v8670, 0.0
  %8719 = vadd.xlane.f32.xlu0 %v8718
  %v8720 = vpop.xlane.xlu0 %8719
  %v8721 = vsel %vm72, %v8671, 0.0
  %8722 = vadd.xlane.f32.xlu0 %v8721
  %v8723 = vpop.xlane.xlu0 %8722
  %v8724 = vsel %vm72, %v8672, 0.0
  %8725 = vadd.xlane.f32.xlu0 %v8724
  %v8726 = vpop.xlane.xlu0 %8725
  %v8727 = vmul.f32 %v8675, %v335
  %v8728 = vmul.f32 %v8678, %v335
  %v8729 = vmul.f32 %v8681, %v335
  %v8730 = vmul.f32 %v8684, %v335
  %v8731 = vmul.f32 %v8687, %v335
  %v8732 = vmul.f32 %v8690, %v335
  %v8733 = vmul.f32 %v8693, %v335
  %v8734 = vmul.f32 %v8696, %v335
  %v8735 = vmul.f32 %v8699, %v335
  %v8736 = vmul.f32 %v8702, %v335
  %v8737 = vmul.f32 %v8705, %v335
  %v8738 = vmul.f32 %v8708, %v335
  %v8739 = vmul.f32 %v8711, %v335
  %v8740 = vmul.f32 %v8714, %v335
  %v8741 = vmul.f32 %v8717, %v335
  %v8742 = vmul.f32 %v8720, %v335
  %v8743 = vmul.f32 %v8723, %v335
  %v8744 = vmul.f32 %v8726, %v335
  %v8745 = vmul.f32 %v8655, %v8655
  %v8746 = vmul.f32 %v8656, %v8656
  %v8747 = vmul.f32 %v8657, %v8657
  %v8748 = vmul.f32 %v8658, %v8658
  %v8749 = vmul.f32 %v8659, %v8659
  %v8750 = vmul.f32 %v8660, %v8660
  %v8751 = vmul.f32 %v8661, %v8661
  %v8752 = vmul.f32 %v8662, %v8662
  %v8753 = vmul.f32 %v8663, %v8663
  %v8754 = vmul.f32 %v8664, %v8664
  %v8755 = vmul.f32 %v8665, %v8665
  %v8756 = vmul.f32 %v8666, %v8666
  %v8757 = vmul.f32 %v8667, %v8667
  %v8758 = vmul.f32 %v8668, %v8668
  %v8759 = vmul.f32 %v8669, %v8669
  %v8760 = vmul.f32 %v8670, %v8670
  %v8761 = vmul.f32 %v8671, %v8671
  %v8762 = vmul.f32 %v8672, %v8672
  %v8763 = vsel %vm72, %v8745, 0.0
  %8764 = vadd.xlane.f32.xlu0 %v8763
  %v8765 = vpop.xlane.xlu0 %8764
  %v8766 = vsel %vm72, %v8746, 0.0
  %8767 = vadd.xlane.f32.xlu0 %v8766
  %v8768 = vpop.xlane.xlu0 %8767
  %v8769 = vsel %vm72, %v8747, 0.0
  %8770 = vadd.xlane.f32.xlu0 %v8769
  %v8771 = vpop.xlane.xlu0 %8770
  %v8772 = vsel %vm72, %v8748, 0.0
  %8773 = vadd.xlane.f32.xlu0 %v8772
  %v8774 = vpop.xlane.xlu0 %8773
  %v8775 = vsel %vm72, %v8749, 0.0
  %8776 = vadd.xlane.f32.xlu0 %v8775
  %v8777 = vpop.xlane.xlu0 %8776
  %v8778 = vsel %vm72, %v8750, 0.0
  %8779 = vadd.xlane.f32.xlu0 %v8778
  %v8780 = vpop.xlane.xlu0 %8779
  %v8781 = vsel %vm72, %v8751, 0.0
  %8782 = vadd.xlane.f32.xlu0 %v8781
  %v8783 = vpop.xlane.xlu0 %8782
  %v8784 = vsel %vm72, %v8752, 0.0
  %8785 = vadd.xlane.f32.xlu0 %v8784
  %v8786 = vpop.xlane.xlu0 %8785
  %v8787 = vsel %vm72, %v8753, 0.0
  %8788 = vadd.xlane.f32.xlu0 %v8787
  %v8789 = vpop.xlane.xlu0 %8788
  %v8790 = vsel %vm72, %v8754, 0.0
  %8791 = vadd.xlane.f32.xlu0 %v8790
  %v8792 = vpop.xlane.xlu0 %8791
  %v8793 = vsel %vm72, %v8755, 0.0
  %8794 = vadd.xlane.f32.xlu0 %v8793
  %v8795 = vpop.xlane.xlu0 %8794
  %v8796 = vsel %vm72, %v8756, 0.0
  %8797 = vadd.xlane.f32.xlu0 %v8796
  %v8798 = vpop.xlane.xlu0 %8797
  %v8799 = vsel %vm72, %v8757, 0.0
  %8800 = vadd.xlane.f32.xlu0 %v8799
  %v8801 = vpop.xlane.xlu0 %8800
  %v8802 = vsel %vm72, %v8758, 0.0
  %8803 = vadd.xlane.f32.xlu0 %v8802
  %v8804 = vpop.xlane.xlu0 %8803
  %v8805 = vsel %vm72, %v8759, 0.0
  %8806 = vadd.xlane.f32.xlu0 %v8805
  %v8807 = vpop.xlane.xlu0 %8806
  %v8808 = vsel %vm72, %v8760, 0.0
  %8809 = vadd.xlane.f32.xlu0 %v8808
  %v8810 = vpop.xlane.xlu0 %8809
  %v8811 = vsel %vm72, %v8761, 0.0
  %8812 = vadd.xlane.f32.xlu0 %v8811
  %v8813 = vpop.xlane.xlu0 %8812
  %v8814 = vsel %vm72, %v8762, 0.0
  %8815 = vadd.xlane.f32.xlu0 %v8814
  %v8816 = vpop.xlane.xlu0 %8815
  %v8817 = vmul.f32 %v8765, %v335
  %v8818 = vmul.f32 %v8768, %v335
  %v8819 = vmul.f32 %v8771, %v335
  %v8820 = vmul.f32 %v8774, %v335
  %v8821 = vmul.f32 %v8777, %v335
  %v8822 = vmul.f32 %v8780, %v335
  %v8823 = vmul.f32 %v8783, %v335
  %v8824 = vmul.f32 %v8786, %v335
  %v8825 = vmul.f32 %v8789, %v335
  %v8826 = vmul.f32 %v8792, %v335
  %v8827 = vmul.f32 %v8795, %v335
  %v8828 = vmul.f32 %v8798, %v335
  %v8829 = vmul.f32 %v8801, %v335
  %v8830 = vmul.f32 %v8804, %v335
  %v8831 = vmul.f32 %v8807, %v335
  %v8832 = vmul.f32 %v8810, %v335
  %v8833 = vmul.f32 %v8813, %v335
  %v8834 = vmul.f32 %v8816, %v335
  %v8835 = vmul.f32 %v8727, %v8727
  %v8836 = vmul.f32 %v8728, %v8728
  %v8837 = vmul.f32 %v8729, %v8729
  %v8838 = vmul.f32 %v8730, %v8730
  %v8839 = vmul.f32 %v8731, %v8731
  %v8840 = vmul.f32 %v8732, %v8732
  %v8841 = vmul.f32 %v8733, %v8733
  %v8842 = vmul.f32 %v8734, %v8734
  %v8843 = vmul.f32 %v8735, %v8735
  %v8844 = vmul.f32 %v8736, %v8736
  %v8845 = vmul.f32 %v8737, %v8737
  %v8846 = vmul.f32 %v8738, %v8738
  %v8847 = vmul.f32 %v8739, %v8739
  %v8848 = vmul.f32 %v8740, %v8740
  %v8849 = vmul.f32 %v8741, %v8741
  %v8850 = vmul.f32 %v8742, %v8742
  %v8851 = vmul.f32 %v8743, %v8743
  %v8852 = vmul.f32 %v8744, %v8744
  %v8853 = vsub.f32 %v8817, %v8835
  %v8854 = vsub.f32 %v8818, %v8836
  %v8855 = vsub.f32 %v8819, %v8837
  %v8856 = vsub.f32 %v8820, %v8838
  %v8857 = vsub.f32 %v8821, %v8839
  %v8858 = vsub.f32 %v8822, %v8840
  %v8859 = vsub.f32 %v8823, %v8841
  %v8860 = vsub.f32 %v8824, %v8842
  %v8861 = vsub.f32 %v8825, %v8843
  %v8862 = vsub.f32 %v8826, %v8844
  %v8863 = vsub.f32 %v8827, %v8845
  %v8864 = vsub.f32 %v8828, %v8846
  %v8865 = vsub.f32 %v8829, %v8847
  %v8866 = vsub.f32 %v8830, %v8848
  %v8867 = vsub.f32 %v8831, %v8849
  %v8868 = vsub.f32 %v8832, %v8850
  %v8869 = vsub.f32 %v8833, %v8851
  %v8870 = vsub.f32 %v8834, %v8852
  %v8871 = vsub.f32 %v8655, %v8727
  %v8872 = vsub.f32 %v8656, %v8728
  %v8873 = vsub.f32 %v8657, %v8729
  %v8874 = vsub.f32 %v8658, %v8730
  %v8875 = vsub.f32 %v8659, %v8731
  %v8876 = vsub.f32 %v8660, %v8732
  %v8877 = vsub.f32 %v8661, %v8733
  %v8878 = vsub.f32 %v8662, %v8734
  %v8879 = vsub.f32 %v8663, %v8735
  %v8880 = vsub.f32 %v8664, %v8736
  %v8881 = vsub.f32 %v8665, %v8737
  %v8882 = vsub.f32 %v8666, %v8738
  %v8883 = vsub.f32 %v8667, %v8739
  %v8884 = vsub.f32 %v8668, %v8740
  %v8885 = vsub.f32 %v8669, %v8741
  %v8886 = vsub.f32 %v8670, %v8742
  %v8887 = vsub.f32 %v8671, %v8743
  %v8888 = vsub.f32 %v8672, %v8744
  %v8889 = vadd.f32 %v8853, 1e-05
  %v8890 = vadd.f32 %v8854, 1e-05
  %v8891 = vadd.f32 %v8855, 1e-05
  %v8892 = vadd.f32 %v8856, 1e-05
  %v8893 = vadd.f32 %v8857, 1e-05
  %v8894 = vadd.f32 %v8858, 1e-05
  %v8895 = vadd.f32 %v8859, 1e-05
  %v8896 = vadd.f32 %v8860, 1e-05
  %v8897 = vadd.f32 %v8861, 1e-05
  %v8898 = vadd.f32 %v8862, 1e-05
  %v8899 = vadd.f32 %v8863, 1e-05
  %v8900 = vadd.f32 %v8864, 1e-05
  %v8901 = vadd.f32 %v8865, 1e-05
  %v8902 = vadd.f32 %v8866, 1e-05
  %v8903 = vadd.f32 %v8867, 1e-05
  %v8904 = vadd.f32 %v8868, 1e-05
  %v8905 = vadd.f32 %v8869, 1e-05
  %v8906 = vadd.f32 %v8870, 1e-05
  %v8907 = vrsqrt.pop %v8889
  %v8908 = vmul.f32 %v8907, %v8889
  %v8909 = vmul.f32 %v8908, %v8907
  %v8910 = vmul.f32 0.5, %v8909
  %v8911 = vsub.f32 1.5, %v8910
  %v8912 = vmul.f32 %v8907, %v8911
  %vm8913 = vweird.f32 %v8889
  %vm8914 = vweird.f32 %v8907
  %vm8915 = vmor %vm8913, %vm8914
  %v8916 = vsel %vm8915, %v8907, %v8912
  %v8917 = vrsqrt.pop %v8890
  %v8918 = vmul.f32 %v8917, %v8890
  %v8919 = vmul.f32 %v8918, %v8917
  %v8920 = vmul.f32 0.5, %v8919
  %v8921 = vsub.f32 1.5, %v8920
  %v8922 = vmul.f32 %v8917, %v8921
  %vm8923 = vweird.f32 %v8890
  %vm8924 = vweird.f32 %v8917
  %vm8925 = vmor %vm8923, %vm8924
  %v8926 = vsel %vm8925, %v8917, %v8922
  %v8927 = vrsqrt.pop %v8891
  %v8928 = vmul.f32 %v8927, %v8891
  %v8929 = vmul.f32 %v8928, %v8927
  %v8930 = vmul.f32 0.5, %v8929
  %v8931 = vsub.f32 1.5, %v8930
  %v8932 = vmul.f32 %v8927, %v8931
  %vm8933 = vweird.f32 %v8891
  %vm8934 = vweird.f32 %v8927
  %vm8935 = vmor %vm8933, %vm8934
  %v8936 = vsel %vm8935, %v8927, %v8932
  %v8937 = vrsqrt.pop %v8892
  %v8938 = vmul.f32 %v8937, %v8892
  %v8939 = vmul.f32 %v8938, %v8937
  %v8940 = vmul.f32 0.5, %v8939
  %v8941 = vsub.f32 1.5, %v8940
  %v8942 = vmul.f32 %v8937, %v8941
  %vm8943 = vweird.f32 %v8892
  %vm8944 = vweird.f32 %v8937
  %vm8945 = vmor %vm8943, %vm8944
  %v8946 = vsel %vm8945, %v8937, %v8942
  %v8947 = vrsqrt.pop %v8893
  %v8948 = vmul.f32 %v8947, %v8893
  %v8949 = vmul.f32 %v8948, %v8947
  %v8950 = vmul.f32 0.5, %v8949
  %v8951 = vsub.f32 1.5, %v8950
  %v8952 = vmul.f32 %v8947, %v8951
  %vm8953 = vweird.f32 %v8893
  %vm8954 = vweird.f32 %v8947
  %vm8955 = vmor %vm8953, %vm8954
  %v8956 = vsel %vm8955, %v8947, %v8952
  %v8957 = vrsqrt.pop %v8894
  %v8958 = vmul.f32 %v8957, %v8894
  %v8959 = vmul.f32 %v8958, %v8957
  %v8960 = vmul.f32 0.5, %v8959
  %v8961 = vsub.f32 1.5, %v8960
  %v8962 = vmul.f32 %v8957, %v8961
  %vm8963 = vweird.f32 %v8894
  %vm8964 = vweird.f32 %v8957
  %vm8965 = vmor %vm8963, %vm8964
  %v8966 = vsel %vm8965, %v8957, %v8962
  %v8967 = vrsqrt.pop %v8895
  %v8968 = vmul.f32 %v8967, %v8895
  %v8969 = vmul.f32 %v8968, %v8967
  %v8970 = vmul.f32 0.5, %v8969
  %v8971 = vsub.f32 1.5, %v8970
  %v8972 = vmul.f32 %v8967, %v8971
  %vm8973 = vweird.f32 %v8895
  %vm8974 = vweird.f32 %v8967
  %vm8975 = vmor %vm8973, %vm8974
  %v8976 = vsel %vm8975, %v8967, %v8972
  %v8977 = vrsqrt.pop %v8896
  %v8978 = vmul.f32 %v8977, %v8896
  %v8979 = vmul.f32 %v8978, %v8977
  %v8980 = vmul.f32 0.5, %v8979
  %v8981 = vsub.f32 1.5, %v8980
  %v8982 = vmul.f32 %v8977, %v8981
  %vm8983 = vweird.f32 %v8896
  %vm8984 = vweird.f32 %v8977
  %vm8985 = vmor %vm8983, %vm8984
  %v8986 = vsel %vm8985, %v8977, %v8982
  %v8987 = vrsqrt.pop %v8897
  %v8988 = vmul.f32 %v8987, %v8897
  %v8989 = vmul.f32 %v8988, %v8987
  %v8990 = vmul.f32 0.5, %v8989
  %v8991 = vsub.f32 1.5, %v8990
  %v8992 = vmul.f32 %v8987, %v8991
  %vm8993 = vweird.f32 %v8897
  %vm8994 = vweird.f32 %v8987
  %vm8995 = vmor %vm8993, %vm8994
  %v8996 = vsel %vm8995, %v8987, %v8992
  %v8997 = vrsqrt.pop %v8898
  %v8998 = vmul.f32 %v8997, %v8898
  %v8999 = vmul.f32 %v8998, %v8997
  %v9000 = vmul.f32 0.5, %v8999
  %v9001 = vsub.f32 1.5, %v9000
  %v9002 = vmul.f32 %v8997, %v9001
  %vm9003 = vweird.f32 %v8898
  %vm9004 = vweird.f32 %v8997
  %vm9005 = vmor %vm9003, %vm9004
  %v9006 = vsel %vm9005, %v8997, %v9002
  %v9007 = vrsqrt.pop %v8899
  %v9008 = vmul.f32 %v9007, %v8899
  %v9009 = vmul.f32 %v9008, %v9007
  %v9010 = vmul.f32 0.5, %v9009
  %v9011 = vsub.f32 1.5, %v9010
  %v9012 = vmul.f32 %v9007, %v9011
  %vm9013 = vweird.f32 %v8899
  %vm9014 = vweird.f32 %v9007
  %vm9015 = vmor %vm9013, %vm9014
  %v9016 = vsel %vm9015, %v9007, %v9012
  %v9017 = vrsqrt.pop %v8900
  %v9018 = vmul.f32 %v9017, %v8900
  %v9019 = vmul.f32 %v9018, %v9017
  %v9020 = vmul.f32 0.5, %v9019
  %v9021 = vsub.f32 1.5, %v9020
  %v9022 = vmul.f32 %v9017, %v9021
  %vm9023 = vweird.f32 %v8900
  %vm9024 = vweird.f32 %v9017
  %vm9025 = vmor %vm9023, %vm9024
  %v9026 = vsel %vm9025, %v9017, %v9022
  %v9027 = vrsqrt.pop %v8901
  %v9028 = vmul.f32 %v9027, %v8901
  %v9029 = vmul.f32 %v9028, %v9027
  %v9030 = vmul.f32 0.5, %v9029
  %v9031 = vsub.f32 1.5, %v9030
  %v9032 = vmul.f32 %v9027, %v9031
  %vm9033 = vweird.f32 %v8901
  %vm9034 = vweird.f32 %v9027
  %vm9035 = vmor %vm9033, %vm9034
  %v9036 = vsel %vm9035, %v9027, %v9032
  %v9037 = vrsqrt.pop %v8902
  %v9038 = vmul.f32 %v9037, %v8902
  %v9039 = vmul.f32 %v9038, %v9037
  %v9040 = vmul.f32 0.5, %v9039
  %v9041 = vsub.f32 1.5, %v9040
  %v9042 = vmul.f32 %v9037, %v9041
  %vm9043 = vweird.f32 %v8902
  %vm9044 = vweird.f32 %v9037
  %vm9045 = vmor %vm9043, %vm9044
  %v9046 = vsel %vm9045, %v9037, %v9042
  %v9047 = vrsqrt.pop %v8903
  %v9048 = vmul.f32 %v9047, %v8903
  %v9049 = vmul.f32 %v9048, %v9047
  %v9050 = vmul.f32 0.5, %v9049
  %v9051 = vsub.f32 1.5, %v9050
  %v9052 = vmul.f32 %v9047, %v9051
  %vm9053 = vweird.f32 %v8903
  %vm9054 = vweird.f32 %v9047
  %vm9055 = vmor %vm9053, %vm9054
  %v9056 = vsel %vm9055, %v9047, %v9052
  %v9057 = vrsqrt.pop %v8904
  %v9058 = vmul.f32 %v9057, %v8904
  %v9059 = vmul.f32 %v9058, %v9057
  %v9060 = vmul.f32 0.5, %v9059
  %v9061 = vsub.f32 1.5, %v9060
  %v9062 = vmul.f32 %v9057, %v9061
  %vm9063 = vweird.f32 %v8904
  %vm9064 = vweird.f32 %v9057
  %vm9065 = vmor %vm9063, %vm9064
  %v9066 = vsel %vm9065, %v9057, %v9062
  %v9067 = vrsqrt.pop %v8905
  %v9068 = vmul.f32 %v9067, %v8905
  %v9069 = vmul.f32 %v9068, %v9067
  %v9070 = vmul.f32 0.5, %v9069
  %v9071 = vsub.f32 1.5, %v9070
  %v9072 = vmul.f32 %v9067, %v9071
  %vm9073 = vweird.f32 %v8905
  %vm9074 = vweird.f32 %v9067
  %vm9075 = vmor %vm9073, %vm9074
  %v9076 = vsel %vm9075, %v9067, %v9072
  %v9077 = vrsqrt.pop %v8906
  %v9078 = vmul.f32 %v9077, %v8906
  %v9079 = vmul.f32 %v9078, %v9077
  %v9080 = vmul.f32 0.5, %v9079
  %v9081 = vsub.f32 1.5, %v9080
  %v9082 = vmul.f32 %v9077, %v9081
  %vm9083 = vweird.f32 %v8906
  %vm9084 = vweird.f32 %v9077
  %vm9085 = vmor %vm9083, %vm9084
  %v9086 = vsel %vm9085, %v9077, %v9082
  %v9087 = vmul.f32 %v8871, %v8916
  %v9088 = vmul.f32 %v8872, %v8926
  %v9089 = vmul.f32 %v8873, %v8936
  %v9090 = vmul.f32 %v8874, %v8946
  %v9091 = vmul.f32 %v8875, %v8956
  %v9092 = vmul.f32 %v8876, %v8966
  %v9093 = vmul.f32 %v8877, %v8976
  %v9094 = vmul.f32 %v8878, %v8986
  %v9095 = vmul.f32 %v8879, %v8996
  %v9096 = vmul.f32 %v8880, %v9006
  %v9097 = vmul.f32 %v8881, %v9016
  %v9098 = vmul.f32 %v8882, %v9026
  %v9099 = vmul.f32 %v8883, %v9036
  %v9100 = vmul.f32 %v8884, %v9046
  %v9101 = vmul.f32 %v8885, %v9056
  %v9102 = vmul.f32 %v8886, %v9066
  %v9103 = vmul.f32 %v8887, %v9076
  %v9104 = vmul.f32 %v8888, %v9086
  %v9106 = vperm.slane %v5026, 0
  %v9108 = vmul.f32 %v9087, %v9106
  %v9109 = vmul.f32 %v9088, %v9106
  %v9110 = vmul.f32 %v9089, %v9106
  %v9111 = vmul.f32 %v9090, %v9106
  %v9112 = vmul.f32 %v9091, %v9106
  %v9113 = vmul.f32 %v9092, %v9106
  %v9114 = vmul.f32 %v9093, %v9106
  %v9115 = vmul.f32 %v9094, %v9106
  %v9116 = vmul.f32 %v9095, %v9106
  %v9117 = vmul.f32 %v9096, %v9106
  %v9118 = vmul.f32 %v9097, %v9106
  %v9119 = vmul.f32 %v9098, %v9106
  %v9120 = vmul.f32 %v9099, %v9106
  %v9121 = vmul.f32 %v9100, %v9106
  %v9122 = vmul.f32 %v9101, %v9106
  %v9123 = vmul.f32 %v9102, %v9106
  %v9124 = vmul.f32 %v9103, %v9106
  %v9125 = vmul.f32 %v9104, %v9106
  %v9127 = vperm.slane %v5028, 0
  %v9129 = vadd.f32 %v9108, %v9127
  %v9130 = vadd.f32 %v9109, %v9127
  %v9131 = vadd.f32 %v9110, %v9127
  %v9132 = vadd.f32 %v9111, %v9127
  %v9133 = vadd.f32 %v9112, %v9127
  %v9134 = vadd.f32 %v9113, %v9127
  %v9135 = vadd.f32 %v9114, %v9127
  %v9136 = vadd.f32 %v9115, %v9127
  %v9137 = vadd.f32 %v9116, %v9127
  %v9138 = vadd.f32 %v9117, %v9127
  %v9139 = vadd.f32 %v9118, %v9127
  %v9140 = vadd.f32 %v9119, %v9127
  %v9141 = vadd.f32 %v9120, %v9127
  %v9142 = vadd.f32 %v9121, %v9127
  %v9143 = vadd.f32 %v9122, %v9127
  %v9144 = vadd.f32 %v9123, %v9127
  %v9145 = vadd.f32 %v9124, %v9127
  %v9146 = vadd.f32 %v9125, %v9127
  %s9147 = scalar_lea.vmem %s8, 32
  %v9148 = vld [vmem:[%s9147] sm:$0xff]
  %v9149 = vld [vmem:[%s9147 + $0x8] sm:$0xff]
  %v9150 = vld [vmem:[%s9147 + $0x10] sm:$0xff]
  %v9151 = vld [vmem:[%s9147 + $0x18] sm:$0xff]
  %s9152 = scalar_lea.vmem %s9, 1
  %v9153 = vld [vmem:[%s9152] sm:$0x1]
  %v9155 = vperm.slane %v9153, 0
  %v9158 = vsel %vm72, %v9129, 0
  %v9161 = vsel %vm72, %v9130, 0
  %v9164 = vsel %vm72, %v9131, 0
  %v9167 = vsel %vm72, %v9132, 0
  %v9170 = vsel %vm72, %v9133, 0
  %v9173 = vsel %vm72, %v9134, 0
  %v9176 = vsel %vm72, %v9135, 0
  %v9179 = vsel %vm72, %v9136, 0
  %v9182 = vsel %vm72, %v9137, 0
  %v9185 = vsel %vm72, %v9138, 0
  %v9188 = vsel %vm72, %v9139, 0
  %v9191 = vsel %vm72, %v9140, 0
  %v9194 = vsel %vm72, %v9141, 0
  %v9197 = vsel %vm72, %v9142, 0
  %v9200 = vsel %vm72, %v9143, 0
  %v9203 = vsel %vm72, %v9144, 0
  %v9206 = vsel %vm72, %v9145, 0
  %v9209 = vsel %vm72, %v9146, 0
  %9211 = vmatpush.msra.mxu0 0.0
  %9212 = vmatpush.msra.mxu0 0.0
  %9213 = vmatpush.msra.mxu0 0.0
  %9214 = vmatpush.msra.mxu0 0.0
  %9215 = vmatpush.msra.mxu0 0.0
  %9216 = vmatpush.msra.mxu0 0.0
  %9217 = vmatpush.msra.mxu0 0.0
  %9218 = vmatpush.msra.mxu0 0.0
  %9219 = vmatpush.msra.mxu0 0.0
  %9220 = vmatpush.msra.mxu0 0.0
  %9221 = vmatpush.msra.mxu0 0.0
  %9222 = vmatpush.msra.mxu0 0.0
  %9223 = vmatpush.msra.mxu0 %v9151
  %9224 = vmatpush.msra.mxu0 %v9150
  %9225 = vmatpush.msra.mxu0 %v9149
  %9226 = vmatpush.msra.mxu0 %v9148
  %9227 = vmatmul.f32.gmra.mxu0 %v9158
  %v9228 = vpop.f32.mrf.mxu0
  %v9229 = vadd.f32 %v9155, %v9228
  %9230 = vmatmul.f32.gmra.mxu0 %v9161
  %v9231 = vpop.f32.mrf.mxu0
  %v9232 = vadd.f32 %v9155, %v9231
  %9233 = vmatmul.f32.gmra.mxu0 %v9164
  %v9234 = vpop.f32.mrf.mxu0
  %v9235 = vadd.f32 %v9155, %v9234
  %9236 = vmatmul.f32.gmra.mxu0 %v9167
  %v9237 = vpop.f32.mrf.mxu0
  %v9238 = vadd.f32 %v9155, %v9237
  %9239 = vmatmul.f32.gmra.mxu0 %v9170
  %v9240 = vpop.f32.mrf.mxu0
  %v9241 = vadd.f32 %v9155, %v9240
  %9242 = vmatmul.f32.gmra.mxu0 %v9173
  %v9243 = vpop.f32.mrf.mxu0
  %v9244 = vadd.f32 %v9155, %v9243
  %9245 = vmatmul.f32.gmra.mxu0 %v9176
  %v9246 = vpop.f32.mrf.mxu0
  %v9247 = vadd.f32 %v9155, %v9246
  %9248 = vmatmul.f32.gmra.mxu0 %v9179
  %v9249 = vpop.f32.mrf.mxu0
  %v9250 = vadd.f32 %v9155, %v9249
  %9251 = vmatmul.f32.gmra.mxu0 %v9182
  %v9252 = vpop.f32.mrf.mxu0
  %v9253 = vadd.f32 %v9155, %v9252
  %9254 = vmatmul.f32.gmra.mxu0 %v9185
  %v9255 = vpop.f32.mrf.mxu0
  %v9256 = vadd.f32 %v9155, %v9255
  %9257 = vmatmul.f32.gmra.mxu0 %v9188
  %v9258 = vpop.f32.mrf.mxu0
  %v9259 = vadd.f32 %v9155, %v9258
  %9260 = vmatmul.f32.gmra.mxu0 %v9191
  %v9261 = vpop.f32.mrf.mxu0
  %v9262 = vadd.f32 %v9155, %v9261
  %9263 = vmatmul.f32.gmra.mxu0 %v9194
  %v9264 = vpop.f32.mrf.mxu0
  %v9265 = vadd.f32 %v9155, %v9264
  %9266 = vmatmul.f32.gmra.mxu0 %v9197
  %v9267 = vpop.f32.mrf.mxu0
  %v9268 = vadd.f32 %v9155, %v9267
  %9269 = vmatmul.f32.gmra.mxu0 %v9200
  %v9270 = vpop.f32.mrf.mxu0
  %v9271 = vadd.f32 %v9155, %v9270
  %9272 = vmatmul.f32.gmra.mxu0 %v9203
  %v9273 = vpop.f32.mrf.mxu0
  %v9274 = vadd.f32 %v9155, %v9273
  %9275 = vmatmul.f32.gmra.mxu0 %v9206
  %v9276 = vpop.f32.mrf.mxu0
  %v9277 = vadd.f32 %v9155, %v9276
  %9278 = vmatmul.f32.gmra.mxu0 %v9209
  %v9279 = vpop.f32.mrf.mxu0
  %v9280 = vadd.f32 %v9155, %v9279
  %9281 = vdwg.mxu0
  %v9282 = vmul.f32 %v9229, 1.702
  %v9283 = vmul.f32 %v9232, 1.702
  %v9284 = vmul.f32 %v9235, 1.702
  %v9285 = vmul.f32 %v9238, 1.702
  %v9286 = vmul.f32 %v9241, 1.702
  %v9287 = vmul.f32 %v9244, 1.702
  %v9288 = vmul.f32 %v9247, 1.702
  %v9289 = vmul.f32 %v9250, 1.702
  %v9290 = vmul.f32 %v9253, 1.702
  %v9291 = vmul.f32 %v9256, 1.702
  %v9292 = vmul.f32 %v9259, 1.702
  %v9293 = vmul.f32 %v9262, 1.702
  %v9294 = vmul.f32 %v9265, 1.702
  %v9295 = vmul.f32 %v9268, 1.702
  %v9296 = vmul.f32 %v9271, 1.702
  %v9297 = vmul.f32 %v9274, 1.702
  %v9298 = vmul.f32 %v9277, 1.702
  %v9299 = vmul.f32 %v9280, 1.702
  %v9300 = vxor.u32 %v9282, 2147483648
  %v9301 = vxor.u32 %v9283, 2147483648
  %v9302 = vxor.u32 %v9284, 2147483648
  %v9303 = vxor.u32 %v9285, 2147483648
  %v9304 = vxor.u32 %v9286, 2147483648
  %v9305 = vxor.u32 %v9287, 2147483648
  %v9306 = vxor.u32 %v9288, 2147483648
  %v9307 = vxor.u32 %v9289, 2147483648
  %v9308 = vxor.u32 %v9290, 2147483648
  %v9309 = vxor.u32 %v9291, 2147483648
  %v9310 = vxor.u32 %v9292, 2147483648
  %v9311 = vxor.u32 %v9293, 2147483648
  %v9312 = vxor.u32 %v9294, 2147483648
  %v9313 = vxor.u32 %v9295, 2147483648
  %v9314 = vxor.u32 %v9296, 2147483648
  %v9315 = vxor.u32 %v9297, 2147483648
  %v9316 = vxor.u32 %v9298, 2147483648
  %v9317 = vxor.u32 %v9299, 2147483648
  %v9318 = vmul.f32 %v9300, 1.442695
  %v9319 = vpow.pop %v9318
  %v9320 = vmul.f32 %v9301, 1.442695
  %v9321 = vpow.pop %v9320
  %v9322 = vmul.f32 %v9302, 1.442695
  %v9323 = vpow.pop %v9322
  %v9324 = vmul.f32 %v9303, 1.442695
  %v9325 = vpow.pop %v9324
  %v9326 = vmul.f32 %v9304, 1.442695
  %v9327 = vpow.pop %v9326
  %v9328 = vmul.f32 %v9305, 1.442695
  %v9329 = vpow.pop %v9328
  %v9330 = vmul.f32 %v9306, 1.442695
  %v9331 = vpow.pop %v9330
  %v9332 = vmul.f32 %v9307, 1.442695
  %v9333 = vpow.pop %v9332
  %v9334 = vmul.f32 %v9308, 1.442695
  %v9335 = vpow.pop %v9334
  %v9336 = vmul.f32 %v9309, 1.442695
  %v9337 = vpow.pop %v9336
  %v9338 = vmul.f32 %v9310, 1.442695
  %v9339 = vpow.pop %v9338
  %v9340 = vmul.f32 %v9311, 1.442695
  %v9341 = vpow.pop %v9340
  %v9342 = vmul.f32 %v9312, 1.442695
  %v9343 = vpow.pop %v9342
  %v9344 = vmul.f32 %v9313, 1.442695
  %v9345 = vpow.pop %v9344
  %v9346 = vmul.f32 %v9314, 1.442695
  %v9347 = vpow.pop %v9346
  %v9348 = vmul.f32 %v9315, 1.442695
  %v9349 = vpow.pop %v9348
  %v9350 = vmul.f32 %v9316, 1.442695
  %v9351 = vpow.pop %v9350
  %v9352 = vmul.f32 %v9317, 1.442695
  %v9353 = vpow.pop %v9352
  %v9354 = vadd.f32 %v9319, 1.0
  %v9355 = vadd.f32 %v9321, 1.0
  %v9356 = vadd.f32 %v9323, 1.0
  %v9357 = vadd.f32 %v9325, 1.0
  %v9358 = vadd.f32 %v9327, 1.0
  %v9359 = vadd.f32 %v9329, 1.0
  %v9360 = vadd.f32 %v9331, 1.0
  %v9361 = vadd.f32 %v9333, 1.0
  %v9362 = vadd.f32 %v9335, 1.0
  %v9363 = vadd.f32 %v9337, 1.0
  %v9364 = vadd.f32 %v9339, 1.0
  %v9365 = vadd.f32 %v9341, 1.0
  %v9366 = vadd.f32 %v9343, 1.0
  %v9367 = vadd.f32 %v9345, 1.0
  %v9368 = vadd.f32 %v9347, 1.0
  %v9369 = vadd.f32 %v9349, 1.0
  %v9370 = vadd.f32 %v9351, 1.0
  %v9371 = vadd.f32 %v9353, 1.0
  %v9372 = vrcp.pop %v9354
  %v9373 = vmul.f32 %v9354, %v9372
  %v9374 = vsub.f32 1.0, %v9373
  %v9375 = vmul.f32 %v9372, %v9374
  %v9376 = vadd.f32 %v9372, %v9375
  %vm9377 = vweird.f32 %v9354
  %vm9378 = vweird.f32 %v9372
  %vm9379 = vmor %vm9377, %vm9378
  %v9380 = vsel %vm9379, %v9372, %v9376
  %v9381 = vand.u32 2147483647, %v9354
  %vm9382 = vcmp.eq.f32.partialorder %v9381, 8.507059e+37
  %v9383 = vand.u32 %v9354, 2147483648
  %v9384 = vor.u32 1.1754944e-38, %v9383
  %v9385 = vsel %vm9382, %v9384, %v9380
  %v9386 = vmul.f32 1.0, %v9385
  %v9387 = vrcp.pop %v9355
  %v9388 = vmul.f32 %v9355, %v9387
  %v9389 = vsub.f32 1.0, %v9388
  %v9390 = vmul.f32 %v9387, %v9389
  %v9391 = vadd.f32 %v9387, %v9390
  %vm9392 = vweird.f32 %v9355
  %vm9393 = vweird.f32 %v9387
  %vm9394 = vmor %vm9392, %vm9393
  %v9395 = vsel %vm9394, %v9387, %v9391
  %v9396 = vand.u32 2147483647, %v9355
  %vm9397 = vcmp.eq.f32.partialorder %v9396, 8.507059e+37
  %v9398 = vand.u32 %v9355, 2147483648
  %v9399 = vor.u32 1.1754944e-38, %v9398
  %v9400 = vsel %vm9397, %v9399, %v9395
  %v9401 = vmul.f32 1.0, %v9400
  %v9402 = vrcp.pop %v9356
  %v9403 = vmul.f32 %v9356, %v9402
  %v9404 = vsub.f32 1.0, %v9403
  %v9405 = vmul.f32 %v9402, %v9404
  %v9406 = vadd.f32 %v9402, %v9405
  %vm9407 = vweird.f32 %v9356
  %vm9408 = vweird.f32 %v9402
  %vm9409 = vmor %vm9407, %vm9408
  %v9410 = vsel %vm9409, %v9402, %v9406
  %v9411 = vand.u32 2147483647, %v9356
  %vm9412 = vcmp.eq.f32.partialorder %v9411, 8.507059e+37
  %v9413 = vand.u32 %v9356, 2147483648
  %v9414 = vor.u32 1.1754944e-38, %v9413
  %v9415 = vsel %vm9412, %v9414, %v9410
  %v9416 = vmul.f32 1.0, %v9415
  %v9417 = vrcp.pop %v9357
  %v9418 = vmul.f32 %v9357, %v9417
  %v9419 = vsub.f32 1.0, %v9418
  %v9420 = vmul.f32 %v9417, %v9419
  %v9421 = vadd.f32 %v9417, %v9420
  %vm9422 = vweird.f32 %v9357
  %vm9423 = vweird.f32 %v9417
  %vm9424 = vmor %vm9422, %vm9423
  %v9425 = vsel %vm9424, %v9417, %v9421
  %v9426 = vand.u32 2147483647, %v9357
  %vm9427 = vcmp.eq.f32.partialorder %v9426, 8.507059e+37
  %v9428 = vand.u32 %v9357, 2147483648
  %v9429 = vor.u32 1.1754944e-38, %v9428
  %v9430 = vsel %vm9427, %v9429, %v9425
  %v9431 = vmul.f32 1.0, %v9430
  %v9432 = vrcp.pop %v9358
  %v9433 = vmul.f32 %v9358, %v9432
  %v9434 = vsub.f32 1.0, %v9433
  %v9435 = vmul.f32 %v9432, %v9434
  %v9436 = vadd.f32 %v9432, %v9435
  %vm9437 = vweird.f32 %v9358
  %vm9438 = vweird.f32 %v9432
  %vm9439 = vmor %vm9437, %vm9438
  %v9440 = vsel %vm9439, %v9432, %v9436
  %v9441 = vand.u32 2147483647, %v9358
  %vm9442 = vcmp.eq.f32.partialorder %v9441, 8.507059e+37
  %v9443 = vand.u32 %v9358, 2147483648
  %v9444 = vor.u32 1.1754944e-38, %v9443
  %v9445 = vsel %vm9442, %v9444, %v9440
  %v9446 = vmul.f32 1.0, %v9445
  %v9447 = vrcp.pop %v9359
  %v9448 = vmul.f32 %v9359, %v9447
  %v9449 = vsub.f32 1.0, %v9448
  %v9450 = vmul.f32 %v9447, %v9449
  %v9451 = vadd.f32 %v9447, %v9450
  %vm9452 = vweird.f32 %v9359
  %vm9453 = vweird.f32 %v9447
  %vm9454 = vmor %vm9452, %vm9453
  %v9455 = vsel %vm9454, %v9447, %v9451
  %v9456 = vand.u32 2147483647, %v9359
  %vm9457 = vcmp.eq.f32.partialorder %v9456, 8.507059e+37
  %v9458 = vand.u32 %v9359, 2147483648
  %v9459 = vor.u32 1.1754944e-38, %v9458
  %v9460 = vsel %vm9457, %v9459, %v9455
  %v9461 = vmul.f32 1.0, %v9460
  %v9462 = vrcp.pop %v9360
  %v9463 = vmul.f32 %v9360, %v9462
  %v9464 = vsub.f32 1.0, %v9463
  %v9465 = vmul.f32 %v9462, %v9464
  %v9466 = vadd.f32 %v9462, %v9465
  %vm9467 = vweird.f32 %v9360
  %vm9468 = vweird.f32 %v9462
  %vm9469 = vmor %vm9467, %vm9468
  %v9470 = vsel %vm9469, %v9462, %v9466
  %v9471 = vand.u32 2147483647, %v9360
  %vm9472 = vcmp.eq.f32.partialorder %v9471, 8.507059e+37
  %v9473 = vand.u32 %v9360, 2147483648
  %v9474 = vor.u32 1.1754944e-38, %v9473
  %v9475 = vsel %vm9472, %v9474, %v9470
  %v9476 = vmul.f32 1.0, %v9475
  %v9477 = vrcp.pop %v9361
  %v9478 = vmul.f32 %v9361, %v9477
  %v9479 = vsub.f32 1.0, %v9478
  %v9480 = vmul.f32 %v9477, %v9479
  %v9481 = vadd.f32 %v9477, %v9480
  %vm9482 = vweird.f32 %v9361
  %vm9483 = vweird.f32 %v9477
  %vm9484 = vmor %vm9482, %vm9483
  %v9485 = vsel %vm9484, %v9477, %v9481
  %v9486 = vand.u32 2147483647, %v9361
  %vm9487 = vcmp.eq.f32.partialorder %v9486, 8.507059e+37
  %v9488 = vand.u32 %v9361, 2147483648
  %v9489 = vor.u32 1.1754944e-38, %v9488
  %v9490 = vsel %vm9487, %v9489, %v9485
  %v9491 = vmul.f32 1.0, %v9490
  %v9492 = vrcp.pop %v9362
  %v9493 = vmul.f32 %v9362, %v9492
  %v9494 = vsub.f32 1.0, %v9493
  %v9495 = vmul.f32 %v9492, %v9494
  %v9496 = vadd.f32 %v9492, %v9495
  %vm9497 = vweird.f32 %v9362
  %vm9498 = vweird.f32 %v9492
  %vm9499 = vmor %vm9497, %vm9498
  %v9500 = vsel %vm9499, %v9492, %v9496
  %v9501 = vand.u32 2147483647, %v9362
  %vm9502 = vcmp.eq.f32.partialorder %v9501, 8.507059e+37
  %v9503 = vand.u32 %v9362, 2147483648
  %v9504 = vor.u32 1.1754944e-38, %v9503
  %v9505 = vsel %vm9502, %v9504, %v9500
  %v9506 = vmul.f32 1.0, %v9505
  %v9507 = vrcp.pop %v9363
  %v9508 = vmul.f32 %v9363, %v9507
  %v9509 = vsub.f32 1.0, %v9508
  %v9510 = vmul.f32 %v9507, %v9509
  %v9511 = vadd.f32 %v9507, %v9510
  %vm9512 = vweird.f32 %v9363
  %vm9513 = vweird.f32 %v9507
  %vm9514 = vmor %vm9512, %vm9513
  %v9515 = vsel %vm9514, %v9507, %v9511
  %v9516 = vand.u32 2147483647, %v9363
  %vm9517 = vcmp.eq.f32.partialorder %v9516, 8.507059e+37
  %v9518 = vand.u32 %v9363, 2147483648
  %v9519 = vor.u32 1.1754944e-38, %v9518
  %v9520 = vsel %vm9517, %v9519, %v9515
  %v9521 = vmul.f32 1.0, %v9520
  %v9522 = vrcp.pop %v9364
  %v9523 = vmul.f32 %v9364, %v9522
  %v9524 = vsub.f32 1.0, %v9523
  %v9525 = vmul.f32 %v9522, %v9524
  %v9526 = vadd.f32 %v9522, %v9525
  %vm9527 = vweird.f32 %v9364
  %vm9528 = vweird.f32 %v9522
  %vm9529 = vmor %vm9527, %vm9528
  %v9530 = vsel %vm9529, %v9522, %v9526
  %v9531 = vand.u32 2147483647, %v9364
  %vm9532 = vcmp.eq.f32.partialorder %v9531, 8.507059e+37
  %v9533 = vand.u32 %v9364, 2147483648
  %v9534 = vor.u32 1.1754944e-38, %v9533
  %v9535 = vsel %vm9532, %v9534, %v9530
  %v9536 = vmul.f32 1.0, %v9535
  %v9537 = vrcp.pop %v9365
  %v9538 = vmul.f32 %v9365, %v9537
  %v9539 = vsub.f32 1.0, %v9538
  %v9540 = vmul.f32 %v9537, %v9539
  %v9541 = vadd.f32 %v9537, %v9540
  %vm9542 = vweird.f32 %v9365
  %vm9543 = vweird.f32 %v9537
  %vm9544 = vmor %vm9542, %vm9543
  %v9545 = vsel %vm9544, %v9537, %v9541
  %v9546 = vand.u32 2147483647, %v9365
  %vm9547 = vcmp.eq.f32.partialorder %v9546, 8.507059e+37
  %v9548 = vand.u32 %v9365, 2147483648
  %v9549 = vor.u32 1.1754944e-38, %v9548
  %v9550 = vsel %vm9547, %v9549, %v9545
  %v9551 = vmul.f32 1.0, %v9550
  %v9552 = vrcp.pop %v9366
  %v9553 = vmul.f32 %v9366, %v9552
  %v9554 = vsub.f32 1.0, %v9553
  %v9555 = vmul.f32 %v9552, %v9554
  %v9556 = vadd.f32 %v9552, %v9555
  %vm9557 = vweird.f32 %v9366
  %vm9558 = vweird.f32 %v9552
  %vm9559 = vmor %vm9557, %vm9558
  %v9560 = vsel %vm9559, %v9552, %v9556
  %v9561 = vand.u32 2147483647, %v9366
  %vm9562 = vcmp.eq.f32.partialorder %v9561, 8.507059e+37
  %v9563 = vand.u32 %v9366, 2147483648
  %v9564 = vor.u32 1.1754944e-38, %v9563
  %v9565 = vsel %vm9562, %v9564, %v9560
  %v9566 = vmul.f32 1.0, %v9565
  %v9567 = vrcp.pop %v9367
  %v9568 = vmul.f32 %v9367, %v9567
  %v9569 = vsub.f32 1.0, %v9568
  %v9570 = vmul.f32 %v9567, %v9569
  %v9571 = vadd.f32 %v9567, %v9570
  %vm9572 = vweird.f32 %v9367
  %vm9573 = vweird.f32 %v9567
  %vm9574 = vmor %vm9572, %vm9573
  %v9575 = vsel %vm9574, %v9567, %v9571
  %v9576 = vand.u32 2147483647, %v9367
  %vm9577 = vcmp.eq.f32.partialorder %v9576, 8.507059e+37
  %v9578 = vand.u32 %v9367, 2147483648
  %v9579 = vor.u32 1.1754944e-38, %v9578
  %v9580 = vsel %vm9577, %v9579, %v9575
  %v9581 = vmul.f32 1.0, %v9580
  %v9582 = vrcp.pop %v9368
  %v9583 = vmul.f32 %v9368, %v9582
  %v9584 = vsub.f32 1.0, %v9583
  %v9585 = vmul.f32 %v9582, %v9584
  %v9586 = vadd.f32 %v9582, %v9585
  %vm9587 = vweird.f32 %v9368
  %vm9588 = vweird.f32 %v9582
  %vm9589 = vmor %vm9587, %vm9588
  %v9590 = vsel %vm9589, %v9582, %v9586
  %v9591 = vand.u32 2147483647, %v9368
  %vm9592 = vcmp.eq.f32.partialorder %v9591, 8.507059e+37
  %v9593 = vand.u32 %v9368, 2147483648
  %v9594 = vor.u32 1.1754944e-38, %v9593
  %v9595 = vsel %vm9592, %v9594, %v9590
  %v9596 = vmul.f32 1.0, %v9595
  %v9597 = vrcp.pop %v9369
  %v9598 = vmul.f32 %v9369, %v9597
  %v9599 = vsub.f32 1.0, %v9598
  %v9600 = vmul.f32 %v9597, %v9599
  %v9601 = vadd.f32 %v9597, %v9600
  %vm9602 = vweird.f32 %v9369
  %vm9603 = vweird.f32 %v9597
  %vm9604 = vmor %vm9602, %vm9603
  %v9605 = vsel %vm9604, %v9597, %v9601
  %v9606 = vand.u32 2147483647, %v9369
  %vm9607 = vcmp.eq.f32.partialorder %v9606, 8.507059e+37
  %v9608 = vand.u32 %v9369, 2147483648
  %v9609 = vor.u32 1.1754944e-38, %v9608
  %v9610 = vsel %vm9607, %v9609, %v9605
  %v9611 = vmul.f32 1.0, %v9610
  %v9612 = vrcp.pop %v9370
  %v9613 = vmul.f32 %v9370, %v9612
  %v9614 = vsub.f32 1.0, %v9613
  %v9615 = vmul.f32 %v9612, %v9614
  %v9616 = vadd.f32 %v9612, %v9615
  %vm9617 = vweird.f32 %v9370
  %vm9618 = vweird.f32 %v9612
  %vm9619 = vmor %vm9617, %vm9618
  %v9620 = vsel %vm9619, %v9612, %v9616
  %v9621 = vand.u32 2147483647, %v9370
  %vm9622 = vcmp.eq.f32.partialorder %v9621, 8.507059e+37
  %v9623 = vand.u32 %v9370, 2147483648
  %v9624 = vor.u32 1.1754944e-38, %v9623
  %v9625 = vsel %vm9622, %v9624, %v9620
  %v9626 = vmul.f32 1.0, %v9625
  %v9627 = vrcp.pop %v9371
  %v9628 = vmul.f32 %v9371, %v9627
  %v9629 = vsub.f32 1.0, %v9628
  %v9630 = vmul.f32 %v9627, %v9629
  %v9631 = vadd.f32 %v9627, %v9630
  %vm9632 = vweird.f32 %v9371
  %vm9633 = vweird.f32 %v9627
  %vm9634 = vmor %vm9632, %vm9633
  %v9635 = vsel %vm9634, %v9627, %v9631
  %v9636 = vand.u32 2147483647, %v9371
  %vm9637 = vcmp.eq.f32.partialorder %v9636, 8.507059e+37
  %v9638 = vand.u32 %v9371, 2147483648
  %v9639 = vor.u32 1.1754944e-38, %v9638
  %v9640 = vsel %vm9637, %v9639, %v9635
  %v9641 = vmul.f32 1.0, %v9640
  %v9642 = vmul.f32 %v9229, %v9386
  %v9643 = vmul.f32 %v9232, %v9401
  %v9644 = vmul.f32 %v9235, %v9416
  %v9645 = vmul.f32 %v9238, %v9431
  %v9646 = vmul.f32 %v9241, %v9446
  %v9647 = vmul.f32 %v9244, %v9461
  %v9648 = vmul.f32 %v9247, %v9476
  %v9649 = vmul.f32 %v9250, %v9491
  %v9650 = vmul.f32 %v9253, %v9506
  %v9651 = vmul.f32 %v9256, %v9521
  %v9652 = vmul.f32 %v9259, %v9536
  %v9653 = vmul.f32 %v9262, %v9551
  %v9654 = vmul.f32 %v9265, %v9566
  %v9655 = vmul.f32 %v9268, %v9581
  %v9656 = vmul.f32 %v9271, %v9596
  %v9657 = vmul.f32 %v9274, %v9611
  %v9658 = vmul.f32 %v9277, %v9626
  %v9659 = vmul.f32 %v9280, %v9641
  %s9660 = scalar_lea.vmem %s10, 128
  %v9661 = vld [vmem:[%s9660] sm:$0xff]
  %v9662 = vld [vmem:[%s9660 + $0x8] sm:$0xff]
  %v9663 = vld [vmem:[%s9660 + $0x10] sm:$0xff]
  %v9664 = vld [vmem:[%s9660 + $0x18] sm:$0xff]
  %v9665 = vld [vmem:[%s9660 + $0x20] sm:$0xff]
  %v9666 = vld [vmem:[%s9660 + $0x28] sm:$0xff]
  %v9667 = vld [vmem:[%s9660 + $0x30] sm:$0xff]
  %v9668 = vld [vmem:[%s9660 + $0x38] sm:$0xff]
  %v9669 = vld [vmem:[%s9660 + $0x40] sm:$0xff]
  %v9670 = vld [vmem:[%s9660 + $0x48] sm:$0xff]
  %v9671 = vld [vmem:[%s9660 + $0x50] sm:$0xff]
  %v9672 = vld [vmem:[%s9660 + $0x58] sm:$0xff]
  %v9673 = vld [vmem:[%s9660 + $0x60] sm:$0xff]
  %v9674 = vld [vmem:[%s9660 + $0x68] sm:$0xff]
  %v9675 = vld [vmem:[%s9660 + $0x70] sm:$0xff]
  %v9676 = vld [vmem:[%s9660 + $0x78] sm:$0xff]
  %v9678 = vperm.slane %v5030, 0
  %9680 = vmatpush.msra.mxu0 %v9676
  %9681 = vmatpush.msra.mxu0 %v9675
  %9682 = vmatpush.msra.mxu0 %v9674
  %9683 = vmatpush.msra.mxu0 %v9673
  %9684 = vmatpush.msra.mxu0 %v9672
  %9685 = vmatpush.msra.mxu0 %v9671
  %9686 = vmatpush.msra.mxu0 %v9670
  %9687 = vmatpush.msra.mxu0 %v9669
  %9688 = vmatpush.msra.mxu0 %v9668
  %9689 = vmatpush.msra.mxu0 %v9667
  %9690 = vmatpush.msra.mxu0 %v9666
  %9691 = vmatpush.msra.mxu0 %v9665
  %9692 = vmatpush.msra.mxu0 %v9664
  %9693 = vmatpush.msra.mxu0 %v9663
  %9694 = vmatpush.msra.mxu0 %v9662
  %9695 = vmatpush.msra.mxu0 %v9661
  %9696 = vmatmul.f32.gmra.mxu0 %v9642
  %v9697 = vpop.f32.mrf.mxu0
  %9698 = vmatmul.f32.gmra.mxu0 %v9643
  %v9699 = vpop.f32.mrf.mxu0
  %v9700 = vadd.f32 %v9678, %v9699
  %9701 = vmatmul.f32.gmra.mxu0 %v9644
  %v9702 = vpop.f32.mrf.mxu0
  %v9703 = vadd.f32 %v9678, %v9702
  %9704 = vmatmul.f32.gmra.mxu0 %v9645
  %v9705 = vpop.f32.mrf.mxu0
  %v9706 = vadd.f32 %v9678, %v9705
  %9707 = vmatmul.f32.gmra.mxu0 %v9646
  %v9708 = vpop.f32.mrf.mxu0
  %v9709 = vadd.f32 %v9678, %v9708
  %9710 = vmatmul.f32.gmra.mxu0 %v9647
  %v9711 = vpop.f32.mrf.mxu0
  %v9712 = vadd.f32 %v9678, %v9711
  %9713 = vmatmul.f32.gmra.mxu0 %v9648
  %v9714 = vpop.f32.mrf.mxu0
  %v9715 = vadd.f32 %v9678, %v9714
  %9716 = vmatmul.f32.gmra.mxu0 %v9649
  %v9717 = vpop.f32.mrf.mxu0
  %v9718 = vadd.f32 %v9678, %v9717
  %9719 = vmatmul.f32.gmra.mxu0 %v9650
  %v9720 = vpop.f32.mrf.mxu0
  %v9721 = vadd.f32 %v9678, %v9720
  %9722 = vmatmul.f32.gmra.mxu0 %v9651
  %v9723 = vpop.f32.mrf.mxu0
  %9724 = vmatmul.f32.gmra.mxu0 %v9652
  %v9725 = vpop.f32.mrf.mxu0
  %v9726 = vadd.f32 %v9678, %v9725
  %9727 = vmatmul.f32.gmra.mxu0 %v9653
  %v9728 = vpop.f32.mrf.mxu0
  %v9729 = vadd.f32 %v9678, %v9728
  %9730 = vmatmul.f32.gmra.mxu0 %v9654
  %v9731 = vpop.f32.mrf.mxu0
  %v9732 = vadd.f32 %v9678, %v9731
  %9733 = vmatmul.f32.gmra.mxu0 %v9655
  %v9734 = vpop.f32.mrf.mxu0
  %v9735 = vadd.f32 %v9678, %v9734
  %9736 = vmatmul.f32.gmra.mxu0 %v9656
  %v9737 = vpop.f32.mrf.mxu0
  %v9738 = vadd.f32 %v9678, %v9737
  %9739 = vmatmul.f32.gmra.mxu0 %v9657
  %v9740 = vpop.f32.mrf.mxu0
  %v9741 = vadd.f32 %v9678, %v9740
  %9742 = vmatmul.f32.gmra.mxu0 %v9658
  %v9743 = vpop.f32.mrf.mxu0
  %v9744 = vadd.f32 %v9678, %v9743
  %9745 = vmatmul.f32.gmra.mxu0 %v9659
  %v9746 = vpop.f32.mrf.mxu0
  %v9747 = vadd.f32 %v9678, %v9746
  %9748 = vdwg.mxu0
  %v9749 = vadd.f32 %v8656, %v9700
  %v9750 = vadd.f32 %v8657, %v9703
  %v9751 = vadd.f32 %v8658, %v9706
  %v9752 = vadd.f32 %v8659, %v9709
  %v9753 = vadd.f32 %v8660, %v9712
  %v9754 = vadd.f32 %v8661, %v9715
  %v9755 = vadd.f32 %v8662, %v9718
  %v9756 = vadd.f32 %v8663, %v9721
  %v9757 = vadd.f32 %v8665, %v9726
  %v9758 = vadd.f32 %v8666, %v9729
  %v9759 = vadd.f32 %v8667, %v9732
  %v9760 = vadd.f32 %v8668, %v9735
  %v9761 = vadd.f32 %v8669, %v9738
  %v9762 = vadd.f32 %v8670, %v9741
  %v9763 = vadd.f32 %v8671, %v9744
  %v9764 = vadd.f32 %v8672, %v9747
  %v9765 = vld [vmem:[%s2] sm:$0xff]
  %v9766 = vld [vmem:[%s2 + $0x8] sm:$0xff]
  %v9767 = vld [vmem:[%s2 + $0x10] sm:$0xff]
  %v9768 = vld [vmem:[%s2 + $0x18] sm:$0xff]
  %v9769 = vld [vmem:[%s2 + $0x20] sm:$0xff]
  %v9770 = vld [vmem:[%s2 + $0x28] sm:$0xff]
  %v9771 = vld [vmem:[%s2 + $0x30] sm:$0xff]
  %v9772 = vld [vmem:[%s2 + $0x38] sm:$0xff]
  %v9773 = vsub.f32 1.0, %v9765
  %v9774 = vsub.f32 1.0, %v9766
  %v9775 = vsub.f32 1.0, %v9767
  %v9776 = vsub.f32 1.0, %v9768
  %v9777 = vsub.f32 1.0, %v9769
  %v9778 = vsub.f32 1.0, %v9770
  %v9779 = vsub.f32 1.0, %v9771
  %v9780 = vsub.f32 1.0, %v9772
  %v9781 = vld [vmem:[%s1] sm:$0xff]
  %v9782 = vld [vmem:[%s1 + $0x8] sm:$0xff]
  %v9783 = vld [vmem:[%s1 + $0x10] sm:$0xff]
  %v9784 = vld [vmem:[%s1 + $0x18] sm:$0xff]
  %v9785 = vld [vmem:[%s1 + $0x20] sm:$0xff]
  %v9786 = vld [vmem:[%s1 + $0x28] sm:$0xff]
  %v9787 = vld [vmem:[%s1 + $0x30] sm:$0xff]
  %v9788 = vld [vmem:[%s1 + $0x38] sm:$0xff]
  %v9789 = vsub.f32 %v9749, %v9781
  %v9790 = vsub.f32 %v9750, %v9782
  %v9791 = vsub.f32 %v9751, %v9783
  %v9792 = vsub.f32 %v9752, %v9784
  %v9793 = vsub.f32 %v9753, %v9785
  %v9794 = vsub.f32 %v9754, %v9786
  %v9795 = vsub.f32 %v9755, %v9787
  %v9796 = vsub.f32 %v9756, %v9788
  %9798 = vset.pattern.permute.xlu0 0
  %9799 = vperm.xlu0 %9798, %v9773
  %v9800 = vpop.permute.xlu0 %9799
  %9803 = vset.pattern.permute.xlu0 0
  %9804 = vperm.xlu0 %9803, %v9774
  %v9805 = vpop.permute.xlu0 %9804
  %9808 = vset.pattern.permute.xlu0 0
  %9809 = vperm.xlu0 %9808, %v9775
  %v9810 = vpop.permute.xlu0 %9809
  %9813 = vset.pattern.permute.xlu0 0
  %9814 = vperm.xlu0 %9813, %v9776
  %v9815 = vpop.permute.xlu0 %9814
  %9818 = vset.pattern.permute.xlu0 0
  %9819 = vperm.xlu0 %9818, %v9777
  %v9820 = vpop.permute.xlu0 %9819
  %9823 = vset.pattern.permute.xlu0 0
  %9824 = vperm.xlu0 %9823, %v9778
  %v9825 = vpop.permute.xlu0 %9824
  %9828 = vset.pattern.permute.xlu0 0
  %9829 = vperm.xlu0 %9828, %v9779
  %v9830 = vpop.permute.xlu0 %9829
  %9833 = vset.pattern.permute.xlu0 0
  %9834 = vperm.xlu0 %9833, %v9780
  %v9835 = vpop.permute.xlu0 %9834
  %v9837 = vmul.f32 %v9789, %v9800
  %v9838 = vmul.f32 %v9790, %v9805
  %v9839 = vmul.f32 %v9791, %v9810
  %v9840 = vmul.f32 %v9792, %v9815
  %v9841 = vmul.f32 %v9793, %v9820
  %v9842 = vmul.f32 %v9794, %v9825
  %v9843 = vmul.f32 %v9795, %v9830
  %v9844 = vmul.f32 %v9796, %v9835
  %v9845 = vmul.f32 %v9837, %v9837
  %v9846 = vmul.f32 %v9838, %v9838
  %v9847 = vmul.f32 %v9839, %v9839
  %v9848 = vmul.f32 %v9840, %v9840
  %v9849 = vmul.f32 %v9841, %v9841
  %v9850 = vmul.f32 %v9842, %v9842
  %v9851 = vmul.f32 %v9843, %v9843
  %v9852 = vmul.f32 %v9844, %v9844
  %v9853 = vsel %vm72, %v9845, 0.0
  %v9854 = vsel %vm72, %v9846, 0.0
  %v9855 = vadd.f32 %v9853, %v9854
  %v9856 = vsel %vm72, %v9847, 0.0
  %v9857 = vadd.f32 %v9855, %v9856
  %v9858 = vsel %vm72, %v9848, 0.0
  %v9859 = vadd.f32 %v9857, %v9858
  %v9860 = vsel %vm72, %v9849, 0.0
  %v9861 = vadd.f32 %v9859, %v9860
  %v9862 = vsel %vm72, %v9850, 0.0
  %v9863 = vadd.f32 %v9861, %v9862
  %v9864 = vsel %vm72, %v9851, 0.0
  %v9865 = vadd.f32 %v9863, %v9864
  %v9866 = vsel %vm72, %v9852, 0.0
  %v9867 = vadd.f32 %v9865, %v9866
  %9868 = vadd.xlane.f32.xlu0 %v9867
  %v9869 = vpop.xlane.xlu0 %9868
  %v9870 = vrot.slane %v9869, 4
  %v9871 = vadd.f32 %v9869, %v9870
  %v9872 = vrot.slane %v9871, 2
  %v9873 = vadd.f32 %v9871, %v9872
  %v9874 = vrot.slane %v9873, 1
  %v9875 = vadd.f32 %v9873, %v9874
  %s9876 = vtos %v9875
  %s9877 = sadd.f32 %s9876, 0.0
  %v9878 = vld [vmem:[%s172] sm:$0xff]
  %v9879 = vld [vmem:[%s172 + $0x8] sm:$0xff]
  %v9880 = vld [vmem:[%s172 + $0x10] sm:$0xff]
  %v9881 = vld [vmem:[%s172 + $0x18] sm:$0xff]
  %v9882 = vld [vmem:[%s172 + $0x20] sm:$0xff]
  %v9883 = vld [vmem:[%s172 + $0x28] sm:$0xff]
  %v9884 = vld [vmem:[%s172 + $0x30] sm:$0xff]
  %v9885 = vld [vmem:[%s172 + $0x38] sm:$0xff]
  %v9886 = vsub.f32 1.0, %v9878
  %v9887 = vsub.f32 1.0, %v9879
  %v9888 = vsub.f32 1.0, %v9880
  %v9889 = vsub.f32 1.0, %v9881
  %v9890 = vsub.f32 1.0, %v9882
  %v9891 = vsub.f32 1.0, %v9883
  %v9892 = vsub.f32 1.0, %v9884
  %v9893 = vsub.f32 1.0, %v9885
  %v9894 = vld [vmem:[%s181] sm:$0xff]
  %v9895 = vld [vmem:[%s181 + $0x8] sm:$0xff]
  %v9896 = vld [vmem:[%s181 + $0x10] sm:$0xff]
  %v9897 = vld [vmem:[%s181 + $0x18] sm:$0xff]
  %v9898 = vld [vmem:[%s181 + $0x20] sm:$0xff]
  %v9899 = vld [vmem:[%s181 + $0x28] sm:$0xff]
  %v9900 = vld [vmem:[%s181 + $0x30] sm:$0xff]
  %v9901 = vld [vmem:[%s181 + $0x38] sm:$0xff]
  %v9902 = vsub.f32 %v9757, %v9894
  %v9903 = vsub.f32 %v9758, %v9895
  %v9904 = vsub.f32 %v9759, %v9896
  %v9905 = vsub.f32 %v9760, %v9897
  %v9906 = vsub.f32 %v9761, %v9898
  %v9907 = vsub.f32 %v9762, %v9899
  %v9908 = vsub.f32 %v9763, %v9900
  %v9909 = vsub.f32 %v9764, %v9901
  %9911 = vset.pattern.permute.xlu0 0
  %9912 = vperm.xlu0 %9911, %v9886
  %v9913 = vpop.permute.xlu0 %9912
  %9916 = vset.pattern.permute.xlu0 0
  %9917 = vperm.xlu0 %9916, %v9887
  %v9918 = vpop.permute.xlu0 %9917
  %9921 = vset.pattern.permute.xlu0 0
  %9922 = vperm.xlu0 %9921, %v9888
  %v9923 = vpop.permute.xlu0 %9922
  %9926 = vset.pattern.permute.xlu0 0
  %9927 = vperm.xlu0 %9926, %v9889
  %v9928 = vpop.permute.xlu0 %9927
  %9931 = vset.pattern.permute.xlu0 0
  %9932 = vperm.xlu0 %9931, %v9890
  %v9933 = vpop.permute.xlu0 %9932
  %9936 = vset.pattern.permute.xlu0 0
  %9937 = vperm.xlu0 %9936, %v9891
  %v9938 = vpop.permute.xlu0 %9937
  %9941 = vset.pattern.permute.xlu0 0
  %9942 = vperm.xlu0 %9941, %v9892
  %v9943 = vpop.permute.xlu0 %9942
  %9946 = vset.pattern.permute.xlu0 0
  %9947 = vperm.xlu0 %9946, %v9893
  %v9948 = vpop.permute.xlu0 %9947
  %v9950 = vmul.f32 %v9902, %v9913
  %v9951 = vmul.f32 %v9903, %v9918
  %v9952 = vmul.f32 %v9904, %v9923
  %v9953 = vmul.f32 %v9905, %v9928
  %v9954 = vmul.f32 %v9906, %v9933
  %v9955 = vmul.f32 %v9907, %v9938
  %v9956 = vmul.f32 %v9908, %v9943
  %v9957 = vmul.f32 %v9909, %v9948
  %v9958 = vmul.f32 %v9950, %v9950
  %v9959 = vmul.f32 %v9951, %v9951
  %v9960 = vmul.f32 %v9952, %v9952
  %v9961 = vmul.f32 %v9953, %v9953
  %v9962 = vmul.f32 %v9954, %v9954
  %v9963 = vmul.f32 %v9955, %v9955
  %v9964 = vmul.f32 %v9956, %v9956
  %v9965 = vmul.f32 %v9957, %v9957
  %v9966 = vsel %vm72, %v9958, 0.0
  %v9967 = vsel %vm72, %v9959, 0.0
  %v9968 = vadd.f32 %v9966, %v9967
  %v9969 = vsel %vm72, %v9960, 0.0
  %v9970 = vadd.f32 %v9968, %v9969
  %v9971 = vsel %vm72, %v9961, 0.0
  %v9972 = vadd.f32 %v9970, %v9971
  %v9973 = vsel %vm72, %v9962, 0.0
  %v9974 = vadd.f32 %v9972, %v9973
  %v9975 = vsel %vm72, %v9963, 0.0
  %v9976 = vadd.f32 %v9974, %v9975
  %v9977 = vsel %vm72, %v9964, 0.0
  %v9978 = vadd.f32 %v9976, %v9977
  %v9979 = vsel %vm72, %v9965, 0.0
  %v9980 = vadd.f32 %v9978, %v9979
  %9981 = vadd.xlane.f32.xlu0 %v9980
  %v9982 = vpop.xlane.xlu0 %9981
  %v9983 = vrot.slane %v9982, 4
  %v9984 = vadd.f32 %v9982, %v9983
  %v9985 = vrot.slane %v9984, 2
  %v9986 = vadd.f32 %v9984, %v9985
  %v9987 = vrot.slane %v9986, 1
  %v9988 = vadd.f32 %v9986, %v9987
  %s9989 = vtos %v9988
  %s9990 = sadd.f32 %s9877, %s9989
  %v9991 = vstv %s9990
  %v9992 = vadd.f32 %v9991, 0.0
  %9993 = vst [vmem:[%s12] sm:$0xff] %v9992
  // Predicated region
  $region50: #{scene_graph_masked_img_loss.1} parent=0 // pred_check
    _
  $region51: #{scene_graph_masked_img_loss.1} parent=0 // pred_check_branch
    %9995 = sbr.rel (0) target = $region53
  $region52: #{scene_graph_masked_img_loss.1} parent=0 // pred_region
    _
  $region53: #{scene_graph_masked_img_loss.1} parent=0 // pred_fallthru
    _
  // Predicated region
  $region54: #{scene_graph_masked_img_loss.1} parent=0 // pred_check
    _
  $region55: #{scene_graph_masked_img_loss.1} parent=0 // pred_check_branch
    %9997 = sbr.rel (0) target = $region57
  $region56: #{scene_graph_masked_img_loss.1} parent=0 // pred_region
    _
  $region57: #{scene_graph_masked_img_loss.1} parent=0 // pred_fallthru
    _

</llo_original>
